<compile_context>
chip_gen: v7x
topology: tpu7x:2x2x1
jax: 0.10.0
libtpu: 0.0.40
codegen_flags: <defaults>
</compile_context>

<pallas_src>
import math
from functools import partial

import jax
import jax.numpy as jnp
from jax.experimental import pallas as pl
from jax.experimental.pallas import tpu as pltpu

_LN_EPS = 1e-5


def _round_up(x, m):
    return (x + m - 1) // m * m


def _cparams(step_bytes, n_axes=1):
    # Explicit scoped-VMEM request: ~2x (double-buffered blocks) + headroom,
    # clamped to stay under v7x's 64 MiB physical VMEM.
    limit = int(2 * step_bytes) + (8 << 20)
    limit = max(32 << 20, min(limit, 56 << 20))
    return pltpu.CompilerParams(
        dimension_semantics=("parallel",) * n_axes,
        vmem_limit_bytes=limit,
    )


def _layernorm_f32(y, g, b, eps):
    mean = jnp.mean(y, axis=-1, keepdims=True)
    var = jnp.mean((y - mean) * (y - mean), axis=-1, keepdims=True)
    return (y - mean) * jax.lax.rsqrt(var + eps) * g + b


# ----------------------------------------------------------------------------
# Pallas kernels
# ----------------------------------------------------------------------------

def _linear_kernel(x_ref, w_ref, b_ref, o_ref):
    y = jnp.dot(x_ref[...], w_ref[...], preferred_element_type=jnp.float32)
    y = y + b_ref[...].astype(jnp.float32)
    o_ref[...] = y.astype(o_ref.dtype)


def _attn_block_kernel(x_ref, wi_ref, bi_ref, wo_ref, bo_ref, g_ref, beta_ref,
                       m_ref, o_ref, *, n_heads, scale, eps):
    # Fused self-attention sublayer for one batch element:
    #   LayerNorm(x + OutProj(MHA(x)))   -- everything stays in VMEM.
    T = x_ref.shape[1]
    D = x_ref.shape[2]
    dh = D // n_heads

    x = x_ref[0]                                             # (T, D)
    # fused QKV in-projection (single wide matmul, weight is loop-invariant)
    qkv = jnp.dot(x, wi_ref[...], preferred_element_type=jnp.float32)
    qkv = (qkv + bi_ref[...].astype(jnp.float32)).astype(x.dtype)   # (T, 3D)

    m = m_ref[0].astype(jnp.float32)                         # (1, T) additive mask

    acc = None
    for h in range(n_heads):                                 # static, small loop
        # scale folded into q: T*dh mults instead of T*T.
        q = qkv[:, h * dh:(h + 1) * dh] * scale
        k = qkv[:, D + h * dh:D + (h + 1) * dh]
        v = qkv[:, 2 * D + h * dh:2 * D + (h + 1) * dh]
        s = jax.lax.dot_general(q, k, (((1,), (1,)), ((), ())),
                                preferred_element_type=jnp.float32)   # (T, T)
        s = s + m
        mx = jnp.max(s, axis=-1, keepdims=True)
        p = jnp.exp(s - mx)
        p = p * (1.0 / jnp.sum(p, axis=-1, keepdims=True))   # exact softmax
        o_h = jnp.dot(p.astype(v.dtype), v,
                      preferred_element_type=jnp.float32)     # (T, dh)
        # fold this head's contribution straight into the output projection
        # (no lane-concat of head outputs).
        contrib = jnp.dot(o_h.astype(wo_ref.dtype),
                          wo_ref[h * dh:(h + 1) * dh, :],
                          preferred_element_type=jnp.float32)  # (T, D)
        acc = contrib if acc is None else acc + contrib

    y = acc + bo_ref[...].astype(jnp.float32) + x.astype(jnp.float32)
    y = _layernorm_f32(y, g_ref[...].astype(jnp.float32),
                       beta_ref[...].astype(jnp.float32), eps)
    o_ref[0] = y.astype(o_ref.dtype)


def _ffn_res_ln_kernel(x_ref, w1_ref, b1_ref, w2_ref, b2_ref, g_ref, beta_ref,
                       o_ref, xp_ref, *, K, eps):
    # LayerNorm(x + Conv1d_k1(ReLU(Conv1d_k9(x))))  for one batch element.
    # Conv is computed as K accumulating matmuls over a zero-padded copy of the
    # activation staged in VMEM scratch (no im2col lane concat).
    T = x_ref.shape[1]
    Din = w1_ref.shape[2]
    pad = (K - 1) // 2
    x = x_ref[0]                                             # (T, D)

    if pad > 0:
        xp_ref[...] = jnp.zeros_like(xp_ref)
        xp_ref[pad:pad + T, :] = x
    else:
        xp_ref[...] = x

    h = jnp.zeros((T, Din), jnp.float32) + b1_ref[...].astype(jnp.float32)
    for j in range(K):                                       # per-tap matmul
        h = h + jnp.dot(xp_ref[j:j + T, :], w1_ref[j],
                        preferred_element_type=jnp.float32)
    h = jnp.maximum(h, 0.0)

    y = jnp.dot(h.astype(w2_ref.dtype), w2_ref[...],
                preferred_element_type=jnp.float32)
    y = y + b2_ref[...].astype(jnp.float32) + x.astype(jnp.float32)
    y = _layernorm_f32(y, g_ref[...].astype(jnp.float32),
                       beta_ref[...].astype(jnp.float32), eps)
    o_ref[0] = y.astype(o_ref.dtype)


def _conv_relu_ln_kernel(x_ref, w_ref, b_ref, g_ref, beta_ref, o_ref, xp_ref,
                         *, K, eps):
    # predictor layer: Conv1d(k, 'same') + ReLU + LayerNorm-over-channels.
    T = x_ref.shape[1]
    Cout = w_ref.shape[2]
    pad = (K - 1) // 2
    x = x_ref[0]

    if pad > 0:
        xp_ref[...] = jnp.zeros_like(xp_ref)
        xp_ref[pad:pad + T, :] = x
    else:
        xp_ref[...] = x

    y = jnp.zeros((T, Cout), jnp.float32) + b_ref[...].astype(jnp.float32)
    for j in range(K):
        y = y + jnp.dot(xp_ref[j:j + T, :], w_ref[j],
                        preferred_element_type=jnp.float32)
    y = jnp.maximum(y, 0.0)
    y = _layernorm_f32(y, g_ref[...].astype(jnp.float32),
                       beta_ref[...].astype(jnp.float32), eps)
    o_ref[0] = y.astype(o_ref.dtype)


# ----------------------------------------------------------------------------
# pallas_call wrappers
# ----------------------------------------------------------------------------

def linear2d(x2d, w, b):
    M, K = x2d.shape
    N = w.shape[1]
    TM = min(1024, _round_up(M, 8))
    itm = x2d.dtype.itemsize
    step = (TM * K + K * N + TM * N + N) * itm
    return pl.pallas_call(
        _linear_kernel,
        out_shape=jax.ShapeDtypeStruct((M, N), x2d.dtype),
        grid=(pl.cdiv(M, TM),),
        in_specs=[pl.BlockSpec((TM, K), lambda i: (i, 0)),
                  pl.BlockSpec((K, N), lambda i: (0, 0)),
                  pl.BlockSpec((1, N), lambda i: (0, 0))],
        out_specs=pl.BlockSpec((TM, N), lambda i: (i, 0)),
        compiler_params=_cparams(step),
    )(x2d, w, b.reshape(1, N))


def linear3d(x, w, b):
    B, T, D = x.shape
    return linear2d(x.reshape(B * T, D), w, b).reshape(B, T, w.shape[1])


def attn_sublayer(x, mask_add, p, n_heads):
    B, T, D = x.shape
    dh = D // n_heads
    itm = x.dtype.itemsize
    witm = p["in_w"].dtype.itemsize
    step = (2 * T * D + T) * itm + (3 * D * D + D * D + 8 * D) * witm \
        + 2 * T * T * 4  # f32 score working set
    return pl.pallas_call(
        partial(_attn_block_kernel, n_heads=n_heads,
                scale=1.0 / math.sqrt(dh), eps=_LN_EPS),
        out_shape=jax.ShapeDtypeStruct((B, T, D), x.dtype),
        grid=(B,),
        in_specs=[pl.BlockSpec((1, T, D), lambda b: (b, 0, 0)),
                  pl.BlockSpec((D, 3 * D), lambda b: (0, 0)),
                  pl.BlockSpec((1, 3 * D), lambda b: (0, 0)),
                  pl.BlockSpec((D, D), lambda b: (0, 0)),
                  pl.BlockSpec((1, D), lambda b: (0, 0)),
                  pl.BlockSpec((1, D), lambda b: (0, 0)),
                  pl.BlockSpec((1, D), lambda b: (0, 0)),
                  pl.BlockSpec((1, 1, T), lambda b: (b, 0, 0))],
        out_specs=pl.BlockSpec((1, T, D), lambda b: (b, 0, 0)),
        compiler_params=_cparams(step),
    )(x, p["in_w"], p["in_b"].reshape(1, 3 * D), p["out_w"],
      p["out_b"].reshape(1, D), p["ln1_g"].reshape(1, D),
      p["ln1_b"].reshape(1, D), mask_add.reshape(B, 1, T))


def ffn_res_ln(x, w1, b1, w2, b2, g, beta, K):
    B, T, D = x.shape
    Din = w1.shape[2]                  # w1: (K, D, Din)
    pad = (K - 1) // 2
    itm = x.dtype.itemsize
    witm = w1.dtype.itemsize
    step = (2 * T * D + (T + 2 * pad) * D) * itm \
        + (K * D * Din + Din * D + Din + 3 * D) * witm + T * Din * 4
    return pl.pallas_call(
        partial(_ffn_res_ln_kernel, K=K, eps=_LN_EPS),
        out_shape=jax.ShapeDtypeStruct((B, T, D), x.dtype),
        grid=(B,),
        in_specs=[pl.BlockSpec((1, T, D), lambda b: (b, 0, 0)),
                  pl.BlockSpec((K, D, Din), lambda b: (0, 0, 0)),
                  pl.BlockSpec((1, Din), lambda b: (0, 0)),
                  pl.BlockSpec((Din, D), lambda b: (0, 0)),
                  pl.BlockSpec((1, D), lambda b: (0, 0)),
                  pl.BlockSpec((1, D), lambda b: (0, 0)),
                  pl.BlockSpec((1, D), lambda b: (0, 0))],
        out_specs=pl.BlockSpec((1, T, D), lambda b: (b, 0, 0)),
        scratch_shapes=[pltpu.VMEM((T + 2 * pad, D), x.dtype)],
        compiler_params=_cparams(step),
    )(x, w1, b1.reshape(1, Din), w2, b2.reshape(1, D),
      g.reshape(1, D), beta.reshape(1, D))


def conv_relu_ln(x, w, b, g, beta, K):
    B, T, C = x.shape
    Cout = w.shape[2]                  # w: (K, C, Cout)
    pad = (K - 1) // 2
    itm = x.dtype.itemsize
    step = (T * C + T * Cout + (T + 2 * pad) * C) * itm \
        + (K * C * Cout + 3 * Cout) * w.dtype.itemsize
    return pl.pallas_call(
        partial(_conv_relu_ln_kernel, K=K, eps=_LN_EPS),
        out_shape=jax.ShapeDtypeStruct((B, T, Cout), x.dtype),
        grid=(B,),
        in_specs=[pl.BlockSpec((1, T, C), lambda b: (b, 0, 0)),
                  pl.BlockSpec((K, C, Cout), lambda b: (0, 0, 0)),
                  pl.BlockSpec((1, Cout), lambda b: (0, 0)),
                  pl.BlockSpec((1, Cout), lambda b: (0, 0)),
                  pl.BlockSpec((1, Cout), lambda b: (0, 0))],
        out_specs=pl.BlockSpec((1, T, Cout), lambda b: (b, 0, 0)),
        scratch_shapes=[pltpu.VMEM((T + 2 * pad, C), x.dtype)],
        compiler_params=_cparams(step),
    )(x, w, b.reshape(1, Cout), g.reshape(1, Cout), beta.reshape(1, Cout))


# ----------------------------------------------------------------------------
# Model pieces (JAX glue around the Pallas kernels)
# ----------------------------------------------------------------------------

def positional_encoding(T, D):
    pos = jnp.arange(T, dtype=jnp.float32)[:, None]
    div = jnp.exp(jnp.arange(0, D, 2, dtype=jnp.float32) * (-math.log(10000.0) / D))
    pe = jnp.zeros((T, D), jnp.float32)
    pe = pe.at[:, 0::2].set(jnp.sin(pos * div))
    pe = pe.at[:, 1::2].set(jnp.cos(pos * div))
    return pe[None]


def fft_block(x, mask_add, p, n_heads):
    # fused: QKV proj + MHA + out-proj + residual + LayerNorm(norm1)
    x1 = attn_sublayer(x, mask_add, p, n_heads)
    # fused: conv(k=9)+ReLU+conv(k=1)+residual+LayerNorm(norm2)
    return ffn_res_ln(x1, p["ffn_w1"], p["ffn_b1"], p["ffn_w2"], p["ffn_b2"],
                      p["ln2_g"], p["ln2_b"], K=9)


def transformer(x, mask_add, layer_params, n_heads):
    _, T, D = x.shape
    x = x + positional_encoding(T, D).astype(x.dtype)
    for lp in layer_params:
        x = fft_block(x, mask_add, lp, n_heads)
    return x


def predictor(x, p, kernel_size):
    h = x
    for lyr in p["layers"]:
        h = conv_relu_ln(h, lyr["w"], lyr["b"], lyr["ln_g"], lyr["ln_b"], K=kernel_size)
    # final k=1 conv, out_dim in {1,2}: sub-128-lane Pallas outputs would lower
    # to masked partial stores -> leave this trivial GEMV to plain XLA.
    return h @ p["out_w"] + p["out_b"]


def length_regulator(x, mel_time, durations):
    # data-dependent gather; index math kept in plain JAX (no clean Pallas gather)
    B, T, F = x.shape
    cum = jnp.cumsum(durations, axis=1)                           # (B, T)
    rng = jnp.arange(mel_time)                                    # (mel_T,)
    mask = rng[None, None, :] >= cum[:, :, None]                  # (B, T, mel_T)
    src = jnp.clip(mask.astype(jnp.int32).sum(axis=1), 0, T - 1)  # (B, mel_T)
    gather_idx = jnp.broadcast_to(src[:, :, None], (B, mel_time, F))
    return jnp.take_along_axis(x, gather_idx, axis=1)


def model_forward(params, speakers, tokens, tones, pitches, periodicity,
                  durations, mels, *, cfg):
    n_heads = cfg["transformer_heads"]

    tok_emb = params["embed_tokens"][tokens]                      # (B, T, d-tone)
    tone_emb = params["embed_tones"][tones]                       # (B, T, tone)
    x = jnp.concatenate([tok_emb, tone_emb], axis=-1)             # (B, T, d_model)

    pad_mask = tokens == 0
    mask_add = jnp.where(pad_mask, -1e9, 0.0).astype(jnp.float32)

    enc = transformer(x, mask_add, params["encoder"], n_heads)
    if "speaker_embedding" in params:
        enc = enc + params["speaker_embedding"][speakers][:, None, :]

    duration_prediction = predictor(enc, params["duration_predictor"],
                                    cfg["duration_kernel_size"])[..., 0]   # (B, T)

    # training-style branch: mels & durations provided (static mel_time)
    durs = jnp.maximum(jnp.round(durations), 0.0).astype(jnp.int32)
    mel_time = mels.shape[1]
    dec_inp = length_regulator(enc, mel_time, durs)

    pitch_feat = predictor(dec_inp, params["pitch_predictor"],
                           cfg["pitch_kernel_size"])                        # (B, mel_T, 2)
    new_feat = jnp.stack([pitches, periodicity], axis=2)                    # (B, mel_T, 2)
    # embed_pitch: 2-wide contraction -> plain XLA (too small to feed the MXU)
    dec_inp = dec_inp + (new_feat @ params["embed_pitch_w"] + params["embed_pitch_b"])

    dec_mask_add = jnp.where(mels.sum(axis=2) == 0, -1e9, 0.0).astype(jnp.float32)
    dec = transformer(dec_inp, dec_mask_add, params["decoder"], n_heads)

    mel_outputs = linear3d(dec, params["mel_w"], params["mel_b"])
    return mel_outputs, duration_prediction, pitch_feat[..., 0], pitch_feat[..., 1]


# ----------------------------------------------------------------------------
# Deterministic parameter initialization (shapes per Model.__init__)
# Conv weights are stored per-tap: w[j, cin, cout] == torch_w[cout, cin, j].
# Pass bfloat16 params/inputs to halve HBM/VMEM traffic (f32 here to match the
# PyTorch reference precision); accumulation is always f32 inside the kernels.
# ----------------------------------------------------------------------------

def init_params(key, cfg):
    keys = iter(jax.random.split(key, 512))

    def nrm(shape, scale=0.02):
        return (scale * jax.random.normal(next(keys), shape)).astype(jnp.float32)

    d = cfg["d_model"]
    d_inner = cfg["transformer_inner"]

    def init_fft():
        return dict(
            in_w=nrm((d, 3 * d)), in_b=jnp.zeros((3 * d,), jnp.float32),
            out_w=nrm((d, d)), out_b=jnp.zeros((d,), jnp.float32),
            ffn_w1=nrm((9, d, d_inner)), ffn_b1=jnp.zeros((d_inner,), jnp.float32),
            ffn_w2=nrm((d_inner, d)), ffn_b2=jnp.zeros((d,), jnp.float32),
            ln1_g=jnp.ones((d,), jnp.float32), ln1_b=jnp.zeros((d,), jnp.float32),
            ln2_g=jnp.ones((d,), jnp.float32), ln2_b=jnp.zeros((d,), jnp.float32),
        )

    def init_predictor(out_dim, n_layers, k):
        layers = [dict(w=nrm((k, d, d)), b=jnp.zeros((d,), jnp.float32),
                       ln_g=jnp.ones((d,), jnp.float32), ln_b=jnp.zeros((d,), jnp.float32))
                  for _ in range(n_layers)]
        return dict(layers=layers, out_w=nrm((d, out_dim)),
                    out_b=jnp.zeros((out_dim,), jnp.float32))

    emb_tok = nrm((cfg["num_phones"], d - cfg["tone_embedding"])).at[0].set(0.0)  # padding_idx=0
    emb_tone = nrm((cfg["num_tones"], cfg["tone_embedding"])).at[0].set(0.0)      # padding_idx=0

    params = dict(
        embed_tokens=emb_tok,
        embed_tones=emb_tone,
        embed_pitch_w=nrm((2, d)), embed_pitch_b=jnp.zeros((d,), jnp.float32),
        encoder=[init_fft() for _ in range(cfg["transformer_layers"])],
        decoder=[init_fft() for _ in range(cfg["transformer_layers"])],
        duration_predictor=init_predictor(1, cfg["duration_layers"], cfg["duration_kernel_size"]),
        pitch_predictor=init_predictor(2, cfg["pitch_layers"], cfg["pitch_kernel_size"]),
        mel_w=nrm((d, cfg["num_mel_bins"])), mel_b=jnp.zeros((cfg["num_mel_bins"],), jnp.float32),
    )
    if cfg["num_speakers"] > 1:
        params["speaker_embedding"] = nrm((cfg["num_speakers"], d))
    return params


# ----------------------------------------------------------------------------

if __name__ == "__main__":
    cfg = dict(
        num_phones=10, num_speakers=3, num_mel_bins=16,
        num_tones=7, tone_embedding=8, d_model=32,
        transformer_layers=2, transformer_heads=4, transformer_inner=64,
        duration_layers=1, duration_kernel_size=3,
        pitch_layers=2, pitch_kernel_size=5,
    )
    B, T, MEL_T = 2, 8, 12

    root = jax.random.PRNGKey(0)
    kp, kd = jax.random.split(root)
    params = init_params(kp, cfg)

    ks = jax.random.split(kd, 6)
    speakers = jnp.array([0, 2], dtype=jnp.int32)
    tokens = jax.random.randint(ks[0], (B, T), 1, cfg["num_phones"], dtype=jnp.int32)
    tones = jax.random.randint(ks[1], (B, T), 1, cfg["num_tones"], dtype=jnp.int32)
    pitches = jax.random.normal(ks[2], (B, MEL_T), dtype=jnp.float32)
    periodicity = jax.random.uniform(ks[3], (B, MEL_T), dtype=jnp.float32)
    durations = jax.random.randint(ks[4], (B, T), 1, 3).astype(jnp.float32)
    mels = jax.random.normal(ks[5], (B, MEL_T, cfg["num_mel_bins"]), dtype=jnp.float32)

    fwd = jax.jit(partial(model_forward, cfg=cfg))   # cfg is static (closure), not traced
    mel_out, dur_pred, pitch0, pitch1 = fwd(params, speakers, tokens, tones,
                                            pitches, periodicity, durations, mels)
    jax.block_until_ready((mel_out, dur_pred, pitch0, pitch1))

    assert mel_out.shape == (B, MEL_T, cfg["num_mel_bins"])
    assert dur_pred.shape == (B, T)
    assert pitch0.shape == (B, MEL_T) and pitch1.shape == (B, MEL_T)
    print("KERNEL_OK")
</pallas_src>

<mosaic_0001>
module attributes {stable_mosaic.version = 11 : i64} {
  func.func @_attn_block_kernel(%arg0: i32, %arg1: memref<1x8x32xf32, #tpu.memory_space<vmem>>, %arg2: memref<32x96xf32, #tpu.memory_space<vmem>>, %arg3: memref<1x96xf32, #tpu.memory_space<vmem>>, %arg4: memref<32x32xf32, #tpu.memory_space<vmem>>, %arg5: memref<1x32xf32, #tpu.memory_space<vmem>>, %arg6: memref<1x32xf32, #tpu.memory_space<vmem>>, %arg7: memref<1x32xf32, #tpu.memory_space<vmem>>, %arg8: memref<1x1x8xf32, #tpu.memory_space<vmem>>, %arg9: memref<1x8x32xf32, #tpu.memory_space<vmem>>) attributes {dimension_semantics = [#tpu.dimension_semantics<parallel>], iteration_bounds = array<i64: 2>, scalar_prefetch = 0 : i64, scratch_operands = 0 : i64, tpu.core_type = #tpu.core_type<tc>, window_params = [{transform_indices = @transform_0, window_bounds = array<i64: 1, 8, 32>}, {pipeline_mode = #tpu.pipeline_mode<synchronous>, transform_indices = @transform_1, window_bounds = array<i64: 32, 96>}, {pipeline_mode = #tpu.pipeline_mode<synchronous>, transform_indices = @transform_2, window_bounds = array<i64: 1, 96>}, {pipeline_mode = #tpu.pipeline_mode<synchronous>, transform_indices = @transform_3, window_bounds = array<i64: 32, 32>}, {pipeline_mode = #tpu.pipeline_mode<synchronous>, transform_indices = @transform_4, window_bounds = array<i64: 1, 32>}, {pipeline_mode = #tpu.pipeline_mode<synchronous>, transform_indices = @transform_5, window_bounds = array<i64: 1, 32>}, {pipeline_mode = #tpu.pipeline_mode<synchronous>, transform_indices = @transform_6, window_bounds = array<i64: 1, 32>}, {transform_indices = @transform_7, window_bounds = array<i64: 1, 1, 8>}, {transform_indices = @transform_8, window_bounds = array<i64: 1, 8, 32>}]} {
    %c0 = arith.constant 0 : index
    %c0_0 = arith.constant 0 : index
    %c0_1 = arith.constant 0 : index
    %0 = vector.load %arg1[%c0, %c0_0, %c0_1] : memref<1x8x32xf32, #tpu.memory_space<vmem>>, vector<1x8x32xf32>
    %1 = vector.shape_cast %0 : vector<1x8x32xf32> to vector<8x32xf32>
    %c0_2 = arith.constant 0 : index
    %c0_3 = arith.constant 0 : index
    %2 = vector.load %arg2[%c0_2, %c0_3] : memref<32x96xf32, #tpu.memory_space<vmem>>, vector<32x96xf32>
    %cst = arith.constant dense<0.000000e+00> : vector<8x96xf32>
    %3 = tpu.matmul %1, %2, %cst {dimension_numbers = #tpu.dot_dimension_numbers<[1], [0], [0], [1], [0, 0, 1, 1], [], []>} : vector<8x32xf32>, vector<32x96xf32>, vector<8x96xf32> -> vector<8x96xf32>
    %c0_4 = arith.constant 0 : index
    %c0_5 = arith.constant 0 : index
    %4 = vector.load %arg3[%c0_4, %c0_5] : memref<1x96xf32, #tpu.memory_space<vmem>>, vector<1x96xf32>
    %5 = vector.broadcast %4 : vector<1x96xf32> to vector<8x96xf32>
    %6 = arith.addf %3, %5 : vector<8x96xf32>
    %c0_6 = arith.constant 0 : index
    %c0_7 = arith.constant 0 : index
    %c0_8 = arith.constant 0 : index
    %7 = vector.load %arg8[%c0_6, %c0_7, %c0_8] : memref<1x1x8xf32, #tpu.memory_space<vmem>>, vector<1x1x8xf32>
    %8 = vector.shape_cast %7 : vector<1x1x8xf32> to vector<1x8xf32>
    %9 = vector.extract_strided_slice %6 {offsets = [0, 0], sizes = [8, 8], strides = [1, 1]} : vector<8x96xf32> to vector<8x8xf32>
    %cst_9 = arith.constant 0.353553385 : f32
    %10 = vector.broadcast %cst_9 : f32 to vector<8x8xf32>
    %11 = arith.mulf %9, %10 : vector<8x8xf32>
    %12 = vector.extract_strided_slice %6 {offsets = [0, 32], sizes = [8, 8], strides = [1, 1]} : vector<8x96xf32> to vector<8x8xf32>
    %13 = vector.extract_strided_slice %6 {offsets = [0, 64], sizes = [8, 8], strides = [1, 1]} : vector<8x96xf32> to vector<8x8xf32>
    %cst_10 = arith.constant dense<0.000000e+00> : vector<8x8xf32>
    %14 = tpu.matmul %11, %12, %cst_10 {dimension_numbers = #tpu.dot_dimension_numbers<[1], [1], [0], [0], [0, 0, 1, 0], [], []>} : vector<8x8xf32>, vector<8x8xf32>, vector<8x8xf32> -> vector<8x8xf32>
    %15 = vector.broadcast %8 : vector<1x8xf32> to vector<8x8xf32>
    %16 = arith.addf %14, %15 : vector<8x8xf32>
    %cst_11 = arith.constant dense<0xFF800000> : vector<8xf32>
    %17 = vector.multi_reduction <maximumf>, %16, %cst_11 [1] : vector<8x8xf32> to vector<8xf32>
    %18 = vector.shape_cast %17 : vector<8xf32> to vector<8x1xf32>
    %19 = vector.broadcast %18 : vector<8x1xf32> to vector<8x8xf32>
    %20 = arith.subf %16, %19 : vector<8x8xf32>
    %21 = math.exp %20 : vector<8x8xf32>
    %cst_12 = arith.constant dense<0.000000e+00> : vector<8xf32>
    %22 = vector.multi_reduction <add>, %21, %cst_12 [1] : vector<8x8xf32> to vector<8xf32>
    %23 = vector.shape_cast %22 : vector<8xf32> to vector<8x1xf32>
    %cst_13 = arith.constant 1.000000e+00 : f32
    %24 = vector.broadcast %cst_13 : f32 to vector<8x1xf32>
    %25 = arith.divf %24, %23 : vector<8x1xf32>
    %26 = vector.broadcast %25 : vector<8x1xf32> to vector<8x8xf32>
    %27 = arith.mulf %21, %26 : vector<8x8xf32>
    %cst_14 = arith.constant dense<0.000000e+00> : vector<8x8xf32>
    %28 = tpu.matmul %27, %13, %cst_14 {dimension_numbers = #tpu.dot_dimension_numbers<[1], [0], [0], [1], [0, 0, 1, 1], [], []>} : vector<8x8xf32>, vector<8x8xf32>, vector<8x8xf32> -> vector<8x8xf32>
    %c0_15 = arith.constant 0 : index
    %c0_16 = arith.constant 0 : index
    %29 = vector.load %arg4[%c0_15, %c0_16] : memref<32x32xf32, #tpu.memory_space<vmem>>, vector<8x32xf32>
    %cst_17 = arith.constant dense<0.000000e+00> : vector<8x32xf32>
    %30 = tpu.matmul %28, %29, %cst_17 {dimension_numbers = #tpu.dot_dimension_numbers<[1], [0], [0], [1], [0, 0, 1, 1], [], []>} : vector<8x8xf32>, vector<8x32xf32>, vector<8x32xf32> -> vector<8x32xf32>
    %31 = vector.extract_strided_slice %6 {offsets = [0, 8], sizes = [8, 8], strides = [1, 1]} : vector<8x96xf32> to vector<8x8xf32>
    %cst_18 = arith.constant 0.353553385 : f32
    %32 = vector.broadcast %cst_18 : f32 to vector<8x8xf32>
    %33 = arith.mulf %31, %32 : vector<8x8xf32>
    %34 = vector.extract_strided_slice %6 {offsets = [0, 40], sizes = [8, 8], strides = [1, 1]} : vector<8x96xf32> to vector<8x8xf32>
    %35 = vector.extract_strided_slice %6 {offsets = [0, 72], sizes = [8, 8], strides = [1, 1]} : vector<8x96xf32> to vector<8x8xf32>
    %cst_19 = arith.constant dense<0.000000e+00> : vector<8x8xf32>
    %36 = tpu.matmul %33, %34, %cst_19 {dimension_numbers = #tpu.dot_dimension_numbers<[1], [1], [0], [0], [0, 0, 1, 0], [], []>} : vector<8x8xf32>, vector<8x8xf32>, vector<8x8xf32> -> vector<8x8xf32>
    %37 = vector.broadcast %8 : vector<1x8xf32> to vector<8x8xf32>
    %38 = arith.addf %36, %37 : vector<8x8xf32>
    %cst_20 = arith.constant dense<0xFF800000> : vector<8xf32>
    %39 = vector.multi_reduction <maximumf>, %38, %cst_20 [1] : vector<8x8xf32> to vector<8xf32>
    %40 = vector.shape_cast %39 : vector<8xf32> to vector<8x1xf32>
    %41 = vector.broadcast %40 : vector<8x1xf32> to vector<8x8xf32>
    %42 = arith.subf %38, %41 : vector<8x8xf32>
    %43 = math.exp %42 : vector<8x8xf32>
    %cst_21 = arith.constant dense<0.000000e+00> : vector<8xf32>
    %44 = vector.multi_reduction <add>, %43, %cst_21 [1] : vector<8x8xf32> to vector<8xf32>
    %45 = vector.shape_cast %44 : vector<8xf32> to vector<8x1xf32>
    %cst_22 = arith.constant 1.000000e+00 : f32
    %46 = vector.broadcast %cst_22 : f32 to vector<8x1xf32>
    %47 = arith.divf %46, %45 : vector<8x1xf32>
    %48 = vector.broadcast %47 : vector<8x1xf32> to vector<8x8xf32>
    %49 = arith.mulf %43, %48 : vector<8x8xf32>
    %cst_23 = arith.constant dense<0.000000e+00> : vector<8x8xf32>
    %50 = tpu.matmul %49, %35, %cst_23 {dimension_numbers = #tpu.dot_dimension_numbers<[1], [0], [0], [1], [0, 0, 1, 1], [], []>} : vector<8x8xf32>, vector<8x8xf32>, vector<8x8xf32> -> vector<8x8xf32>
    %c8 = arith.constant 8 : index
    %c0_24 = arith.constant 0 : index
    %51 = vector.load %arg4[%c8, %c0_24] : memref<32x32xf32, #tpu.memory_space<vmem>>, vector<8x32xf32>
    %cst_25 = arith.constant dense<0.000000e+00> : vector<8x32xf32>
    %52 = tpu.matmul %50, %51, %cst_25 {dimension_numbers = #tpu.dot_dimension_numbers<[1], [0], [0], [1], [0, 0, 1, 1], [], []>} : vector<8x8xf32>, vector<8x32xf32>, vector<8x32xf32> -> vector<8x32xf32>
    %53 = arith.addf %30, %52 : vector<8x32xf32>
    %54 = vector.extract_strided_slice %6 {offsets = [0, 16], sizes = [8, 8], strides = [1, 1]} : vector<8x96xf32> to vector<8x8xf32>
    %cst_26 = arith.constant 0.353553385 : f32
    %55 = vector.broadcast %cst_26 : f32 to vector<8x8xf32>
    %56 = arith.mulf %54, %55 : vector<8x8xf32>
    %57 = vector.extract_strided_slice %6 {offsets = [0, 48], sizes = [8, 8], strides = [1, 1]} : vector<8x96xf32> to vector<8x8xf32>
    %58 = vector.extract_strided_slice %6 {offsets = [0, 80], sizes = [8, 8], strides = [1, 1]} : vector<8x96xf32> to vector<8x8xf32>
    %cst_27 = arith.constant dense<0.000000e+00> : vector<8x8xf32>
    %59 = tpu.matmul %56, %57, %cst_27 {dimension_numbers = #tpu.dot_dimension_numbers<[1], [1], [0], [0], [0, 0, 1, 0], [], []>} : vector<8x8xf32>, vector<8x8xf32>, vector<8x8xf32> -> vector<8x8xf32>
    %60 = vector.broadcast %8 : vector<1x8xf32> to vector<8x8xf32>
    %61 = arith.addf %59, %60 : vector<8x8xf32>
    %cst_28 = arith.constant dense<0xFF800000> : vector<8xf32>
    %62 = vector.multi_reduction <maximumf>, %61, %cst_28 [1] : vector<8x8xf32> to vector<8xf32>
    %63 = vector.shape_cast %62 : vector<8xf32> to vector<8x1xf32>
    %64 = vector.broadcast %63 : vector<8x1xf32> to vector<8x8xf32>
    %65 = arith.subf %61, %64 : vector<8x8xf32>
    %66 = math.exp %65 : vector<8x8xf32>
    %cst_29 = arith.constant dense<0.000000e+00> : vector<8xf32>
    %67 = vector.multi_reduction <add>, %66, %cst_29 [1] : vector<8x8xf32> to vector<8xf32>
    %68 = vector.shape_cast %67 : vector<8xf32> to vector<8x1xf32>
    %cst_30 = arith.constant 1.000000e+00 : f32
    %69 = vector.broadcast %cst_30 : f32 to vector<8x1xf32>
    %70 = arith.divf %69, %68 : vector<8x1xf32>
    %71 = vector.broadcast %70 : vector<8x1xf32> to vector<8x8xf32>
    %72 = arith.mulf %66, %71 : vector<8x8xf32>
    %cst_31 = arith.constant dense<0.000000e+00> : vector<8x8xf32>
    %73 = tpu.matmul %72, %58, %cst_31 {dimension_numbers = #tpu.dot_dimension_numbers<[1], [0], [0], [1], [0, 0, 1, 1], [], []>} : vector<8x8xf32>, vector<8x8xf32>, vector<8x8xf32> -> vector<8x8xf32>
    %c16 = arith.constant 16 : index
    %c0_32 = arith.constant 0 : index
    %74 = vector.load %arg4[%c16, %c0_32] : memref<32x32xf32, #tpu.memory_space<vmem>>, vector<8x32xf32>
    %cst_33 = arith.constant dense<0.000000e+00> : vector<8x32xf32>
    %75 = tpu.matmul %73, %74, %cst_33 {dimension_numbers = #tpu.dot_dimension_numbers<[1], [0], [0], [1], [0, 0, 1, 1], [], []>} : vector<8x8xf32>, vector<8x32xf32>, vector<8x32xf32> -> vector<8x32xf32>
    %76 = arith.addf %53, %75 : vector<8x32xf32>
    %77 = vector.extract_strided_slice %6 {offsets = [0, 24], sizes = [8, 8], strides = [1, 1]} : vector<8x96xf32> to vector<8x8xf32>
    %cst_34 = arith.constant 0.353553385 : f32
    %78 = vector.broadcast %cst_34 : f32 to vector<8x8xf32>
    %79 = arith.mulf %77, %78 : vector<8x8xf32>
    %80 = vector.extract_strided_slice %6 {offsets = [0, 56], sizes = [8, 8], strides = [1, 1]} : vector<8x96xf32> to vector<8x8xf32>
    %81 = vector.extract_strided_slice %6 {offsets = [0, 88], sizes = [8, 8], strides = [1, 1]} : vector<8x96xf32> to vector<8x8xf32>
    %cst_35 = arith.constant dense<0.000000e+00> : vector<8x8xf32>
    %82 = tpu.matmul %79, %80, %cst_35 {dimension_numbers = #tpu.dot_dimension_numbers<[1], [1], [0], [0], [0, 0, 1, 0], [], []>} : vector<8x8xf32>, vector<8x8xf32>, vector<8x8xf32> -> vector<8x8xf32>
    %83 = vector.broadcast %8 : vector<1x8xf32> to vector<8x8xf32>
    %84 = arith.addf %82, %83 : vector<8x8xf32>
    %cst_36 = arith.constant dense<0xFF800000> : vector<8xf32>
    %85 = vector.multi_reduction <maximumf>, %84, %cst_36 [1] : vector<8x8xf32> to vector<8xf32>
    %86 = vector.shape_cast %85 : vector<8xf32> to vector<8x1xf32>
    %87 = vector.broadcast %86 : vector<8x1xf32> to vector<8x8xf32>
    %88 = arith.subf %84, %87 : vector<8x8xf32>
    %89 = math.exp %88 : vector<8x8xf32>
    %cst_37 = arith.constant dense<0.000000e+00> : vector<8xf32>
    %90 = vector.multi_reduction <add>, %89, %cst_37 [1] : vector<8x8xf32> to vector<8xf32>
    %91 = vector.shape_cast %90 : vector<8xf32> to vector<8x1xf32>
    %cst_38 = arith.constant 1.000000e+00 : f32
    %92 = vector.broadcast %cst_38 : f32 to vector<8x1xf32>
    %93 = arith.divf %92, %91 : vector<8x1xf32>
    %94 = vector.broadcast %93 : vector<8x1xf32> to vector<8x8xf32>
    %95 = arith.mulf %89, %94 : vector<8x8xf32>
    %cst_39 = arith.constant dense<0.000000e+00> : vector<8x8xf32>
    %96 = tpu.matmul %95, %81, %cst_39 {dimension_numbers = #tpu.dot_dimension_numbers<[1], [0], [0], [1], [0, 0, 1, 1], [], []>} : vector<8x8xf32>, vector<8x8xf32>, vector<8x8xf32> -> vector<8x8xf32>
    %c24 = arith.constant 24 : index
    %c0_40 = arith.constant 0 : index
    %97 = vector.load %arg4[%c24, %c0_40] : memref<32x32xf32, #tpu.memory_space<vmem>>, vector<8x32xf32>
    %cst_41 = arith.constant dense<0.000000e+00> : vector<8x32xf32>
    %98 = tpu.matmul %96, %97, %cst_41 {dimension_numbers = #tpu.dot_dimension_numbers<[1], [0], [0], [1], [0, 0, 1, 1], [], []>} : vector<8x8xf32>, vector<8x32xf32>, vector<8x32xf32> -> vector<8x32xf32>
    %99 = arith.addf %76, %98 : vector<8x32xf32>
    %c0_42 = arith.constant 0 : index
    %c0_43 = arith.constant 0 : index
    %100 = vector.load %arg5[%c0_42, %c0_43] : memref<1x32xf32, #tpu.memory_space<vmem>>, vector<1x32xf32>
    %101 = vector.broadcast %100 : vector<1x32xf32> to vector<8x32xf32>
    %102 = arith.addf %99, %101 : vector<8x32xf32>
    %103 = arith.addf %102, %1 : vector<8x32xf32>
    %c0_44 = arith.constant 0 : index
    %c0_45 = arith.constant 0 : index
    %104 = vector.load %arg6[%c0_44, %c0_45] : memref<1x32xf32, #tpu.memory_space<vmem>>, vector<1x32xf32>
    %c0_46 = arith.constant 0 : index
    %c0_47 = arith.constant 0 : index
    %105 = vector.load %arg7[%c0_46, %c0_47] : memref<1x32xf32, #tpu.memory_space<vmem>>, vector<1x32xf32>
    %cst_48 = arith.constant dense<0.000000e+00> : vector<8xf32>
    %106 = vector.multi_reduction <add>, %103, %cst_48 [1] : vector<8x32xf32> to vector<8xf32>
    %107 = vector.shape_cast %106 : vector<8xf32> to vector<8x1xf32>
    %cst_49 = arith.constant 3.200000e+01 : f32
    %108 = vector.broadcast %cst_49 : f32 to vector<8x1xf32>
    %109 = arith.divf %107, %108 : vector<8x1xf32>
    %110 = vector.broadcast %109 : vector<8x1xf32> to vector<8x32xf32>
    %111 = arith.subf %103, %110 : vector<8x32xf32>
    %112 = vector.broadcast %109 : vector<8x1xf32> to vector<8x32xf32>
    %113 = arith.subf %103, %112 : vector<8x32xf32>
    %114 = arith.mulf %111, %113 : vector<8x32xf32>
    %cst_50 = arith.constant dense<0.000000e+00> : vector<8xf32>
    %115 = vector.multi_reduction <add>, %114, %cst_50 [1] : vector<8x32xf32> to vector<8xf32>
    %116 = vector.shape_cast %115 : vector<8xf32> to vector<8x1xf32>
    %cst_51 = arith.constant 3.200000e+01 : f32
    %117 = vector.broadcast %cst_51 : f32 to vector<8x1xf32>
    %118 = arith.divf %116, %117 : vector<8x1xf32>
    %119 = vector.broadcast %109 : vector<8x1xf32> to vector<8x32xf32>
    %120 = arith.subf %103, %119 : vector<8x32xf32>
    %cst_52 = arith.constant 9.99999974E-6 : f32
    %121 = vector.broadcast %cst_52 : f32 to vector<8x1xf32>
    %122 = arith.addf %118, %121 : vector<8x1xf32>
    %123 = math.rsqrt %122 : vector<8x1xf32>
    %124 = vector.broadcast %123 : vector<8x1xf32> to vector<8x32xf32>
    %125 = arith.mulf %120, %124 : vector<8x32xf32>
    %126 = vector.broadcast %104 : vector<1x32xf32> to vector<8x32xf32>
    %127 = arith.mulf %125, %126 : vector<8x32xf32>
    %128 = vector.broadcast %105 : vector<1x32xf32> to vector<8x32xf32>
    %129 = arith.addf %127, %128 : vector<8x32xf32>
    %c0_53 = arith.constant 0 : index
    %c0_54 = arith.constant 0 : index
    %c0_55 = arith.constant 0 : index
    %130 = vector.load %arg9[%c0_53, %c0_54, %c0_55] : memref<1x8x32xf32, #tpu.memory_space<vmem>>, vector<1x8x32xf32>
    %131 = vector.shape_cast %130 : vector<1x8x32xf32> to vector<8x32xf32>
    %132 = vector.shape_cast %129 : vector<8x32xf32> to vector<1x8x32xf32>
    tpu.vector_store %arg9[%c0_53, %c0_54, %c0_55], %132 {strides = array<i32>} : memref<1x8x32xf32, #tpu.memory_space<vmem>>, vector<1x8x32xf32>,
    return
  }
  func.func @transform_0(%arg0: i32) -> (i32, i32, i32) {
    %c0_i32 = arith.constant 0 : i32
    %c0_i32_0 = arith.constant 0 : i32
    %c0_i32_1 = arith.constant 0 : i32
    return %arg0, %c0_i32, %c0_i32_0 : i32, i32, i32
  }
  func.func @transform_1(%arg0: i32) -> (i32, i32) {
    %c0_i32 = arith.constant 0 : i32
    %c0_i32_0 = arith.constant 0 : i32
    %c0_i32_1 = arith.constant 0 : i32
    return %c0_i32, %c0_i32_0 : i32, i32
  }
  func.func @transform_2(%arg0: i32) -> (i32, i32) {
    %c0_i32 = arith.constant 0 : i32
    %c0_i32_0 = arith.constant 0 : i32
    %c0_i32_1 = arith.constant 0 : i32
    return %c0_i32, %c0_i32_0 : i32, i32
  }
  func.func @transform_3(%arg0: i32) -> (i32, i32) {
    %c0_i32 = arith.constant 0 : i32
    %c0_i32_0 = arith.constant 0 : i32
    %c0_i32_1 = arith.constant 0 : i32
    return %c0_i32, %c0_i32_0 : i32, i32
  }
  func.func @transform_4(%arg0: i32) -> (i32, i32) {
    %c0_i32 = arith.constant 0 : i32
    %c0_i32_0 = arith.constant 0 : i32
    %c0_i32_1 = arith.constant 0 : i32
    return %c0_i32, %c0_i32_0 : i32, i32
  }
  func.func @transform_5(%arg0: i32) -> (i32, i32) {
    %c0_i32 = arith.constant 0 : i32
    %c0_i32_0 = arith.constant 0 : i32
    %c0_i32_1 = arith.constant 0 : i32
    return %c0_i32, %c0_i32_0 : i32, i32
  }
  func.func @transform_6(%arg0: i32) -> (i32, i32) {
    %c0_i32 = arith.constant 0 : i32
    %c0_i32_0 = arith.constant 0 : i32
    %c0_i32_1 = arith.constant 0 : i32
    return %c0_i32, %c0_i32_0 : i32, i32
  }
  func.func @transform_7(%arg0: i32) -> (i32, i32, i32) {
    %c0_i32 = arith.constant 0 : i32
    %c0_i32_0 = arith.constant 0 : i32
    %c0_i32_1 = arith.constant 0 : i32
    return %arg0, %c0_i32, %c0_i32_0 : i32, i32, i32
  }
  func.func @transform_8(%arg0: i32) -> (i32, i32, i32) {
    %c0_i32 = arith.constant 0 : i32
    %c0_i32_0 = arith.constant 0 : i32
    %c0_i32_1 = arith.constant 0 : i32
    return %arg0, %c0_i32, %c0_i32_0 : i32, i32, i32
  }
}

module attributes {stable_mosaic.version = 11 : i64} {
  func.func @_ffn_res_ln_kernel(%arg0: i32, %arg1: memref<1x8x32xf32, #tpu.memory_space<vmem>>, %arg2: memref<9x32x64xf32, #tpu.memory_space<vmem>>, %arg3: memref<1x64xf32, #tpu.memory_space<vmem>>, %arg4: memref<64x32xf32, #tpu.memory_space<vmem>>, %arg5: memref<1x32xf32, #tpu.memory_space<vmem>>, %arg6: memref<1x32xf32, #tpu.memory_space<vmem>>, %arg7: memref<1x32xf32, #tpu.memory_space<vmem>>, %arg8: memref<1x8x32xf32, #tpu.memory_space<vmem>>, %arg9: memref<16x32xf32, #tpu.memory_space<vmem>>) attributes {dimension_semantics = [#tpu.dimension_semantics<parallel>], iteration_bounds = array<i64: 2>, scalar_prefetch = 0 : i64, scratch_operands = 1 : i64, tpu.core_type = #tpu.core_type<tc>, window_params = [{transform_indices = @transform_0, window_bounds = array<i64: 1, 8, 32>}, {pipeline_mode = #tpu.pipeline_mode<synchronous>, transform_indices = @transform_1, window_bounds = array<i64: 9, 32, 64>}, {pipeline_mode = #tpu.pipeline_mode<synchronous>, transform_indices = @transform_2, window_bounds = array<i64: 1, 64>}, {pipeline_mode = #tpu.pipeline_mode<synchronous>, transform_indices = @transform_3, window_bounds = array<i64: 64, 32>}, {pipeline_mode = #tpu.pipeline_mode<synchronous>, transform_indices = @transform_4, window_bounds = array<i64: 1, 32>}, {pipeline_mode = #tpu.pipeline_mode<synchronous>, transform_indices = @transform_5, window_bounds = array<i64: 1, 32>}, {pipeline_mode = #tpu.pipeline_mode<synchronous>, transform_indices = @transform_6, window_bounds = array<i64: 1, 32>}, {transform_indices = @transform_7, window_bounds = array<i64: 1, 8, 32>}]} {
    %c0 = arith.constant 0 : index
    %c0_0 = arith.constant 0 : index
    %c0_1 = arith.constant 0 : index
    %0 = vector.load %arg1[%c0, %c0_0, %c0_1] : memref<1x8x32xf32, #tpu.memory_space<vmem>>, vector<1x8x32xf32>
    %1 = vector.shape_cast %0 : vector<1x8x32xf32> to vector<8x32xf32>
    %cst = arith.constant 0.000000e+00 : f32
    %2 = vector.broadcast %cst : f32 to vector<16x32xf32>
    %c0_2 = arith.constant 0 : index
    %c0_3 = arith.constant 0 : index
    %3 = vector.load %arg9[%c0_2, %c0_3] : memref<16x32xf32, #tpu.memory_space<vmem>>, vector<16x32xf32>
    tpu.vector_store %arg9[%c0_2, %c0_3], %2 {strides = array<i32>} : memref<16x32xf32, #tpu.memory_space<vmem>>, vector<16x32xf32>,
    %c4 = arith.constant 4 : index
    %c0_4 = arith.constant 0 : index
    %4 = vector.load %arg9[%c4, %c0_4] : memref<16x32xf32, #tpu.memory_space<vmem>>, vector<8x32xf32>
    tpu.vector_store %arg9[%c4, %c0_4], %1 {strides = array<i32>} : memref<16x32xf32, #tpu.memory_space<vmem>>, vector<8x32xf32>,
    %cst_5 = arith.constant 0.000000e+00 : f32
    %5 = vector.broadcast %cst_5 : f32 to vector<8x64xf32>
    %c0_6 = arith.constant 0 : index
    %c0_7 = arith.constant 0 : index
    %6 = vector.load %arg3[%c0_6, %c0_7] : memref<1x64xf32, #tpu.memory_space<vmem>>, vector<1x64xf32>
    %7 = vector.broadcast %6 : vector<1x64xf32> to vector<8x64xf32>
    %8 = arith.addf %5, %7 : vector<8x64xf32>
    %c0_8 = arith.constant 0 : index
    %c0_9 = arith.constant 0 : index
    %9 = vector.load %arg9[%c0_8, %c0_9] : memref<16x32xf32, #tpu.memory_space<vmem>>, vector<8x32xf32>
    %c0_10 = arith.constant 0 : index
    %c0_11 = arith.constant 0 : index
    %c0_12 = arith.constant 0 : index
    %10 = vector.load %arg2[%c0_10, %c0_11, %c0_12] : memref<9x32x64xf32, #tpu.memory_space<vmem>>, vector<1x32x64xf32>
    %11 = vector.shape_cast %10 : vector<1x32x64xf32> to vector<32x64xf32>
    %cst_13 = arith.constant dense<0.000000e+00> : vector<8x64xf32>
    %12 = tpu.matmul %9, %11, %cst_13 {dimension_numbers = #tpu.dot_dimension_numbers<[1], [0], [0], [1], [0, 0, 1, 1], [], []>} : vector<8x32xf32>, vector<32x64xf32>, vector<8x64xf32> -> vector<8x64xf32>
    %13 = arith.addf %8, %12 : vector<8x64xf32>
    %c1 = arith.constant 1 : index
    %c0_14 = arith.constant 0 : index
    %14 = vector.load %arg9[%c1, %c0_14] : memref<16x32xf32, #tpu.memory_space<vmem>>, vector<8x32xf32>
    %c1_15 = arith.constant 1 : index
    %c0_16 = arith.constant 0 : index
    %c0_17 = arith.constant 0 : index
    %15 = vector.load %arg2[%c1_15, %c0_16, %c0_17] : memref<9x32x64xf32, #tpu.memory_space<vmem>>, vector<1x32x64xf32>
    %16 = vector.shape_cast %15 : vector<1x32x64xf32> to vector<32x64xf32>
    %cst_18 = arith.constant dense<0.000000e+00> : vector<8x64xf32>
    %17 = tpu.matmul %14, %16, %cst_18 {dimension_numbers = #tpu.dot_dimension_numbers<[1], [0], [0], [1], [0, 0, 1, 1], [], []>} : vector<8x32xf32>, vector<32x64xf32>, vector<8x64xf32> -> vector<8x64xf32>
    %18 = arith.addf %13, %17 : vector<8x64xf32>
    %c2 = arith.constant 2 : index
    %c0_19 = arith.constant 0 : index
    %19 = vector.load %arg9[%c2, %c0_19] : memref<16x32xf32, #tpu.memory_space<vmem>>, vector<8x32xf32>
    %c2_20 = arith.constant 2 : index
    %c0_21 = arith.constant 0 : index
    %c0_22 = arith.constant 0 : index
    %20 = vector.load %arg2[%c2_20, %c0_21, %c0_22] : memref<9x32x64xf32, #tpu.memory_space<vmem>>, vector<1x32x64xf32>
    %21 = vector.shape_cast %20 : vector<1x32x64xf32> to vector<32x64xf32>
    %cst_23 = arith.constant dense<0.000000e+00> : vector<8x64xf32>
    %22 = tpu.matmul %19, %21, %cst_23 {dimension_numbers = #tpu.dot_dimension_numbers<[1], [0], [0], [1], [0, 0, 1, 1], [], []>} : vector<8x32xf32>, vector<32x64xf32>, vector<8x64xf32> -> vector<8x64xf32>
    %23 = arith.addf %18, %22 : vector<8x64xf32>
    %c3 = arith.constant 3 : index
    %c0_24 = arith.constant 0 : index
    %24 = vector.load %arg9[%c3, %c0_24] : memref<16x32xf32, #tpu.memory_space<vmem>>, vector<8x32xf32>
    %c3_25 = arith.constant 3 : index
    %c0_26 = arith.constant 0 : index
    %c0_27 = arith.constant 0 : index
    %25 = vector.load %arg2[%c3_25, %c0_26, %c0_27] : memref<9x32x64xf32, #tpu.memory_space<vmem>>, vector<1x32x64xf32>
    %26 = vector.shape_cast %25 : vector<1x32x64xf32> to vector<32x64xf32>
    %cst_28 = arith.constant dense<0.000000e+00> : vector<8x64xf32>
    %27 = tpu.matmul %24, %26, %cst_28 {dimension_numbers = #tpu.dot_dimension_numbers<[1], [0], [0], [1], [0, 0, 1, 1], [], []>} : vector<8x32xf32>, vector<32x64xf32>, vector<8x64xf32> -> vector<8x64xf32>
    %28 = arith.addf %23, %27 : vector<8x64xf32>
    %c4_29 = arith.constant 4 : index
    %c0_30 = arith.constant 0 : index
    %29 = vector.load %arg9[%c4_29, %c0_30] : memref<16x32xf32, #tpu.memory_space<vmem>>, vector<8x32xf32>
    %c4_31 = arith.constant 4 : index
    %c0_32 = arith.constant 0 : index
    %c0_33 = arith.constant 0 : index
    %30 = vector.load %arg2[%c4_31, %c0_32, %c0_33] : memref<9x32x64xf32, #tpu.memory_space<vmem>>, vector<1x32x64xf32>
    %31 = vector.shape_cast %30 : vector<1x32x64xf32> to vector<32x64xf32>
    %cst_34 = arith.constant dense<0.000000e+00> : vector<8x64xf32>
    %32 = tpu.matmul %29, %31, %cst_34 {dimension_numbers = #tpu.dot_dimension_numbers<[1], [0], [0], [1], [0, 0, 1, 1], [], []>} : vector<8x32xf32>, vector<32x64xf32>, vector<8x64xf32> -> vector<8x64xf32>
    %33 = arith.addf %28, %32 : vector<8x64xf32>
    %c5 = arith.constant 5 : index
    %c0_35 = arith.constant 0 : index
    %34 = vector.load %arg9[%c5, %c0_35] : memref<16x32xf32, #tpu.memory_space<vmem>>, vector<8x32xf32>
    %c5_36 = arith.constant 5 : index
    %c0_37 = arith.constant 0 : index
    %c0_38 = arith.constant 0 : index
    %35 = vector.load %arg2[%c5_36, %c0_37, %c0_38] : memref<9x32x64xf32, #tpu.memory_space<vmem>>, vector<1x32x64xf32>
    %36 = vector.shape_cast %35 : vector<1x32x64xf32> to vector<32x64xf32>
    %cst_39 = arith.constant dense<0.000000e+00> : vector<8x64xf32>
    %37 = tpu.matmul %34, %36, %cst_39 {dimension_numbers = #tpu.dot_dimension_numbers<[1], [0], [0], [1], [0, 0, 1, 1], [], []>} : vector<8x32xf32>, vector<32x64xf32>, vector<8x64xf32> -> vector<8x64xf32>
    %38 = arith.addf %33, %37 : vector<8x64xf32>
    %c6 = arith.constant 6 : index
    %c0_40 = arith.constant 0 : index
    %39 = vector.load %arg9[%c6, %c0_40] : memref<16x32xf32, #tpu.memory_space<vmem>>, vector<8x32xf32>
    %c6_41 = arith.constant 6 : index
    %c0_42 = arith.constant 0 : index
    %c0_43 = arith.constant 0 : index
    %40 = vector.load %arg2[%c6_41, %c0_42, %c0_43] : memref<9x32x64xf32, #tpu.memory_space<vmem>>, vector<1x32x64xf32>
    %41 = vector.shape_cast %40 : vector<1x32x64xf32> to vector<32x64xf32>
    %cst_44 = arith.constant dense<0.000000e+00> : vector<8x64xf32>
    %42 = tpu.matmul %39, %41, %cst_44 {dimension_numbers = #tpu.dot_dimension_numbers<[1], [0], [0], [1], [0, 0, 1, 1], [], []>} : vector<8x32xf32>, vector<32x64xf32>, vector<8x64xf32> -> vector<8x64xf32>
    %43 = arith.addf %38, %42 : vector<8x64xf32>
    %c7 = arith.constant 7 : index
    %c0_45 = arith.constant 0 : index
    %44 = vector.load %arg9[%c7, %c0_45] : memref<16x32xf32, #tpu.memory_space<vmem>>, vector<8x32xf32>
    %c7_46 = arith.constant 7 : index
    %c0_47 = arith.constant 0 : index
    %c0_48 = arith.constant 0 : index
    %45 = vector.load %arg2[%c7_46, %c0_47, %c0_48] : memref<9x32x64xf32, #tpu.memory_space<vmem>>, vector<1x32x64xf32>
    %46 = vector.shape_cast %45 : vector<1x32x64xf32> to vector<32x64xf32>
    %cst_49 = arith.constant dense<0.000000e+00> : vector<8x64xf32>
    %47 = tpu.matmul %44, %46, %cst_49 {dimension_numbers = #tpu.dot_dimension_numbers<[1], [0], [0], [1], [0, 0, 1, 1], [], []>} : vector<8x32xf32>, vector<32x64xf32>, vector<8x64xf32> -> vector<8x64xf32>
    %48 = arith.addf %43, %47 : vector<8x64xf32>
    %c8 = arith.constant 8 : index
    %c0_50 = arith.constant 0 : index
    %49 = vector.load %arg9[%c8, %c0_50] : memref<16x32xf32, #tpu.memory_space<vmem>>, vector<8x32xf32>
    %c8_51 = arith.constant 8 : index
    %c0_52 = arith.constant 0 : index
    %c0_53 = arith.constant 0 : index
    %50 = vector.load %arg2[%c8_51, %c0_52, %c0_53] : memref<9x32x64xf32, #tpu.memory_space<vmem>>, vector<1x32x64xf32>
    %51 = vector.shape_cast %50 : vector<1x32x64xf32> to vector<32x64xf32>
    %cst_54 = arith.constant dense<0.000000e+00> : vector<8x64xf32>
    %52 = tpu.matmul %49, %51, %cst_54 {dimension_numbers = #tpu.dot_dimension_numbers<[1], [0], [0], [1], [0, 0, 1, 1], [], []>} : vector<8x32xf32>, vector<32x64xf32>, vector<8x64xf32> -> vector<8x64xf32>
    %53 = arith.addf %48, %52 : vector<8x64xf32>
    %cst_55 = arith.constant 0.000000e+00 : f32
    %54 = vector.broadcast %cst_55 : f32 to vector<8x64xf32>
    %55 = arith.maximumf %53, %54 : vector<8x64xf32>
    %c0_56 = arith.constant 0 : index
    %c0_57 = arith.constant 0 : index
    %56 = vector.load %arg4[%c0_56, %c0_57] : memref<64x32xf32, #tpu.memory_space<vmem>>, vector<64x32xf32>
    %cst_58 = arith.constant dense<0.000000e+00> : vector<8x32xf32>
    %57 = tpu.matmul %55, %56, %cst_58 {dimension_numbers = #tpu.dot_dimension_numbers<[1], [0], [0], [1], [0, 0, 1, 1], [], []>} : vector<8x64xf32>, vector<64x32xf32>, vector<8x32xf32> -> vector<8x32xf32>
    %c0_59 = arith.constant 0 : index
    %c0_60 = arith.constant 0 : index
    %58 = vector.load %arg5[%c0_59, %c0_60] : memref<1x32xf32, #tpu.memory_space<vmem>>, vector<1x32xf32>
    %59 = vector.broadcast %58 : vector<1x32xf32> to vector<8x32xf32>
    %60 = arith.addf %57, %59 : vector<8x32xf32>
    %61 = arith.addf %60, %1 : vector<8x32xf32>
    %c0_61 = arith.constant 0 : index
    %c0_62 = arith.constant 0 : index
    %62 = vector.load %arg6[%c0_61, %c0_62] : memref<1x32xf32, #tpu.memory_space<vmem>>, vector<1x32xf32>
    %c0_63 = arith.constant 0 : index
    %c0_64 = arith.constant 0 : index
    %63 = vector.load %arg7[%c0_63, %c0_64] : memref<1x32xf32, #tpu.memory_space<vmem>>, vector<1x32xf32>
    %cst_65 = arith.constant dense<0.000000e+00> : vector<8xf32>
    %64 = vector.multi_reduction <add>, %61, %cst_65 [1] : vector<8x32xf32> to vector<8xf32>
    %65 = vector.shape_cast %64 : vector<8xf32> to vector<8x1xf32>
    %cst_66 = arith.constant 3.200000e+01 : f32
    %66 = vector.broadcast %cst_66 : f32 to vector<8x1xf32>
    %67 = arith.divf %65, %66 : vector<8x1xf32>
    %68 = vector.broadcast %67 : vector<8x1xf32> to vector<8x32xf32>
    %69 = arith.subf %61, %68 : vector<8x32xf32>
    %70 = vector.broadcast %67 : vector<8x1xf32> to vector<8x32xf32>
    %71 = arith.subf %61, %70 : vector<8x32xf32>
    %72 = arith.mulf %69, %71 : vector<8x32xf32>
    %cst_67 = arith.constant dense<0.000000e+00> : vector<8xf32>
    %73 = vector.multi_reduction <add>, %72, %cst_67 [1] : vector<8x32xf32> to vector<8xf32>
    %74 = vector.shape_cast %73 : vector<8xf32> to vector<8x1xf32>
    %cst_68 = arith.constant 3.200000e+01 : f32
    %75 = vector.broadcast %cst_68 : f32 to vector<8x1xf32>
    %76 = arith.divf %74, %75 : vector<8x1xf32>
    %77 = vector.broadcast %67 : vector<8x1xf32> to vector<8x32xf32>
    %78 = arith.subf %61, %77 : vector<8x32xf32>
    %cst_69 = arith.constant 9.99999974E-6 : f32
    %79 = vector.broadcast %cst_69 : f32 to vector<8x1xf32>
    %80 = arith.addf %76, %79 : vector<8x1xf32>
    %81 = math.rsqrt %80 : vector<8x1xf32>
    %82 = vector.broadcast %81 : vector<8x1xf32> to vector<8x32xf32>
    %83 = arith.mulf %78, %82 : vector<8x32xf32>
    %84 = vector.broadcast %62 : vector<1x32xf32> to vector<8x32xf32>
    %85 = arith.mulf %83, %84 : vector<8x32xf32>
    %86 = vector.broadcast %63 : vector<1x32xf32> to vector<8x32xf32>
    %87 = arith.addf %85, %86 : vector<8x32xf32>
    %c0_70 = arith.constant 0 : index
    %c0_71 = arith.constant 0 : index
    %c0_72 = arith.constant 0 : index
    %88 = vector.load %arg8[%c0_70, %c0_71, %c0_72] : memref<1x8x32xf32, #tpu.memory_space<vmem>>, vector<1x8x32xf32>
    %89 = vector.shape_cast %88 : vector<1x8x32xf32> to vector<8x32xf32>
    %90 = vector.shape_cast %87 : vector<8x32xf32> to vector<1x8x32xf32>
    tpu.vector_store %arg8[%c0_70, %c0_71, %c0_72], %90 {strides = array<i32>} : memref<1x8x32xf32, #tpu.memory_space<vmem>>, vector<1x8x32xf32>,
    return
  }
  func.func @transform_0(%arg0: i32) -> (i32, i32, i32) {
    %c0_i32 = arith.constant 0 : i32
    %c0_i32_0 = arith.constant 0 : i32
    %c0_i32_1 = arith.constant 0 : i32
    return %arg0, %c0_i32, %c0_i32_0 : i32, i32, i32
  }
  func.func @transform_1(%arg0: i32) -> (i32, i32, i32) {
    %c0_i32 = arith.constant 0 : i32
    %c0_i32_0 = arith.constant 0 : i32
    %c0_i32_1 = arith.constant 0 : i32
    %c0_i32_2 = arith.constant 0 : i32
    return %c0_i32, %c0_i32_0, %c0_i32_1 : i32, i32, i32
  }
  func.func @transform_2(%arg0: i32) -> (i32, i32) {
    %c0_i32 = arith.constant 0 : i32
    %c0_i32_0 = arith.constant 0 : i32
    %c0_i32_1 = arith.constant 0 : i32
    return %c0_i32, %c0_i32_0 : i32, i32
  }
  func.func @transform_3(%arg0: i32) -> (i32, i32) {
    %c0_i32 = arith.constant 0 : i32
    %c0_i32_0 = arith.constant 0 : i32
    %c0_i32_1 = arith.constant 0 : i32
    return %c0_i32, %c0_i32_0 : i32, i32
  }
  func.func @transform_4(%arg0: i32) -> (i32, i32) {
    %c0_i32 = arith.constant 0 : i32
    %c0_i32_0 = arith.constant 0 : i32
    %c0_i32_1 = arith.constant 0 : i32
    return %c0_i32, %c0_i32_0 : i32, i32
  }
  func.func @transform_5(%arg0: i32) -> (i32, i32) {
    %c0_i32 = arith.constant 0 : i32
    %c0_i32_0 = arith.constant 0 : i32
    %c0_i32_1 = arith.constant 0 : i32
    return %c0_i32, %c0_i32_0 : i32, i32
  }
  func.func @transform_6(%arg0: i32) -> (i32, i32) {
    %c0_i32 = arith.constant 0 : i32
    %c0_i32_0 = arith.constant 0 : i32
    %c0_i32_1 = arith.constant 0 : i32
    return %c0_i32, %c0_i32_0 : i32, i32
  }
  func.func @transform_7(%arg0: i32) -> (i32, i32, i32) {
    %c0_i32 = arith.constant 0 : i32
    %c0_i32_0 = arith.constant 0 : i32
    %c0_i32_1 = arith.constant 0 : i32
    return %arg0, %c0_i32, %c0_i32_0 : i32, i32, i32
  }
}

module attributes {stable_mosaic.version = 11 : i64} {
  func.func @_ffn_res_ln_kernel(%arg0: i32, %arg1: memref<1x12x32xf32, #tpu.memory_space<vmem>>, %arg2: memref<9x32x64xf32, #tpu.memory_space<vmem>>, %arg3: memref<1x64xf32, #tpu.memory_space<vmem>>, %arg4: memref<64x32xf32, #tpu.memory_space<vmem>>, %arg5: memref<1x32xf32, #tpu.memory_space<vmem>>, %arg6: memref<1x32xf32, #tpu.memory_space<vmem>>, %arg7: memref<1x32xf32, #tpu.memory_space<vmem>>, %arg8: memref<1x12x32xf32, #tpu.memory_space<vmem>>, %arg9: memref<20x32xf32, #tpu.memory_space<vmem>>) attributes {dimension_semantics = [#tpu.dimension_semantics<parallel>], iteration_bounds = array<i64: 2>, scalar_prefetch = 0 : i64, scratch_operands = 1 : i64, tpu.core_type = #tpu.core_type<tc>, window_params = [{transform_indices = @transform_0, window_bounds = array<i64: 1, 12, 32>}, {pipeline_mode = #tpu.pipeline_mode<synchronous>, transform_indices = @transform_1, window_bounds = array<i64: 9, 32, 64>}, {pipeline_mode = #tpu.pipeline_mode<synchronous>, transform_indices = @transform_2, window_bounds = array<i64: 1, 64>}, {pipeline_mode = #tpu.pipeline_mode<synchronous>, transform_indices = @transform_3, window_bounds = array<i64: 64, 32>}, {pipeline_mode = #tpu.pipeline_mode<synchronous>, transform_indices = @transform_4, window_bounds = array<i64: 1, 32>}, {pipeline_mode = #tpu.pipeline_mode<synchronous>, transform_indices = @transform_5, window_bounds = array<i64: 1, 32>}, {pipeline_mode = #tpu.pipeline_mode<synchronous>, transform_indices = @transform_6, window_bounds = array<i64: 1, 32>}, {transform_indices = @transform_7, window_bounds = array<i64: 1, 12, 32>}]} {
    %c0 = arith.constant 0 : index
    %c0_0 = arith.constant 0 : index
    %c0_1 = arith.constant 0 : index
    %0 = vector.load %arg1[%c0, %c0_0, %c0_1] : memref<1x12x32xf32, #tpu.memory_space<vmem>>, vector<1x12x32xf32>
    %1 = vector.shape_cast %0 : vector<1x12x32xf32> to vector<12x32xf32>
    %cst = arith.constant 0.000000e+00 : f32
    %2 = vector.broadcast %cst : f32 to vector<20x32xf32>
    %c0_2 = arith.constant 0 : index
    %c0_3 = arith.constant 0 : index
    %3 = vector.load %arg9[%c0_2, %c0_3] : memref<20x32xf32, #tpu.memory_space<vmem>>, vector<20x32xf32>
    tpu.vector_store %arg9[%c0_2, %c0_3], %2 {strides = array<i32>} : memref<20x32xf32, #tpu.memory_space<vmem>>, vector<20x32xf32>,
    %c4 = arith.constant 4 : index
    %c0_4 = arith.constant 0 : index
    %4 = vector.load %arg9[%c4, %c0_4] : memref<20x32xf32, #tpu.memory_space<vmem>>, vector<12x32xf32>
    tpu.vector_store %arg9[%c4, %c0_4], %1 {strides = array<i32>} : memref<20x32xf32, #tpu.memory_space<vmem>>, vector<12x32xf32>,
    %cst_5 = arith.constant 0.000000e+00 : f32
    %5 = vector.broadcast %cst_5 : f32 to vector<12x64xf32>
    %c0_6 = arith.constant 0 : index
    %c0_7 = arith.constant 0 : index
    %6 = vector.load %arg3[%c0_6, %c0_7] : memref<1x64xf32, #tpu.memory_space<vmem>>, vector<1x64xf32>
    %7 = vector.broadcast %6 : vector<1x64xf32> to vector<12x64xf32>
    %8 = arith.addf %5, %7 : vector<12x64xf32>
    %c0_8 = arith.constant 0 : index
    %c0_9 = arith.constant 0 : index
    %9 = vector.load %arg9[%c0_8, %c0_9] : memref<20x32xf32, #tpu.memory_space<vmem>>, vector<12x32xf32>
    %c0_10 = arith.constant 0 : index
    %c0_11 = arith.constant 0 : index
    %c0_12 = arith.constant 0 : index
    %10 = vector.load %arg2[%c0_10, %c0_11, %c0_12] : memref<9x32x64xf32, #tpu.memory_space<vmem>>, vector<1x32x64xf32>
    %11 = vector.shape_cast %10 : vector<1x32x64xf32> to vector<32x64xf32>
    %cst_13 = arith.constant dense<0.000000e+00> : vector<12x64xf32>
    %12 = tpu.matmul %9, %11, %cst_13 {dimension_numbers = #tpu.dot_dimension_numbers<[1], [0], [0], [1], [0, 0, 1, 1], [], []>} : vector<12x32xf32>, vector<32x64xf32>, vector<12x64xf32> -> vector<12x64xf32>
    %13 = arith.addf %8, %12 : vector<12x64xf32>
    %c1 = arith.constant 1 : index
    %c0_14 = arith.constant 0 : index
    %14 = vector.load %arg9[%c1, %c0_14] : memref<20x32xf32, #tpu.memory_space<vmem>>, vector<12x32xf32>
    %c1_15 = arith.constant 1 : index
    %c0_16 = arith.constant 0 : index
    %c0_17 = arith.constant 0 : index
    %15 = vector.load %arg2[%c1_15, %c0_16, %c0_17] : memref<9x32x64xf32, #tpu.memory_space<vmem>>, vector<1x32x64xf32>
    %16 = vector.shape_cast %15 : vector<1x32x64xf32> to vector<32x64xf32>
    %cst_18 = arith.constant dense<0.000000e+00> : vector<12x64xf32>
    %17 = tpu.matmul %14, %16, %cst_18 {dimension_numbers = #tpu.dot_dimension_numbers<[1], [0], [0], [1], [0, 0, 1, 1], [], []>} : vector<12x32xf32>, vector<32x64xf32>, vector<12x64xf32> -> vector<12x64xf32>
    %18 = arith.addf %13, %17 : vector<12x64xf32>
    %c2 = arith.constant 2 : index
    %c0_19 = arith.constant 0 : index
    %19 = vector.load %arg9[%c2, %c0_19] : memref<20x32xf32, #tpu.memory_space<vmem>>, vector<12x32xf32>
    %c2_20 = arith.constant 2 : index
    %c0_21 = arith.constant 0 : index
    %c0_22 = arith.constant 0 : index
    %20 = vector.load %arg2[%c2_20, %c0_21, %c0_22] : memref<9x32x64xf32, #tpu.memory_space<vmem>>, vector<1x32x64xf32>
    %21 = vector.shape_cast %20 : vector<1x32x64xf32> to vector<32x64xf32>
    %cst_23 = arith.constant dense<0.000000e+00> : vector<12x64xf32>
    %22 = tpu.matmul %19, %21, %cst_23 {dimension_numbers = #tpu.dot_dimension_numbers<[1], [0], [0], [1], [0, 0, 1, 1], [], []>} : vector<12x32xf32>, vector<32x64xf32>, vector<12x64xf32> -> vector<12x64xf32>
    %23 = arith.addf %18, %22 : vector<12x64xf32>
    %c3 = arith.constant 3 : index
    %c0_24 = arith.constant 0 : index
    %24 = vector.load %arg9[%c3, %c0_24] : memref<20x32xf32, #tpu.memory_space<vmem>>, vector<12x32xf32>
    %c3_25 = arith.constant 3 : index
    %c0_26 = arith.constant 0 : index
    %c0_27 = arith.constant 0 : index
    %25 = vector.load %arg2[%c3_25, %c0_26, %c0_27] : memref<9x32x64xf32, #tpu.memory_space<vmem>>, vector<1x32x64xf32>
    %26 = vector.shape_cast %25 : vector<1x32x64xf32> to vector<32x64xf32>
    %cst_28 = arith.constant dense<0.000000e+00> : vector<12x64xf32>
    %27 = tpu.matmul %24, %26, %cst_28 {dimension_numbers = #tpu.dot_dimension_numbers<[1], [0], [0], [1], [0, 0, 1, 1], [], []>} : vector<12x32xf32>, vector<32x64xf32>, vector<12x64xf32> -> vector<12x64xf32>
    %28 = arith.addf %23, %27 : vector<12x64xf32>
    %c4_29 = arith.constant 4 : index
    %c0_30 = arith.constant 0 : index
    %29 = vector.load %arg9[%c4_29, %c0_30] : memref<20x32xf32, #tpu.memory_space<vmem>>, vector<12x32xf32>
    %c4_31 = arith.constant 4 : index
    %c0_32 = arith.constant 0 : index
    %c0_33 = arith.constant 0 : index
    %30 = vector.load %arg2[%c4_31, %c0_32, %c0_33] : memref<9x32x64xf32, #tpu.memory_space<vmem>>, vector<1x32x64xf32>
    %31 = vector.shape_cast %30 : vector<1x32x64xf32> to vector<32x64xf32>
    %cst_34 = arith.constant dense<0.000000e+00> : vector<12x64xf32>
    %32 = tpu.matmul %29, %31, %cst_34 {dimension_numbers = #tpu.dot_dimension_numbers<[1], [0], [0], [1], [0, 0, 1, 1], [], []>} : vector<12x32xf32>, vector<32x64xf32>, vector<12x64xf32> -> vector<12x64xf32>
    %33 = arith.addf %28, %32 : vector<12x64xf32>
    %c5 = arith.constant 5 : index
    %c0_35 = arith.constant 0 : index
    %34 = vector.load %arg9[%c5, %c0_35] : memref<20x32xf32, #tpu.memory_space<vmem>>, vector<12x32xf32>
    %c5_36 = arith.constant 5 : index
    %c0_37 = arith.constant 0 : index
    %c0_38 = arith.constant 0 : index
    %35 = vector.load %arg2[%c5_36, %c0_37, %c0_38] : memref<9x32x64xf32, #tpu.memory_space<vmem>>, vector<1x32x64xf32>
    %36 = vector.shape_cast %35 : vector<1x32x64xf32> to vector<32x64xf32>
    %cst_39 = arith.constant dense<0.000000e+00> : vector<12x64xf32>
    %37 = tpu.matmul %34, %36, %cst_39 {dimension_numbers = #tpu.dot_dimension_numbers<[1], [0], [0], [1], [0, 0, 1, 1], [], []>} : vector<12x32xf32>, vector<32x64xf32>, vector<12x64xf32> -> vector<12x64xf32>
    %38 = arith.addf %33, %37 : vector<12x64xf32>
    %c6 = arith.constant 6 : index
    %c0_40 = arith.constant 0 : index
    %39 = vector.load %arg9[%c6, %c0_40] : memref<20x32xf32, #tpu.memory_space<vmem>>, vector<12x32xf32>
    %c6_41 = arith.constant 6 : index
    %c0_42 = arith.constant 0 : index
    %c0_43 = arith.constant 0 : index
    %40 = vector.load %arg2[%c6_41, %c0_42, %c0_43] : memref<9x32x64xf32, #tpu.memory_space<vmem>>, vector<1x32x64xf32>
    %41 = vector.shape_cast %40 : vector<1x32x64xf32> to vector<32x64xf32>
    %cst_44 = arith.constant dense<0.000000e+00> : vector<12x64xf32>
    %42 = tpu.matmul %39, %41, %cst_44 {dimension_numbers = #tpu.dot_dimension_numbers<[1], [0], [0], [1], [0, 0, 1, 1], [], []>} : vector<12x32xf32>, vector<32x64xf32>, vector<12x64xf32> -> vector<12x64xf32>
    %43 = arith.addf %38, %42 : vector<12x64xf32>
    %c7 = arith.constant 7 : index
    %c0_45 = arith.constant 0 : index
    %44 = vector.load %arg9[%c7, %c0_45] : memref<20x32xf32, #tpu.memory_space<vmem>>, vector<12x32xf32>
    %c7_46 = arith.constant 7 : index
    %c0_47 = arith.constant 0 : index
    %c0_48 = arith.constant 0 : index
    %45 = vector.load %arg2[%c7_46, %c0_47, %c0_48] : memref<9x32x64xf32, #tpu.memory_space<vmem>>, vector<1x32x64xf32>
    %46 = vector.shape_cast %45 : vector<1x32x64xf32> to vector<32x64xf32>
    %cst_49 = arith.constant dense<0.000000e+00> : vector<12x64xf32>
    %47 = tpu.matmul %44, %46, %cst_49 {dimension_numbers = #tpu.dot_dimension_numbers<[1], [0], [0], [1], [0, 0, 1, 1], [], []>} : vector<12x32xf32>, vector<32x64xf32>, vector<12x64xf32> -> vector<12x64xf32>
    %48 = arith.addf %43, %47 : vector<12x64xf32>
    %c8 = arith.constant 8 : index
    %c0_50 = arith.constant 0 : index
    %49 = vector.load %arg9[%c8, %c0_50] : memref<20x32xf32, #tpu.memory_space<vmem>>, vector<12x32xf32>
    %c8_51 = arith.constant 8 : index
    %c0_52 = arith.constant 0 : index
    %c0_53 = arith.constant 0 : index
    %50 = vector.load %arg2[%c8_51, %c0_52, %c0_53] : memref<9x32x64xf32, #tpu.memory_space<vmem>>, vector<1x32x64xf32>
    %51 = vector.shape_cast %50 : vector<1x32x64xf32> to vector<32x64xf32>
    %cst_54 = arith.constant dense<0.000000e+00> : vector<12x64xf32>
    %52 = tpu.matmul %49, %51, %cst_54 {dimension_numbers = #tpu.dot_dimension_numbers<[1], [0], [0], [1], [0, 0, 1, 1], [], []>} : vector<12x32xf32>, vector<32x64xf32>, vector<12x64xf32> -> vector<12x64xf32>
    %53 = arith.addf %48, %52 : vector<12x64xf32>
    %cst_55 = arith.constant 0.000000e+00 : f32
    %54 = vector.broadcast %cst_55 : f32 to vector<12x64xf32>
    %55 = arith.maximumf %53, %54 : vector<12x64xf32>
    %c0_56 = arith.constant 0 : index
    %c0_57 = arith.constant 0 : index
    %56 = vector.load %arg4[%c0_56, %c0_57] : memref<64x32xf32, #tpu.memory_space<vmem>>, vector<64x32xf32>
    %cst_58 = arith.constant dense<0.000000e+00> : vector<12x32xf32>
    %57 = tpu.matmul %55, %56, %cst_58 {dimension_numbers = #tpu.dot_dimension_numbers<[1], [0], [0], [1], [0, 0, 1, 1], [], []>} : vector<12x64xf32>, vector<64x32xf32>, vector<12x32xf32> -> vector<12x32xf32>
    %c0_59 = arith.constant 0 : index
    %c0_60 = arith.constant 0 : index
    %58 = vector.load %arg5[%c0_59, %c0_60] : memref<1x32xf32, #tpu.memory_space<vmem>>, vector<1x32xf32>
    %59 = vector.broadcast %58 : vector<1x32xf32> to vector<12x32xf32>
    %60 = arith.addf %57, %59 : vector<12x32xf32>
    %61 = arith.addf %60, %1 : vector<12x32xf32>
    %c0_61 = arith.constant 0 : index
    %c0_62 = arith.constant 0 : index
    %62 = vector.load %arg6[%c0_61, %c0_62] : memref<1x32xf32, #tpu.memory_space<vmem>>, vector<1x32xf32>
    %c0_63 = arith.constant 0 : index
    %c0_64 = arith.constant 0 : index
    %63 = vector.load %arg7[%c0_63, %c0_64] : memref<1x32xf32, #tpu.memory_space<vmem>>, vector<1x32xf32>
    %cst_65 = arith.constant dense<0.000000e+00> : vector<12xf32>
    %64 = vector.multi_reduction <add>, %61, %cst_65 [1] : vector<12x32xf32> to vector<12xf32>
    %65 = vector.shape_cast %64 : vector<12xf32> to vector<12x1xf32>
    %cst_66 = arith.constant 3.200000e+01 : f32
    %66 = vector.broadcast %cst_66 : f32 to vector<12x1xf32>
    %67 = arith.divf %65, %66 : vector<12x1xf32>
    %68 = vector.broadcast %67 : vector<12x1xf32> to vector<12x32xf32>
    %69 = arith.subf %61, %68 : vector<12x32xf32>
    %70 = vector.broadcast %67 : vector<12x1xf32> to vector<12x32xf32>
    %71 = arith.subf %61, %70 : vector<12x32xf32>
    %72 = arith.mulf %69, %71 : vector<12x32xf32>
    %cst_67 = arith.constant dense<0.000000e+00> : vector<12xf32>
    %73 = vector.multi_reduction <add>, %72, %cst_67 [1] : vector<12x32xf32> to vector<12xf32>
    %74 = vector.shape_cast %73 : vector<12xf32> to vector<12x1xf32>
    %cst_68 = arith.constant 3.200000e+01 : f32
    %75 = vector.broadcast %cst_68 : f32 to vector<12x1xf32>
    %76 = arith.divf %74, %75 : vector<12x1xf32>
    %77 = vector.broadcast %67 : vector<12x1xf32> to vector<12x32xf32>
    %78 = arith.subf %61, %77 : vector<12x32xf32>
    %cst_69 = arith.constant 9.99999974E-6 : f32
    %79 = vector.broadcast %cst_69 : f32 to vector<12x1xf32>
    %80 = arith.addf %76, %79 : vector<12x1xf32>
    %81 = math.rsqrt %80 : vector<12x1xf32>
    %82 = vector.broadcast %81 : vector<12x1xf32> to vector<12x32xf32>
    %83 = arith.mulf %78, %82 : vector<12x32xf32>
    %84 = vector.broadcast %62 : vector<1x32xf32> to vector<12x32xf32>
    %85 = arith.mulf %83, %84 : vector<12x32xf32>
    %86 = vector.broadcast %63 : vector<1x32xf32> to vector<12x32xf32>
    %87 = arith.addf %85, %86 : vector<12x32xf32>
    %c0_70 = arith.constant 0 : index
    %c0_71 = arith.constant 0 : index
    %c0_72 = arith.constant 0 : index
    %88 = vector.load %arg8[%c0_70, %c0_71, %c0_72] : memref<1x12x32xf32, #tpu.memory_space<vmem>>, vector<1x12x32xf32>
    %89 = vector.shape_cast %88 : vector<1x12x32xf32> to vector<12x32xf32>
    %90 = vector.shape_cast %87 : vector<12x32xf32> to vector<1x12x32xf32>
    tpu.vector_store %arg8[%c0_70, %c0_71, %c0_72], %90 {strides = array<i32>} : memref<1x12x32xf32, #tpu.memory_space<vmem>>, vector<1x12x32xf32>,
    return
  }
  func.func @transform_0(%arg0: i32) -> (i32, i32, i32) {
    %c0_i32 = arith.constant 0 : i32
    %c0_i32_0 = arith.constant 0 : i32
    %c0_i32_1 = arith.constant 0 : i32
    return %arg0, %c0_i32, %c0_i32_0 : i32, i32, i32
  }
  func.func @transform_1(%arg0: i32) -> (i32, i32, i32) {
    %c0_i32 = arith.constant 0 : i32
    %c0_i32_0 = arith.constant 0 : i32
    %c0_i32_1 = arith.constant 0 : i32
    %c0_i32_2 = arith.constant 0 : i32
    return %c0_i32, %c0_i32_0, %c0_i32_1 : i32, i32, i32
  }
  func.func @transform_2(%arg0: i32) -> (i32, i32) {
    %c0_i32 = arith.constant 0 : i32
    %c0_i32_0 = arith.constant 0 : i32
    %c0_i32_1 = arith.constant 0 : i32
    return %c0_i32, %c0_i32_0 : i32, i32
  }
  func.func @transform_3(%arg0: i32) -> (i32, i32) {
    %c0_i32 = arith.constant 0 : i32
    %c0_i32_0 = arith.constant 0 : i32
    %c0_i32_1 = arith.constant 0 : i32
    return %c0_i32, %c0_i32_0 : i32, i32
  }
  func.func @transform_4(%arg0: i32) -> (i32, i32) {
    %c0_i32 = arith.constant 0 : i32
    %c0_i32_0 = arith.constant 0 : i32
    %c0_i32_1 = arith.constant 0 : i32
    return %c0_i32, %c0_i32_0 : i32, i32
  }
  func.func @transform_5(%arg0: i32) -> (i32, i32) {
    %c0_i32 = arith.constant 0 : i32
    %c0_i32_0 = arith.constant 0 : i32
    %c0_i32_1 = arith.constant 0 : i32
    return %c0_i32, %c0_i32_0 : i32, i32
  }
  func.func @transform_6(%arg0: i32) -> (i32, i32) {
    %c0_i32 = arith.constant 0 : i32
    %c0_i32_0 = arith.constant 0 : i32
    %c0_i32_1 = arith.constant 0 : i32
    return %c0_i32, %c0_i32_0 : i32, i32
  }
  func.func @transform_7(%arg0: i32) -> (i32, i32, i32) {
    %c0_i32 = arith.constant 0 : i32
    %c0_i32_0 = arith.constant 0 : i32
    %c0_i32_1 = arith.constant 0 : i32
    return %arg0, %c0_i32, %c0_i32_0 : i32, i32, i32
  }
}

module attributes {stable_mosaic.version = 11 : i64} {
  func.func @_attn_block_kernel(%arg0: i32, %arg1: memref<1x12x32xf32, #tpu.memory_space<vmem>>, %arg2: memref<32x96xf32, #tpu.memory_space<vmem>>, %arg3: memref<1x96xf32, #tpu.memory_space<vmem>>, %arg4: memref<32x32xf32, #tpu.memory_space<vmem>>, %arg5: memref<1x32xf32, #tpu.memory_space<vmem>>, %arg6: memref<1x32xf32, #tpu.memory_space<vmem>>, %arg7: memref<1x32xf32, #tpu.memory_space<vmem>>, %arg8: memref<1x1x12xf32, #tpu.memory_space<vmem>>, %arg9: memref<1x12x32xf32, #tpu.memory_space<vmem>>) attributes {dimension_semantics = [#tpu.dimension_semantics<parallel>], iteration_bounds = array<i64: 2>, scalar_prefetch = 0 : i64, scratch_operands = 0 : i64, tpu.core_type = #tpu.core_type<tc>, window_params = [{transform_indices = @transform_0, window_bounds = array<i64: 1, 12, 32>}, {pipeline_mode = #tpu.pipeline_mode<synchronous>, transform_indices = @transform_1, window_bounds = array<i64: 32, 96>}, {pipeline_mode = #tpu.pipeline_mode<synchronous>, transform_indices = @transform_2, window_bounds = array<i64: 1, 96>}, {pipeline_mode = #tpu.pipeline_mode<synchronous>, transform_indices = @transform_3, window_bounds = array<i64: 32, 32>}, {pipeline_mode = #tpu.pipeline_mode<synchronous>, transform_indices = @transform_4, window_bounds = array<i64: 1, 32>}, {pipeline_mode = #tpu.pipeline_mode<synchronous>, transform_indices = @transform_5, window_bounds = array<i64: 1, 32>}, {pipeline_mode = #tpu.pipeline_mode<synchronous>, transform_indices = @transform_6, window_bounds = array<i64: 1, 32>}, {transform_indices = @transform_7, window_bounds = array<i64: 1, 1, 12>}, {transform_indices = @transform_8, window_bounds = array<i64: 1, 12, 32>}]} {
    %c0 = arith.constant 0 : index
    %c0_0 = arith.constant 0 : index
    %c0_1 = arith.constant 0 : index
    %0 = vector.load %arg1[%c0, %c0_0, %c0_1] : memref<1x12x32xf32, #tpu.memory_space<vmem>>, vector<1x12x32xf32>
    %1 = vector.shape_cast %0 : vector<1x12x32xf32> to vector<12x32xf32>
    %c0_2 = arith.constant 0 : index
    %c0_3 = arith.constant 0 : index
    %2 = vector.load %arg2[%c0_2, %c0_3] : memref<32x96xf32, #tpu.memory_space<vmem>>, vector<32x96xf32>
    %cst = arith.constant dense<0.000000e+00> : vector<12x96xf32>
    %3 = tpu.matmul %1, %2, %cst {dimension_numbers = #tpu.dot_dimension_numbers<[1], [0], [0], [1], [0, 0, 1, 1], [], []>} : vector<12x32xf32>, vector<32x96xf32>, vector<12x96xf32> -> vector<12x96xf32>
    %c0_4 = arith.constant 0 : index
    %c0_5 = arith.constant 0 : index
    %4 = vector.load %arg3[%c0_4, %c0_5] : memref<1x96xf32, #tpu.memory_space<vmem>>, vector<1x96xf32>
    %5 = vector.broadcast %4 : vector<1x96xf32> to vector<12x96xf32>
    %6 = arith.addf %3, %5 : vector<12x96xf32>
    %c0_6 = arith.constant 0 : index
    %c0_7 = arith.constant 0 : index
    %c0_8 = arith.constant 0 : index
    %7 = vector.load %arg8[%c0_6, %c0_7, %c0_8] : memref<1x1x12xf32, #tpu.memory_space<vmem>>, vector<1x1x12xf32>
    %8 = vector.shape_cast %7 : vector<1x1x12xf32> to vector<1x12xf32>
    %9 = vector.extract_strided_slice %6 {offsets = [0, 0], sizes = [12, 8], strides = [1, 1]} : vector<12x96xf32> to vector<12x8xf32>
    %cst_9 = arith.constant 0.353553385 : f32
    %10 = vector.broadcast %cst_9 : f32 to vector<12x8xf32>
    %11 = arith.mulf %9, %10 : vector<12x8xf32>
    %12 = vector.extract_strided_slice %6 {offsets = [0, 32], sizes = [12, 8], strides = [1, 1]} : vector<12x96xf32> to vector<12x8xf32>
    %13 = vector.extract_strided_slice %6 {offsets = [0, 64], sizes = [12, 8], strides = [1, 1]} : vector<12x96xf32> to vector<12x8xf32>
    %cst_10 = arith.constant dense<0.000000e+00> : vector<12x12xf32>
    %14 = tpu.matmul %11, %12, %cst_10 {dimension_numbers = #tpu.dot_dimension_numbers<[1], [1], [0], [0], [0, 0, 1, 0], [], []>} : vector<12x8xf32>, vector<12x8xf32>, vector<12x12xf32> -> vector<12x12xf32>
    %15 = vector.broadcast %8 : vector<1x12xf32> to vector<12x12xf32>
    %16 = arith.addf %14, %15 : vector<12x12xf32>
    %cst_11 = arith.constant dense<0xFF800000> : vector<12xf32>
    %17 = vector.multi_reduction <maximumf>, %16, %cst_11 [1] : vector<12x12xf32> to vector<12xf32>
    %18 = vector.shape_cast %17 : vector<12xf32> to vector<12x1xf32>
    %19 = vector.broadcast %18 : vector<12x1xf32> to vector<12x12xf32>
    %20 = arith.subf %16, %19 : vector<12x12xf32>
    %21 = math.exp %20 : vector<12x12xf32>
    %cst_12 = arith.constant dense<0.000000e+00> : vector<12xf32>
    %22 = vector.multi_reduction <add>, %21, %cst_12 [1] : vector<12x12xf32> to vector<12xf32>
    %23 = vector.shape_cast %22 : vector<12xf32> to vector<12x1xf32>
    %cst_13 = arith.constant 1.000000e+00 : f32
    %24 = vector.broadcast %cst_13 : f32 to vector<12x1xf32>
    %25 = arith.divf %24, %23 : vector<12x1xf32>
    %26 = vector.broadcast %25 : vector<12x1xf32> to vector<12x12xf32>
    %27 = arith.mulf %21, %26 : vector<12x12xf32>
    %cst_14 = arith.constant dense<0.000000e+00> : vector<12x8xf32>
    %28 = tpu.matmul %27, %13, %cst_14 {dimension_numbers = #tpu.dot_dimension_numbers<[1], [0], [0], [1], [0, 0, 1, 1], [], []>} : vector<12x12xf32>, vector<12x8xf32>, vector<12x8xf32> -> vector<12x8xf32>
    %c0_15 = arith.constant 0 : index
    %c0_16 = arith.constant 0 : index
    %29 = vector.load %arg4[%c0_15, %c0_16] : memref<32x32xf32, #tpu.memory_space<vmem>>, vector<8x32xf32>
    %cst_17 = arith.constant dense<0.000000e+00> : vector<12x32xf32>
    %30 = tpu.matmul %28, %29, %cst_17 {dimension_numbers = #tpu.dot_dimension_numbers<[1], [0], [0], [1], [0, 0, 1, 1], [], []>} : vector<12x8xf32>, vector<8x32xf32>, vector<12x32xf32> -> vector<12x32xf32>
    %31 = vector.extract_strided_slice %6 {offsets = [0, 8], sizes = [12, 8], strides = [1, 1]} : vector<12x96xf32> to vector<12x8xf32>
    %cst_18 = arith.constant 0.353553385 : f32
    %32 = vector.broadcast %cst_18 : f32 to vector<12x8xf32>
    %33 = arith.mulf %31, %32 : vector<12x8xf32>
    %34 = vector.extract_strided_slice %6 {offsets = [0, 40], sizes = [12, 8], strides = [1, 1]} : vector<12x96xf32> to vector<12x8xf32>
    %35 = vector.extract_strided_slice %6 {offsets = [0, 72], sizes = [12, 8], strides = [1, 1]} : vector<12x96xf32> to vector<12x8xf32>
    %cst_19 = arith.constant dense<0.000000e+00> : vector<12x12xf32>
    %36 = tpu.matmul %33, %34, %cst_19 {dimension_numbers = #tpu.dot_dimension_numbers<[1], [1], [0], [0], [0, 0, 1, 0], [], []>} : vector<12x8xf32>, vector<12x8xf32>, vector<12x12xf32> -> vector<12x12xf32>
    %37 = vector.broadcast %8 : vector<1x12xf32> to vector<12x12xf32>
    %38 = arith.addf %36, %37 : vector<12x12xf32>
    %cst_20 = arith.constant dense<0xFF800000> : vector<12xf32>
    %39 = vector.multi_reduction <maximumf>, %38, %cst_20 [1] : vector<12x12xf32> to vector<12xf32>
    %40 = vector.shape_cast %39 : vector<12xf32> to vector<12x1xf32>
    %41 = vector.broadcast %40 : vector<12x1xf32> to vector<12x12xf32>
    %42 = arith.subf %38, %41 : vector<12x12xf32>
    %43 = math.exp %42 : vector<12x12xf32>
    %cst_21 = arith.constant dense<0.000000e+00> : vector<12xf32>
    %44 = vector.multi_reduction <add>, %43, %cst_21 [1] : vector<12x12xf32> to vector<12xf32>
    %45 = vector.shape_cast %44 : vector<12xf32> to vector<12x1xf32>
    %cst_22 = arith.constant 1.000000e+00 : f32
    %46 = vector.broadcast %cst_22 : f32 to vector<12x1xf32>
    %47 = arith.divf %46, %45 : vector<12x1xf32>
    %48 = vector.broadcast %47 : vector<12x1xf32> to vector<12x12xf32>
    %49 = arith.mulf %43, %48 : vector<12x12xf32>
    %cst_23 = arith.constant dense<0.000000e+00> : vector<12x8xf32>
    %50 = tpu.matmul %49, %35, %cst_23 {dimension_numbers = #tpu.dot_dimension_numbers<[1], [0], [0], [1], [0, 0, 1, 1], [], []>} : vector<12x12xf32>, vector<12x8xf32>, vector<12x8xf32> -> vector<12x8xf32>
    %c8 = arith.constant 8 : index
    %c0_24 = arith.constant 0 : index
    %51 = vector.load %arg4[%c8, %c0_24] : memref<32x32xf32, #tpu.memory_space<vmem>>, vector<8x32xf32>
    %cst_25 = arith.constant dense<0.000000e+00> : vector<12x32xf32>
    %52 = tpu.matmul %50, %51, %cst_25 {dimension_numbers = #tpu.dot_dimension_numbers<[1], [0], [0], [1], [0, 0, 1, 1], [], []>} : vector<12x8xf32>, vector<8x32xf32>, vector<12x32xf32> -> vector<12x32xf32>
    %53 = arith.addf %30, %52 : vector<12x32xf32>
    %54 = vector.extract_strided_slice %6 {offsets = [0, 16], sizes = [12, 8], strides = [1, 1]} : vector<12x96xf32> to vector<12x8xf32>
    %cst_26 = arith.constant 0.353553385 : f32
    %55 = vector.broadcast %cst_26 : f32 to vector<12x8xf32>
    %56 = arith.mulf %54, %55 : vector<12x8xf32>
    %57 = vector.extract_strided_slice %6 {offsets = [0, 48], sizes = [12, 8], strides = [1, 1]} : vector<12x96xf32> to vector<12x8xf32>
    %58 = vector.extract_strided_slice %6 {offsets = [0, 80], sizes = [12, 8], strides = [1, 1]} : vector<12x96xf32> to vector<12x8xf32>
    %cst_27 = arith.constant dense<0.000000e+00> : vector<12x12xf32>
    %59 = tpu.matmul %56, %57, %cst_27 {dimension_numbers = #tpu.dot_dimension_numbers<[1], [1], [0], [0], [0, 0, 1, 0], [], []>} : vector<12x8xf32>, vector<12x8xf32>, vector<12x12xf32> -> vector<12x12xf32>
    %60 = vector.broadcast %8 : vector<1x12xf32> to vector<12x12xf32>
    %61 = arith.addf %59, %60 : vector<12x12xf32>
    %cst_28 = arith.constant dense<0xFF800000> : vector<12xf32>
    %62 = vector.multi_reduction <maximumf>, %61, %cst_28 [1] : vector<12x12xf32> to vector<12xf32>
    %63 = vector.shape_cast %62 : vector<12xf32> to vector<12x1xf32>
    %64 = vector.broadcast %63 : vector<12x1xf32> to vector<12x12xf32>
    %65 = arith.subf %61, %64 : vector<12x12xf32>
    %66 = math.exp %65 : vector<12x12xf32>
    %cst_29 = arith.constant dense<0.000000e+00> : vector<12xf32>
    %67 = vector.multi_reduction <add>, %66, %cst_29 [1] : vector<12x12xf32> to vector<12xf32>
    %68 = vector.shape_cast %67 : vector<12xf32> to vector<12x1xf32>
    %cst_30 = arith.constant 1.000000e+00 : f32
    %69 = vector.broadcast %cst_30 : f32 to vector<12x1xf32>
    %70 = arith.divf %69, %68 : vector<12x1xf32>
    %71 = vector.broadcast %70 : vector<12x1xf32> to vector<12x12xf32>
    %72 = arith.mulf %66, %71 : vector<12x12xf32>
    %cst_31 = arith.constant dense<0.000000e+00> : vector<12x8xf32>
    %73 = tpu.matmul %72, %58, %cst_31 {dimension_numbers = #tpu.dot_dimension_numbers<[1], [0], [0], [1], [0, 0, 1, 1], [], []>} : vector<12x12xf32>, vector<12x8xf32>, vector<12x8xf32> -> vector<12x8xf32>
    %c16 = arith.constant 16 : index
    %c0_32 = arith.constant 0 : index
    %74 = vector.load %arg4[%c16, %c0_32] : memref<32x32xf32, #tpu.memory_space<vmem>>, vector<8x32xf32>
    %cst_33 = arith.constant dense<0.000000e+00> : vector<12x32xf32>
    %75 = tpu.matmul %73, %74, %cst_33 {dimension_numbers = #tpu.dot_dimension_numbers<[1], [0], [0], [1], [0, 0, 1, 1], [], []>} : vector<12x8xf32>, vector<8x32xf32>, vector<12x32xf32> -> vector<12x32xf32>
    %76 = arith.addf %53, %75 : vector<12x32xf32>
    %77 = vector.extract_strided_slice %6 {offsets = [0, 24], sizes = [12, 8], strides = [1, 1]} : vector<12x96xf32> to vector<12x8xf32>
    %cst_34 = arith.constant 0.353553385 : f32
    %78 = vector.broadcast %cst_34 : f32 to vector<12x8xf32>
    %79 = arith.mulf %77, %78 : vector<12x8xf32>
    %80 = vector.extract_strided_slice %6 {offsets = [0, 56], sizes = [12, 8], strides = [1, 1]} : vector<12x96xf32> to vector<12x8xf32>
    %81 = vector.extract_strided_slice %6 {offsets = [0, 88], sizes = [12, 8], strides = [1, 1]} : vector<12x96xf32> to vector<12x8xf32>
    %cst_35 = arith.constant dense<0.000000e+00> : vector<12x12xf32>
    %82 = tpu.matmul %79, %80, %cst_35 {dimension_numbers = #tpu.dot_dimension_numbers<[1], [1], [0], [0], [0, 0, 1, 0], [], []>} : vector<12x8xf32>, vector<12x8xf32>, vector<12x12xf32> -> vector<12x12xf32>
    %83 = vector.broadcast %8 : vector<1x12xf32> to vector<12x12xf32>
    %84 = arith.addf %82, %83 : vector<12x12xf32>
    %cst_36 = arith.constant dense<0xFF800000> : vector<12xf32>
    %85 = vector.multi_reduction <maximumf>, %84, %cst_36 [1] : vector<12x12xf32> to vector<12xf32>
    %86 = vector.shape_cast %85 : vector<12xf32> to vector<12x1xf32>
    %87 = vector.broadcast %86 : vector<12x1xf32> to vector<12x12xf32>
    %88 = arith.subf %84, %87 : vector<12x12xf32>
    %89 = math.exp %88 : vector<12x12xf32>
    %cst_37 = arith.constant dense<0.000000e+00> : vector<12xf32>
    %90 = vector.multi_reduction <add>, %89, %cst_37 [1] : vector<12x12xf32> to vector<12xf32>
    %91 = vector.shape_cast %90 : vector<12xf32> to vector<12x1xf32>
    %cst_38 = arith.constant 1.000000e+00 : f32
    %92 = vector.broadcast %cst_38 : f32 to vector<12x1xf32>
    %93 = arith.divf %92, %91 : vector<12x1xf32>
    %94 = vector.broadcast %93 : vector<12x1xf32> to vector<12x12xf32>
    %95 = arith.mulf %89, %94 : vector<12x12xf32>
    %cst_39 = arith.constant dense<0.000000e+00> : vector<12x8xf32>
    %96 = tpu.matmul %95, %81, %cst_39 {dimension_numbers = #tpu.dot_dimension_numbers<[1], [0], [0], [1], [0, 0, 1, 1], [], []>} : vector<12x12xf32>, vector<12x8xf32>, vector<12x8xf32> -> vector<12x8xf32>
    %c24 = arith.constant 24 : index
    %c0_40 = arith.constant 0 : index
    %97 = vector.load %arg4[%c24, %c0_40] : memref<32x32xf32, #tpu.memory_space<vmem>>, vector<8x32xf32>
    %cst_41 = arith.constant dense<0.000000e+00> : vector<12x32xf32>
    %98 = tpu.matmul %96, %97, %cst_41 {dimension_numbers = #tpu.dot_dimension_numbers<[1], [0], [0], [1], [0, 0, 1, 1], [], []>} : vector<12x8xf32>, vector<8x32xf32>, vector<12x32xf32> -> vector<12x32xf32>
    %99 = arith.addf %76, %98 : vector<12x32xf32>
    %c0_42 = arith.constant 0 : index
    %c0_43 = arith.constant 0 : index
    %100 = vector.load %arg5[%c0_42, %c0_43] : memref<1x32xf32, #tpu.memory_space<vmem>>, vector<1x32xf32>
    %101 = vector.broadcast %100 : vector<1x32xf32> to vector<12x32xf32>
    %102 = arith.addf %99, %101 : vector<12x32xf32>
    %103 = arith.addf %102, %1 : vector<12x32xf32>
    %c0_44 = arith.constant 0 : index
    %c0_45 = arith.constant 0 : index
    %104 = vector.load %arg6[%c0_44, %c0_45] : memref<1x32xf32, #tpu.memory_space<vmem>>, vector<1x32xf32>
    %c0_46 = arith.constant 0 : index
    %c0_47 = arith.constant 0 : index
    %105 = vector.load %arg7[%c0_46, %c0_47] : memref<1x32xf32, #tpu.memory_space<vmem>>, vector<1x32xf32>
    %cst_48 = arith.constant dense<0.000000e+00> : vector<12xf32>
    %106 = vector.multi_reduction <add>, %103, %cst_48 [1] : vector<12x32xf32> to vector<12xf32>
    %107 = vector.shape_cast %106 : vector<12xf32> to vector<12x1xf32>
    %cst_49 = arith.constant 3.200000e+01 : f32
    %108 = vector.broadcast %cst_49 : f32 to vector<12x1xf32>
    %109 = arith.divf %107, %108 : vector<12x1xf32>
    %110 = vector.broadcast %109 : vector<12x1xf32> to vector<12x32xf32>
    %111 = arith.subf %103, %110 : vector<12x32xf32>
    %112 = vector.broadcast %109 : vector<12x1xf32> to vector<12x32xf32>
    %113 = arith.subf %103, %112 : vector<12x32xf32>
    %114 = arith.mulf %111, %113 : vector<12x32xf32>
    %cst_50 = arith.constant dense<0.000000e+00> : vector<12xf32>
    %115 = vector.multi_reduction <add>, %114, %cst_50 [1] : vector<12x32xf32> to vector<12xf32>
    %116 = vector.shape_cast %115 : vector<12xf32> to vector<12x1xf32>
    %cst_51 = arith.constant 3.200000e+01 : f32
    %117 = vector.broadcast %cst_51 : f32 to vector<12x1xf32>
    %118 = arith.divf %116, %117 : vector<12x1xf32>
    %119 = vector.broadcast %109 : vector<12x1xf32> to vector<12x32xf32>
    %120 = arith.subf %103, %119 : vector<12x32xf32>
    %cst_52 = arith.constant 9.99999974E-6 : f32
    %121 = vector.broadcast %cst_52 : f32 to vector<12x1xf32>
    %122 = arith.addf %118, %121 : vector<12x1xf32>
    %123 = math.rsqrt %122 : vector<12x1xf32>
    %124 = vector.broadcast %123 : vector<12x1xf32> to vector<12x32xf32>
    %125 = arith.mulf %120, %124 : vector<12x32xf32>
    %126 = vector.broadcast %104 : vector<1x32xf32> to vector<12x32xf32>
    %127 = arith.mulf %125, %126 : vector<12x32xf32>
    %128 = vector.broadcast %105 : vector<1x32xf32> to vector<12x32xf32>
    %129 = arith.addf %127, %128 : vector<12x32xf32>
    %c0_53 = arith.constant 0 : index
    %c0_54 = arith.constant 0 : index
    %c0_55 = arith.constant 0 : index
    %130 = vector.load %arg9[%c0_53, %c0_54, %c0_55] : memref<1x12x32xf32, #tpu.memory_space<vmem>>, vector<1x12x32xf32>
    %131 = vector.shape_cast %130 : vector<1x12x32xf32> to vector<12x32xf32>
    %132 = vector.shape_cast %129 : vector<12x32xf32> to vector<1x12x32xf32>
    tpu.vector_store %arg9[%c0_53, %c0_54, %c0_55], %132 {strides = array<i32>} : memref<1x12x32xf32, #tpu.memory_space<vmem>>, vector<1x12x32xf32>,
    return
  }
  func.func @transform_0(%arg0: i32) -> (i32, i32, i32) {
    %c0_i32 = arith.constant 0 : i32
    %c0_i32_0 = arith.constant 0 : i32
    %c0_i32_1 = arith.constant 0 : i32
    return %arg0, %c0_i32, %c0_i32_0 : i32, i32, i32
  }
  func.func @transform_1(%arg0: i32) -> (i32, i32) {
    %c0_i32 = arith.constant 0 : i32
    %c0_i32_0 = arith.constant 0 : i32
    %c0_i32_1 = arith.constant 0 : i32
    return %c0_i32, %c0_i32_0 : i32, i32
  }
  func.func @transform_2(%arg0: i32) -> (i32, i32) {
    %c0_i32 = arith.constant 0 : i32
    %c0_i32_0 = arith.constant 0 : i32
    %c0_i32_1 = arith.constant 0 : i32
    return %c0_i32, %c0_i32_0 : i32, i32
  }
  func.func @transform_3(%arg0: i32) -> (i32, i32) {
    %c0_i32 = arith.constant 0 : i32
    %c0_i32_0 = arith.constant 0 : i32
    %c0_i32_1 = arith.constant 0 : i32
    return %c0_i32, %c0_i32_0 : i32, i32
  }
  func.func @transform_4(%arg0: i32) -> (i32, i32) {
    %c0_i32 = arith.constant 0 : i32
    %c0_i32_0 = arith.constant 0 : i32
    %c0_i32_1 = arith.constant 0 : i32
    return %c0_i32, %c0_i32_0 : i32, i32
  }
  func.func @transform_5(%arg0: i32) -> (i32, i32) {
    %c0_i32 = arith.constant 0 : i32
    %c0_i32_0 = arith.constant 0 : i32
    %c0_i32_1 = arith.constant 0 : i32
    return %c0_i32, %c0_i32_0 : i32, i32
  }
  func.func @transform_6(%arg0: i32) -> (i32, i32) {
    %c0_i32 = arith.constant 0 : i32
    %c0_i32_0 = arith.constant 0 : i32
    %c0_i32_1 = arith.constant 0 : i32
    return %c0_i32, %c0_i32_0 : i32, i32
  }
  func.func @transform_7(%arg0: i32) -> (i32, i32, i32) {
    %c0_i32 = arith.constant 0 : i32
    %c0_i32_0 = arith.constant 0 : i32
    %c0_i32_1 = arith.constant 0 : i32
    return %arg0, %c0_i32, %c0_i32_0 : i32, i32, i32
  }
  func.func @transform_8(%arg0: i32) -> (i32, i32, i32) {
    %c0_i32 = arith.constant 0 : i32
    %c0_i32_0 = arith.constant 0 : i32
    %c0_i32_1 = arith.constant 0 : i32
    return %arg0, %c0_i32, %c0_i32_0 : i32, i32, i32
  }
}

module attributes {stable_mosaic.version = 11 : i64} {
  func.func @_linear_kernel(%arg0: i32, %arg1: memref<24x32xf32, #tpu.memory_space<vmem>>, %arg2: memref<32x16xf32, #tpu.memory_space<vmem>>, %arg3: memref<1x16xf32, #tpu.memory_space<vmem>>, %arg4: memref<24x16xf32, #tpu.memory_space<vmem>>) attributes {dimension_semantics = [#tpu.dimension_semantics<parallel>], iteration_bounds = array<i64: 1>, scalar_prefetch = 0 : i64, scratch_operands = 0 : i64, tpu.core_type = #tpu.core_type<tc>, window_params = [{transform_indices = @transform_0, window_bounds = array<i64: 24, 32>}, {pipeline_mode = #tpu.pipeline_mode<synchronous>, transform_indices = @transform_1, window_bounds = array<i64: 32, 16>}, {pipeline_mode = #tpu.pipeline_mode<synchronous>, transform_indices = @transform_2, window_bounds = array<i64: 1, 16>}, {transform_indices = @transform_3, window_bounds = array<i64: 24, 16>}]} {
    %c0 = arith.constant 0 : index
    %c0_0 = arith.constant 0 : index
    %0 = vector.load %arg1[%c0, %c0_0] : memref<24x32xf32, #tpu.memory_space<vmem>>, vector<24x32xf32>
    %c0_1 = arith.constant 0 : index
    %c0_2 = arith.constant 0 : index
    %1 = vector.load %arg2[%c0_1, %c0_2] : memref<32x16xf32, #tpu.memory_space<vmem>>, vector<32x16xf32>
    %cst = arith.constant dense<0.000000e+00> : vector<24x16xf32>
    %2 = tpu.matmul %0, %1, %cst {dimension_numbers = #tpu.dot_dimension_numbers<[1], [0], [0], [1], [0, 0, 1, 1], [], []>} : vector<24x32xf32>, vector<32x16xf32>, vector<24x16xf32> -> vector<24x16xf32>
    %c0_3 = arith.constant 0 : index
    %c0_4 = arith.constant 0 : index
    %3 = vector.load %arg3[%c0_3, %c0_4] : memref<1x16xf32, #tpu.memory_space<vmem>>, vector<1x16xf32>
    %4 = vector.broadcast %3 : vector<1x16xf32> to vector<24x16xf32>
    %5 = arith.addf %2, %4 : vector<24x16xf32>
    %c0_5 = arith.constant 0 : index
    %c0_6 = arith.constant 0 : index
    %6 = vector.load %arg4[%c0_5, %c0_6] : memref<24x16xf32, #tpu.memory_space<vmem>>, vector<24x16xf32>
    tpu.vector_store %arg4[%c0_5, %c0_6], %5 {strides = array<i32>} : memref<24x16xf32, #tpu.memory_space<vmem>>, vector<24x16xf32>,
    return
  }
  func.func @transform_0(%arg0: i32) -> (i32, i32) {
    %c0_i32 = arith.constant 0 : i32
    %c0_i32_0 = arith.constant 0 : i32
    return %arg0, %c0_i32 : i32, i32
  }
  func.func @transform_1(%arg0: i32) -> (i32, i32) {
    %c0_i32 = arith.constant 0 : i32
    %c0_i32_0 = arith.constant 0 : i32
    %c0_i32_1 = arith.constant 0 : i32
    return %c0_i32, %c0_i32_0 : i32, i32
  }
  func.func @transform_2(%arg0: i32) -> (i32, i32) {
    %c0_i32 = arith.constant 0 : i32
    %c0_i32_0 = arith.constant 0 : i32
    %c0_i32_1 = arith.constant 0 : i32
    return %c0_i32, %c0_i32_0 : i32, i32
  }
  func.func @transform_3(%arg0: i32) -> (i32, i32) {
    %c0_i32 = arith.constant 0 : i32
    %c0_i32_0 = arith.constant 0 : i32
    return %arg0, %c0_i32 : i32, i32
  }
}

module attributes {stable_mosaic.version = 11 : i64} {
  func.func @_conv_relu_ln_kernel(%arg0: i32, %arg1: memref<1x12x32xf32, #tpu.memory_space<vmem>>, %arg2: memref<5x32x32xf32, #tpu.memory_space<vmem>>, %arg3: memref<1x32xf32, #tpu.memory_space<vmem>>, %arg4: memref<1x32xf32, #tpu.memory_space<vmem>>, %arg5: memref<1x32xf32, #tpu.memory_space<vmem>>, %arg6: memref<1x12x32xf32, #tpu.memory_space<vmem>>, %arg7: memref<16x32xf32, #tpu.memory_space<vmem>>) attributes {dimension_semantics = [#tpu.dimension_semantics<parallel>], iteration_bounds = array<i64: 2>, scalar_prefetch = 0 : i64, scratch_operands = 1 : i64, tpu.core_type = #tpu.core_type<tc>, window_params = [{transform_indices = @transform_0, window_bounds = array<i64: 1, 12, 32>}, {pipeline_mode = #tpu.pipeline_mode<synchronous>, transform_indices = @transform_1, window_bounds = array<i64: 5, 32, 32>}, {pipeline_mode = #tpu.pipeline_mode<synchronous>, transform_indices = @transform_2, window_bounds = array<i64: 1, 32>}, {pipeline_mode = #tpu.pipeline_mode<synchronous>, transform_indices = @transform_3, window_bounds = array<i64: 1, 32>}, {pipeline_mode = #tpu.pipeline_mode<synchronous>, transform_indices = @transform_4, window_bounds = array<i64: 1, 32>}, {transform_indices = @transform_5, window_bounds = array<i64: 1, 12, 32>}]} {
    %c0 = arith.constant 0 : index
    %c0_0 = arith.constant 0 : index
    %c0_1 = arith.constant 0 : index
    %0 = vector.load %arg1[%c0, %c0_0, %c0_1] : memref<1x12x32xf32, #tpu.memory_space<vmem>>, vector<1x12x32xf32>
    %1 = vector.shape_cast %0 : vector<1x12x32xf32> to vector<12x32xf32>
    %cst = arith.constant 0.000000e+00 : f32
    %2 = vector.broadcast %cst : f32 to vector<16x32xf32>
    %c0_2 = arith.constant 0 : index
    %c0_3 = arith.constant 0 : index
    %3 = vector.load %arg7[%c0_2, %c0_3] : memref<16x32xf32, #tpu.memory_space<vmem>>, vector<16x32xf32>
    tpu.vector_store %arg7[%c0_2, %c0_3], %2 {strides = array<i32>} : memref<16x32xf32, #tpu.memory_space<vmem>>, vector<16x32xf32>,
    %c2 = arith.constant 2 : index
    %c0_4 = arith.constant 0 : index
    %4 = vector.load %arg7[%c2, %c0_4] : memref<16x32xf32, #tpu.memory_space<vmem>>, vector<12x32xf32>
    tpu.vector_store %arg7[%c2, %c0_4], %1 {strides = array<i32>} : memref<16x32xf32, #tpu.memory_space<vmem>>, vector<12x32xf32>,
    %cst_5 = arith.constant 0.000000e+00 : f32
    %5 = vector.broadcast %cst_5 : f32 to vector<12x32xf32>
    %c0_6 = arith.constant 0 : index
    %c0_7 = arith.constant 0 : index
    %6 = vector.load %arg3[%c0_6, %c0_7] : memref<1x32xf32, #tpu.memory_space<vmem>>, vector<1x32xf32>
    %7 = vector.broadcast %6 : vector<1x32xf32> to vector<12x32xf32>
    %8 = arith.addf %5, %7 : vector<12x32xf32>
    %c0_8 = arith.constant 0 : index
    %c0_9 = arith.constant 0 : index
    %9 = vector.load %arg7[%c0_8, %c0_9] : memref<16x32xf32, #tpu.memory_space<vmem>>, vector<12x32xf32>
    %c0_10 = arith.constant 0 : index
    %c0_11 = arith.constant 0 : index
    %c0_12 = arith.constant 0 : index
    %10 = vector.load %arg2[%c0_10, %c0_11, %c0_12] : memref<5x32x32xf32, #tpu.memory_space<vmem>>, vector<1x32x32xf32>
    %11 = vector.shape_cast %10 : vector<1x32x32xf32> to vector<32x32xf32>
    %cst_13 = arith.constant dense<0.000000e+00> : vector<12x32xf32>
    %12 = tpu.matmul %9, %11, %cst_13 {dimension_numbers = #tpu.dot_dimension_numbers<[1], [0], [0], [1], [0, 0, 1, 1], [], []>} : vector<12x32xf32>, vector<32x32xf32>, vector<12x32xf32> -> vector<12x32xf32>
    %13 = arith.addf %8, %12 : vector<12x32xf32>
    %c1 = arith.constant 1 : index
    %c0_14 = arith.constant 0 : index
    %14 = vector.load %arg7[%c1, %c0_14] : memref<16x32xf32, #tpu.memory_space<vmem>>, vector<12x32xf32>
    %c1_15 = arith.constant 1 : index
    %c0_16 = arith.constant 0 : index
    %c0_17 = arith.constant 0 : index
    %15 = vector.load %arg2[%c1_15, %c0_16, %c0_17] : memref<5x32x32xf32, #tpu.memory_space<vmem>>, vector<1x32x32xf32>
    %16 = vector.shape_cast %15 : vector<1x32x32xf32> to vector<32x32xf32>
    %cst_18 = arith.constant dense<0.000000e+00> : vector<12x32xf32>
    %17 = tpu.matmul %14, %16, %cst_18 {dimension_numbers = #tpu.dot_dimension_numbers<[1], [0], [0], [1], [0, 0, 1, 1], [], []>} : vector<12x32xf32>, vector<32x32xf32>, vector<12x32xf32> -> vector<12x32xf32>
    %18 = arith.addf %13, %17 : vector<12x32xf32>
    %c2_19 = arith.constant 2 : index
    %c0_20 = arith.constant 0 : index
    %19 = vector.load %arg7[%c2_19, %c0_20] : memref<16x32xf32, #tpu.memory_space<vmem>>, vector<12x32xf32>
    %c2_21 = arith.constant 2 : index
    %c0_22 = arith.constant 0 : index
    %c0_23 = arith.constant 0 : index
    %20 = vector.load %arg2[%c2_21, %c0_22, %c0_23] : memref<5x32x32xf32, #tpu.memory_space<vmem>>, vector<1x32x32xf32>
    %21 = vector.shape_cast %20 : vector<1x32x32xf32> to vector<32x32xf32>
    %cst_24 = arith.constant dense<0.000000e+00> : vector<12x32xf32>
    %22 = tpu.matmul %19, %21, %cst_24 {dimension_numbers = #tpu.dot_dimension_numbers<[1], [0], [0], [1], [0, 0, 1, 1], [], []>} : vector<12x32xf32>, vector<32x32xf32>, vector<12x32xf32> -> vector<12x32xf32>
    %23 = arith.addf %18, %22 : vector<12x32xf32>
    %c3 = arith.constant 3 : index
    %c0_25 = arith.constant 0 : index
    %24 = vector.load %arg7[%c3, %c0_25] : memref<16x32xf32, #tpu.memory_space<vmem>>, vector<12x32xf32>
    %c3_26 = arith.constant 3 : index
    %c0_27 = arith.constant 0 : index
    %c0_28 = arith.constant 0 : index
    %25 = vector.load %arg2[%c3_26, %c0_27, %c0_28] : memref<5x32x32xf32, #tpu.memory_space<vmem>>, vector<1x32x32xf32>
    %26 = vector.shape_cast %25 : vector<1x32x32xf32> to vector<32x32xf32>
    %cst_29 = arith.constant dense<0.000000e+00> : vector<12x32xf32>
    %27 = tpu.matmul %24, %26, %cst_29 {dimension_numbers = #tpu.dot_dimension_numbers<[1], [0], [0], [1], [0, 0, 1, 1], [], []>} : vector<12x32xf32>, vector<32x32xf32>, vector<12x32xf32> -> vector<12x32xf32>
    %28 = arith.addf %23, %27 : vector<12x32xf32>
    %c4 = arith.constant 4 : index
    %c0_30 = arith.constant 0 : index
    %29 = vector.load %arg7[%c4, %c0_30] : memref<16x32xf32, #tpu.memory_space<vmem>>, vector<12x32xf32>
    %c4_31 = arith.constant 4 : index
    %c0_32 = arith.constant 0 : index
    %c0_33 = arith.constant 0 : index
    %30 = vector.load %arg2[%c4_31, %c0_32, %c0_33] : memref<5x32x32xf32, #tpu.memory_space<vmem>>, vector<1x32x32xf32>
    %31 = vector.shape_cast %30 : vector<1x32x32xf32> to vector<32x32xf32>
    %cst_34 = arith.constant dense<0.000000e+00> : vector<12x32xf32>
    %32 = tpu.matmul %29, %31, %cst_34 {dimension_numbers = #tpu.dot_dimension_numbers<[1], [0], [0], [1], [0, 0, 1, 1], [], []>} : vector<12x32xf32>, vector<32x32xf32>, vector<12x32xf32> -> vector<12x32xf32>
    %33 = arith.addf %28, %32 : vector<12x32xf32>
    %cst_35 = arith.constant 0.000000e+00 : f32
    %34 = vector.broadcast %cst_35 : f32 to vector<12x32xf32>
    %35 = arith.maximumf %33, %34 : vector<12x32xf32>
    %c0_36 = arith.constant 0 : index
    %c0_37 = arith.constant 0 : index
    %36 = vector.load %arg4[%c0_36, %c0_37] : memref<1x32xf32, #tpu.memory_space<vmem>>, vector<1x32xf32>
    %c0_38 = arith.constant 0 : index
    %c0_39 = arith.constant 0 : index
    %37 = vector.load %arg5[%c0_38, %c0_39] : memref<1x32xf32, #tpu.memory_space<vmem>>, vector<1x32xf32>
    %cst_40 = arith.constant dense<0.000000e+00> : vector<12xf32>
    %38 = vector.multi_reduction <add>, %35, %cst_40 [1] : vector<12x32xf32> to vector<12xf32>
    %39 = vector.shape_cast %38 : vector<12xf32> to vector<12x1xf32>
    %cst_41 = arith.constant 3.200000e+01 : f32
    %40 = vector.broadcast %cst_41 : f32 to vector<12x1xf32>
    %41 = arith.divf %39, %40 : vector<12x1xf32>
    %42 = vector.broadcast %41 : vector<12x1xf32> to vector<12x32xf32>
    %43 = arith.subf %35, %42 : vector<12x32xf32>
    %44 = vector.broadcast %41 : vector<12x1xf32> to vector<12x32xf32>
    %45 = arith.subf %35, %44 : vector<12x32xf32>
    %46 = arith.mulf %43, %45 : vector<12x32xf32>
    %cst_42 = arith.constant dense<0.000000e+00> : vector<12xf32>
    %47 = vector.multi_reduction <add>, %46, %cst_42 [1] : vector<12x32xf32> to vector<12xf32>
    %48 = vector.shape_cast %47 : vector<12xf32> to vector<12x1xf32>
    %cst_43 = arith.constant 3.200000e+01 : f32
    %49 = vector.broadcast %cst_43 : f32 to vector<12x1xf32>
    %50 = arith.divf %48, %49 : vector<12x1xf32>
    %51 = vector.broadcast %41 : vector<12x1xf32> to vector<12x32xf32>
    %52 = arith.subf %35, %51 : vector<12x32xf32>
    %cst_44 = arith.constant 9.99999974E-6 : f32
    %53 = vector.broadcast %cst_44 : f32 to vector<12x1xf32>
    %54 = arith.addf %50, %53 : vector<12x1xf32>
    %55 = math.rsqrt %54 : vector<12x1xf32>
    %56 = vector.broadcast %55 : vector<12x1xf32> to vector<12x32xf32>
    %57 = arith.mulf %52, %56 : vector<12x32xf32>
    %58 = vector.broadcast %36 : vector<1x32xf32> to vector<12x32xf32>
    %59 = arith.mulf %57, %58 : vector<12x32xf32>
    %60 = vector.broadcast %37 : vector<1x32xf32> to vector<12x32xf32>
    %61 = arith.addf %59, %60 : vector<12x32xf32>
    %c0_45 = arith.constant 0 : index
    %c0_46 = arith.constant 0 : index
    %c0_47 = arith.constant 0 : index
    %62 = vector.load %arg6[%c0_45, %c0_46, %c0_47] : memref<1x12x32xf32, #tpu.memory_space<vmem>>, vector<1x12x32xf32>
    %63 = vector.shape_cast %62 : vector<1x12x32xf32> to vector<12x32xf32>
    %64 = vector.shape_cast %61 : vector<12x32xf32> to vector<1x12x32xf32>
    tpu.vector_store %arg6[%c0_45, %c0_46, %c0_47], %64 {strides = array<i32>} : memref<1x12x32xf32, #tpu.memory_space<vmem>>, vector<1x12x32xf32>,
    return
  }
  func.func @transform_0(%arg0: i32) -> (i32, i32, i32) {
    %c0_i32 = arith.constant 0 : i32
    %c0_i32_0 = arith.constant 0 : i32
    %c0_i32_1 = arith.constant 0 : i32
    return %arg0, %c0_i32, %c0_i32_0 : i32, i32, i32
  }
  func.func @transform_1(%arg0: i32) -> (i32, i32, i32) {
    %c0_i32 = arith.constant 0 : i32
    %c0_i32_0 = arith.constant 0 : i32
    %c0_i32_1 = arith.constant 0 : i32
    %c0_i32_2 = arith.constant 0 : i32
    return %c0_i32, %c0_i32_0, %c0_i32_1 : i32, i32, i32
  }
  func.func @transform_2(%arg0: i32) -> (i32, i32) {
    %c0_i32 = arith.constant 0 : i32
    %c0_i32_0 = arith.constant 0 : i32
    %c0_i32_1 = arith.constant 0 : i32
    return %c0_i32, %c0_i32_0 : i32, i32
  }
  func.func @transform_3(%arg0: i32) -> (i32, i32) {
    %c0_i32 = arith.constant 0 : i32
    %c0_i32_0 = arith.constant 0 : i32
    %c0_i32_1 = arith.constant 0 : i32
    return %c0_i32, %c0_i32_0 : i32, i32
  }
  func.func @transform_4(%arg0: i32) -> (i32, i32) {
    %c0_i32 = arith.constant 0 : i32
    %c0_i32_0 = arith.constant 0 : i32
    %c0_i32_1 = arith.constant 0 : i32
    return %c0_i32, %c0_i32_0 : i32, i32
  }
  func.func @transform_5(%arg0: i32) -> (i32, i32, i32) {
    %c0_i32 = arith.constant 0 : i32
    %c0_i32_0 = arith.constant 0 : i32
    %c0_i32_1 = arith.constant 0 : i32
    return %arg0, %c0_i32, %c0_i32_0 : i32, i32, i32
  }
}

module attributes {stable_mosaic.version = 11 : i64} {
  func.func @_conv_relu_ln_kernel(%arg0: i32, %arg1: memref<1x8x32xf32, #tpu.memory_space<vmem>>, %arg2: memref<3x32x32xf32, #tpu.memory_space<vmem>>, %arg3: memref<1x32xf32, #tpu.memory_space<vmem>>, %arg4: memref<1x32xf32, #tpu.memory_space<vmem>>, %arg5: memref<1x32xf32, #tpu.memory_space<vmem>>, %arg6: memref<1x8x32xf32, #tpu.memory_space<vmem>>, %arg7: memref<10x32xf32, #tpu.memory_space<vmem>>) attributes {dimension_semantics = [#tpu.dimension_semantics<parallel>], iteration_bounds = array<i64: 2>, scalar_prefetch = 0 : i64, scratch_operands = 1 : i64, tpu.core_type = #tpu.core_type<tc>, window_params = [{transform_indices = @transform_0, window_bounds = array<i64: 1, 8, 32>}, {pipeline_mode = #tpu.pipeline_mode<synchronous>, transform_indices = @transform_1, window_bounds = array<i64: 3, 32, 32>}, {pipeline_mode = #tpu.pipeline_mode<synchronous>, transform_indices = @transform_2, window_bounds = array<i64: 1, 32>}, {pipeline_mode = #tpu.pipeline_mode<synchronous>, transform_indices = @transform_3, window_bounds = array<i64: 1, 32>}, {pipeline_mode = #tpu.pipeline_mode<synchronous>, transform_indices = @transform_4, window_bounds = array<i64: 1, 32>}, {transform_indices = @transform_5, window_bounds = array<i64: 1, 8, 32>}]} {
    %c0 = arith.constant 0 : index
    %c0_0 = arith.constant 0 : index
    %c0_1 = arith.constant 0 : index
    %0 = vector.load %arg1[%c0, %c0_0, %c0_1] : memref<1x8x32xf32, #tpu.memory_space<vmem>>, vector<1x8x32xf32>
    %1 = vector.shape_cast %0 : vector<1x8x32xf32> to vector<8x32xf32>
    %cst = arith.constant 0.000000e+00 : f32
    %2 = vector.broadcast %cst : f32 to vector<10x32xf32>
    %c0_2 = arith.constant 0 : index
    %c0_3 = arith.constant 0 : index
    %3 = vector.load %arg7[%c0_2, %c0_3] : memref<10x32xf32, #tpu.memory_space<vmem>>, vector<10x32xf32>
    tpu.vector_store %arg7[%c0_2, %c0_3], %2 {strides = array<i32>} : memref<10x32xf32, #tpu.memory_space<vmem>>, vector<10x32xf32>,
    %c1 = arith.constant 1 : index
    %c0_4 = arith.constant 0 : index
    %4 = vector.load %arg7[%c1, %c0_4] : memref<10x32xf32, #tpu.memory_space<vmem>>, vector<8x32xf32>
    tpu.vector_store %arg7[%c1, %c0_4], %1 {strides = array<i32>} : memref<10x32xf32, #tpu.memory_space<vmem>>, vector<8x32xf32>,
    %cst_5 = arith.constant 0.000000e+00 : f32
    %5 = vector.broadcast %cst_5 : f32 to vector<8x32xf32>
    %c0_6 = arith.constant 0 : index
    %c0_7 = arith.constant 0 : index
    %6 = vector.load %arg3[%c0_6, %c0_7] : memref<1x32xf32, #tpu.memory_space<vmem>>, vector<1x32xf32>
    %7 = vector.broadcast %6 : vector<1x32xf32> to vector<8x32xf32>
    %8 = arith.addf %5, %7 : vector<8x32xf32>
    %c0_8 = arith.constant 0 : index
    %c0_9 = arith.constant 0 : index
    %9 = vector.load %arg7[%c0_8, %c0_9] : memref<10x32xf32, #tpu.memory_space<vmem>>, vector<8x32xf32>
    %c0_10 = arith.constant 0 : index
    %c0_11 = arith.constant 0 : index
    %c0_12 = arith.constant 0 : index
    %10 = vector.load %arg2[%c0_10, %c0_11, %c0_12] : memref<3x32x32xf32, #tpu.memory_space<vmem>>, vector<1x32x32xf32>
    %11 = vector.shape_cast %10 : vector<1x32x32xf32> to vector<32x32xf32>
    %cst_13 = arith.constant dense<0.000000e+00> : vector<8x32xf32>
    %12 = tpu.matmul %9, %11, %cst_13 {dimension_numbers = #tpu.dot_dimension_numbers<[1], [0], [0], [1], [0, 0, 1, 1], [], []>} : vector<8x32xf32>, vector<32x32xf32>, vector<8x32xf32> -> vector<8x32xf32>
    %13 = arith.addf %8, %12 : vector<8x32xf32>
    %c1_14 = arith.constant 1 : index
    %c0_15 = arith.constant 0 : index
    %14 = vector.load %arg7[%c1_14, %c0_15] : memref<10x32xf32, #tpu.memory_space<vmem>>, vector<8x32xf32>
    %c1_16 = arith.constant 1 : index
    %c0_17 = arith.constant 0 : index
    %c0_18 = arith.constant 0 : index
    %15 = vector.load %arg2[%c1_16, %c0_17, %c0_18] : memref<3x32x32xf32, #tpu.memory_space<vmem>>, vector<1x32x32xf32>
    %16 = vector.shape_cast %15 : vector<1x32x32xf32> to vector<32x32xf32>
    %cst_19 = arith.constant dense<0.000000e+00> : vector<8x32xf32>
    %17 = tpu.matmul %14, %16, %cst_19 {dimension_numbers = #tpu.dot_dimension_numbers<[1], [0], [0], [1], [0, 0, 1, 1], [], []>} : vector<8x32xf32>, vector<32x32xf32>, vector<8x32xf32> -> vector<8x32xf32>
    %18 = arith.addf %13, %17 : vector<8x32xf32>
    %c2 = arith.constant 2 : index
    %c0_20 = arith.constant 0 : index
    %19 = vector.load %arg7[%c2, %c0_20] : memref<10x32xf32, #tpu.memory_space<vmem>>, vector<8x32xf32>
    %c2_21 = arith.constant 2 : index
    %c0_22 = arith.constant 0 : index
    %c0_23 = arith.constant 0 : index
    %20 = vector.load %arg2[%c2_21, %c0_22, %c0_23] : memref<3x32x32xf32, #tpu.memory_space<vmem>>, vector<1x32x32xf32>
    %21 = vector.shape_cast %20 : vector<1x32x32xf32> to vector<32x32xf32>
    %cst_24 = arith.constant dense<0.000000e+00> : vector<8x32xf32>
    %22 = tpu.matmul %19, %21, %cst_24 {dimension_numbers = #tpu.dot_dimension_numbers<[1], [0], [0], [1], [0, 0, 1, 1], [], []>} : vector<8x32xf32>, vector<32x32xf32>, vector<8x32xf32> -> vector<8x32xf32>
    %23 = arith.addf %18, %22 : vector<8x32xf32>
    %cst_25 = arith.constant 0.000000e+00 : f32
    %24 = vector.broadcast %cst_25 : f32 to vector<8x32xf32>
    %25 = arith.maximumf %23, %24 : vector<8x32xf32>
    %c0_26 = arith.constant 0 : index
    %c0_27 = arith.constant 0 : index
    %26 = vector.load %arg4[%c0_26, %c0_27] : memref<1x32xf32, #tpu.memory_space<vmem>>, vector<1x32xf32>
    %c0_28 = arith.constant 0 : index
    %c0_29 = arith.constant 0 : index
    %27 = vector.load %arg5[%c0_28, %c0_29] : memref<1x32xf32, #tpu.memory_space<vmem>>, vector<1x32xf32>
    %cst_30 = arith.constant dense<0.000000e+00> : vector<8xf32>
    %28 = vector.multi_reduction <add>, %25, %cst_30 [1] : vector<8x32xf32> to vector<8xf32>
    %29 = vector.shape_cast %28 : vector<8xf32> to vector<8x1xf32>
    %cst_31 = arith.constant 3.200000e+01 : f32
    %30 = vector.broadcast %cst_31 : f32 to vector<8x1xf32>
    %31 = arith.divf %29, %30 : vector<8x1xf32>
    %32 = vector.broadcast %31 : vector<8x1xf32> to vector<8x32xf32>
    %33 = arith.subf %25, %32 : vector<8x32xf32>
    %34 = vector.broadcast %31 : vector<8x1xf32> to vector<8x32xf32>
    %35 = arith.subf %25, %34 : vector<8x32xf32>
    %36 = arith.mulf %33, %35 : vector<8x32xf32>
    %cst_32 = arith.constant dense<0.000000e+00> : vector<8xf32>
    %37 = vector.multi_reduction <add>, %36, %cst_32 [1] : vector<8x32xf32> to vector<8xf32>
    %38 = vector.shape_cast %37 : vector<8xf32> to vector<8x1xf32>
    %cst_33 = arith.constant 3.200000e+01 : f32
    %39 = vector.broadcast %cst_33 : f32 to vector<8x1xf32>
    %40 = arith.divf %38, %39 : vector<8x1xf32>
    %41 = vector.broadcast %31 : vector<8x1xf32> to vector<8x32xf32>
    %42 = arith.subf %25, %41 : vector<8x32xf32>
    %cst_34 = arith.constant 9.99999974E-6 : f32
    %43 = vector.broadcast %cst_34 : f32 to vector<8x1xf32>
    %44 = arith.addf %40, %43 : vector<8x1xf32>
    %45 = math.rsqrt %44 : vector<8x1xf32>
    %46 = vector.broadcast %45 : vector<8x1xf32> to vector<8x32xf32>
    %47 = arith.mulf %42, %46 : vector<8x32xf32>
    %48 = vector.broadcast %26 : vector<1x32xf32> to vector<8x32xf32>
    %49 = arith.mulf %47, %48 : vector<8x32xf32>
    %50 = vector.broadcast %27 : vector<1x32xf32> to vector<8x32xf32>
    %51 = arith.addf %49, %50 : vector<8x32xf32>
    %c0_35 = arith.constant 0 : index
    %c0_36 = arith.constant 0 : index
    %c0_37 = arith.constant 0 : index
    %52 = vector.load %arg6[%c0_35, %c0_36, %c0_37] : memref<1x8x32xf32, #tpu.memory_space<vmem>>, vector<1x8x32xf32>
    %53 = vector.shape_cast %52 : vector<1x8x32xf32> to vector<8x32xf32>
    %54 = vector.shape_cast %51 : vector<8x32xf32> to vector<1x8x32xf32>
    tpu.vector_store %arg6[%c0_35, %c0_36, %c0_37], %54 {strides = array<i32>} : memref<1x8x32xf32, #tpu.memory_space<vmem>>, vector<1x8x32xf32>,
    return
  }
  func.func @transform_0(%arg0: i32) -> (i32, i32, i32) {
    %c0_i32 = arith.constant 0 : i32
    %c0_i32_0 = arith.constant 0 : i32
    %c0_i32_1 = arith.constant 0 : i32
    return %arg0, %c0_i32, %c0_i32_0 : i32, i32, i32
  }
  func.func @transform_1(%arg0: i32) -> (i32, i32, i32) {
    %c0_i32 = arith.constant 0 : i32
    %c0_i32_0 = arith.constant 0 : i32
    %c0_i32_1 = arith.constant 0 : i32
    %c0_i32_2 = arith.constant 0 : i32
    return %c0_i32, %c0_i32_0, %c0_i32_1 : i32, i32, i32
  }
  func.func @transform_2(%arg0: i32) -> (i32, i32) {
    %c0_i32 = arith.constant 0 : i32
    %c0_i32_0 = arith.constant 0 : i32
    %c0_i32_1 = arith.constant 0 : i32
    return %c0_i32, %c0_i32_0 : i32, i32
  }
  func.func @transform_3(%arg0: i32) -> (i32, i32) {
    %c0_i32 = arith.constant 0 : i32
    %c0_i32_0 = arith.constant 0 : i32
    %c0_i32_1 = arith.constant 0 : i32
    return %c0_i32, %c0_i32_0 : i32, i32
  }
  func.func @transform_4(%arg0: i32) -> (i32, i32) {
    %c0_i32 = arith.constant 0 : i32
    %c0_i32_0 = arith.constant 0 : i32
    %c0_i32_1 = arith.constant 0 : i32
    return %c0_i32, %c0_i32_0 : i32, i32
  }
  func.func @transform_5(%arg0: i32) -> (i32, i32, i32) {
    %c0_i32 = arith.constant 0 : i32
    %c0_i32_0 = arith.constant 0 : i32
    %c0_i32_1 = arith.constant 0 : i32
    return %arg0, %c0_i32, %c0_i32_0 : i32, i32, i32
  }
}

</mosaic_0001>

<llo_original>
// kernel: model_forward.12
$region0: #{model_forward.12}
  #allocation0 [shape = 'u32[]', space=smem, size = 0x4, offset = 0x4, fixed_abs, tag = 'smem constant byte address 0x4 - core index']
  #allocation1 [shape = 'u32[144,128]{1,0:T(1,128)}', space=vmem, size = 0x12000, scoped, tag = 'internal scratch']
  %s0 = inlined_call_operand.vmem [shape: f32[2,8,32], index: 0, kind: input, shape index: {}]
  %s1 = inlined_call_operand.vmem [shape: f32[32,96], index: 1, kind: input, shape index: {}]
  %s2 = inlined_call_operand.vmem [shape: f32[1,96], index: 2, kind: input, shape index: {}]
  %s3 = inlined_call_operand.vmem [shape: f32[32,32], index: 3, kind: input, shape index: {}]
  %s4 = inlined_call_operand.vmem [shape: f32[1,32], index: 4, kind: input, shape index: {}]
  %s5 = inlined_call_operand.vmem [shape: f32[1,32], index: 5, kind: input, shape index: {}]
  %s6 = inlined_call_operand.vmem [shape: f32[1,32], index: 6, kind: input, shape index: {}]
  %s7 = inlined_call_operand.vmem [shape: f32[2,1,8], index: 7, kind: input, shape index: {}]
  %s8 = inlined_call_operand.vmem [shape: f32[2,8,32], index: 8, kind: output, shape index: {}]
  %s9 = sld [smem:[#allocation0]]
  $region65: #{model_forward.12} parent=0
    _
  %s11 = ssub.s32 1, %s9
  %s12 = scalar_select 0, %s11, %s9
  loop: start=0, step=1, limit=4
  $region2: #{model_forward.12} parent=0 // loop_pre_header
    _
  $region3: #{model_forward.12} parent=0 // loop_header
    %s14 = sphi 0, %s18
    %p15 = scmp.ge.s32.totalorder %s14, 4
    %s24 = sphi 0, %s26
    %s27 = sphi 0, %s24
    %s28 = sphi 0, %s27
    %s44 = sphi 0, %s28
    %s48 = sphi 0, %s48
    %s50 = sphi 0, %s48
    %s51 = sphi 0, %s50
    %s65 = sphi 0, %s51
    %s69 = sphi 0, %s69
    %s71 = sphi 0, %s69
    %s72 = sphi 0, %s71
    %s86 = sphi 0, %s72
    %s90 = sphi 0, %s90
    %s92 = sphi 0, %s90
    %s93 = sphi 0, %s92
    %s107 = sphi 0, %s93
    %s111 = sphi 0, %s111
    %s113 = sphi 0, %s111
    %s114 = sphi 0, %s113
    %s128 = sphi 0, %s114
    %s132 = sphi 0, %s132
    %s134 = sphi 0, %s132
    %s135 = sphi 0, %s134
    %s149 = sphi 0, %s135
    %s153 = sphi 0, %s153
    %s155 = sphi 0, %s153
    %s156 = sphi 0, %s155
    %s170 = sphi 0, %s156
    %s176 = sphi 0, %s178
    %s179 = sphi 0, %s176
    %s180 = sphi 0, %s179
    %s196 = sphi 0, %s180
    %s202 = sphi 0, %s204
    %s205 = sphi 0, %s202
    %s206 = sphi 0, %s205
    %s222 = sphi 0, %s206
  $region4: #{model_forward.12} parent=0 // loop_header_branch
    %17 = sbr.rel (%p15) target = $region8
  $region5: #{model_forward.12} parent=0 // loop_body
    %s19 = ssub.s32 %s14, 1
    %s20 = ssub.s32 %s14, 2
    %s21 = sadd.s32 %s14, 1
    %s22 = ssub.s32 %s14, %s21
    %p23 = scmp.eq.s32.totalorder %s22, 0
    %s25 = sadd.s32 %s24, 1
    %s26 = scalar_select %p23, %s24, %s25
    %p29 = pneg %p23
    %p30 = scmp.eq.s32.totalorder %s14, 1
    %p31 = por %p29, %p30
    %p32 = scmp.ne.s32.totalorder %s24, %s27
    %p33 = scmp.eq.s32.totalorder %s14, 0
    %p34 = por %p32, %p33
    %p35 = scmp.ne.s32.totalorder %s24, %s27
    %p36 = scmp.eq.s32.totalorder %s19, 1
    %p37 = por %p35, %p36
    %p38 = scmp.ne.s32.totalorder %s27, %s28
    %p39 = scmp.eq.s32.totalorder %s19, 0
    %p40 = por %p38, %p39
    %p41 = scmp.ne.s32.totalorder %s27, %s28
    %p42 = scmp.eq.s32.totalorder %s20, 1
    %p43 = por %p41, %p42
    %p45 = scmp.ne.s32.totalorder %s28, %s44
    %p46 = scmp.eq.s32.totalorder %s20, 0
    %p47 = por %p45, %p46
    %s49 = sadd.s32 %s48, 1
    %p52 = scmp.eq.s32.totalorder %s14, 1
    %p53 = scmp.ne.s32.totalorder %s48, %s50
    %p54 = scmp.eq.s32.totalorder %s14, 0
    %p55 = por %p53, %p54
    %p56 = scmp.ne.s32.totalorder %s48, %s50
    %p57 = scmp.eq.s32.totalorder %s19, 1
    %p58 = por %p56, %p57
    %p59 = scmp.ne.s32.totalorder %s50, %s51
    %p60 = scmp.eq.s32.totalorder %s19, 0
    %p61 = por %p59, %p60
    %p62 = scmp.ne.s32.totalorder %s50, %s51
    %p63 = scmp.eq.s32.totalorder %s20, 1
    %p64 = por %p62, %p63
    %p66 = scmp.ne.s32.totalorder %s51, %s65
    %p67 = scmp.eq.s32.totalorder %s20, 0
    %p68 = por %p66, %p67
    %s70 = sadd.s32 %s69, 1
    %p73 = scmp.eq.s32.totalorder %s14, 1
    %p74 = scmp.ne.s32.totalorder %s69, %s71
    %p75 = scmp.eq.s32.totalorder %s14, 0
    %p76 = por %p74, %p75
    %p77 = scmp.ne.s32.totalorder %s69, %s71
    %p78 = scmp.eq.s32.totalorder %s19, 1
    %p79 = por %p77, %p78
    %p80 = scmp.ne.s32.totalorder %s71, %s72
    %p81 = scmp.eq.s32.totalorder %s19, 0
    %p82 = por %p80, %p81
    %p83 = scmp.ne.s32.totalorder %s71, %s72
    %p84 = scmp.eq.s32.totalorder %s20, 1
    %p85 = por %p83, %p84
    %p87 = scmp.ne.s32.totalorder %s72, %s86
    %p88 = scmp.eq.s32.totalorder %s20, 0
    %p89 = por %p87, %p88
    %s91 = sadd.s32 %s90, 1
    %p94 = scmp.eq.s32.totalorder %s14, 1
    %p95 = scmp.ne.s32.totalorder %s90, %s92
    %p96 = scmp.eq.s32.totalorder %s14, 0
    %p97 = por %p95, %p96
    %p98 = scmp.ne.s32.totalorder %s90, %s92
    %p99 = scmp.eq.s32.totalorder %s19, 1
    %p100 = por %p98, %p99
    %p101 = scmp.ne.s32.totalorder %s92, %s93
    %p102 = scmp.eq.s32.totalorder %s19, 0
    %p103 = por %p101, %p102
    %p104 = scmp.ne.s32.totalorder %s92, %s93
    %p105 = scmp.eq.s32.totalorder %s20, 1
    %p106 = por %p104, %p105
    %p108 = scmp.ne.s32.totalorder %s93, %s107
    %p109 = scmp.eq.s32.totalorder %s20, 0
    %p110 = por %p108, %p109
    %s112 = sadd.s32 %s111, 1
    %p115 = scmp.eq.s32.totalorder %s14, 1
    %p116 = scmp.ne.s32.totalorder %s111, %s113
    %p117 = scmp.eq.s32.totalorder %s14, 0
    %p118 = por %p116, %p117
    %p119 = scmp.ne.s32.totalorder %s111, %s113
    %p120 = scmp.eq.s32.totalorder %s19, 1
    %p121 = por %p119, %p120
    %p122 = scmp.ne.s32.totalorder %s113, %s114
    %p123 = scmp.eq.s32.totalorder %s19, 0
    %p124 = por %p122, %p123
    %p125 = scmp.ne.s32.totalorder %s113, %s114
    %p126 = scmp.eq.s32.totalorder %s20, 1
    %p127 = por %p125, %p126
    %p129 = scmp.ne.s32.totalorder %s114, %s128
    %p130 = scmp.eq.s32.totalorder %s20, 0
    %p131 = por %p129, %p130
    %s133 = sadd.s32 %s132, 1
    %p136 = scmp.eq.s32.totalorder %s14, 1
    %p137 = scmp.ne.s32.totalorder %s132, %s134
    %p138 = scmp.eq.s32.totalorder %s14, 0
    %p139 = por %p137, %p138
    %p140 = scmp.ne.s32.totalorder %s132, %s134
    %p141 = scmp.eq.s32.totalorder %s19, 1
    %p142 = por %p140, %p141
    %p143 = scmp.ne.s32.totalorder %s134, %s135
    %p144 = scmp.eq.s32.totalorder %s19, 0
    %p145 = por %p143, %p144
    %p146 = scmp.ne.s32.totalorder %s134, %s135
    %p147 = scmp.eq.s32.totalorder %s20, 1
    %p148 = por %p146, %p147
    %p150 = scmp.ne.s32.totalorder %s135, %s149
    %p151 = scmp.eq.s32.totalorder %s20, 0
    %p152 = por %p150, %p151
    %s154 = sadd.s32 %s153, 1
    %p157 = scmp.eq.s32.totalorder %s14, 1
    %p158 = scmp.ne.s32.totalorder %s153, %s155
    %p159 = scmp.eq.s32.totalorder %s14, 0
    %p160 = por %p158, %p159
    %p161 = scmp.ne.s32.totalorder %s153, %s155
    %p162 = scmp.eq.s32.totalorder %s19, 1
    %p163 = por %p161, %p162
    %p164 = scmp.ne.s32.totalorder %s155, %s156
    %p165 = scmp.eq.s32.totalorder %s19, 0
    %p166 = por %p164, %p165
    %p167 = scmp.ne.s32.totalorder %s155, %s156
    %p168 = scmp.eq.s32.totalorder %s20, 1
    %p169 = por %p167, %p168
    %p171 = scmp.ne.s32.totalorder %s156, %s170
    %p172 = scmp.eq.s32.totalorder %s20, 0
    %p173 = por %p171, %p172
    %s174 = ssub.s32 %s14, %s21
    %p175 = scmp.eq.s32.totalorder %s174, 0
    %s177 = sadd.s32 %s176, 1
    %s178 = scalar_select %p175, %s176, %s177
    %p181 = pneg %p175
    %p182 = scmp.eq.s32.totalorder %s14, 1
    %p183 = por %p181, %p182
    %p184 = scmp.ne.s32.totalorder %s176, %s179
    %p185 = scmp.eq.s32.totalorder %s14, 0
    %p186 = por %p184, %p185
    %p187 = scmp.ne.s32.totalorder %s176, %s179
    %p188 = scmp.eq.s32.totalorder %s19, 1
    %p189 = por %p187, %p188
    %p190 = scmp.ne.s32.totalorder %s179, %s180
    %p191 = scmp.eq.s32.totalorder %s19, 0
    %p192 = por %p190, %p191
    %p193 = scmp.ne.s32.totalorder %s179, %s180
    %p194 = scmp.eq.s32.totalorder %s20, 1
    %p195 = por %p193, %p194
    %p197 = scmp.ne.s32.totalorder %s180, %s196
    %p198 = scmp.eq.s32.totalorder %s20, 0
    %p199 = por %p197, %p198
    %s200 = ssub.s32 %s14, %s21
    %p201 = scmp.eq.s32.totalorder %s200, 0
    %s203 = sadd.s32 %s202, 1
    %s204 = scalar_select %p201, %s202, %s203
    %p207 = pneg %p201
    %p208 = scmp.eq.s32.totalorder %s14, 1
    %p209 = por %p207, %p208
    %p210 = scmp.ne.s32.totalorder %s202, %s205
    %p211 = scmp.eq.s32.totalorder %s14, 0
    %p212 = por %p210, %p211
    %p213 = scmp.ne.s32.totalorder %s202, %s205
    %p214 = scmp.eq.s32.totalorder %s19, 1
    %p215 = por %p213, %p214
    %p216 = scmp.ne.s32.totalorder %s205, %s206
    %p217 = scmp.eq.s32.totalorder %s19, 0
    %p218 = por %p216, %p217
    %p219 = scmp.ne.s32.totalorder %s205, %s206
    %p220 = scmp.eq.s32.totalorder %s20, 1
    %p221 = por %p219, %p220
    %p223 = scmp.ne.s32.totalorder %s206, %s222
    %p224 = scmp.eq.s32.totalorder %s20, 0
    %p225 = por %p223, %p224
    %p226 = scmp.le.s32.totalorder 1, %s14
    %p227 = scmp.lt.s32.totalorder %s14, 3
    %p228 = pnand %p226, %p227
    %p229 = pneg %p228
    // Predicated region
    $region9: #{model_forward.12} parent=5 // pred_check
      _
    $region10: #{model_forward.12} parent=5 // pred_check_branch
      %231 = sbr.rel (%p228) target = $region12
    $region11: #{model_forward.12} parent=5 // pred_region
      %s232 = ssub.s32 %s14, 1
      // Predicated region
      $region13: #{model_forward.12} parent=11 // pred_check
        %p233 = pneg %p61
      $region14: #{model_forward.12} parent=11 // pred_check_branch
        %235 = sbr.rel (%p233) target = $region16
      $region15: #{model_forward.12} parent=11 // pred_region
        _
      $region16: #{model_forward.12} parent=11 // pred_fallthru
        _
      // Predicated region
      $region17: #{model_forward.12} parent=11 // pred_check
        %p236 = pneg %p82
      $region18: #{model_forward.12} parent=11 // pred_check_branch
        %238 = sbr.rel (%p236) target = $region20
      $region19: #{model_forward.12} parent=11 // pred_region
        _
      $region20: #{model_forward.12} parent=11 // pred_fallthru
        _
      // Predicated region
      $region21: #{model_forward.12} parent=11 // pred_check
        %p239 = pneg %p103
      $region22: #{model_forward.12} parent=11 // pred_check_branch
        %241 = sbr.rel (%p239) target = $region24
      $region23: #{model_forward.12} parent=11 // pred_region
        _
      $region24: #{model_forward.12} parent=11 // pred_fallthru
        _
      // Predicated region
      $region25: #{model_forward.12} parent=11 // pred_check
        %p242 = pneg %p124
      $region26: #{model_forward.12} parent=11 // pred_check_branch
        %244 = sbr.rel (%p242) target = $region28
      $region27: #{model_forward.12} parent=11 // pred_region
        _
      $region28: #{model_forward.12} parent=11 // pred_fallthru
        _
      // Predicated region
      $region29: #{model_forward.12} parent=11 // pred_check
        %p245 = pneg %p145
      $region30: #{model_forward.12} parent=11 // pred_check_branch
        %247 = sbr.rel (%p245) target = $region32
      $region31: #{model_forward.12} parent=11 // pred_region
        _
      $region32: #{model_forward.12} parent=11 // pred_fallthru
        _
      // Predicated region
      $region33: #{model_forward.12} parent=11 // pred_check
        %p248 = pneg %p166
      $region34: #{model_forward.12} parent=11 // pred_check_branch
        %250 = sbr.rel (%p248) target = $region36
      $region35: #{model_forward.12} parent=11 // pred_region
        _
      $region36: #{model_forward.12} parent=11 // pred_fallthru
        _
    $region12: #{model_forward.12} parent=5 // pred_fallthru
      _
    %p251 = scmp.lt.s32.totalorder %s14, 2
    // Predicated region
    $region37: #{model_forward.12} parent=5 // pred_check
      %p252 = pneg %p251
    $region38: #{model_forward.12} parent=5 // pred_check_branch
      %254 = sbr.rel (%p252) target = $region40
    $region39: #{model_forward.12} parent=5 // pred_region
      // Predicated region
      $region41: #{model_forward.12} parent=39 // pred_check
        %p255 = pneg %p34
      $region42: #{model_forward.12} parent=39 // pred_check_branch
        %257 = sbr.rel (%p255) target = $region44
      $region43: #{model_forward.12} parent=39 // pred_region
        %p258 = scmp.lt.s32.totalorder %s14, 1
        %s259 = scalar_select %p258, %s14, 1
        %s260 = smul.addr %s259, 8
        %s261 = scalar_lea.vmem %s0, %s260
      $region44: #{model_forward.12} parent=39 // pred_fallthru
        _
      // Predicated region
      $region45: #{model_forward.12} parent=39 // pred_check
        %p262 = pneg %p186
      $region46: #{model_forward.12} parent=39 // pred_check_branch
        %264 = sbr.rel (%p262) target = $region48
      $region47: #{model_forward.12} parent=39 // pred_region
        %p265 = scmp.lt.s32.totalorder %s14, 1
        %s266 = scalar_select %p265, %s14, 1
        %s267 = scalar_lea.vmem %s7, %s266
      $region48: #{model_forward.12} parent=39 // pred_fallthru
        _
    $region40: #{model_forward.12} parent=5 // pred_fallthru
      _
    %p268 = scmp.le.s32.totalorder 1, %s14
    %p269 = scmp.lt.s32.totalorder %s14, 3
    %p270 = pnand %p268, %p269
    %p271 = pneg %p270
    // Predicated region
    $region49: #{model_forward.12} parent=5 // pred_check
      _
    $region50: #{model_forward.12} parent=5 // pred_check_branch
      %273 = sbr.rel (%p270) target = $region52
    $region51: #{model_forward.12} parent=5 // pred_region
      %s274 = ssub.s32 %s14, 1
      %p275 = scmp.lt.s32.totalorder %s19, 1
      %s276 = scalar_select %p275, %s19, 1
      %s277 = smul.addr %s276, 8
      %s278 = scalar_lea.vmem %s0, %s277
      %p279 = pneg %p40
      %p280 = pneg %p37
      %p281 = pneg %p61
      %p282 = pneg %p58
      %p283 = pneg %p82
      %p284 = pneg %p79
      %p285 = pneg %p103
      %p286 = pneg %p100
      %p287 = pneg %p124
      %p288 = pneg %p121
      %p289 = pneg %p145
      %p290 = pneg %p142
      %p291 = pneg %p166
      %p292 = pneg %p163
      %p293 = scmp.lt.s32.totalorder %s19, 1
      %s294 = scalar_select %p293, %s19, 1
      %s295 = scalar_lea.vmem %s7, %s294
      %p296 = pneg %p192
      %p297 = pneg %p189
      %p298 = pneg %p218
      %p299 = pneg %p215
      %p300 = scmp.lt.s32.totalorder %s19, 1
      %s301 = scalar_select %p300, %s19, 1
      %s302 = smul.addr %s301, 8
      %s303 = scalar_lea.vmem %s8, %s302
      %p304 = scmp.lt.s32.totalorder %s19, 1
      %s305 = scalar_select %p304, %s19, 1
      %s306 = smul.addr %s305, 8
      %s307 = scalar_lea.vmem %s0, %s306
      %p308 = scmp.lt.s32.totalorder %s19, 1
      %s309 = scalar_select %p308, %s19, 1
      %s310 = scalar_lea.vmem %s7, %s309
      %p311 = scmp.lt.s32.totalorder %s19, 1
      %s312 = scalar_select %p311, %s19, 1
      %s313 = smul.addr %s312, 8
      %s314 = scalar_lea.vmem %s8, %s313
      %v315 = vld [vmem:[%s307] sm:$0xff]
      %v316 = vld [vmem:[%s1] sm:$0xff]
      %v317 = vld [vmem:[%s1 + $0x8] sm:$0xff]
      %v318 = vld [vmem:[%s1 + $0x10] sm:$0xff]
      %v319 = vld [vmem:[%s1 + $0x18] sm:$0xff]
      %v320 = vld [vmem:[%s2] sm:$0x1]
      %v322 = vlaneseq
      %v323 = vshrl.u32 %v322, 7
      %v324 = vsub.s32 0, %v323
      %v325 = vrot.slane %v320, %v324
      %vm327 = vcmask 261120
      %v329 = vsel %vm327, %v315, 0
      %331 = vmatprep.subr.mxu0 0.0
      %332 = vmatpush1.msra.mxu0 %v316
      %333 = vmatprep.subr.mxu0 0.0
      %334 = vmatpush1.msra.mxu0 %v317
      %335 = vmatprep.subr.mxu0 0.0
      %336 = vmatpush1.msra.mxu0 %v318
      %337 = vmatprep.subr.mxu0 0.0
      %338 = vmatpush1.msra.mxu0 %v319
      %339 = vmatprep.subr.mxu0 0.0
      %340 = vmatpush1.msra.mxu0 0.0
      %341 = vmatprep.subr.mxu0 0.0
      %342 = vmatpush1.msra.mxu0 0.0
      %343 = vmatprep.subr.mxu0 0.0
      %344 = vmatpush1.msra.mxu0 0.0
      %345 = vmatprep.subr.mxu0 0.0
      %346 = vmatpush1.msra.mxu0 0.0
      %347 = vmatprep.subr.mxu0 0.0
      %348 = vmatpush1.msra.mxu0 0.0
      %349 = vmatprep.subr.mxu0 0.0
      %350 = vmatpush1.msra.mxu0 0.0
      %351 = vmatprep.subr.mxu0 0.0
      %352 = vmatpush1.msra.mxu0 0.0
      %353 = vmatprep.subr.mxu0 0.0
      %354 = vmatpush1.msra.mxu0 0.0
      %355 = vmatprep.subr.mxu0 0.0
      %356 = vmatpush1.msra.mxu0 0.0
      %357 = vmatprep.subr.mxu0 0.0
      %358 = vmatpush1.msra.mxu0 0.0
      %359 = vmatprep.subr.mxu0 0.0
      %360 = vmatpush1.msra.mxu0 0.0
      %361 = vmatprep.subr.mxu0 0.0
      %362 = vmatpush1.msra.mxu0 0.0
      %363 = vmatprep.subr.mxu0 0.0
      %364 = vmatpush1.msra.mxu0 0.0
      %365 = vmatprep.subr.mxu0 0.0
      %366 = vmatpush1.msra.mxu0 0.0
      %367 = vmatprep.subr.mxu0 0.0
      %368 = vmatpush1.msra.mxu0 0.0
      %369 = vmatprep.subr.mxu0 0.0
      %370 = vmatpush1.msra.mxu0 0.0
      %371 = vmatprep.subr.mxu0 0.0
      %372 = vmatpush1.msra.mxu0 0.0
      %373 = vmatprep.subr.mxu0 0.0
      %374 = vmatpush1.msra.mxu0 0.0
      %375 = vmatprep.subr.mxu0 0.0
      %376 = vmatpush1.msra.mxu0 0.0
      %377 = vmatprep.subr.mxu0 0.0
      %378 = vmatpush1.msra.mxu0 0.0
      %379 = vmatprep.subr.mxu0 0.0
      %380 = vmatpush1.msra.mxu0 0.0
      %381 = vmatprep.subr.mxu0 0.0
      %382 = vmatpush1.msra.mxu0 0.0
      %383 = vmatprep.subr.mxu0 0.0
      %384 = vmatpush1.msra.mxu0 0.0
      %385 = vmatprep.subr.mxu0 0.0
      %386 = vmatpush1.msra.mxu0 0.0
      %387 = vmatprep.subr.mxu0 0.0
      %388 = vmatpush1.msra.mxu0 0.0
      %389 = vmatprep.subr.mxu0 0.0
      %390 = vmatpush1.msra.mxu0 0.0
      %391 = vmatprep.subr.mxu0 0.0
      %392 = vmatpush1.msra.mxu0 0.0
      %393 = vmatprep.subr.mxu0 0.0
      %394 = vmatpush1.msra.mxu0 0.0
      %395 = vmatprep.mubr.f32.mxu0 0.0
      %396 = vmatmul.mubr.f32.gmra.mrb[0].mxu0 %v329
      %v397 = vpop.f32.mrb[0].mxu0
      %v398 = vadd.f32 %v325, %v397
      %v399 = vpop.f32.mrb[0].mxu0
      %400 = vdwg.mxu0
      %v401 = vld [vmem:[%s310] sm:$0x1]
      %v402 = vmul.f32 %v398, 0.35355338
      %v404 = vlaneseq
      %v405 = vshrl.u32 %v404, 7
      %v406 = vsub.s32 0, %v405
      %v407 = vrot.slane %v401, %v406
      %410 = vrot.lane.b32.xlu0 %v398, 96
      %v411 = vpop.permute.xlu0 %410
      %vm412 = vcmask 64512
      %v414 = vsel %vm412, %v402, 0
      %v416 = vsel %vm412, %v411, 0
      %418 = vmatprep.subr.mxu0 0.0
      %419 = vmatpush1.xpose.msra.mxu0 %v416
      %420 = vmatprep.subr.mxu0 0.0
      %421 = vmatpush1.xpose.msra.mxu0 0.0
      %422 = vmatprep.subr.mxu0 0.0
      %423 = vmatpush1.xpose.msra.mxu0 0.0
      %424 = vmatprep.subr.mxu0 0.0
      %425 = vmatpush1.xpose.msra.mxu0 0.0
      %426 = vmatprep.subr.mxu0 0.0
      %427 = vmatpush1.xpose.msra.mxu0 0.0
      %428 = vmatprep.subr.mxu0 0.0
      %429 = vmatpush1.xpose.msra.mxu0 0.0
      %430 = vmatprep.subr.mxu0 0.0
      %431 = vmatpush1.xpose.msra.mxu0 0.0
      %432 = vmatprep.subr.mxu0 0.0
      %433 = vmatpush1.xpose.msra.mxu0 0.0
      %434 = vmatprep.subr.mxu0 0.0
      %435 = vmatpush1.xpose.msra.mxu0 0.0
      %436 = vmatprep.subr.mxu0 0.0
      %437 = vmatpush1.xpose.msra.mxu0 0.0
      %438 = vmatprep.subr.mxu0 0.0
      %439 = vmatpush1.xpose.msra.mxu0 0.0
      %440 = vmatprep.subr.mxu0 0.0
      %441 = vmatpush1.xpose.msra.mxu0 0.0
      %442 = vmatprep.subr.mxu0 0.0
      %443 = vmatpush1.xpose.msra.mxu0 0.0
      %444 = vmatprep.subr.mxu0 0.0
      %445 = vmatpush1.xpose.msra.mxu0 0.0
      %446 = vmatprep.subr.mxu0 0.0
      %447 = vmatpush1.xpose.msra.mxu0 0.0
      %448 = vmatprep.subr.mxu0 0.0
      %449 = vmatpush1.xpose.msra.mxu0 0.0
      %450 = vmatprep.subr.mxu0 0.0
      %451 = vmatpush1.xpose.msra.mxu0 0.0
      %452 = vmatprep.subr.mxu0 0.0
      %453 = vmatpush1.xpose.msra.mxu0 0.0
      %454 = vmatprep.subr.mxu0 0.0
      %455 = vmatpush1.xpose.msra.mxu0 0.0
      %456 = vmatprep.subr.mxu0 0.0
      %457 = vmatpush1.xpose.msra.mxu0 0.0
      %458 = vmatprep.subr.mxu0 0.0
      %459 = vmatpush1.xpose.msra.mxu0 0.0
      %460 = vmatprep.subr.mxu0 0.0
      %461 = vmatpush1.xpose.msra.mxu0 0.0
      %462 = vmatprep.subr.mxu0 0.0
      %463 = vmatpush1.xpose.msra.mxu0 0.0
      %464 = vmatprep.subr.mxu0 0.0
      %465 = vmatpush1.xpose.msra.mxu0 0.0
      %466 = vmatprep.subr.mxu0 0.0
      %467 = vmatpush1.xpose.msra.mxu0 0.0
      %468 = vmatprep.subr.mxu0 0.0
      %469 = vmatpush1.xpose.msra.mxu0 0.0
      %470 = vmatprep.subr.mxu0 0.0
      %471 = vmatpush1.xpose.msra.mxu0 0.0
      %472 = vmatprep.subr.mxu0 0.0
      %473 = vmatpush1.xpose.msra.mxu0 0.0
      %474 = vmatprep.subr.mxu0 0.0
      %475 = vmatpush1.xpose.msra.mxu0 0.0
      %476 = vmatprep.subr.mxu0 0.0
      %477 = vmatpush1.xpose.msra.mxu0 0.0
      %478 = vmatprep.subr.mxu0 0.0
      %479 = vmatpush1.xpose.msra.mxu0 0.0
      %480 = vmatprep.subr.mxu0 0.0
      %481 = vmatpush1.xpose.msra.mxu0 0.0
      %482 = vmatprep.mubr.f32.mxu0 0.0
      %483 = vmatmul.mubr.f32.gmra.mrb[0].mxu0 %v414
      %v484 = vpop.f32.mrb[0].mxu0
      %v485 = vadd.f32 %v407, %v484
      %v486 = vpop.f32.mrb[0].mxu0
      %487 = vdwg.mxu0
      %v488 = vsel %vm412, %v485, -inf
      %489 = vmax.xlane.f32.xlu0 %v488
      %v490 = vpop.xlane.xlu0 %489
      %v491 = vsub.f32 %v485, %v490
      %v492 = vmul.f32 %v491, 1.442695
      %v493 = vpow.pop %v492
      %v494 = vsel %vm412, %v493, 0.0
      %495 = vadd.xlane.f32.xlu0 %v494
      %v496 = vpop.xlane.xlu0 %495
      %v497 = vrcp.pop %v496
      %v498 = vmul.f32 1.0, %v497
      %v499 = vmul.f32 %v493, %v498
      %500 = vrot.lane.b32.xlu0 %v398, 64
      %v501 = vpop.permute.xlu0 %500
      %v504 = vsel %vm412, %v499, 0
      %506 = vmatprep.subr.mxu0 0.0
      %507 = vmatpush1.msra.mxu0 %v501
      %508 = vmatprep.subr.mxu0 0.0
      %509 = vmatpush1.msra.mxu0 0.0
      %510 = vmatprep.subr.mxu0 0.0
      %511 = vmatpush1.msra.mxu0 0.0
      %512 = vmatprep.subr.mxu0 0.0
      %513 = vmatpush1.msra.mxu0 0.0
      %514 = vmatprep.subr.mxu0 0.0
      %515 = vmatpush1.msra.mxu0 0.0
      %516 = vmatprep.subr.mxu0 0.0
      %517 = vmatpush1.msra.mxu0 0.0
      %518 = vmatprep.subr.mxu0 0.0
      %519 = vmatpush1.msra.mxu0 0.0
      %520 = vmatprep.subr.mxu0 0.0
      %521 = vmatpush1.msra.mxu0 0.0
      %522 = vmatprep.subr.mxu0 0.0
      %523 = vmatpush1.msra.mxu0 0.0
      %524 = vmatprep.subr.mxu0 0.0
      %525 = vmatpush1.msra.mxu0 0.0
      %526 = vmatprep.subr.mxu0 0.0
      %527 = vmatpush1.msra.mxu0 0.0
      %528 = vmatprep.subr.mxu0 0.0
      %529 = vmatpush1.msra.mxu0 0.0
      %530 = vmatprep.subr.mxu0 0.0
      %531 = vmatpush1.msra.mxu0 0.0
      %532 = vmatprep.subr.mxu0 0.0
      %533 = vmatpush1.msra.mxu0 0.0
      %534 = vmatprep.subr.mxu0 0.0
      %535 = vmatpush1.msra.mxu0 0.0
      %536 = vmatprep.subr.mxu0 0.0
      %537 = vmatpush1.msra.mxu0 0.0
      %538 = vmatprep.subr.mxu0 0.0
      %539 = vmatpush1.msra.mxu0 0.0
      %540 = vmatprep.subr.mxu0 0.0
      %541 = vmatpush1.msra.mxu0 0.0
      %542 = vmatprep.subr.mxu0 0.0
      %543 = vmatpush1.msra.mxu0 0.0
      %544 = vmatprep.subr.mxu0 0.0
      %545 = vmatpush1.msra.mxu0 0.0
      %546 = vmatprep.subr.mxu0 0.0
      %547 = vmatpush1.msra.mxu0 0.0
      %548 = vmatprep.subr.mxu0 0.0
      %549 = vmatpush1.msra.mxu0 0.0
      %550 = vmatprep.subr.mxu0 0.0
      %551 = vmatpush1.msra.mxu0 0.0
      %552 = vmatprep.subr.mxu0 0.0
      %553 = vmatpush1.msra.mxu0 0.0
      %554 = vmatprep.subr.mxu0 0.0
      %555 = vmatpush1.msra.mxu0 0.0
      %556 = vmatprep.subr.mxu0 0.0
      %557 = vmatpush1.msra.mxu0 0.0
      %558 = vmatprep.subr.mxu0 0.0
      %559 = vmatpush1.msra.mxu0 0.0
      %560 = vmatprep.subr.mxu0 0.0
      %561 = vmatpush1.msra.mxu0 0.0
      %562 = vmatprep.subr.mxu0 0.0
      %563 = vmatpush1.msra.mxu0 0.0
      %564 = vmatprep.subr.mxu0 0.0
      %565 = vmatpush1.msra.mxu0 0.0
      %566 = vmatprep.subr.mxu0 0.0
      %567 = vmatpush1.msra.mxu0 0.0
      %568 = vmatprep.subr.mxu0 0.0
      %569 = vmatpush1.msra.mxu0 0.0
      %570 = vmatprep.mubr.f32.mxu0 0.0
      %571 = vmatmul.mubr.f32.gmra.mrb[0].mxu0 %v504
      %v572 = vpop.f32.mrb[0].mxu0
      %v573 = vadd.f32 0.0, %v572
      %v574 = vpop.f32.mrb[0].mxu0
      %575 = vdwg.mxu0
      %v576 = vld [vmem:[%s3] sm:$0xff]
      %577 = vrot.lane.b32.xlu0 %v402, 120
      %v578 = vpop.permute.xlu0 %577
      %579 = vrot.lane.b32.xlu0 %v398, 88
      %v580 = vpop.permute.xlu0 %579
      %v581 = vsel %vm412, %v578, 0
      %v583 = vsel %vm412, %v580, 0
      %585 = vmatprep.subr.mxu0 0.0
      %586 = vmatpush1.xpose.msra.mxu0 %v583
      %587 = vmatprep.subr.mxu0 0.0
      %588 = vmatpush1.xpose.msra.mxu0 0.0
      %589 = vmatprep.subr.mxu0 0.0
      %590 = vmatpush1.xpose.msra.mxu0 0.0
      %591 = vmatprep.subr.mxu0 0.0
      %592 = vmatpush1.xpose.msra.mxu0 0.0
      %593 = vmatprep.subr.mxu0 0.0
      %594 = vmatpush1.xpose.msra.mxu0 0.0
      %595 = vmatprep.subr.mxu0 0.0
      %596 = vmatpush1.xpose.msra.mxu0 0.0
      %597 = vmatprep.subr.mxu0 0.0
      %598 = vmatpush1.xpose.msra.mxu0 0.0
      %599 = vmatprep.subr.mxu0 0.0
      %600 = vmatpush1.xpose.msra.mxu0 0.0
      %601 = vmatprep.subr.mxu0 0.0
      %602 = vmatpush1.xpose.msra.mxu0 0.0
      %603 = vmatprep.subr.mxu0 0.0
      %604 = vmatpush1.xpose.msra.mxu0 0.0
      %605 = vmatprep.subr.mxu0 0.0
      %606 = vmatpush1.xpose.msra.mxu0 0.0
      %607 = vmatprep.subr.mxu0 0.0
      %608 = vmatpush1.xpose.msra.mxu0 0.0
      %609 = vmatprep.subr.mxu0 0.0
      %610 = vmatpush1.xpose.msra.mxu0 0.0
      %611 = vmatprep.subr.mxu0 0.0
      %612 = vmatpush1.xpose.msra.mxu0 0.0
      %613 = vmatprep.subr.mxu0 0.0
      %614 = vmatpush1.xpose.msra.mxu0 0.0
      %615 = vmatprep.subr.mxu0 0.0
      %616 = vmatpush1.xpose.msra.mxu0 0.0
      %617 = vmatprep.subr.mxu0 0.0
      %618 = vmatpush1.xpose.msra.mxu0 0.0
      %619 = vmatprep.subr.mxu0 0.0
      %620 = vmatpush1.xpose.msra.mxu0 0.0
      %621 = vmatprep.subr.mxu0 0.0
      %622 = vmatpush1.xpose.msra.mxu0 0.0
      %623 = vmatprep.subr.mxu0 0.0
      %624 = vmatpush1.xpose.msra.mxu0 0.0
      %625 = vmatprep.subr.mxu0 0.0
      %626 = vmatpush1.xpose.msra.mxu0 0.0
      %627 = vmatprep.subr.mxu0 0.0
      %628 = vmatpush1.xpose.msra.mxu0 0.0
      %629 = vmatprep.subr.mxu0 0.0
      %630 = vmatpush1.xpose.msra.mxu0 0.0
      %631 = vmatprep.subr.mxu0 0.0
      %632 = vmatpush1.xpose.msra.mxu0 0.0
      %633 = vmatprep.subr.mxu0 0.0
      %634 = vmatpush1.xpose.msra.mxu0 0.0
      %635 = vmatprep.subr.mxu0 0.0
      %636 = vmatpush1.xpose.msra.mxu0 0.0
      %637 = vmatprep.subr.mxu0 0.0
      %638 = vmatpush1.xpose.msra.mxu0 0.0
      %639 = vmatprep.subr.mxu0 0.0
      %640 = vmatpush1.xpose.msra.mxu0 0.0
      %641 = vmatprep.subr.mxu0 0.0
      %642 = vmatpush1.xpose.msra.mxu0 0.0
      %643 = vmatprep.subr.mxu0 0.0
      %644 = vmatpush1.xpose.msra.mxu0 0.0
      %645 = vmatprep.subr.mxu0 0.0
      %646 = vmatpush1.xpose.msra.mxu0 0.0
      %647 = vmatprep.subr.mxu0 0.0
      %648 = vmatpush1.xpose.msra.mxu0 0.0
      %649 = vmatprep.mubr.f32.mxu0 0.0
      %650 = vmatmul.mubr.f32.gmra.mrb[0].mxu0 %v581
      %v651 = vpop.f32.mrb[0].mxu0
      %v652 = vadd.f32 %v407, %v651
      %v653 = vpop.f32.mrb[0].mxu0
      %654 = vdwg.mxu0
      %v655 = vsel %vm412, %v652, -inf
      %656 = vmax.xlane.f32.xlu0 %v655
      %v657 = vpop.xlane.xlu0 %656
      %v658 = vsub.f32 %v652, %v657
      %v659 = vmul.f32 %v658, 1.442695
      %v660 = vpow.pop %v659
      %v661 = vsel %vm412, %v660, 0.0
      %662 = vadd.xlane.f32.xlu0 %v661
      %v663 = vpop.xlane.xlu0 %662
      %v664 = vrcp.pop %v663
      %v665 = vmul.f32 1.0, %v664
      %v666 = vmul.f32 %v660, %v665
      %667 = vrot.lane.b32.xlu0 %v398, 56
      %v668 = vpop.permute.xlu0 %667
      %v671 = vsel %vm412, %v666, 0
      %673 = vmatprep.subr.mxu0 0.0
      %674 = vmatpush1.msra.mxu0 %v668
      %675 = vmatprep.subr.mxu0 0.0
      %676 = vmatpush1.msra.mxu0 0.0
      %677 = vmatprep.subr.mxu0 0.0
      %678 = vmatpush1.msra.mxu0 0.0
      %679 = vmatprep.subr.mxu0 0.0
      %680 = vmatpush1.msra.mxu0 0.0
      %681 = vmatprep.subr.mxu0 0.0
      %682 = vmatpush1.msra.mxu0 0.0
      %683 = vmatprep.subr.mxu0 0.0
      %684 = vmatpush1.msra.mxu0 0.0
      %685 = vmatprep.subr.mxu0 0.0
      %686 = vmatpush1.msra.mxu0 0.0
      %687 = vmatprep.subr.mxu0 0.0
      %688 = vmatpush1.msra.mxu0 0.0
      %689 = vmatprep.subr.mxu0 0.0
      %690 = vmatpush1.msra.mxu0 0.0
      %691 = vmatprep.subr.mxu0 0.0
      %692 = vmatpush1.msra.mxu0 0.0
      %693 = vmatprep.subr.mxu0 0.0
      %694 = vmatpush1.msra.mxu0 0.0
      %695 = vmatprep.subr.mxu0 0.0
      %696 = vmatpush1.msra.mxu0 0.0
      %697 = vmatprep.subr.mxu0 0.0
      %698 = vmatpush1.msra.mxu0 0.0
      %699 = vmatprep.subr.mxu0 0.0
      %700 = vmatpush1.msra.mxu0 0.0
      %701 = vmatprep.subr.mxu0 0.0
      %702 = vmatpush1.msra.mxu0 0.0
      %703 = vmatprep.subr.mxu0 0.0
      %704 = vmatpush1.msra.mxu0 0.0
      %705 = vmatprep.subr.mxu0 0.0
      %706 = vmatpush1.msra.mxu0 0.0
      %707 = vmatprep.subr.mxu0 0.0
      %708 = vmatpush1.msra.mxu0 0.0
      %709 = vmatprep.subr.mxu0 0.0
      %710 = vmatpush1.msra.mxu0 0.0
      %711 = vmatprep.subr.mxu0 0.0
      %712 = vmatpush1.msra.mxu0 0.0
      %713 = vmatprep.subr.mxu0 0.0
      %714 = vmatpush1.msra.mxu0 0.0
      %715 = vmatprep.subr.mxu0 0.0
      %716 = vmatpush1.msra.mxu0 0.0
      %717 = vmatprep.subr.mxu0 0.0
      %718 = vmatpush1.msra.mxu0 0.0
      %719 = vmatprep.subr.mxu0 0.0
      %720 = vmatpush1.msra.mxu0 0.0
      %721 = vmatprep.subr.mxu0 0.0
      %722 = vmatpush1.msra.mxu0 0.0
      %723 = vmatprep.subr.mxu0 0.0
      %724 = vmatpush1.msra.mxu0 0.0
      %725 = vmatprep.subr.mxu0 0.0
      %726 = vmatpush1.msra.mxu0 0.0
      %727 = vmatprep.subr.mxu0 0.0
      %728 = vmatpush1.msra.mxu0 0.0
      %729 = vmatprep.subr.mxu0 0.0
      %730 = vmatpush1.msra.mxu0 0.0
      %731 = vmatprep.subr.mxu0 0.0
      %732 = vmatpush1.msra.mxu0 0.0
      %733 = vmatprep.subr.mxu0 0.0
      %734 = vmatpush1.msra.mxu0 0.0
      %735 = vmatprep.subr.mxu0 0.0
      %736 = vmatpush1.msra.mxu0 0.0
      %737 = vmatprep.mubr.f32.mxu0 0.0
      %738 = vmatmul.mubr.f32.gmra.mrb[0].mxu0 %v671
      %v739 = vpop.f32.mrb[0].mxu0
      %v740 = vadd.f32 0.0, %v739
      %v741 = vpop.f32.mrb[0].mxu0
      %742 = vdwg.mxu0
      %v743 = vld [vmem:[%s3 + $0x8] sm:$0xff]
      %v745 = vsel %vm412, %v740, 0
      %747 = vmatprep.subr.mxu0 0.0
      %748 = vmatpush1.msra.mxu0 %v743
      %749 = vmatprep.subr.mxu0 0.0
      %750 = vmatpush1.msra.mxu0 0.0
      %751 = vmatprep.subr.mxu0 0.0
      %752 = vmatpush1.msra.mxu0 0.0
      %753 = vmatprep.subr.mxu0 0.0
      %754 = vmatpush1.msra.mxu0 0.0
      %755 = vmatprep.subr.mxu0 0.0
      %756 = vmatpush1.msra.mxu0 0.0
      %757 = vmatprep.subr.mxu0 0.0
      %758 = vmatpush1.msra.mxu0 0.0
      %759 = vmatprep.subr.mxu0 0.0
      %760 = vmatpush1.msra.mxu0 0.0
      %761 = vmatprep.subr.mxu0 0.0
      %762 = vmatpush1.msra.mxu0 0.0
      %763 = vmatprep.subr.mxu0 0.0
      %764 = vmatpush1.msra.mxu0 0.0
      %765 = vmatprep.subr.mxu0 0.0
      %766 = vmatpush1.msra.mxu0 0.0
      %767 = vmatprep.subr.mxu0 0.0
      %768 = vmatpush1.msra.mxu0 0.0
      %769 = vmatprep.subr.mxu0 0.0
      %770 = vmatpush1.msra.mxu0 0.0
      %771 = vmatprep.subr.mxu0 0.0
      %772 = vmatpush1.msra.mxu0 0.0
      %773 = vmatprep.subr.mxu0 0.0
      %774 = vmatpush1.msra.mxu0 0.0
      %775 = vmatprep.subr.mxu0 0.0
      %776 = vmatpush1.msra.mxu0 0.0
      %777 = vmatprep.subr.mxu0 0.0
      %778 = vmatpush1.msra.mxu0 0.0
      %779 = vmatprep.subr.mxu0 0.0
      %780 = vmatpush1.msra.mxu0 0.0
      %781 = vmatprep.subr.mxu0 0.0
      %782 = vmatpush1.msra.mxu0 0.0
      %783 = vmatprep.subr.mxu0 0.0
      %784 = vmatpush1.msra.mxu0 0.0
      %785 = vmatprep.subr.mxu0 0.0
      %786 = vmatpush1.msra.mxu0 0.0
      %787 = vmatprep.subr.mxu0 0.0
      %788 = vmatpush1.msra.mxu0 0.0
      %789 = vmatprep.subr.mxu0 0.0
      %790 = vmatpush1.msra.mxu0 0.0
      %791 = vmatprep.subr.mxu0 0.0
      %792 = vmatpush1.msra.mxu0 0.0
      %793 = vmatprep.subr.mxu0 0.0
      %794 = vmatpush1.msra.mxu0 0.0
      %795 = vmatprep.subr.mxu0 0.0
      %796 = vmatpush1.msra.mxu0 0.0
      %797 = vmatprep.subr.mxu0 0.0
      %798 = vmatpush1.msra.mxu0 0.0
      %799 = vmatprep.subr.mxu0 0.0
      %800 = vmatpush1.msra.mxu0 0.0
      %801 = vmatprep.subr.mxu0 0.0
      %802 = vmatpush1.msra.mxu0 0.0
      %803 = vmatprep.subr.mxu0 0.0
      %804 = vmatpush1.msra.mxu0 0.0
      %805 = vmatprep.subr.mxu0 0.0
      %806 = vmatpush1.msra.mxu0 0.0
      %807 = vmatprep.subr.mxu0 0.0
      %808 = vmatpush1.msra.mxu0 0.0
      %809 = vmatprep.subr.mxu0 0.0
      %810 = vmatpush1.msra.mxu0 0.0
      %811 = vmatprep.mubr.f32.mxu0 0.0
      %812 = vmatmul.mubr.f32.gmra.mrb[0].mxu0 %v745
      %v813 = vpop.f32.mrb[0].mxu0
      %v814 = vadd.f32 0.0, %v813
      %v815 = vpop.f32.mrb[0].mxu0
      %816 = vdwg.mxu0
      %v818 = vsel %vm412, %v573, 0
      %820 = vmatprep.subr.mxu0 0.0
      %821 = vmatpush1.msra.mxu0 %v576
      %822 = vmatprep.subr.mxu0 0.0
      %823 = vmatpush1.msra.mxu0 0.0
      %824 = vmatprep.subr.mxu0 0.0
      %825 = vmatpush1.msra.mxu0 0.0
      %826 = vmatprep.subr.mxu0 0.0
      %827 = vmatpush1.msra.mxu0 0.0
      %828 = vmatprep.subr.mxu0 0.0
      %829 = vmatpush1.msra.mxu0 0.0
      %830 = vmatprep.subr.mxu0 0.0
      %831 = vmatpush1.msra.mxu0 0.0
      %832 = vmatprep.subr.mxu0 0.0
      %833 = vmatpush1.msra.mxu0 0.0
      %834 = vmatprep.subr.mxu0 0.0
      %835 = vmatpush1.msra.mxu0 0.0
      %836 = vmatprep.subr.mxu0 0.0
      %837 = vmatpush1.msra.mxu0 0.0
      %838 = vmatprep.subr.mxu0 0.0
      %839 = vmatpush1.msra.mxu0 0.0
      %840 = vmatprep.subr.mxu0 0.0
      %841 = vmatpush1.msra.mxu0 0.0
      %842 = vmatprep.subr.mxu0 0.0
      %843 = vmatpush1.msra.mxu0 0.0
      %844 = vmatprep.subr.mxu0 0.0
      %845 = vmatpush1.msra.mxu0 0.0
      %846 = vmatprep.subr.mxu0 0.0
      %847 = vmatpush1.msra.mxu0 0.0
      %848 = vmatprep.subr.mxu0 0.0
      %849 = vmatpush1.msra.mxu0 0.0
      %850 = vmatprep.subr.mxu0 0.0
      %851 = vmatpush1.msra.mxu0 0.0
      %852 = vmatprep.subr.mxu0 0.0
      %853 = vmatpush1.msra.mxu0 0.0
      %854 = vmatprep.subr.mxu0 0.0
      %855 = vmatpush1.msra.mxu0 0.0
      %856 = vmatprep.subr.mxu0 0.0
      %857 = vmatpush1.msra.mxu0 0.0
      %858 = vmatprep.subr.mxu0 0.0
      %859 = vmatpush1.msra.mxu0 0.0
      %860 = vmatprep.subr.mxu0 0.0
      %861 = vmatpush1.msra.mxu0 0.0
      %862 = vmatprep.subr.mxu0 0.0
      %863 = vmatpush1.msra.mxu0 0.0
      %864 = vmatprep.subr.mxu0 0.0
      %865 = vmatpush1.msra.mxu0 0.0
      %866 = vmatprep.subr.mxu0 0.0
      %867 = vmatpush1.msra.mxu0 0.0
      %868 = vmatprep.subr.mxu0 0.0
      %869 = vmatpush1.msra.mxu0 0.0
      %870 = vmatprep.subr.mxu0 0.0
      %871 = vmatpush1.msra.mxu0 0.0
      %872 = vmatprep.subr.mxu0 0.0
      %873 = vmatpush1.msra.mxu0 0.0
      %874 = vmatprep.subr.mxu0 0.0
      %875 = vmatpush1.msra.mxu0 0.0
      %876 = vmatprep.subr.mxu0 0.0
      %877 = vmatpush1.msra.mxu0 0.0
      %878 = vmatprep.subr.mxu0 0.0
      %879 = vmatpush1.msra.mxu0 0.0
      %880 = vmatprep.subr.mxu0 0.0
      %881 = vmatpush1.msra.mxu0 0.0
      %882 = vmatprep.subr.mxu0 0.0
      %883 = vmatpush1.msra.mxu0 0.0
      %884 = vmatprep.mubr.f32.mxu0 0.0
      %885 = vmatmul.mubr.f32.gmra.mrb[0].mxu0 %v818
      %v886 = vpop.f32.mrb[0].mxu0
      %v887 = vadd.f32 %v814, %v886
      %v888 = vpop.f32.mrb[0].mxu0
      %889 = vdwg.mxu0
      %890 = vrot.lane.b32.xlu0 %v402, 112
      %v891 = vpop.permute.xlu0 %890
      %892 = vrot.lane.b32.xlu0 %v398, 80
      %v893 = vpop.permute.xlu0 %892
      %v894 = vsel %vm412, %v891, 0
      %v896 = vsel %vm412, %v893, 0
      %898 = vmatprep.subr.mxu0 0.0
      %899 = vmatpush1.xpose.msra.mxu0 %v896
      %900 = vmatprep.subr.mxu0 0.0
      %901 = vmatpush1.xpose.msra.mxu0 0.0
      %902 = vmatprep.subr.mxu0 0.0
      %903 = vmatpush1.xpose.msra.mxu0 0.0
      %904 = vmatprep.subr.mxu0 0.0
      %905 = vmatpush1.xpose.msra.mxu0 0.0
      %906 = vmatprep.subr.mxu0 0.0
      %907 = vmatpush1.xpose.msra.mxu0 0.0
      %908 = vmatprep.subr.mxu0 0.0
      %909 = vmatpush1.xpose.msra.mxu0 0.0
      %910 = vmatprep.subr.mxu0 0.0
      %911 = vmatpush1.xpose.msra.mxu0 0.0
      %912 = vmatprep.subr.mxu0 0.0
      %913 = vmatpush1.xpose.msra.mxu0 0.0
      %914 = vmatprep.subr.mxu0 0.0
      %915 = vmatpush1.xpose.msra.mxu0 0.0
      %916 = vmatprep.subr.mxu0 0.0
      %917 = vmatpush1.xpose.msra.mxu0 0.0
      %918 = vmatprep.subr.mxu0 0.0
      %919 = vmatpush1.xpose.msra.mxu0 0.0
      %920 = vmatprep.subr.mxu0 0.0
      %921 = vmatpush1.xpose.msra.mxu0 0.0
      %922 = vmatprep.subr.mxu0 0.0
      %923 = vmatpush1.xpose.msra.mxu0 0.0
      %924 = vmatprep.subr.mxu0 0.0
      %925 = vmatpush1.xpose.msra.mxu0 0.0
      %926 = vmatprep.subr.mxu0 0.0
      %927 = vmatpush1.xpose.msra.mxu0 0.0
      %928 = vmatprep.subr.mxu0 0.0
      %929 = vmatpush1.xpose.msra.mxu0 0.0
      %930 = vmatprep.subr.mxu0 0.0
      %931 = vmatpush1.xpose.msra.mxu0 0.0
      %932 = vmatprep.subr.mxu0 0.0
      %933 = vmatpush1.xpose.msra.mxu0 0.0
      %934 = vmatprep.subr.mxu0 0.0
      %935 = vmatpush1.xpose.msra.mxu0 0.0
      %936 = vmatprep.subr.mxu0 0.0
      %937 = vmatpush1.xpose.msra.mxu0 0.0
      %938 = vmatprep.subr.mxu0 0.0
      %939 = vmatpush1.xpose.msra.mxu0 0.0
      %940 = vmatprep.subr.mxu0 0.0
      %941 = vmatpush1.xpose.msra.mxu0 0.0
      %942 = vmatprep.subr.mxu0 0.0
      %943 = vmatpush1.xpose.msra.mxu0 0.0
      %944 = vmatprep.subr.mxu0 0.0
      %945 = vmatpush1.xpose.msra.mxu0 0.0
      %946 = vmatprep.subr.mxu0 0.0
      %947 = vmatpush1.xpose.msra.mxu0 0.0
      %948 = vmatprep.subr.mxu0 0.0
      %949 = vmatpush1.xpose.msra.mxu0 0.0
      %950 = vmatprep.subr.mxu0 0.0
      %951 = vmatpush1.xpose.msra.mxu0 0.0
      %952 = vmatprep.subr.mxu0 0.0
      %953 = vmatpush1.xpose.msra.mxu0 0.0
      %954 = vmatprep.subr.mxu0 0.0
      %955 = vmatpush1.xpose.msra.mxu0 0.0
      %956 = vmatprep.subr.mxu0 0.0
      %957 = vmatpush1.xpose.msra.mxu0 0.0
      %958 = vmatprep.subr.mxu0 0.0
      %959 = vmatpush1.xpose.msra.mxu0 0.0
      %960 = vmatprep.subr.mxu0 0.0
      %961 = vmatpush1.xpose.msra.mxu0 0.0
      %962 = vmatprep.mubr.f32.mxu0 0.0
      %963 = vmatmul.mubr.f32.gmra.mrb[0].mxu0 %v894
      %v964 = vpop.f32.mrb[0].mxu0
      %v965 = vadd.f32 %v407, %v964
      %v966 = vpop.f32.mrb[0].mxu0
      %967 = vdwg.mxu0
      %v968 = vsel %vm412, %v965, -inf
      %969 = vmax.xlane.f32.xlu0 %v968
      %v970 = vpop.xlane.xlu0 %969
      %v971 = vsub.f32 %v965, %v970
      %v972 = vmul.f32 %v971, 1.442695
      %v973 = vpow.pop %v972
      %v974 = vsel %vm412, %v973, 0.0
      %975 = vadd.xlane.f32.xlu0 %v974
      %v976 = vpop.xlane.xlu0 %975
      %v977 = vrcp.pop %v976
      %v978 = vmul.f32 1.0, %v977
      %v979 = vmul.f32 %v973, %v978
      %980 = vrot.lane.b32.xlu0 %v398, 48
      %v981 = vpop.permute.xlu0 %980
      %v984 = vsel %vm412, %v979, 0
      %986 = vmatprep.subr.mxu0 0.0
      %987 = vmatpush1.msra.mxu0 %v981
      %988 = vmatprep.subr.mxu0 0.0
      %989 = vmatpush1.msra.mxu0 0.0
      %990 = vmatprep.subr.mxu0 0.0
      %991 = vmatpush1.msra.mxu0 0.0
      %992 = vmatprep.subr.mxu0 0.0
      %993 = vmatpush1.msra.mxu0 0.0
      %994 = vmatprep.subr.mxu0 0.0
      %995 = vmatpush1.msra.mxu0 0.0
      %996 = vmatprep.subr.mxu0 0.0
      %997 = vmatpush1.msra.mxu0 0.0
      %998 = vmatprep.subr.mxu0 0.0
      %999 = vmatpush1.msra.mxu0 0.0
      %1000 = vmatprep.subr.mxu0 0.0
      %1001 = vmatpush1.msra.mxu0 0.0
      %1002 = vmatprep.subr.mxu0 0.0
      %1003 = vmatpush1.msra.mxu0 0.0
      %1004 = vmatprep.subr.mxu0 0.0
      %1005 = vmatpush1.msra.mxu0 0.0
      %1006 = vmatprep.subr.mxu0 0.0
      %1007 = vmatpush1.msra.mxu0 0.0
      %1008 = vmatprep.subr.mxu0 0.0
      %1009 = vmatpush1.msra.mxu0 0.0
      %1010 = vmatprep.subr.mxu0 0.0
      %1011 = vmatpush1.msra.mxu0 0.0
      %1012 = vmatprep.subr.mxu0 0.0
      %1013 = vmatpush1.msra.mxu0 0.0
      %1014 = vmatprep.subr.mxu0 0.0
      %1015 = vmatpush1.msra.mxu0 0.0
      %1016 = vmatprep.subr.mxu0 0.0
      %1017 = vmatpush1.msra.mxu0 0.0
      %1018 = vmatprep.subr.mxu0 0.0
      %1019 = vmatpush1.msra.mxu0 0.0
      %1020 = vmatprep.subr.mxu0 0.0
      %1021 = vmatpush1.msra.mxu0 0.0
      %1022 = vmatprep.subr.mxu0 0.0
      %1023 = vmatpush1.msra.mxu0 0.0
      %1024 = vmatprep.subr.mxu0 0.0
      %1025 = vmatpush1.msra.mxu0 0.0
      %1026 = vmatprep.subr.mxu0 0.0
      %1027 = vmatpush1.msra.mxu0 0.0
      %1028 = vmatprep.subr.mxu0 0.0
      %1029 = vmatpush1.msra.mxu0 0.0
      %1030 = vmatprep.subr.mxu0 0.0
      %1031 = vmatpush1.msra.mxu0 0.0
      %1032 = vmatprep.subr.mxu0 0.0
      %1033 = vmatpush1.msra.mxu0 0.0
      %1034 = vmatprep.subr.mxu0 0.0
      %1035 = vmatpush1.msra.mxu0 0.0
      %1036 = vmatprep.subr.mxu0 0.0
      %1037 = vmatpush1.msra.mxu0 0.0
      %1038 = vmatprep.subr.mxu0 0.0
      %1039 = vmatpush1.msra.mxu0 0.0
      %1040 = vmatprep.subr.mxu0 0.0
      %1041 = vmatpush1.msra.mxu0 0.0
      %1042 = vmatprep.subr.mxu0 0.0
      %1043 = vmatpush1.msra.mxu0 0.0
      %1044 = vmatprep.subr.mxu0 0.0
      %1045 = vmatpush1.msra.mxu0 0.0
      %1046 = vmatprep.subr.mxu0 0.0
      %1047 = vmatpush1.msra.mxu0 0.0
      %1048 = vmatprep.subr.mxu0 0.0
      %1049 = vmatpush1.msra.mxu0 0.0
      %1050 = vmatprep.mubr.f32.mxu0 0.0
      %1051 = vmatmul.mubr.f32.gmra.mrb[0].mxu0 %v984
      %v1052 = vpop.f32.mrb[0].mxu0
      %v1053 = vadd.f32 0.0, %v1052
      %v1054 = vpop.f32.mrb[0].mxu0
      %1055 = vdwg.mxu0
      %v1056 = vld [vmem:[%s3 + $0x10] sm:$0xff]
      %v1058 = vsel %vm412, %v1053, 0
      %1060 = vmatprep.subr.mxu0 0.0
      %1061 = vmatpush1.msra.mxu0 %v1056
      %1062 = vmatprep.subr.mxu0 0.0
      %1063 = vmatpush1.msra.mxu0 0.0
      %1064 = vmatprep.subr.mxu0 0.0
      %1065 = vmatpush1.msra.mxu0 0.0
      %1066 = vmatprep.subr.mxu0 0.0
      %1067 = vmatpush1.msra.mxu0 0.0
      %1068 = vmatprep.subr.mxu0 0.0
      %1069 = vmatpush1.msra.mxu0 0.0
      %1070 = vmatprep.subr.mxu0 0.0
      %1071 = vmatpush1.msra.mxu0 0.0
      %1072 = vmatprep.subr.mxu0 0.0
      %1073 = vmatpush1.msra.mxu0 0.0
      %1074 = vmatprep.subr.mxu0 0.0
      %1075 = vmatpush1.msra.mxu0 0.0
      %1076 = vmatprep.subr.mxu0 0.0
      %1077 = vmatpush1.msra.mxu0 0.0
      %1078 = vmatprep.subr.mxu0 0.0
      %1079 = vmatpush1.msra.mxu0 0.0
      %1080 = vmatprep.subr.mxu0 0.0
      %1081 = vmatpush1.msra.mxu0 0.0
      %1082 = vmatprep.subr.mxu0 0.0
      %1083 = vmatpush1.msra.mxu0 0.0
      %1084 = vmatprep.subr.mxu0 0.0
      %1085 = vmatpush1.msra.mxu0 0.0
      %1086 = vmatprep.subr.mxu0 0.0
      %1087 = vmatpush1.msra.mxu0 0.0
      %1088 = vmatprep.subr.mxu0 0.0
      %1089 = vmatpush1.msra.mxu0 0.0
      %1090 = vmatprep.subr.mxu0 0.0
      %1091 = vmatpush1.msra.mxu0 0.0
      %1092 = vmatprep.subr.mxu0 0.0
      %1093 = vmatpush1.msra.mxu0 0.0
      %1094 = vmatprep.subr.mxu0 0.0
      %1095 = vmatpush1.msra.mxu0 0.0
      %1096 = vmatprep.subr.mxu0 0.0
      %1097 = vmatpush1.msra.mxu0 0.0
      %1098 = vmatprep.subr.mxu0 0.0
      %1099 = vmatpush1.msra.mxu0 0.0
      %1100 = vmatprep.subr.mxu0 0.0
      %1101 = vmatpush1.msra.mxu0 0.0
      %1102 = vmatprep.subr.mxu0 0.0
      %1103 = vmatpush1.msra.mxu0 0.0
      %1104 = vmatprep.subr.mxu0 0.0
      %1105 = vmatpush1.msra.mxu0 0.0
      %1106 = vmatprep.subr.mxu0 0.0
      %1107 = vmatpush1.msra.mxu0 0.0
      %1108 = vmatprep.subr.mxu0 0.0
      %1109 = vmatpush1.msra.mxu0 0.0
      %1110 = vmatprep.subr.mxu0 0.0
      %1111 = vmatpush1.msra.mxu0 0.0
      %1112 = vmatprep.subr.mxu0 0.0
      %1113 = vmatpush1.msra.mxu0 0.0
      %1114 = vmatprep.subr.mxu0 0.0
      %1115 = vmatpush1.msra.mxu0 0.0
      %1116 = vmatprep.subr.mxu0 0.0
      %1117 = vmatpush1.msra.mxu0 0.0
      %1118 = vmatprep.subr.mxu0 0.0
      %1119 = vmatpush1.msra.mxu0 0.0
      %1120 = vmatprep.subr.mxu0 0.0
      %1121 = vmatpush1.msra.mxu0 0.0
      %1122 = vmatprep.subr.mxu0 0.0
      %1123 = vmatpush1.msra.mxu0 0.0
      %1124 = vmatprep.mubr.f32.mxu0 0.0
      %1125 = vmatmul.mubr.f32.gmra.mrb[0].mxu0 %v1058
      %v1126 = vpop.f32.mrb[0].mxu0
      %v1127 = vadd.f32 0.0, %v1126
      %v1128 = vpop.f32.mrb[0].mxu0
      %1129 = vdwg.mxu0
      %v1130 = vadd.f32 %v887, %v1127
      %1131 = vrot.lane.b32.xlu0 %v402, 104
      %v1132 = vpop.permute.xlu0 %1131
      %1133 = vrot.lane.b32.xlu0 %v398, 72
      %v1134 = vpop.permute.xlu0 %1133
      %v1135 = vsel %vm412, %v1132, 0
      %v1137 = vsel %vm412, %v1134, 0
      %1139 = vmatprep.subr.mxu0 0.0
      %1140 = vmatpush1.xpose.msra.mxu0 %v1137
      %1141 = vmatprep.subr.mxu0 0.0
      %1142 = vmatpush1.xpose.msra.mxu0 0.0
      %1143 = vmatprep.subr.mxu0 0.0
      %1144 = vmatpush1.xpose.msra.mxu0 0.0
      %1145 = vmatprep.subr.mxu0 0.0
      %1146 = vmatpush1.xpose.msra.mxu0 0.0
      %1147 = vmatprep.subr.mxu0 0.0
      %1148 = vmatpush1.xpose.msra.mxu0 0.0
      %1149 = vmatprep.subr.mxu0 0.0
      %1150 = vmatpush1.xpose.msra.mxu0 0.0
      %1151 = vmatprep.subr.mxu0 0.0
      %1152 = vmatpush1.xpose.msra.mxu0 0.0
      %1153 = vmatprep.subr.mxu0 0.0
      %1154 = vmatpush1.xpose.msra.mxu0 0.0
      %1155 = vmatprep.subr.mxu0 0.0
      %1156 = vmatpush1.xpose.msra.mxu0 0.0
      %1157 = vmatprep.subr.mxu0 0.0
      %1158 = vmatpush1.xpose.msra.mxu0 0.0
      %1159 = vmatprep.subr.mxu0 0.0
      %1160 = vmatpush1.xpose.msra.mxu0 0.0
      %1161 = vmatprep.subr.mxu0 0.0
      %1162 = vmatpush1.xpose.msra.mxu0 0.0
      %1163 = vmatprep.subr.mxu0 0.0
      %1164 = vmatpush1.xpose.msra.mxu0 0.0
      %1165 = vmatprep.subr.mxu0 0.0
      %1166 = vmatpush1.xpose.msra.mxu0 0.0
      %1167 = vmatprep.subr.mxu0 0.0
      %1168 = vmatpush1.xpose.msra.mxu0 0.0
      %1169 = vmatprep.subr.mxu0 0.0
      %1170 = vmatpush1.xpose.msra.mxu0 0.0
      %1171 = vmatprep.subr.mxu0 0.0
      %1172 = vmatpush1.xpose.msra.mxu0 0.0
      %1173 = vmatprep.subr.mxu0 0.0
      %1174 = vmatpush1.xpose.msra.mxu0 0.0
      %1175 = vmatprep.subr.mxu0 0.0
      %1176 = vmatpush1.xpose.msra.mxu0 0.0
      %1177 = vmatprep.subr.mxu0 0.0
      %1178 = vmatpush1.xpose.msra.mxu0 0.0
      %1179 = vmatprep.subr.mxu0 0.0
      %1180 = vmatpush1.xpose.msra.mxu0 0.0
      %1181 = vmatprep.subr.mxu0 0.0
      %1182 = vmatpush1.xpose.msra.mxu0 0.0
      %1183 = vmatprep.subr.mxu0 0.0
      %1184 = vmatpush1.xpose.msra.mxu0 0.0
      %1185 = vmatprep.subr.mxu0 0.0
      %1186 = vmatpush1.xpose.msra.mxu0 0.0
      %1187 = vmatprep.subr.mxu0 0.0
      %1188 = vmatpush1.xpose.msra.mxu0 0.0
      %1189 = vmatprep.subr.mxu0 0.0
      %1190 = vmatpush1.xpose.msra.mxu0 0.0
      %1191 = vmatprep.subr.mxu0 0.0
      %1192 = vmatpush1.xpose.msra.mxu0 0.0
      %1193 = vmatprep.subr.mxu0 0.0
      %1194 = vmatpush1.xpose.msra.mxu0 0.0
      %1195 = vmatprep.subr.mxu0 0.0
      %1196 = vmatpush1.xpose.msra.mxu0 0.0
      %1197 = vmatprep.subr.mxu0 0.0
      %1198 = vmatpush1.xpose.msra.mxu0 0.0
      %1199 = vmatprep.subr.mxu0 0.0
      %1200 = vmatpush1.xpose.msra.mxu0 0.0
      %1201 = vmatprep.subr.mxu0 0.0
      %1202 = vmatpush1.xpose.msra.mxu0 0.0
      %1203 = vmatprep.mubr.f32.mxu0 0.0
      %1204 = vmatmul.mubr.f32.gmra.mrb[0].mxu0 %v1135
      %v1205 = vpop.f32.mrb[0].mxu0
      %v1206 = vadd.f32 %v407, %v1205
      %v1207 = vpop.f32.mrb[0].mxu0
      %1208 = vdwg.mxu0
      %v1209 = vsel %vm412, %v1206, -inf
      %1210 = vmax.xlane.f32.xlu0 %v1209
      %v1211 = vpop.xlane.xlu0 %1210
      %v1212 = vsub.f32 %v1206, %v1211
      %v1213 = vmul.f32 %v1212, 1.442695
      %v1214 = vpow.pop %v1213
      %v1215 = vsel %vm412, %v1214, 0.0
      %1216 = vadd.xlane.f32.xlu0 %v1215
      %v1217 = vpop.xlane.xlu0 %1216
      %v1218 = vrcp.pop %v1217
      %v1219 = vmul.f32 1.0, %v1218
      %v1220 = vmul.f32 %v1214, %v1219
      %1221 = vrot.lane.b32.xlu0 %v398, 40
      %v1222 = vpop.permute.xlu0 %1221
      %v1225 = vsel %vm412, %v1220, 0
      %1227 = vmatprep.subr.mxu0 0.0
      %1228 = vmatpush1.msra.mxu0 %v1222
      %1229 = vmatprep.subr.mxu0 0.0
      %1230 = vmatpush1.msra.mxu0 0.0
      %1231 = vmatprep.subr.mxu0 0.0
      %1232 = vmatpush1.msra.mxu0 0.0
      %1233 = vmatprep.subr.mxu0 0.0
      %1234 = vmatpush1.msra.mxu0 0.0
      %1235 = vmatprep.subr.mxu0 0.0
      %1236 = vmatpush1.msra.mxu0 0.0
      %1237 = vmatprep.subr.mxu0 0.0
      %1238 = vmatpush1.msra.mxu0 0.0
      %1239 = vmatprep.subr.mxu0 0.0
      %1240 = vmatpush1.msra.mxu0 0.0
      %1241 = vmatprep.subr.mxu0 0.0
      %1242 = vmatpush1.msra.mxu0 0.0
      %1243 = vmatprep.subr.mxu0 0.0
      %1244 = vmatpush1.msra.mxu0 0.0
      %1245 = vmatprep.subr.mxu0 0.0
      %1246 = vmatpush1.msra.mxu0 0.0
      %1247 = vmatprep.subr.mxu0 0.0
      %1248 = vmatpush1.msra.mxu0 0.0
      %1249 = vmatprep.subr.mxu0 0.0
      %1250 = vmatpush1.msra.mxu0 0.0
      %1251 = vmatprep.subr.mxu0 0.0
      %1252 = vmatpush1.msra.mxu0 0.0
      %1253 = vmatprep.subr.mxu0 0.0
      %1254 = vmatpush1.msra.mxu0 0.0
      %1255 = vmatprep.subr.mxu0 0.0
      %1256 = vmatpush1.msra.mxu0 0.0
      %1257 = vmatprep.subr.mxu0 0.0
      %1258 = vmatpush1.msra.mxu0 0.0
      %1259 = vmatprep.subr.mxu0 0.0
      %1260 = vmatpush1.msra.mxu0 0.0
      %1261 = vmatprep.subr.mxu0 0.0
      %1262 = vmatpush1.msra.mxu0 0.0
      %1263 = vmatprep.subr.mxu0 0.0
      %1264 = vmatpush1.msra.mxu0 0.0
      %1265 = vmatprep.subr.mxu0 0.0
      %1266 = vmatpush1.msra.mxu0 0.0
      %1267 = vmatprep.subr.mxu0 0.0
      %1268 = vmatpush1.msra.mxu0 0.0
      %1269 = vmatprep.subr.mxu0 0.0
      %1270 = vmatpush1.msra.mxu0 0.0
      %1271 = vmatprep.subr.mxu0 0.0
      %1272 = vmatpush1.msra.mxu0 0.0
      %1273 = vmatprep.subr.mxu0 0.0
      %1274 = vmatpush1.msra.mxu0 0.0
      %1275 = vmatprep.subr.mxu0 0.0
      %1276 = vmatpush1.msra.mxu0 0.0
      %1277 = vmatprep.subr.mxu0 0.0
      %1278 = vmatpush1.msra.mxu0 0.0
      %1279 = vmatprep.subr.mxu0 0.0
      %1280 = vmatpush1.msra.mxu0 0.0
      %1281 = vmatprep.subr.mxu0 0.0
      %1282 = vmatpush1.msra.mxu0 0.0
      %1283 = vmatprep.subr.mxu0 0.0
      %1284 = vmatpush1.msra.mxu0 0.0
      %1285 = vmatprep.subr.mxu0 0.0
      %1286 = vmatpush1.msra.mxu0 0.0
      %1287 = vmatprep.subr.mxu0 0.0
      %1288 = vmatpush1.msra.mxu0 0.0
      %1289 = vmatprep.subr.mxu0 0.0
      %1290 = vmatpush1.msra.mxu0 0.0
      %1291 = vmatprep.mubr.f32.mxu0 0.0
      %1292 = vmatmul.mubr.f32.gmra.mrb[0].mxu0 %v1225
      %v1293 = vpop.f32.mrb[0].mxu0
      %v1294 = vadd.f32 0.0, %v1293
      %v1295 = vpop.f32.mrb[0].mxu0
      %1296 = vdwg.mxu0
      %v1297 = vld [vmem:[%s3 + $0x18] sm:$0xff]
      %v1299 = vsel %vm412, %v1294, 0
      %1301 = vmatprep.subr.mxu0 0.0
      %1302 = vmatpush1.msra.mxu0 %v1297
      %1303 = vmatprep.subr.mxu0 0.0
      %1304 = vmatpush1.msra.mxu0 0.0
      %1305 = vmatprep.subr.mxu0 0.0
      %1306 = vmatpush1.msra.mxu0 0.0
      %1307 = vmatprep.subr.mxu0 0.0
      %1308 = vmatpush1.msra.mxu0 0.0
      %1309 = vmatprep.subr.mxu0 0.0
      %1310 = vmatpush1.msra.mxu0 0.0
      %1311 = vmatprep.subr.mxu0 0.0
      %1312 = vmatpush1.msra.mxu0 0.0
      %1313 = vmatprep.subr.mxu0 0.0
      %1314 = vmatpush1.msra.mxu0 0.0
      %1315 = vmatprep.subr.mxu0 0.0
      %1316 = vmatpush1.msra.mxu0 0.0
      %1317 = vmatprep.subr.mxu0 0.0
      %1318 = vmatpush1.msra.mxu0 0.0
      %1319 = vmatprep.subr.mxu0 0.0
      %1320 = vmatpush1.msra.mxu0 0.0
      %1321 = vmatprep.subr.mxu0 0.0
      %1322 = vmatpush1.msra.mxu0 0.0
      %1323 = vmatprep.subr.mxu0 0.0
      %1324 = vmatpush1.msra.mxu0 0.0
      %1325 = vmatprep.subr.mxu0 0.0
      %1326 = vmatpush1.msra.mxu0 0.0
      %1327 = vmatprep.subr.mxu0 0.0
      %1328 = vmatpush1.msra.mxu0 0.0
      %1329 = vmatprep.subr.mxu0 0.0
      %1330 = vmatpush1.msra.mxu0 0.0
      %1331 = vmatprep.subr.mxu0 0.0
      %1332 = vmatpush1.msra.mxu0 0.0
      %1333 = vmatprep.subr.mxu0 0.0
      %1334 = vmatpush1.msra.mxu0 0.0
      %1335 = vmatprep.subr.mxu0 0.0
      %1336 = vmatpush1.msra.mxu0 0.0
      %1337 = vmatprep.subr.mxu0 0.0
      %1338 = vmatpush1.msra.mxu0 0.0
      %1339 = vmatprep.subr.mxu0 0.0
      %1340 = vmatpush1.msra.mxu0 0.0
      %1341 = vmatprep.subr.mxu0 0.0
      %1342 = vmatpush1.msra.mxu0 0.0
      %1343 = vmatprep.subr.mxu0 0.0
      %1344 = vmatpush1.msra.mxu0 0.0
      %1345 = vmatprep.subr.mxu0 0.0
      %1346 = vmatpush1.msra.mxu0 0.0
      %1347 = vmatprep.subr.mxu0 0.0
      %1348 = vmatpush1.msra.mxu0 0.0
      %1349 = vmatprep.subr.mxu0 0.0
      %1350 = vmatpush1.msra.mxu0 0.0
      %1351 = vmatprep.subr.mxu0 0.0
      %1352 = vmatpush1.msra.mxu0 0.0
      %1353 = vmatprep.subr.mxu0 0.0
      %1354 = vmatpush1.msra.mxu0 0.0
      %1355 = vmatprep.subr.mxu0 0.0
      %1356 = vmatpush1.msra.mxu0 0.0
      %1357 = vmatprep.subr.mxu0 0.0
      %1358 = vmatpush1.msra.mxu0 0.0
      %1359 = vmatprep.subr.mxu0 0.0
      %1360 = vmatpush1.msra.mxu0 0.0
      %1361 = vmatprep.subr.mxu0 0.0
      %1362 = vmatpush1.msra.mxu0 0.0
      %1363 = vmatprep.subr.mxu0 0.0
      %1364 = vmatpush1.msra.mxu0 0.0
      %1365 = vmatprep.mubr.f32.mxu0 0.0
      %1366 = vmatmul.mubr.f32.gmra.mrb[0].mxu0 %v1299
      %v1367 = vpop.f32.mrb[0].mxu0
      %v1368 = vadd.f32 0.0, %v1367
      %v1369 = vpop.f32.mrb[0].mxu0
      %1370 = vdwg.mxu0
      %v1371 = vadd.f32 %v1130, %v1368
      %v1372 = vld [vmem:[%s4] sm:$0x1]
      %v1374 = vlaneseq
      %v1375 = vshrl.u32 %v1374, 7
      %v1376 = vsub.s32 0, %v1375
      %v1377 = vrot.slane %v1372, %v1376
      %v1379 = vadd.f32 %v1371, %v1377
      %v1380 = vadd.f32 %v1379, %v315
      %v1381 = vld [vmem:[%s5] sm:$0x1]
      %v1382 = vld [vmem:[%s6] sm:$0x1]
      %v1383 = vsel %vm327, %v1380, 0.0
      %1384 = vadd.xlane.f32.xlu0 %v1383
      %v1385 = vpop.xlane.xlu0 %1384
      %v1386 = vrcp.pop 32.0
      %v1387 = vmul.f32 %v1385, %v1386
      %v1388 = vsub.f32 %v1380, %v1387
      %v1389 = vmul.f32 %v1388, %v1388
      %v1390 = vsel %vm327, %v1389, 0.0
      %1391 = vadd.xlane.f32.xlu0 %v1390
      %v1392 = vpop.xlane.xlu0 %1391
      %v1393 = vmul.f32 %v1392, %v1386
      %v1394 = vadd.f32 %v1393, 1e-05
      %v1395 = vrsqrt.pop %v1394
      %v1396 = vmul.f32 %v1388, %v1395
      %v1398 = vlaneseq
      %v1399 = vshrl.u32 %v1398, 7
      %v1400 = vsub.s32 0, %v1399
      %v1401 = vrot.slane %v1381, %v1400
      %v1403 = vmul.f32 %v1396, %v1401
      %v1405 = vlaneseq
      %v1406 = vshrl.u32 %v1405, 7
      %v1407 = vsub.s32 0, %v1406
      %v1408 = vrot.slane %v1382, %v1407
      %v1410 = vadd.f32 %v1403, %v1408
      %1411 = vst.msk [vmem:[%s314] sm:$0xff] %vm327, %v1410
      %p1412 = scmp.lt.s32.totalorder %s19, 1
      %s1413 = scalar_select %p1412, %s19, 1
      %s1414 = smul.addr %s1413, 8
      %s1415 = scalar_lea.vmem %s8, %s1414
      // Predicated region
      $region53: #{model_forward.12} parent=51 // pred_check
        %p1416 = pneg %p215
      $region54: #{model_forward.12} parent=51 // pred_check_branch
        %1418 = sbr.rel (%p1416) target = $region56
      $region55: #{model_forward.12} parent=51 // pred_region
        _
      $region56: #{model_forward.12} parent=51 // pred_fallthru
        _
    $region52: #{model_forward.12} parent=5 // pred_fallthru
      _
    %p1419 = scmp.le.s32.totalorder 2, %s14
    // Predicated region
    $region57: #{model_forward.12} parent=5 // pred_check
      %p1420 = pneg %p1419
    $region58: #{model_forward.12} parent=5 // pred_check_branch
      %1422 = sbr.rel (%p1420) target = $region60
    $region59: #{model_forward.12} parent=5 // pred_region
      %s1423 = ssub.s32 %s14, 2
      // Predicated region
      $region61: #{model_forward.12} parent=59 // pred_check
        %p1424 = pneg %p221
      $region62: #{model_forward.12} parent=59 // pred_check_branch
        %1426 = sbr.rel (%p1424) target = $region64
      $region63: #{model_forward.12} parent=59 // pred_region
        %p1427 = scmp.lt.s32.totalorder %s20, 1
        %s1428 = scalar_select %p1427, %s20, 1
        %s1429 = smul.addr %s1428, 8
        %s1430 = scalar_lea.vmem %s8, %s1429
      $region64: #{model_forward.12} parent=59 // pred_fallthru
        _
    $region60: #{model_forward.12} parent=5 // pred_fallthru
      _
  $region6: #{model_forward.12} parent=0 // loop_footer
    %s18 = sadd.s32 1, %s14
  $region7: #{model_forward.12} parent=0 // loop_footer_branch
    %13 = sbr.rel target = $region3
  $region8: #{model_forward.12} parent=0 // loop_exit
    _

// kernel: model_forward.13
$region0: #{model_forward.13}
  #allocation0 [shape = 'u32[]', space=smem, size = 0x4, offset = 0x4, fixed_abs, tag = 'smem constant byte address 0x4 - core index']
  #allocation1 [shape = 'u32[144,128]{1,0:T(1,128)}', space=vmem, size = 0x12000, scoped, tag = 'internal scratch']
  #allocation2 [shape = 'f32[16,32]{1,0:T(8,128)}', space=vmem, size = 0x2000, scoped, tag = 'scratch operand']
  %s0 = inlined_call_operand.vmem [shape: f32[2,8,32], index: 0, kind: input, shape index: {}]
  %s1 = inlined_call_operand.vmem [shape: f32[9,32,64], index: 1, kind: input, shape index: {}]
  %s2 = inlined_call_operand.vmem [shape: f32[1,64], index: 2, kind: input, shape index: {}]
  %s3 = inlined_call_operand.vmem [shape: f32[64,32], index: 3, kind: input, shape index: {}]
  %s4 = inlined_call_operand.vmem [shape: f32[1,32], index: 4, kind: input, shape index: {}]
  %s5 = inlined_call_operand.vmem [shape: f32[1,32], index: 5, kind: input, shape index: {}]
  %s6 = inlined_call_operand.vmem [shape: f32[1,32], index: 6, kind: input, shape index: {}]
  %s7 = inlined_call_operand.vmem [shape: f32[2,8,32], index: 7, kind: output, shape index: {}]
  %s8 = sld [smem:[#allocation0]]
  $region61: #{model_forward.13} parent=0
    _
  %s10 = ssub.s32 1, %s8
  %s11 = scalar_select 0, %s10, %s8
  loop: start=0, step=1, limit=4
  $region2: #{model_forward.13} parent=0 // loop_pre_header
    _
  $region3: #{model_forward.13} parent=0 // loop_header
    %s13 = sphi 0, %s17
    %p14 = scmp.ge.s32.totalorder %s13, 4
    %s23 = sphi 0, %s25
    %s26 = sphi 0, %s23
    %s27 = sphi 0, %s26
    %s43 = sphi 0, %s27
    %s47 = sphi 0, %s47
    %s49 = sphi 0, %s47
    %s50 = sphi 0, %s49
    %s64 = sphi 0, %s50
    %s68 = sphi 0, %s68
    %s70 = sphi 0, %s68
    %s71 = sphi 0, %s70
    %s85 = sphi 0, %s71
    %s89 = sphi 0, %s89
    %s91 = sphi 0, %s89
    %s92 = sphi 0, %s91
    %s106 = sphi 0, %s92
    %s110 = sphi 0, %s110
    %s112 = sphi 0, %s110
    %s113 = sphi 0, %s112
    %s127 = sphi 0, %s113
    %s131 = sphi 0, %s131
    %s133 = sphi 0, %s131
    %s134 = sphi 0, %s133
    %s148 = sphi 0, %s134
    %s152 = sphi 0, %s152
    %s154 = sphi 0, %s152
    %s155 = sphi 0, %s154
    %s169 = sphi 0, %s155
    %s175 = sphi 0, %s177
    %s178 = sphi 0, %s175
    %s179 = sphi 0, %s178
    %s195 = sphi 0, %s179
  $region4: #{model_forward.13} parent=0 // loop_header_branch
    %16 = sbr.rel (%p14) target = $region8
  $region5: #{model_forward.13} parent=0 // loop_body
    %s18 = ssub.s32 %s13, 1
    %s19 = ssub.s32 %s13, 2
    %s20 = sadd.s32 %s13, 1
    %s21 = ssub.s32 %s13, %s20
    %p22 = scmp.eq.s32.totalorder %s21, 0
    %s24 = sadd.s32 %s23, 1
    %s25 = scalar_select %p22, %s23, %s24
    %p28 = pneg %p22
    %p29 = scmp.eq.s32.totalorder %s13, 1
    %p30 = por %p28, %p29
    %p31 = scmp.ne.s32.totalorder %s23, %s26
    %p32 = scmp.eq.s32.totalorder %s13, 0
    %p33 = por %p31, %p32
    %p34 = scmp.ne.s32.totalorder %s23, %s26
    %p35 = scmp.eq.s32.totalorder %s18, 1
    %p36 = por %p34, %p35
    %p37 = scmp.ne.s32.totalorder %s26, %s27
    %p38 = scmp.eq.s32.totalorder %s18, 0
    %p39 = por %p37, %p38
    %p40 = scmp.ne.s32.totalorder %s26, %s27
    %p41 = scmp.eq.s32.totalorder %s19, 1
    %p42 = por %p40, %p41
    %p44 = scmp.ne.s32.totalorder %s27, %s43
    %p45 = scmp.eq.s32.totalorder %s19, 0
    %p46 = por %p44, %p45
    %s48 = sadd.s32 %s47, 1
    %p51 = scmp.eq.s32.totalorder %s13, 1
    %p52 = scmp.ne.s32.totalorder %s47, %s49
    %p53 = scmp.eq.s32.totalorder %s13, 0
    %p54 = por %p52, %p53
    %p55 = scmp.ne.s32.totalorder %s47, %s49
    %p56 = scmp.eq.s32.totalorder %s18, 1
    %p57 = por %p55, %p56
    %p58 = scmp.ne.s32.totalorder %s49, %s50
    %p59 = scmp.eq.s32.totalorder %s18, 0
    %p60 = por %p58, %p59
    %p61 = scmp.ne.s32.totalorder %s49, %s50
    %p62 = scmp.eq.s32.totalorder %s19, 1
    %p63 = por %p61, %p62
    %p65 = scmp.ne.s32.totalorder %s50, %s64
    %p66 = scmp.eq.s32.totalorder %s19, 0
    %p67 = por %p65, %p66
    %s69 = sadd.s32 %s68, 1
    %p72 = scmp.eq.s32.totalorder %s13, 1
    %p73 = scmp.ne.s32.totalorder %s68, %s70
    %p74 = scmp.eq.s32.totalorder %s13, 0
    %p75 = por %p73, %p74
    %p76 = scmp.ne.s32.totalorder %s68, %s70
    %p77 = scmp.eq.s32.totalorder %s18, 1
    %p78 = por %p76, %p77
    %p79 = scmp.ne.s32.totalorder %s70, %s71
    %p80 = scmp.eq.s32.totalorder %s18, 0
    %p81 = por %p79, %p80
    %p82 = scmp.ne.s32.totalorder %s70, %s71
    %p83 = scmp.eq.s32.totalorder %s19, 1
    %p84 = por %p82, %p83
    %p86 = scmp.ne.s32.totalorder %s71, %s85
    %p87 = scmp.eq.s32.totalorder %s19, 0
    %p88 = por %p86, %p87
    %s90 = sadd.s32 %s89, 1
    %p93 = scmp.eq.s32.totalorder %s13, 1
    %p94 = scmp.ne.s32.totalorder %s89, %s91
    %p95 = scmp.eq.s32.totalorder %s13, 0
    %p96 = por %p94, %p95
    %p97 = scmp.ne.s32.totalorder %s89, %s91
    %p98 = scmp.eq.s32.totalorder %s18, 1
    %p99 = por %p97, %p98
    %p100 = scmp.ne.s32.totalorder %s91, %s92
    %p101 = scmp.eq.s32.totalorder %s18, 0
    %p102 = por %p100, %p101
    %p103 = scmp.ne.s32.totalorder %s91, %s92
    %p104 = scmp.eq.s32.totalorder %s19, 1
    %p105 = por %p103, %p104
    %p107 = scmp.ne.s32.totalorder %s92, %s106
    %p108 = scmp.eq.s32.totalorder %s19, 0
    %p109 = por %p107, %p108
    %s111 = sadd.s32 %s110, 1
    %p114 = scmp.eq.s32.totalorder %s13, 1
    %p115 = scmp.ne.s32.totalorder %s110, %s112
    %p116 = scmp.eq.s32.totalorder %s13, 0
    %p117 = por %p115, %p116
    %p118 = scmp.ne.s32.totalorder %s110, %s112
    %p119 = scmp.eq.s32.totalorder %s18, 1
    %p120 = por %p118, %p119
    %p121 = scmp.ne.s32.totalorder %s112, %s113
    %p122 = scmp.eq.s32.totalorder %s18, 0
    %p123 = por %p121, %p122
    %p124 = scmp.ne.s32.totalorder %s112, %s113
    %p125 = scmp.eq.s32.totalorder %s19, 1
    %p126 = por %p124, %p125
    %p128 = scmp.ne.s32.totalorder %s113, %s127
    %p129 = scmp.eq.s32.totalorder %s19, 0
    %p130 = por %p128, %p129
    %s132 = sadd.s32 %s131, 1
    %p135 = scmp.eq.s32.totalorder %s13, 1
    %p136 = scmp.ne.s32.totalorder %s131, %s133
    %p137 = scmp.eq.s32.totalorder %s13, 0
    %p138 = por %p136, %p137
    %p139 = scmp.ne.s32.totalorder %s131, %s133
    %p140 = scmp.eq.s32.totalorder %s18, 1
    %p141 = por %p139, %p140
    %p142 = scmp.ne.s32.totalorder %s133, %s134
    %p143 = scmp.eq.s32.totalorder %s18, 0
    %p144 = por %p142, %p143
    %p145 = scmp.ne.s32.totalorder %s133, %s134
    %p146 = scmp.eq.s32.totalorder %s19, 1
    %p147 = por %p145, %p146
    %p149 = scmp.ne.s32.totalorder %s134, %s148
    %p150 = scmp.eq.s32.totalorder %s19, 0
    %p151 = por %p149, %p150
    %s153 = sadd.s32 %s152, 1
    %p156 = scmp.eq.s32.totalorder %s13, 1
    %p157 = scmp.ne.s32.totalorder %s152, %s154
    %p158 = scmp.eq.s32.totalorder %s13, 0
    %p159 = por %p157, %p158
    %p160 = scmp.ne.s32.totalorder %s152, %s154
    %p161 = scmp.eq.s32.totalorder %s18, 1
    %p162 = por %p160, %p161
    %p163 = scmp.ne.s32.totalorder %s154, %s155
    %p164 = scmp.eq.s32.totalorder %s18, 0
    %p165 = por %p163, %p164
    %p166 = scmp.ne.s32.totalorder %s154, %s155
    %p167 = scmp.eq.s32.totalorder %s19, 1
    %p168 = por %p166, %p167
    %p170 = scmp.ne.s32.totalorder %s155, %s169
    %p171 = scmp.eq.s32.totalorder %s19, 0
    %p172 = por %p170, %p171
    %s173 = ssub.s32 %s13, %s20
    %p174 = scmp.eq.s32.totalorder %s173, 0
    %s176 = sadd.s32 %s175, 1
    %s177 = scalar_select %p174, %s175, %s176
    %p180 = pneg %p174
    %p181 = scmp.eq.s32.totalorder %s13, 1
    %p182 = por %p180, %p181
    %p183 = scmp.ne.s32.totalorder %s175, %s178
    %p184 = scmp.eq.s32.totalorder %s13, 0
    %p185 = por %p183, %p184
    %p186 = scmp.ne.s32.totalorder %s175, %s178
    %p187 = scmp.eq.s32.totalorder %s18, 1
    %p188 = por %p186, %p187
    %p189 = scmp.ne.s32.totalorder %s178, %s179
    %p190 = scmp.eq.s32.totalorder %s18, 0
    %p191 = por %p189, %p190
    %p192 = scmp.ne.s32.totalorder %s178, %s179
    %p193 = scmp.eq.s32.totalorder %s19, 1
    %p194 = por %p192, %p193
    %p196 = scmp.ne.s32.totalorder %s179, %s195
    %p197 = scmp.eq.s32.totalorder %s19, 0
    %p198 = por %p196, %p197
    %p199 = scmp.le.s32.totalorder 1, %s13
    %p200 = scmp.lt.s32.totalorder %s13, 3
    %p201 = pnand %p199, %p200
    %p202 = pneg %p201
    // Predicated region
    $region9: #{model_forward.13} parent=5 // pred_check
      _
    $region10: #{model_forward.13} parent=5 // pred_check_branch
      %204 = sbr.rel (%p201) target = $region12
    $region11: #{model_forward.13} parent=5 // pred_region
      %s205 = ssub.s32 %s13, 1
      // Predicated region
      $region13: #{model_forward.13} parent=11 // pred_check
        %p206 = pneg %p60
      $region14: #{model_forward.13} parent=11 // pred_check_branch
        %208 = sbr.rel (%p206) target = $region16
      $region15: #{model_forward.13} parent=11 // pred_region
        _
      $region16: #{model_forward.13} parent=11 // pred_fallthru
        _
      // Predicated region
      $region17: #{model_forward.13} parent=11 // pred_check
        %p209 = pneg %p81
      $region18: #{model_forward.13} parent=11 // pred_check_branch
        %211 = sbr.rel (%p209) target = $region20
      $region19: #{model_forward.13} parent=11 // pred_region
        _
      $region20: #{model_forward.13} parent=11 // pred_fallthru
        _
      // Predicated region
      $region21: #{model_forward.13} parent=11 // pred_check
        %p212 = pneg %p102
      $region22: #{model_forward.13} parent=11 // pred_check_branch
        %214 = sbr.rel (%p212) target = $region24
      $region23: #{model_forward.13} parent=11 // pred_region
        _
      $region24: #{model_forward.13} parent=11 // pred_fallthru
        _
      // Predicated region
      $region25: #{model_forward.13} parent=11 // pred_check
        %p215 = pneg %p123
      $region26: #{model_forward.13} parent=11 // pred_check_branch
        %217 = sbr.rel (%p215) target = $region28
      $region27: #{model_forward.13} parent=11 // pred_region
        _
      $region28: #{model_forward.13} parent=11 // pred_fallthru
        _
      // Predicated region
      $region29: #{model_forward.13} parent=11 // pred_check
        %p218 = pneg %p144
      $region30: #{model_forward.13} parent=11 // pred_check_branch
        %220 = sbr.rel (%p218) target = $region32
      $region31: #{model_forward.13} parent=11 // pred_region
        _
      $region32: #{model_forward.13} parent=11 // pred_fallthru
        _
      // Predicated region
      $region33: #{model_forward.13} parent=11 // pred_check
        %p221 = pneg %p165
      $region34: #{model_forward.13} parent=11 // pred_check_branch
        %223 = sbr.rel (%p221) target = $region36
      $region35: #{model_forward.13} parent=11 // pred_region
        _
      $region36: #{model_forward.13} parent=11 // pred_fallthru
        _
    $region12: #{model_forward.13} parent=5 // pred_fallthru
      _
    %p224 = scmp.lt.s32.totalorder %s13, 2
    // Predicated region
    $region37: #{model_forward.13} parent=5 // pred_check
      %p225 = pneg %p224
    $region38: #{model_forward.13} parent=5 // pred_check_branch
      %227 = sbr.rel (%p225) target = $region40
    $region39: #{model_forward.13} parent=5 // pred_region
      // Predicated region
      $region41: #{model_forward.13} parent=39 // pred_check
        %p228 = pneg %p33
      $region42: #{model_forward.13} parent=39 // pred_check_branch
        %230 = sbr.rel (%p228) target = $region44
      $region43: #{model_forward.13} parent=39 // pred_region
        %p231 = scmp.lt.s32.totalorder %s13, 1
        %s232 = scalar_select %p231, %s13, 1
        %s233 = smul.addr %s232, 8
        %s234 = scalar_lea.vmem %s0, %s233
      $region44: #{model_forward.13} parent=39 // pred_fallthru
        _
    $region40: #{model_forward.13} parent=5 // pred_fallthru
      _
    %p235 = scmp.le.s32.totalorder 1, %s13
    %p236 = scmp.lt.s32.totalorder %s13, 3
    %p237 = pnand %p235, %p236
    %p238 = pneg %p237
    // Predicated region
    $region45: #{model_forward.13} parent=5 // pred_check
      _
    $region46: #{model_forward.13} parent=5 // pred_check_branch
      %240 = sbr.rel (%p237) target = $region48
    $region47: #{model_forward.13} parent=5 // pred_region
      %s241 = ssub.s32 %s13, 1
      %p242 = scmp.lt.s32.totalorder %s18, 1
      %s243 = scalar_select %p242, %s18, 1
      %s244 = smul.addr %s243, 8
      %s245 = scalar_lea.vmem %s0, %s244
      %p246 = pneg %p39
      %p247 = pneg %p36
      %p248 = pneg %p60
      %p249 = pneg %p57
      %p250 = pneg %p81
      %p251 = pneg %p78
      %p252 = pneg %p102
      %p253 = pneg %p99
      %p254 = pneg %p123
      %p255 = pneg %p120
      %p256 = pneg %p144
      %p257 = pneg %p141
      %p258 = pneg %p165
      %p259 = pneg %p162
      %p260 = pneg %p191
      %p261 = pneg %p188
      %p262 = scmp.lt.s32.totalorder %s18, 1
      %s263 = scalar_select %p262, %s18, 1
      %s264 = smul.addr %s263, 8
      %s265 = scalar_lea.vmem %s7, %s264
      %p266 = scmp.lt.s32.totalorder %s18, 1
      %s267 = scalar_select %p266, %s18, 1
      %s268 = smul.addr %s267, 8
      %s269 = scalar_lea.vmem %s0, %s268
      %p270 = scmp.lt.s32.totalorder %s18, 1
      %s271 = scalar_select %p270, %s18, 1
      %s272 = smul.addr %s271, 8
      %s273 = scalar_lea.vmem %s7, %s272
      %v274 = vld [vmem:[%s269] sm:$0xff]
      %vm275 = vcmask 261120
      %276 = vst.msk [vmem:[#allocation2] sm:$0xff] %vm275, 0.0
      %277 = vst.msk [vmem:[#allocation2 + $0x8] sm:$0xff] %vm275, 0.0
      %278 = vst.msk [vmem:[#allocation2 + $0x4] sm:$0xff] %vm275, %v274
      %v279 = vld [vmem:[%s2] sm:$0x1]
      %v281 = vlaneseq
      %v282 = vshrl.u32 %v281, 7
      %v283 = vsub.s32 0, %v282
      %v284 = vrot.slane %v279, %v283
      %v286 = vadd.f32 %v284, 0.0
      %v287 = vld [vmem:[#allocation2] sm:$0xff]
      %v288 = vld [vmem:[%s1] sm:$0xff]
      %v289 = vld [vmem:[%s1 + $0x8] sm:$0xff]
      %v290 = vld [vmem:[%s1 + $0x10] sm:$0xff]
      %v291 = vld [vmem:[%s1 + $0x18] sm:$0xff]
      %v293 = vsel %vm275, %v287, 0
      %295 = vmatprep.subr.mxu0 0.0
      %296 = vmatpush1.msra.mxu0 %v288
      %297 = vmatprep.subr.mxu0 0.0
      %298 = vmatpush1.msra.mxu0 %v289
      %299 = vmatprep.subr.mxu0 0.0
      %300 = vmatpush1.msra.mxu0 %v290
      %301 = vmatprep.subr.mxu0 0.0
      %302 = vmatpush1.msra.mxu0 %v291
      %303 = vmatprep.subr.mxu0 0.0
      %304 = vmatpush1.msra.mxu0 0.0
      %305 = vmatprep.subr.mxu0 0.0
      %306 = vmatpush1.msra.mxu0 0.0
      %307 = vmatprep.subr.mxu0 0.0
      %308 = vmatpush1.msra.mxu0 0.0
      %309 = vmatprep.subr.mxu0 0.0
      %310 = vmatpush1.msra.mxu0 0.0
      %311 = vmatprep.subr.mxu0 0.0
      %312 = vmatpush1.msra.mxu0 0.0
      %313 = vmatprep.subr.mxu0 0.0
      %314 = vmatpush1.msra.mxu0 0.0
      %315 = vmatprep.subr.mxu0 0.0
      %316 = vmatpush1.msra.mxu0 0.0
      %317 = vmatprep.subr.mxu0 0.0
      %318 = vmatpush1.msra.mxu0 0.0
      %319 = vmatprep.subr.mxu0 0.0
      %320 = vmatpush1.msra.mxu0 0.0
      %321 = vmatprep.subr.mxu0 0.0
      %322 = vmatpush1.msra.mxu0 0.0
      %323 = vmatprep.subr.mxu0 0.0
      %324 = vmatpush1.msra.mxu0 0.0
      %325 = vmatprep.subr.mxu0 0.0
      %326 = vmatpush1.msra.mxu0 0.0
      %327 = vmatprep.subr.mxu0 0.0
      %328 = vmatpush1.msra.mxu0 0.0
      %329 = vmatprep.subr.mxu0 0.0
      %330 = vmatpush1.msra.mxu0 0.0
      %331 = vmatprep.subr.mxu0 0.0
      %332 = vmatpush1.msra.mxu0 0.0
      %333 = vmatprep.subr.mxu0 0.0
      %334 = vmatpush1.msra.mxu0 0.0
      %335 = vmatprep.subr.mxu0 0.0
      %336 = vmatpush1.msra.mxu0 0.0
      %337 = vmatprep.subr.mxu0 0.0
      %338 = vmatpush1.msra.mxu0 0.0
      %339 = vmatprep.subr.mxu0 0.0
      %340 = vmatpush1.msra.mxu0 0.0
      %341 = vmatprep.subr.mxu0 0.0
      %342 = vmatpush1.msra.mxu0 0.0
      %343 = vmatprep.subr.mxu0 0.0
      %344 = vmatpush1.msra.mxu0 0.0
      %345 = vmatprep.subr.mxu0 0.0
      %346 = vmatpush1.msra.mxu0 0.0
      %347 = vmatprep.subr.mxu0 0.0
      %348 = vmatpush1.msra.mxu0 0.0
      %349 = vmatprep.subr.mxu0 0.0
      %350 = vmatpush1.msra.mxu0 0.0
      %351 = vmatprep.subr.mxu0 0.0
      %352 = vmatpush1.msra.mxu0 0.0
      %353 = vmatprep.subr.mxu0 0.0
      %354 = vmatpush1.msra.mxu0 0.0
      %355 = vmatprep.subr.mxu0 0.0
      %356 = vmatpush1.msra.mxu0 0.0
      %357 = vmatprep.subr.mxu0 0.0
      %358 = vmatpush1.msra.mxu0 0.0
      %359 = vmatprep.mubr.f32.mxu0 0.0
      %360 = vmatmul.mubr.f32.gmra.mrb[0].mxu0 %v293
      %v361 = vpop.f32.mrb[0].mxu0
      %v362 = vadd.f32 0.0, %v361
      %v363 = vpop.f32.mrb[0].mxu0
      %364 = vdwg.mxu0
      %v365 = vadd.f32 %v286, %v362
      %v366 = vld [vmem:[#allocation2 + $0x1] sm:$0xff]
      %s367 = scalar_lea.vmem %s1, 32
      %v368 = vld [vmem:[%s367] sm:$0xff]
      %v369 = vld [vmem:[%s367 + $0x8] sm:$0xff]
      %v370 = vld [vmem:[%s367 + $0x10] sm:$0xff]
      %v371 = vld [vmem:[%s367 + $0x18] sm:$0xff]
      %v373 = vsel %vm275, %v366, 0
      %375 = vmatprep.subr.mxu0 0.0
      %376 = vmatpush1.msra.mxu0 %v368
      %377 = vmatprep.subr.mxu0 0.0
      %378 = vmatpush1.msra.mxu0 %v369
      %379 = vmatprep.subr.mxu0 0.0
      %380 = vmatpush1.msra.mxu0 %v370
      %381 = vmatprep.subr.mxu0 0.0
      %382 = vmatpush1.msra.mxu0 %v371
      %383 = vmatprep.subr.mxu0 0.0
      %384 = vmatpush1.msra.mxu0 0.0
      %385 = vmatprep.subr.mxu0 0.0
      %386 = vmatpush1.msra.mxu0 0.0
      %387 = vmatprep.subr.mxu0 0.0
      %388 = vmatpush1.msra.mxu0 0.0
      %389 = vmatprep.subr.mxu0 0.0
      %390 = vmatpush1.msra.mxu0 0.0
      %391 = vmatprep.subr.mxu0 0.0
      %392 = vmatpush1.msra.mxu0 0.0
      %393 = vmatprep.subr.mxu0 0.0
      %394 = vmatpush1.msra.mxu0 0.0
      %395 = vmatprep.subr.mxu0 0.0
      %396 = vmatpush1.msra.mxu0 0.0
      %397 = vmatprep.subr.mxu0 0.0
      %398 = vmatpush1.msra.mxu0 0.0
      %399 = vmatprep.subr.mxu0 0.0
      %400 = vmatpush1.msra.mxu0 0.0
      %401 = vmatprep.subr.mxu0 0.0
      %402 = vmatpush1.msra.mxu0 0.0
      %403 = vmatprep.subr.mxu0 0.0
      %404 = vmatpush1.msra.mxu0 0.0
      %405 = vmatprep.subr.mxu0 0.0
      %406 = vmatpush1.msra.mxu0 0.0
      %407 = vmatprep.subr.mxu0 0.0
      %408 = vmatpush1.msra.mxu0 0.0
      %409 = vmatprep.subr.mxu0 0.0
      %410 = vmatpush1.msra.mxu0 0.0
      %411 = vmatprep.subr.mxu0 0.0
      %412 = vmatpush1.msra.mxu0 0.0
      %413 = vmatprep.subr.mxu0 0.0
      %414 = vmatpush1.msra.mxu0 0.0
      %415 = vmatprep.subr.mxu0 0.0
      %416 = vmatpush1.msra.mxu0 0.0
      %417 = vmatprep.subr.mxu0 0.0
      %418 = vmatpush1.msra.mxu0 0.0
      %419 = vmatprep.subr.mxu0 0.0
      %420 = vmatpush1.msra.mxu0 0.0
      %421 = vmatprep.subr.mxu0 0.0
      %422 = vmatpush1.msra.mxu0 0.0
      %423 = vmatprep.subr.mxu0 0.0
      %424 = vmatpush1.msra.mxu0 0.0
      %425 = vmatprep.subr.mxu0 0.0
      %426 = vmatpush1.msra.mxu0 0.0
      %427 = vmatprep.subr.mxu0 0.0
      %428 = vmatpush1.msra.mxu0 0.0
      %429 = vmatprep.subr.mxu0 0.0
      %430 = vmatpush1.msra.mxu0 0.0
      %431 = vmatprep.subr.mxu0 0.0
      %432 = vmatpush1.msra.mxu0 0.0
      %433 = vmatprep.subr.mxu0 0.0
      %434 = vmatpush1.msra.mxu0 0.0
      %435 = vmatprep.subr.mxu0 0.0
      %436 = vmatpush1.msra.mxu0 0.0
      %437 = vmatprep.subr.mxu0 0.0
      %438 = vmatpush1.msra.mxu0 0.0
      %439 = vmatprep.mubr.f32.mxu0 0.0
      %440 = vmatmul.mubr.f32.gmra.mrb[0].mxu0 %v373
      %v441 = vpop.f32.mrb[0].mxu0
      %v442 = vadd.f32 0.0, %v441
      %v443 = vpop.f32.mrb[0].mxu0
      %444 = vdwg.mxu0
      %v445 = vadd.f32 %v365, %v442
      %v446 = vld [vmem:[#allocation2 + $0x2] sm:$0xff]
      %s447 = scalar_lea.vmem %s1, 64
      %v448 = vld [vmem:[%s447] sm:$0xff]
      %v449 = vld [vmem:[%s447 + $0x8] sm:$0xff]
      %v450 = vld [vmem:[%s447 + $0x10] sm:$0xff]
      %v451 = vld [vmem:[%s447 + $0x18] sm:$0xff]
      %v453 = vsel %vm275, %v446, 0
      %455 = vmatprep.subr.mxu0 0.0
      %456 = vmatpush1.msra.mxu0 %v448
      %457 = vmatprep.subr.mxu0 0.0
      %458 = vmatpush1.msra.mxu0 %v449
      %459 = vmatprep.subr.mxu0 0.0
      %460 = vmatpush1.msra.mxu0 %v450
      %461 = vmatprep.subr.mxu0 0.0
      %462 = vmatpush1.msra.mxu0 %v451
      %463 = vmatprep.subr.mxu0 0.0
      %464 = vmatpush1.msra.mxu0 0.0
      %465 = vmatprep.subr.mxu0 0.0
      %466 = vmatpush1.msra.mxu0 0.0
      %467 = vmatprep.subr.mxu0 0.0
      %468 = vmatpush1.msra.mxu0 0.0
      %469 = vmatprep.subr.mxu0 0.0
      %470 = vmatpush1.msra.mxu0 0.0
      %471 = vmatprep.subr.mxu0 0.0
      %472 = vmatpush1.msra.mxu0 0.0
      %473 = vmatprep.subr.mxu0 0.0
      %474 = vmatpush1.msra.mxu0 0.0
      %475 = vmatprep.subr.mxu0 0.0
      %476 = vmatpush1.msra.mxu0 0.0
      %477 = vmatprep.subr.mxu0 0.0
      %478 = vmatpush1.msra.mxu0 0.0
      %479 = vmatprep.subr.mxu0 0.0
      %480 = vmatpush1.msra.mxu0 0.0
      %481 = vmatprep.subr.mxu0 0.0
      %482 = vmatpush1.msra.mxu0 0.0
      %483 = vmatprep.subr.mxu0 0.0
      %484 = vmatpush1.msra.mxu0 0.0
      %485 = vmatprep.subr.mxu0 0.0
      %486 = vmatpush1.msra.mxu0 0.0
      %487 = vmatprep.subr.mxu0 0.0
      %488 = vmatpush1.msra.mxu0 0.0
      %489 = vmatprep.subr.mxu0 0.0
      %490 = vmatpush1.msra.mxu0 0.0
      %491 = vmatprep.subr.mxu0 0.0
      %492 = vmatpush1.msra.mxu0 0.0
      %493 = vmatprep.subr.mxu0 0.0
      %494 = vmatpush1.msra.mxu0 0.0
      %495 = vmatprep.subr.mxu0 0.0
      %496 = vmatpush1.msra.mxu0 0.0
      %497 = vmatprep.subr.mxu0 0.0
      %498 = vmatpush1.msra.mxu0 0.0
      %499 = vmatprep.subr.mxu0 0.0
      %500 = vmatpush1.msra.mxu0 0.0
      %501 = vmatprep.subr.mxu0 0.0
      %502 = vmatpush1.msra.mxu0 0.0
      %503 = vmatprep.subr.mxu0 0.0
      %504 = vmatpush1.msra.mxu0 0.0
      %505 = vmatprep.subr.mxu0 0.0
      %506 = vmatpush1.msra.mxu0 0.0
      %507 = vmatprep.subr.mxu0 0.0
      %508 = vmatpush1.msra.mxu0 0.0
      %509 = vmatprep.subr.mxu0 0.0
      %510 = vmatpush1.msra.mxu0 0.0
      %511 = vmatprep.subr.mxu0 0.0
      %512 = vmatpush1.msra.mxu0 0.0
      %513 = vmatprep.subr.mxu0 0.0
      %514 = vmatpush1.msra.mxu0 0.0
      %515 = vmatprep.subr.mxu0 0.0
      %516 = vmatpush1.msra.mxu0 0.0
      %517 = vmatprep.subr.mxu0 0.0
      %518 = vmatpush1.msra.mxu0 0.0
      %519 = vmatprep.mubr.f32.mxu0 0.0
      %520 = vmatmul.mubr.f32.gmra.mrb[0].mxu0 %v453
      %v521 = vpop.f32.mrb[0].mxu0
      %v522 = vadd.f32 0.0, %v521
      %v523 = vpop.f32.mrb[0].mxu0
      %524 = vdwg.mxu0
      %v525 = vadd.f32 %v445, %v522
      %v526 = vld [vmem:[#allocation2 + $0x3] sm:$0xff]
      %s527 = scalar_lea.vmem %s1, 96
      %v528 = vld [vmem:[%s527] sm:$0xff]
      %v529 = vld [vmem:[%s527 + $0x8] sm:$0xff]
      %v530 = vld [vmem:[%s527 + $0x10] sm:$0xff]
      %v531 = vld [vmem:[%s527 + $0x18] sm:$0xff]
      %v533 = vsel %vm275, %v526, 0
      %535 = vmatprep.subr.mxu0 0.0
      %536 = vmatpush1.msra.mxu0 %v528
      %537 = vmatprep.subr.mxu0 0.0
      %538 = vmatpush1.msra.mxu0 %v529
      %539 = vmatprep.subr.mxu0 0.0
      %540 = vmatpush1.msra.mxu0 %v530
      %541 = vmatprep.subr.mxu0 0.0
      %542 = vmatpush1.msra.mxu0 %v531
      %543 = vmatprep.subr.mxu0 0.0
      %544 = vmatpush1.msra.mxu0 0.0
      %545 = vmatprep.subr.mxu0 0.0
      %546 = vmatpush1.msra.mxu0 0.0
      %547 = vmatprep.subr.mxu0 0.0
      %548 = vmatpush1.msra.mxu0 0.0
      %549 = vmatprep.subr.mxu0 0.0
      %550 = vmatpush1.msra.mxu0 0.0
      %551 = vmatprep.subr.mxu0 0.0
      %552 = vmatpush1.msra.mxu0 0.0
      %553 = vmatprep.subr.mxu0 0.0
      %554 = vmatpush1.msra.mxu0 0.0
      %555 = vmatprep.subr.mxu0 0.0
      %556 = vmatpush1.msra.mxu0 0.0
      %557 = vmatprep.subr.mxu0 0.0
      %558 = vmatpush1.msra.mxu0 0.0
      %559 = vmatprep.subr.mxu0 0.0
      %560 = vmatpush1.msra.mxu0 0.0
      %561 = vmatprep.subr.mxu0 0.0
      %562 = vmatpush1.msra.mxu0 0.0
      %563 = vmatprep.subr.mxu0 0.0
      %564 = vmatpush1.msra.mxu0 0.0
      %565 = vmatprep.subr.mxu0 0.0
      %566 = vmatpush1.msra.mxu0 0.0
      %567 = vmatprep.subr.mxu0 0.0
      %568 = vmatpush1.msra.mxu0 0.0
      %569 = vmatprep.subr.mxu0 0.0
      %570 = vmatpush1.msra.mxu0 0.0
      %571 = vmatprep.subr.mxu0 0.0
      %572 = vmatpush1.msra.mxu0 0.0
      %573 = vmatprep.subr.mxu0 0.0
      %574 = vmatpush1.msra.mxu0 0.0
      %575 = vmatprep.subr.mxu0 0.0
      %576 = vmatpush1.msra.mxu0 0.0
      %577 = vmatprep.subr.mxu0 0.0
      %578 = vmatpush1.msra.mxu0 0.0
      %579 = vmatprep.subr.mxu0 0.0
      %580 = vmatpush1.msra.mxu0 0.0
      %581 = vmatprep.subr.mxu0 0.0
      %582 = vmatpush1.msra.mxu0 0.0
      %583 = vmatprep.subr.mxu0 0.0
      %584 = vmatpush1.msra.mxu0 0.0
      %585 = vmatprep.subr.mxu0 0.0
      %586 = vmatpush1.msra.mxu0 0.0
      %587 = vmatprep.subr.mxu0 0.0
      %588 = vmatpush1.msra.mxu0 0.0
      %589 = vmatprep.subr.mxu0 0.0
      %590 = vmatpush1.msra.mxu0 0.0
      %591 = vmatprep.subr.mxu0 0.0
      %592 = vmatpush1.msra.mxu0 0.0
      %593 = vmatprep.subr.mxu0 0.0
      %594 = vmatpush1.msra.mxu0 0.0
      %595 = vmatprep.subr.mxu0 0.0
      %596 = vmatpush1.msra.mxu0 0.0
      %597 = vmatprep.subr.mxu0 0.0
      %598 = vmatpush1.msra.mxu0 0.0
      %599 = vmatprep.mubr.f32.mxu0 0.0
      %600 = vmatmul.mubr.f32.gmra.mrb[0].mxu0 %v533
      %v601 = vpop.f32.mrb[0].mxu0
      %v602 = vadd.f32 0.0, %v601
      %v603 = vpop.f32.mrb[0].mxu0
      %604 = vdwg.mxu0
      %v605 = vadd.f32 %v525, %v602
      %v606 = vld [vmem:[#allocation2 + $0x4] sm:$0xff]
      %s607 = scalar_lea.vmem %s1, 128
      %v608 = vld [vmem:[%s607] sm:$0xff]
      %v609 = vld [vmem:[%s607 + $0x8] sm:$0xff]
      %v610 = vld [vmem:[%s607 + $0x10] sm:$0xff]
      %v611 = vld [vmem:[%s607 + $0x18] sm:$0xff]
      %v613 = vsel %vm275, %v606, 0
      %615 = vmatprep.subr.mxu0 0.0
      %616 = vmatpush1.msra.mxu0 %v608
      %617 = vmatprep.subr.mxu0 0.0
      %618 = vmatpush1.msra.mxu0 %v609
      %619 = vmatprep.subr.mxu0 0.0
      %620 = vmatpush1.msra.mxu0 %v610
      %621 = vmatprep.subr.mxu0 0.0
      %622 = vmatpush1.msra.mxu0 %v611
      %623 = vmatprep.subr.mxu0 0.0
      %624 = vmatpush1.msra.mxu0 0.0
      %625 = vmatprep.subr.mxu0 0.0
      %626 = vmatpush1.msra.mxu0 0.0
      %627 = vmatprep.subr.mxu0 0.0
      %628 = vmatpush1.msra.mxu0 0.0
      %629 = vmatprep.subr.mxu0 0.0
      %630 = vmatpush1.msra.mxu0 0.0
      %631 = vmatprep.subr.mxu0 0.0
      %632 = vmatpush1.msra.mxu0 0.0
      %633 = vmatprep.subr.mxu0 0.0
      %634 = vmatpush1.msra.mxu0 0.0
      %635 = vmatprep.subr.mxu0 0.0
      %636 = vmatpush1.msra.mxu0 0.0
      %637 = vmatprep.subr.mxu0 0.0
      %638 = vmatpush1.msra.mxu0 0.0
      %639 = vmatprep.subr.mxu0 0.0
      %640 = vmatpush1.msra.mxu0 0.0
      %641 = vmatprep.subr.mxu0 0.0
      %642 = vmatpush1.msra.mxu0 0.0
      %643 = vmatprep.subr.mxu0 0.0
      %644 = vmatpush1.msra.mxu0 0.0
      %645 = vmatprep.subr.mxu0 0.0
      %646 = vmatpush1.msra.mxu0 0.0
      %647 = vmatprep.subr.mxu0 0.0
      %648 = vmatpush1.msra.mxu0 0.0
      %649 = vmatprep.subr.mxu0 0.0
      %650 = vmatpush1.msra.mxu0 0.0
      %651 = vmatprep.subr.mxu0 0.0
      %652 = vmatpush1.msra.mxu0 0.0
      %653 = vmatprep.subr.mxu0 0.0
      %654 = vmatpush1.msra.mxu0 0.0
      %655 = vmatprep.subr.mxu0 0.0
      %656 = vmatpush1.msra.mxu0 0.0
      %657 = vmatprep.subr.mxu0 0.0
      %658 = vmatpush1.msra.mxu0 0.0
      %659 = vmatprep.subr.mxu0 0.0
      %660 = vmatpush1.msra.mxu0 0.0
      %661 = vmatprep.subr.mxu0 0.0
      %662 = vmatpush1.msra.mxu0 0.0
      %663 = vmatprep.subr.mxu0 0.0
      %664 = vmatpush1.msra.mxu0 0.0
      %665 = vmatprep.subr.mxu0 0.0
      %666 = vmatpush1.msra.mxu0 0.0
      %667 = vmatprep.subr.mxu0 0.0
      %668 = vmatpush1.msra.mxu0 0.0
      %669 = vmatprep.subr.mxu0 0.0
      %670 = vmatpush1.msra.mxu0 0.0
      %671 = vmatprep.subr.mxu0 0.0
      %672 = vmatpush1.msra.mxu0 0.0
      %673 = vmatprep.subr.mxu0 0.0
      %674 = vmatpush1.msra.mxu0 0.0
      %675 = vmatprep.subr.mxu0 0.0
      %676 = vmatpush1.msra.mxu0 0.0
      %677 = vmatprep.subr.mxu0 0.0
      %678 = vmatpush1.msra.mxu0 0.0
      %679 = vmatprep.mubr.f32.mxu0 0.0
      %680 = vmatmul.mubr.f32.gmra.mrb[0].mxu0 %v613
      %v681 = vpop.f32.mrb[0].mxu0
      %v682 = vadd.f32 0.0, %v681
      %v683 = vpop.f32.mrb[0].mxu0
      %684 = vdwg.mxu0
      %v685 = vadd.f32 %v605, %v682
      %v686 = vld [vmem:[#allocation2 + $0x5] sm:$0xff]
      %s687 = scalar_lea.vmem %s1, 160
      %v688 = vld [vmem:[%s687] sm:$0xff]
      %v689 = vld [vmem:[%s687 + $0x8] sm:$0xff]
      %v690 = vld [vmem:[%s687 + $0x10] sm:$0xff]
      %v691 = vld [vmem:[%s687 + $0x18] sm:$0xff]
      %v693 = vsel %vm275, %v686, 0
      %695 = vmatprep.subr.mxu0 0.0
      %696 = vmatpush1.msra.mxu0 %v688
      %697 = vmatprep.subr.mxu0 0.0
      %698 = vmatpush1.msra.mxu0 %v689
      %699 = vmatprep.subr.mxu0 0.0
      %700 = vmatpush1.msra.mxu0 %v690
      %701 = vmatprep.subr.mxu0 0.0
      %702 = vmatpush1.msra.mxu0 %v691
      %703 = vmatprep.subr.mxu0 0.0
      %704 = vmatpush1.msra.mxu0 0.0
      %705 = vmatprep.subr.mxu0 0.0
      %706 = vmatpush1.msra.mxu0 0.0
      %707 = vmatprep.subr.mxu0 0.0
      %708 = vmatpush1.msra.mxu0 0.0
      %709 = vmatprep.subr.mxu0 0.0
      %710 = vmatpush1.msra.mxu0 0.0
      %711 = vmatprep.subr.mxu0 0.0
      %712 = vmatpush1.msra.mxu0 0.0
      %713 = vmatprep.subr.mxu0 0.0
      %714 = vmatpush1.msra.mxu0 0.0
      %715 = vmatprep.subr.mxu0 0.0
      %716 = vmatpush1.msra.mxu0 0.0
      %717 = vmatprep.subr.mxu0 0.0
      %718 = vmatpush1.msra.mxu0 0.0
      %719 = vmatprep.subr.mxu0 0.0
      %720 = vmatpush1.msra.mxu0 0.0
      %721 = vmatprep.subr.mxu0 0.0
      %722 = vmatpush1.msra.mxu0 0.0
      %723 = vmatprep.subr.mxu0 0.0
      %724 = vmatpush1.msra.mxu0 0.0
      %725 = vmatprep.subr.mxu0 0.0
      %726 = vmatpush1.msra.mxu0 0.0
      %727 = vmatprep.subr.mxu0 0.0
      %728 = vmatpush1.msra.mxu0 0.0
      %729 = vmatprep.subr.mxu0 0.0
      %730 = vmatpush1.msra.mxu0 0.0
      %731 = vmatprep.subr.mxu0 0.0
      %732 = vmatpush1.msra.mxu0 0.0
      %733 = vmatprep.subr.mxu0 0.0
      %734 = vmatpush1.msra.mxu0 0.0
      %735 = vmatprep.subr.mxu0 0.0
      %736 = vmatpush1.msra.mxu0 0.0
      %737 = vmatprep.subr.mxu0 0.0
      %738 = vmatpush1.msra.mxu0 0.0
      %739 = vmatprep.subr.mxu0 0.0
      %740 = vmatpush1.msra.mxu0 0.0
      %741 = vmatprep.subr.mxu0 0.0
      %742 = vmatpush1.msra.mxu0 0.0
      %743 = vmatprep.subr.mxu0 0.0
      %744 = vmatpush1.msra.mxu0 0.0
      %745 = vmatprep.subr.mxu0 0.0
      %746 = vmatpush1.msra.mxu0 0.0
      %747 = vmatprep.subr.mxu0 0.0
      %748 = vmatpush1.msra.mxu0 0.0
      %749 = vmatprep.subr.mxu0 0.0
      %750 = vmatpush1.msra.mxu0 0.0
      %751 = vmatprep.subr.mxu0 0.0
      %752 = vmatpush1.msra.mxu0 0.0
      %753 = vmatprep.subr.mxu0 0.0
      %754 = vmatpush1.msra.mxu0 0.0
      %755 = vmatprep.subr.mxu0 0.0
      %756 = vmatpush1.msra.mxu0 0.0
      %757 = vmatprep.subr.mxu0 0.0
      %758 = vmatpush1.msra.mxu0 0.0
      %759 = vmatprep.mubr.f32.mxu0 0.0
      %760 = vmatmul.mubr.f32.gmra.mrb[0].mxu0 %v693
      %v761 = vpop.f32.mrb[0].mxu0
      %v762 = vadd.f32 0.0, %v761
      %v763 = vpop.f32.mrb[0].mxu0
      %764 = vdwg.mxu0
      %v765 = vadd.f32 %v685, %v762
      %v766 = vld [vmem:[#allocation2 + $0x6] sm:$0xff]
      %s767 = scalar_lea.vmem %s1, 192
      %v768 = vld [vmem:[%s767] sm:$0xff]
      %v769 = vld [vmem:[%s767 + $0x8] sm:$0xff]
      %v770 = vld [vmem:[%s767 + $0x10] sm:$0xff]
      %v771 = vld [vmem:[%s767 + $0x18] sm:$0xff]
      %v773 = vsel %vm275, %v766, 0
      %775 = vmatprep.subr.mxu0 0.0
      %776 = vmatpush1.msra.mxu0 %v768
      %777 = vmatprep.subr.mxu0 0.0
      %778 = vmatpush1.msra.mxu0 %v769
      %779 = vmatprep.subr.mxu0 0.0
      %780 = vmatpush1.msra.mxu0 %v770
      %781 = vmatprep.subr.mxu0 0.0
      %782 = vmatpush1.msra.mxu0 %v771
      %783 = vmatprep.subr.mxu0 0.0
      %784 = vmatpush1.msra.mxu0 0.0
      %785 = vmatprep.subr.mxu0 0.0
      %786 = vmatpush1.msra.mxu0 0.0
      %787 = vmatprep.subr.mxu0 0.0
      %788 = vmatpush1.msra.mxu0 0.0
      %789 = vmatprep.subr.mxu0 0.0
      %790 = vmatpush1.msra.mxu0 0.0
      %791 = vmatprep.subr.mxu0 0.0
      %792 = vmatpush1.msra.mxu0 0.0
      %793 = vmatprep.subr.mxu0 0.0
      %794 = vmatpush1.msra.mxu0 0.0
      %795 = vmatprep.subr.mxu0 0.0
      %796 = vmatpush1.msra.mxu0 0.0
      %797 = vmatprep.subr.mxu0 0.0
      %798 = vmatpush1.msra.mxu0 0.0
      %799 = vmatprep.subr.mxu0 0.0
      %800 = vmatpush1.msra.mxu0 0.0
      %801 = vmatprep.subr.mxu0 0.0
      %802 = vmatpush1.msra.mxu0 0.0
      %803 = vmatprep.subr.mxu0 0.0
      %804 = vmatpush1.msra.mxu0 0.0
      %805 = vmatprep.subr.mxu0 0.0
      %806 = vmatpush1.msra.mxu0 0.0
      %807 = vmatprep.subr.mxu0 0.0
      %808 = vmatpush1.msra.mxu0 0.0
      %809 = vmatprep.subr.mxu0 0.0
      %810 = vmatpush1.msra.mxu0 0.0
      %811 = vmatprep.subr.mxu0 0.0
      %812 = vmatpush1.msra.mxu0 0.0
      %813 = vmatprep.subr.mxu0 0.0
      %814 = vmatpush1.msra.mxu0 0.0
      %815 = vmatprep.subr.mxu0 0.0
      %816 = vmatpush1.msra.mxu0 0.0
      %817 = vmatprep.subr.mxu0 0.0
      %818 = vmatpush1.msra.mxu0 0.0
      %819 = vmatprep.subr.mxu0 0.0
      %820 = vmatpush1.msra.mxu0 0.0
      %821 = vmatprep.subr.mxu0 0.0
      %822 = vmatpush1.msra.mxu0 0.0
      %823 = vmatprep.subr.mxu0 0.0
      %824 = vmatpush1.msra.mxu0 0.0
      %825 = vmatprep.subr.mxu0 0.0
      %826 = vmatpush1.msra.mxu0 0.0
      %827 = vmatprep.subr.mxu0 0.0
      %828 = vmatpush1.msra.mxu0 0.0
      %829 = vmatprep.subr.mxu0 0.0
      %830 = vmatpush1.msra.mxu0 0.0
      %831 = vmatprep.subr.mxu0 0.0
      %832 = vmatpush1.msra.mxu0 0.0
      %833 = vmatprep.subr.mxu0 0.0
      %834 = vmatpush1.msra.mxu0 0.0
      %835 = vmatprep.subr.mxu0 0.0
      %836 = vmatpush1.msra.mxu0 0.0
      %837 = vmatprep.subr.mxu0 0.0
      %838 = vmatpush1.msra.mxu0 0.0
      %839 = vmatprep.mubr.f32.mxu0 0.0
      %840 = vmatmul.mubr.f32.gmra.mrb[0].mxu0 %v773
      %v841 = vpop.f32.mrb[0].mxu0
      %v842 = vadd.f32 0.0, %v841
      %v843 = vpop.f32.mrb[0].mxu0
      %844 = vdwg.mxu0
      %v845 = vadd.f32 %v765, %v842
      %v846 = vld [vmem:[#allocation2 + $0x7] sm:$0xff]
      %s847 = scalar_lea.vmem %s1, 224
      %v848 = vld [vmem:[%s847] sm:$0xff]
      %v849 = vld [vmem:[%s847 + $0x8] sm:$0xff]
      %v850 = vld [vmem:[%s847 + $0x10] sm:$0xff]
      %v851 = vld [vmem:[%s847 + $0x18] sm:$0xff]
      %v853 = vsel %vm275, %v846, 0
      %855 = vmatprep.subr.mxu0 0.0
      %856 = vmatpush1.msra.mxu0 %v848
      %857 = vmatprep.subr.mxu0 0.0
      %858 = vmatpush1.msra.mxu0 %v849
      %859 = vmatprep.subr.mxu0 0.0
      %860 = vmatpush1.msra.mxu0 %v850
      %861 = vmatprep.subr.mxu0 0.0
      %862 = vmatpush1.msra.mxu0 %v851
      %863 = vmatprep.subr.mxu0 0.0
      %864 = vmatpush1.msra.mxu0 0.0
      %865 = vmatprep.subr.mxu0 0.0
      %866 = vmatpush1.msra.mxu0 0.0
      %867 = vmatprep.subr.mxu0 0.0
      %868 = vmatpush1.msra.mxu0 0.0
      %869 = vmatprep.subr.mxu0 0.0
      %870 = vmatpush1.msra.mxu0 0.0
      %871 = vmatprep.subr.mxu0 0.0
      %872 = vmatpush1.msra.mxu0 0.0
      %873 = vmatprep.subr.mxu0 0.0
      %874 = vmatpush1.msra.mxu0 0.0
      %875 = vmatprep.subr.mxu0 0.0
      %876 = vmatpush1.msra.mxu0 0.0
      %877 = vmatprep.subr.mxu0 0.0
      %878 = vmatpush1.msra.mxu0 0.0
      %879 = vmatprep.subr.mxu0 0.0
      %880 = vmatpush1.msra.mxu0 0.0
      %881 = vmatprep.subr.mxu0 0.0
      %882 = vmatpush1.msra.mxu0 0.0
      %883 = vmatprep.subr.mxu0 0.0
      %884 = vmatpush1.msra.mxu0 0.0
      %885 = vmatprep.subr.mxu0 0.0
      %886 = vmatpush1.msra.mxu0 0.0
      %887 = vmatprep.subr.mxu0 0.0
      %888 = vmatpush1.msra.mxu0 0.0
      %889 = vmatprep.subr.mxu0 0.0
      %890 = vmatpush1.msra.mxu0 0.0
      %891 = vmatprep.subr.mxu0 0.0
      %892 = vmatpush1.msra.mxu0 0.0
      %893 = vmatprep.subr.mxu0 0.0
      %894 = vmatpush1.msra.mxu0 0.0
      %895 = vmatprep.subr.mxu0 0.0
      %896 = vmatpush1.msra.mxu0 0.0
      %897 = vmatprep.subr.mxu0 0.0
      %898 = vmatpush1.msra.mxu0 0.0
      %899 = vmatprep.subr.mxu0 0.0
      %900 = vmatpush1.msra.mxu0 0.0
      %901 = vmatprep.subr.mxu0 0.0
      %902 = vmatpush1.msra.mxu0 0.0
      %903 = vmatprep.subr.mxu0 0.0
      %904 = vmatpush1.msra.mxu0 0.0
      %905 = vmatprep.subr.mxu0 0.0
      %906 = vmatpush1.msra.mxu0 0.0
      %907 = vmatprep.subr.mxu0 0.0
      %908 = vmatpush1.msra.mxu0 0.0
      %909 = vmatprep.subr.mxu0 0.0
      %910 = vmatpush1.msra.mxu0 0.0
      %911 = vmatprep.subr.mxu0 0.0
      %912 = vmatpush1.msra.mxu0 0.0
      %913 = vmatprep.subr.mxu0 0.0
      %914 = vmatpush1.msra.mxu0 0.0
      %915 = vmatprep.subr.mxu0 0.0
      %916 = vmatpush1.msra.mxu0 0.0
      %917 = vmatprep.subr.mxu0 0.0
      %918 = vmatpush1.msra.mxu0 0.0
      %919 = vmatprep.mubr.f32.mxu0 0.0
      %920 = vmatmul.mubr.f32.gmra.mrb[0].mxu0 %v853
      %v921 = vpop.f32.mrb[0].mxu0
      %v922 = vadd.f32 0.0, %v921
      %v923 = vpop.f32.mrb[0].mxu0
      %924 = vdwg.mxu0
      %v925 = vadd.f32 %v845, %v922
      %v926 = vld [vmem:[#allocation2 + $0x8] sm:$0xff]
      %s927 = scalar_lea.vmem %s1, 256
      %v928 = vld [vmem:[%s927] sm:$0xff]
      %v929 = vld [vmem:[%s927 + $0x8] sm:$0xff]
      %v930 = vld [vmem:[%s927 + $0x10] sm:$0xff]
      %v931 = vld [vmem:[%s927 + $0x18] sm:$0xff]
      %v933 = vsel %vm275, %v926, 0
      %935 = vmatprep.subr.mxu0 0.0
      %936 = vmatpush1.msra.mxu0 %v928
      %937 = vmatprep.subr.mxu0 0.0
      %938 = vmatpush1.msra.mxu0 %v929
      %939 = vmatprep.subr.mxu0 0.0
      %940 = vmatpush1.msra.mxu0 %v930
      %941 = vmatprep.subr.mxu0 0.0
      %942 = vmatpush1.msra.mxu0 %v931
      %943 = vmatprep.subr.mxu0 0.0
      %944 = vmatpush1.msra.mxu0 0.0
      %945 = vmatprep.subr.mxu0 0.0
      %946 = vmatpush1.msra.mxu0 0.0
      %947 = vmatprep.subr.mxu0 0.0
      %948 = vmatpush1.msra.mxu0 0.0
      %949 = vmatprep.subr.mxu0 0.0
      %950 = vmatpush1.msra.mxu0 0.0
      %951 = vmatprep.subr.mxu0 0.0
      %952 = vmatpush1.msra.mxu0 0.0
      %953 = vmatprep.subr.mxu0 0.0
      %954 = vmatpush1.msra.mxu0 0.0
      %955 = vmatprep.subr.mxu0 0.0
      %956 = vmatpush1.msra.mxu0 0.0
      %957 = vmatprep.subr.mxu0 0.0
      %958 = vmatpush1.msra.mxu0 0.0
      %959 = vmatprep.subr.mxu0 0.0
      %960 = vmatpush1.msra.mxu0 0.0
      %961 = vmatprep.subr.mxu0 0.0
      %962 = vmatpush1.msra.mxu0 0.0
      %963 = vmatprep.subr.mxu0 0.0
      %964 = vmatpush1.msra.mxu0 0.0
      %965 = vmatprep.subr.mxu0 0.0
      %966 = vmatpush1.msra.mxu0 0.0
      %967 = vmatprep.subr.mxu0 0.0
      %968 = vmatpush1.msra.mxu0 0.0
      %969 = vmatprep.subr.mxu0 0.0
      %970 = vmatpush1.msra.mxu0 0.0
      %971 = vmatprep.subr.mxu0 0.0
      %972 = vmatpush1.msra.mxu0 0.0
      %973 = vmatprep.subr.mxu0 0.0
      %974 = vmatpush1.msra.mxu0 0.0
      %975 = vmatprep.subr.mxu0 0.0
      %976 = vmatpush1.msra.mxu0 0.0
      %977 = vmatprep.subr.mxu0 0.0
      %978 = vmatpush1.msra.mxu0 0.0
      %979 = vmatprep.subr.mxu0 0.0
      %980 = vmatpush1.msra.mxu0 0.0
      %981 = vmatprep.subr.mxu0 0.0
      %982 = vmatpush1.msra.mxu0 0.0
      %983 = vmatprep.subr.mxu0 0.0
      %984 = vmatpush1.msra.mxu0 0.0
      %985 = vmatprep.subr.mxu0 0.0
      %986 = vmatpush1.msra.mxu0 0.0
      %987 = vmatprep.subr.mxu0 0.0
      %988 = vmatpush1.msra.mxu0 0.0
      %989 = vmatprep.subr.mxu0 0.0
      %990 = vmatpush1.msra.mxu0 0.0
      %991 = vmatprep.subr.mxu0 0.0
      %992 = vmatpush1.msra.mxu0 0.0
      %993 = vmatprep.subr.mxu0 0.0
      %994 = vmatpush1.msra.mxu0 0.0
      %995 = vmatprep.subr.mxu0 0.0
      %996 = vmatpush1.msra.mxu0 0.0
      %997 = vmatprep.subr.mxu0 0.0
      %998 = vmatpush1.msra.mxu0 0.0
      %999 = vmatprep.mubr.f32.mxu0 0.0
      %1000 = vmatmul.mubr.f32.gmra.mrb[0].mxu0 %v933
      %v1001 = vpop.f32.mrb[0].mxu0
      %v1002 = vadd.f32 0.0, %v1001
      %v1003 = vpop.f32.mrb[0].mxu0
      %1004 = vdwg.mxu0
      %v1005 = vadd.f32 %v925, %v1002
      %v1006 = vmax.f32 %v1005, 0.0
      %v1007 = vld [vmem:[%s3] sm:$0xff]
      %v1008 = vld [vmem:[%s3 + $0x8] sm:$0xff]
      %v1009 = vld [vmem:[%s3 + $0x10] sm:$0xff]
      %v1010 = vld [vmem:[%s3 + $0x18] sm:$0xff]
      %v1011 = vld [vmem:[%s3 + $0x20] sm:$0xff]
      %v1012 = vld [vmem:[%s3 + $0x28] sm:$0xff]
      %v1013 = vld [vmem:[%s3 + $0x30] sm:$0xff]
      %v1014 = vld [vmem:[%s3 + $0x38] sm:$0xff]
      %v1015 = vld [vmem:[%s4] sm:$0x1]
      %v1017 = vlaneseq
      %v1018 = vshrl.u32 %v1017, 7
      %v1019 = vsub.s32 0, %v1018
      %v1020 = vrot.slane %v1015, %v1019
      %vm1022 = vcmask 523264
      %v1024 = vsel %vm1022, %v1006, 0
      %1026 = vmatprep.subr.mxu0 0.0
      %1027 = vmatpush1.msra.mxu0 %v1007
      %1028 = vmatprep.subr.mxu0 0.0
      %1029 = vmatpush1.msra.mxu0 %v1008
      %1030 = vmatprep.subr.mxu0 0.0
      %1031 = vmatpush1.msra.mxu0 %v1009
      %1032 = vmatprep.subr.mxu0 0.0
      %1033 = vmatpush1.msra.mxu0 %v1010
      %1034 = vmatprep.subr.mxu0 0.0
      %1035 = vmatpush1.msra.mxu0 %v1011
      %1036 = vmatprep.subr.mxu0 0.0
      %1037 = vmatpush1.msra.mxu0 %v1012
      %1038 = vmatprep.subr.mxu0 0.0
      %1039 = vmatpush1.msra.mxu0 %v1013
      %1040 = vmatprep.subr.mxu0 0.0
      %1041 = vmatpush1.msra.mxu0 %v1014
      %1042 = vmatprep.subr.mxu0 0.0
      %1043 = vmatpush1.msra.mxu0 0.0
      %1044 = vmatprep.subr.mxu0 0.0
      %1045 = vmatpush1.msra.mxu0 0.0
      %1046 = vmatprep.subr.mxu0 0.0
      %1047 = vmatpush1.msra.mxu0 0.0
      %1048 = vmatprep.subr.mxu0 0.0
      %1049 = vmatpush1.msra.mxu0 0.0
      %1050 = vmatprep.subr.mxu0 0.0
      %1051 = vmatpush1.msra.mxu0 0.0
      %1052 = vmatprep.subr.mxu0 0.0
      %1053 = vmatpush1.msra.mxu0 0.0
      %1054 = vmatprep.subr.mxu0 0.0
      %1055 = vmatpush1.msra.mxu0 0.0
      %1056 = vmatprep.subr.mxu0 0.0
      %1057 = vmatpush1.msra.mxu0 0.0
      %1058 = vmatprep.subr.mxu0 0.0
      %1059 = vmatpush1.msra.mxu0 0.0
      %1060 = vmatprep.subr.mxu0 0.0
      %1061 = vmatpush1.msra.mxu0 0.0
      %1062 = vmatprep.subr.mxu0 0.0
      %1063 = vmatpush1.msra.mxu0 0.0
      %1064 = vmatprep.subr.mxu0 0.0
      %1065 = vmatpush1.msra.mxu0 0.0
      %1066 = vmatprep.subr.mxu0 0.0
      %1067 = vmatpush1.msra.mxu0 0.0
      %1068 = vmatprep.subr.mxu0 0.0
      %1069 = vmatpush1.msra.mxu0 0.0
      %1070 = vmatprep.subr.mxu0 0.0
      %1071 = vmatpush1.msra.mxu0 0.0
      %1072 = vmatprep.subr.mxu0 0.0
      %1073 = vmatpush1.msra.mxu0 0.0
      %1074 = vmatprep.subr.mxu0 0.0
      %1075 = vmatpush1.msra.mxu0 0.0
      %1076 = vmatprep.subr.mxu0 0.0
      %1077 = vmatpush1.msra.mxu0 0.0
      %1078 = vmatprep.subr.mxu0 0.0
      %1079 = vmatpush1.msra.mxu0 0.0
      %1080 = vmatprep.subr.mxu0 0.0
      %1081 = vmatpush1.msra.mxu0 0.0
      %1082 = vmatprep.subr.mxu0 0.0
      %1083 = vmatpush1.msra.mxu0 0.0
      %1084 = vmatprep.subr.mxu0 0.0
      %1085 = vmatpush1.msra.mxu0 0.0
      %1086 = vmatprep.subr.mxu0 0.0
      %1087 = vmatpush1.msra.mxu0 0.0
      %1088 = vmatprep.subr.mxu0 0.0
      %1089 = vmatpush1.msra.mxu0 0.0
      %1090 = vmatprep.mubr.f32.mxu0 0.0
      %1091 = vmatmul.mubr.f32.gmra.mrb[0].mxu0 %v1024
      %v1092 = vpop.f32.mrb[0].mxu0
      %v1093 = vadd.f32 %v1020, %v1092
      %v1094 = vpop.f32.mrb[0].mxu0
      %1095 = vdwg.mxu0
      %v1096 = vadd.f32 %v1093, %v274
      %v1097 = vld [vmem:[%s5] sm:$0x1]
      %v1098 = vld [vmem:[%s6] sm:$0x1]
      %v1099 = vsel %vm275, %v1096, 0.0
      %1100 = vadd.xlane.f32.xlu0 %v1099
      %v1101 = vpop.xlane.xlu0 %1100
      %v1102 = vrcp.pop 32.0
      %v1103 = vmul.f32 %v1101, %v1102
      %v1104 = vsub.f32 %v1096, %v1103
      %v1105 = vmul.f32 %v1104, %v1104
      %v1106 = vsel %vm275, %v1105, 0.0
      %1107 = vadd.xlane.f32.xlu0 %v1106
      %v1108 = vpop.xlane.xlu0 %1107
      %v1109 = vmul.f32 %v1108, %v1102
      %v1110 = vadd.f32 %v1109, 1e-05
      %v1111 = vrsqrt.pop %v1110
      %v1112 = vmul.f32 %v1104, %v1111
      %v1114 = vlaneseq
      %v1115 = vshrl.u32 %v1114, 7
      %v1116 = vsub.s32 0, %v1115
      %v1117 = vrot.slane %v1097, %v1116
      %v1119 = vmul.f32 %v1112, %v1117
      %v1121 = vlaneseq
      %v1122 = vshrl.u32 %v1121, 7
      %v1123 = vsub.s32 0, %v1122
      %v1124 = vrot.slane %v1098, %v1123
      %v1126 = vadd.f32 %v1119, %v1124
      %1127 = vst.msk [vmem:[%s273] sm:$0xff] %vm275, %v1126
      %p1128 = scmp.lt.s32.totalorder %s18, 1
      %s1129 = scalar_select %p1128, %s18, 1
      %s1130 = smul.addr %s1129, 8
      %s1131 = scalar_lea.vmem %s7, %s1130
      // Predicated region
      $region49: #{model_forward.13} parent=47 // pred_check
        %p1132 = pneg %p188
      $region50: #{model_forward.13} parent=47 // pred_check_branch
        %1134 = sbr.rel (%p1132) target = $region52
      $region51: #{model_forward.13} parent=47 // pred_region
        _
      $region52: #{model_forward.13} parent=47 // pred_fallthru
        _
    $region48: #{model_forward.13} parent=5 // pred_fallthru
      _
    %p1135 = scmp.le.s32.totalorder 2, %s13
    // Predicated region
    $region53: #{model_forward.13} parent=5 // pred_check
      %p1136 = pneg %p1135
    $region54: #{model_forward.13} parent=5 // pred_check_branch
      %1138 = sbr.rel (%p1136) target = $region56
    $region55: #{model_forward.13} parent=5 // pred_region
      %s1139 = ssub.s32 %s13, 2
      // Predicated region
      $region57: #{model_forward.13} parent=55 // pred_check
        %p1140 = pneg %p194
      $region58: #{model_forward.13} parent=55 // pred_check_branch
        %1142 = sbr.rel (%p1140) target = $region60
      $region59: #{model_forward.13} parent=55 // pred_region
        %p1143 = scmp.lt.s32.totalorder %s19, 1
        %s1144 = scalar_select %p1143, %s19, 1
        %s1145 = smul.addr %s1144, 8
        %s1146 = scalar_lea.vmem %s7, %s1145
      $region60: #{model_forward.13} parent=55 // pred_fallthru
        _
    $region56: #{model_forward.13} parent=5 // pred_fallthru
      _
  $region6: #{model_forward.13} parent=0 // loop_footer
    %s17 = sadd.s32 1, %s13
  $region7: #{model_forward.13} parent=0 // loop_footer_branch
    %12 = sbr.rel target = $region3
  $region8: #{model_forward.13} parent=0 // loop_exit
    _

// kernel: model_forward.23
$region0: #{model_forward.23}
  #allocation0 [shape = 'u32[]', space=smem, size = 0x4, offset = 0x4, fixed_abs, tag = 'smem constant byte address 0x4 - core index']
  #allocation1 [shape = 'u32[144,128]{1,0:T(1,128)}', space=vmem, size = 0x12000, scoped, tag = 'internal scratch']
  %s0 = inlined_call_operand.vmem [shape: f32[24,32], index: 0, kind: input, shape index: {}]
  %s1 = inlined_call_operand.vmem [shape: f32[32,16], index: 1, kind: input, shape index: {}]
  %s2 = inlined_call_operand.vmem [shape: f32[1,16], index: 2, kind: input, shape index: {}]
  %s3 = inlined_call_operand.vmem [shape: f32[24,16], index: 3, kind: output, shape index: {}]
  %s4 = sld [smem:[#allocation0]]
  $region22: #{model_forward.23} parent=0
    _
  %s6 = ssub.s32 1, %s4
  %s7 = scalar_select 0, %s6, %s4
  // Predicated region
  $region2: #{model_forward.23} parent=0 // pred_check
    _
  $region3: #{model_forward.23} parent=0 // pred_check_branch
    %9 = sbr.rel (0) target = $region5
  $region4: #{model_forward.23} parent=0 // pred_region
    _
  $region5: #{model_forward.23} parent=0 // pred_fallthru
    _
  // Predicated region
  $region6: #{model_forward.23} parent=0 // pred_check
    _
  $region7: #{model_forward.23} parent=0 // pred_check_branch
    %11 = sbr.rel (0) target = $region9
  $region8: #{model_forward.23} parent=0 // pred_region
    _
  $region9: #{model_forward.23} parent=0 // pred_fallthru
    _
  // Predicated region
  $region10: #{model_forward.23} parent=0 // pred_check
    _
  $region11: #{model_forward.23} parent=0 // pred_check_branch
    %13 = sbr.rel (0) target = $region13
  $region12: #{model_forward.23} parent=0 // pred_region
    _
  $region13: #{model_forward.23} parent=0 // pred_fallthru
    _
  %v14 = vld [vmem:[%s0] sm:$0xff]
  %v15 = vld [vmem:[%s0 + $0x8] sm:$0xff]
  %v16 = vld [vmem:[%s0 + $0x10] sm:$0xff]
  %v17 = vld [vmem:[%s1] sm:$0xff]
  %v18 = vld [vmem:[%s1 + $0x8] sm:$0xff]
  %v19 = vld [vmem:[%s1 + $0x10] sm:$0xff]
  %v20 = vld [vmem:[%s1 + $0x18] sm:$0xff]
  %v21 = vld [vmem:[%s2] sm:$0x1]
  %v23 = vlaneseq
  %v24 = vshrl.u32 %v23, 7
  %v25 = vsub.s32 0, %v24
  %v26 = vrot.slane %v21, %v25
  %vm28 = vcmask 261120
  %v30 = vsel %vm28, %v14, 0
  %v33 = vsel %vm28, %v15, 0
  %v36 = vsel %vm28, %v16, 0
  %38 = vmatprep.subr.mxu0 0.0
  %39 = vmatpush1.msra.mxu0 %v17
  %40 = vmatprep.subr.mxu0 0.0
  %41 = vmatpush1.msra.mxu0 %v18
  %42 = vmatprep.subr.mxu0 0.0
  %43 = vmatpush1.msra.mxu0 %v19
  %44 = vmatprep.subr.mxu0 0.0
  %45 = vmatpush1.msra.mxu0 %v20
  %46 = vmatprep.subr.mxu0 0.0
  %47 = vmatpush1.msra.mxu0 0.0
  %48 = vmatprep.subr.mxu0 0.0
  %49 = vmatpush1.msra.mxu0 0.0
  %50 = vmatprep.subr.mxu0 0.0
  %51 = vmatpush1.msra.mxu0 0.0
  %52 = vmatprep.subr.mxu0 0.0
  %53 = vmatpush1.msra.mxu0 0.0
  %54 = vmatprep.subr.mxu0 0.0
  %55 = vmatpush1.msra.mxu0 0.0
  %56 = vmatprep.subr.mxu0 0.0
  %57 = vmatpush1.msra.mxu0 0.0
  %58 = vmatprep.subr.mxu0 0.0
  %59 = vmatpush1.msra.mxu0 0.0
  %60 = vmatprep.subr.mxu0 0.0
  %61 = vmatpush1.msra.mxu0 0.0
  %62 = vmatprep.subr.mxu0 0.0
  %63 = vmatpush1.msra.mxu0 0.0
  %64 = vmatprep.subr.mxu0 0.0
  %65 = vmatpush1.msra.mxu0 0.0
  %66 = vmatprep.subr.mxu0 0.0
  %67 = vmatpush1.msra.mxu0 0.0
  %68 = vmatprep.subr.mxu0 0.0
  %69 = vmatpush1.msra.mxu0 0.0
  %70 = vmatprep.subr.mxu0 0.0
  %71 = vmatpush1.msra.mxu0 0.0
  %72 = vmatprep.subr.mxu0 0.0
  %73 = vmatpush1.msra.mxu0 0.0
  %74 = vmatprep.subr.mxu0 0.0
  %75 = vmatpush1.msra.mxu0 0.0
  %76 = vmatprep.subr.mxu0 0.0
  %77 = vmatpush1.msra.mxu0 0.0
  %78 = vmatprep.subr.mxu0 0.0
  %79 = vmatpush1.msra.mxu0 0.0
  %80 = vmatprep.subr.mxu0 0.0
  %81 = vmatpush1.msra.mxu0 0.0
  %82 = vmatprep.subr.mxu0 0.0
  %83 = vmatpush1.msra.mxu0 0.0
  %84 = vmatprep.subr.mxu0 0.0
  %85 = vmatpush1.msra.mxu0 0.0
  %86 = vmatprep.subr.mxu0 0.0
  %87 = vmatpush1.msra.mxu0 0.0
  %88 = vmatprep.subr.mxu0 0.0
  %89 = vmatpush1.msra.mxu0 0.0
  %90 = vmatprep.subr.mxu0 0.0
  %91 = vmatpush1.msra.mxu0 0.0
  %92 = vmatprep.subr.mxu0 0.0
  %93 = vmatpush1.msra.mxu0 0.0
  %94 = vmatprep.subr.mxu0 0.0
  %95 = vmatpush1.msra.mxu0 0.0
  %96 = vmatprep.subr.mxu0 0.0
  %97 = vmatpush1.msra.mxu0 0.0
  %98 = vmatprep.subr.mxu0 0.0
  %99 = vmatpush1.msra.mxu0 0.0
  %100 = vmatprep.subr.mxu0 0.0
  %101 = vmatpush1.msra.mxu0 0.0
  %102 = vmatprep.mubr.f32.mxu0 0.0
  %103 = vmatmul.mubr.f32.gmra.mrb[0].mxu0 %v30
  %v104 = vpop.f32.mrb[0].mxu0
  %v105 = vadd.f32 %v26, %v104
  %v106 = vpop.f32.mrb[0].mxu0
  %107 = vmatprep.mubr.f32.mxu0 0.0
  %108 = vmatmul.mubr.f32.gmra.mrb[0].mxu0 %v33
  %v109 = vpop.f32.mrb[0].mxu0
  %v110 = vadd.f32 %v26, %v109
  %v111 = vpop.f32.mrb[0].mxu0
  %112 = vmatprep.mubr.f32.mxu0 0.0
  %113 = vmatmul.mubr.f32.gmra.mrb[0].mxu0 %v36
  %v114 = vpop.f32.mrb[0].mxu0
  %v115 = vadd.f32 %v26, %v114
  %v116 = vpop.f32.mrb[0].mxu0
  %117 = vdwg.mxu0
  %vm118 = vcmask 130048
  %119 = vst.msk [vmem:[%s3] sm:$0xff] %vm118, %v105
  %120 = vst.msk [vmem:[%s3 + $0x8] sm:$0xff] %vm118, %v110
  %121 = vst.msk [vmem:[%s3 + $0x10] sm:$0xff] %vm118, %v115
  // Predicated region
  $region14: #{model_forward.23} parent=0 // pred_check
    _
  $region15: #{model_forward.23} parent=0 // pred_check_branch
    %123 = sbr.rel (0) target = $region17
  $region16: #{model_forward.23} parent=0 // pred_region
    _
  $region17: #{model_forward.23} parent=0 // pred_fallthru
    _
  // Predicated region
  $region18: #{model_forward.23} parent=0 // pred_check
    _
  $region19: #{model_forward.23} parent=0 // pred_check_branch
    %125 = sbr.rel (0) target = $region21
  $region20: #{model_forward.23} parent=0 // pred_region
    _
  $region21: #{model_forward.23} parent=0 // pred_fallthru
    _

// kernel: model_forward.20
$region0: #{model_forward.20}
  #allocation0 [shape = 'u32[]', space=smem, size = 0x4, offset = 0x4, fixed_abs, tag = 'smem constant byte address 0x4 - core index']
  #allocation1 [shape = 'u32[144,128]{1,0:T(1,128)}', space=vmem, size = 0x12000, scoped, tag = 'internal scratch']
  #allocation2 [shape = 'f32[20,32]{1,0:T(8,128)}', space=vmem, size = 0x3000, scoped, tag = 'scratch operand']
  %s0 = inlined_call_operand.vmem [shape: f32[2,12,32], index: 0, kind: input, shape index: {}]
  %s1 = inlined_call_operand.vmem [shape: f32[9,32,64], index: 1, kind: input, shape index: {}]
  %s2 = inlined_call_operand.vmem [shape: f32[1,64], index: 2, kind: input, shape index: {}]
  %s3 = inlined_call_operand.vmem [shape: f32[64,32], index: 3, kind: input, shape index: {}]
  %s4 = inlined_call_operand.vmem [shape: f32[1,32], index: 4, kind: input, shape index: {}]
  %s5 = inlined_call_operand.vmem [shape: f32[1,32], index: 5, kind: input, shape index: {}]
  %s6 = inlined_call_operand.vmem [shape: f32[1,32], index: 6, kind: input, shape index: {}]
  %s7 = inlined_call_operand.vmem [shape: f32[2,12,32], index: 7, kind: output, shape index: {}]
  %s8 = sld [smem:[#allocation0]]
  $region61: #{model_forward.20} parent=0
    _
  %s10 = ssub.s32 1, %s8
  %s11 = scalar_select 0, %s10, %s8
  loop: start=0, step=1, limit=4
  $region2: #{model_forward.20} parent=0 // loop_pre_header
    _
  $region3: #{model_forward.20} parent=0 // loop_header
    %s13 = sphi 0, %s17
    %p14 = scmp.ge.s32.totalorder %s13, 4
    %s23 = sphi 0, %s25
    %s26 = sphi 0, %s23
    %s27 = sphi 0, %s26
    %s43 = sphi 0, %s27
    %s47 = sphi 0, %s47
    %s49 = sphi 0, %s47
    %s50 = sphi 0, %s49
    %s64 = sphi 0, %s50
    %s68 = sphi 0, %s68
    %s70 = sphi 0, %s68
    %s71 = sphi 0, %s70
    %s85 = sphi 0, %s71
    %s89 = sphi 0, %s89
    %s91 = sphi 0, %s89
    %s92 = sphi 0, %s91
    %s106 = sphi 0, %s92
    %s110 = sphi 0, %s110
    %s112 = sphi 0, %s110
    %s113 = sphi 0, %s112
    %s127 = sphi 0, %s113
    %s131 = sphi 0, %s131
    %s133 = sphi 0, %s131
    %s134 = sphi 0, %s133
    %s148 = sphi 0, %s134
    %s152 = sphi 0, %s152
    %s154 = sphi 0, %s152
    %s155 = sphi 0, %s154
    %s169 = sphi 0, %s155
    %s175 = sphi 0, %s177
    %s178 = sphi 0, %s175
    %s179 = sphi 0, %s178
    %s195 = sphi 0, %s179
  $region4: #{model_forward.20} parent=0 // loop_header_branch
    %16 = sbr.rel (%p14) target = $region8
  $region5: #{model_forward.20} parent=0 // loop_body
    %s18 = ssub.s32 %s13, 1
    %s19 = ssub.s32 %s13, 2
    %s20 = sadd.s32 %s13, 1
    %s21 = ssub.s32 %s13, %s20
    %p22 = scmp.eq.s32.totalorder %s21, 0
    %s24 = sadd.s32 %s23, 1
    %s25 = scalar_select %p22, %s23, %s24
    %p28 = pneg %p22
    %p29 = scmp.eq.s32.totalorder %s13, 1
    %p30 = por %p28, %p29
    %p31 = scmp.ne.s32.totalorder %s23, %s26
    %p32 = scmp.eq.s32.totalorder %s13, 0
    %p33 = por %p31, %p32
    %p34 = scmp.ne.s32.totalorder %s23, %s26
    %p35 = scmp.eq.s32.totalorder %s18, 1
    %p36 = por %p34, %p35
    %p37 = scmp.ne.s32.totalorder %s26, %s27
    %p38 = scmp.eq.s32.totalorder %s18, 0
    %p39 = por %p37, %p38
    %p40 = scmp.ne.s32.totalorder %s26, %s27
    %p41 = scmp.eq.s32.totalorder %s19, 1
    %p42 = por %p40, %p41
    %p44 = scmp.ne.s32.totalorder %s27, %s43
    %p45 = scmp.eq.s32.totalorder %s19, 0
    %p46 = por %p44, %p45
    %s48 = sadd.s32 %s47, 1
    %p51 = scmp.eq.s32.totalorder %s13, 1
    %p52 = scmp.ne.s32.totalorder %s47, %s49
    %p53 = scmp.eq.s32.totalorder %s13, 0
    %p54 = por %p52, %p53
    %p55 = scmp.ne.s32.totalorder %s47, %s49
    %p56 = scmp.eq.s32.totalorder %s18, 1
    %p57 = por %p55, %p56
    %p58 = scmp.ne.s32.totalorder %s49, %s50
    %p59 = scmp.eq.s32.totalorder %s18, 0
    %p60 = por %p58, %p59
    %p61 = scmp.ne.s32.totalorder %s49, %s50
    %p62 = scmp.eq.s32.totalorder %s19, 1
    %p63 = por %p61, %p62
    %p65 = scmp.ne.s32.totalorder %s50, %s64
    %p66 = scmp.eq.s32.totalorder %s19, 0
    %p67 = por %p65, %p66
    %s69 = sadd.s32 %s68, 1
    %p72 = scmp.eq.s32.totalorder %s13, 1
    %p73 = scmp.ne.s32.totalorder %s68, %s70
    %p74 = scmp.eq.s32.totalorder %s13, 0
    %p75 = por %p73, %p74
    %p76 = scmp.ne.s32.totalorder %s68, %s70
    %p77 = scmp.eq.s32.totalorder %s18, 1
    %p78 = por %p76, %p77
    %p79 = scmp.ne.s32.totalorder %s70, %s71
    %p80 = scmp.eq.s32.totalorder %s18, 0
    %p81 = por %p79, %p80
    %p82 = scmp.ne.s32.totalorder %s70, %s71
    %p83 = scmp.eq.s32.totalorder %s19, 1
    %p84 = por %p82, %p83
    %p86 = scmp.ne.s32.totalorder %s71, %s85
    %p87 = scmp.eq.s32.totalorder %s19, 0
    %p88 = por %p86, %p87
    %s90 = sadd.s32 %s89, 1
    %p93 = scmp.eq.s32.totalorder %s13, 1
    %p94 = scmp.ne.s32.totalorder %s89, %s91
    %p95 = scmp.eq.s32.totalorder %s13, 0
    %p96 = por %p94, %p95
    %p97 = scmp.ne.s32.totalorder %s89, %s91
    %p98 = scmp.eq.s32.totalorder %s18, 1
    %p99 = por %p97, %p98
    %p100 = scmp.ne.s32.totalorder %s91, %s92
    %p101 = scmp.eq.s32.totalorder %s18, 0
    %p102 = por %p100, %p101
    %p103 = scmp.ne.s32.totalorder %s91, %s92
    %p104 = scmp.eq.s32.totalorder %s19, 1
    %p105 = por %p103, %p104
    %p107 = scmp.ne.s32.totalorder %s92, %s106
    %p108 = scmp.eq.s32.totalorder %s19, 0
    %p109 = por %p107, %p108
    %s111 = sadd.s32 %s110, 1
    %p114 = scmp.eq.s32.totalorder %s13, 1
    %p115 = scmp.ne.s32.totalorder %s110, %s112
    %p116 = scmp.eq.s32.totalorder %s13, 0
    %p117 = por %p115, %p116
    %p118 = scmp.ne.s32.totalorder %s110, %s112
    %p119 = scmp.eq.s32.totalorder %s18, 1
    %p120 = por %p118, %p119
    %p121 = scmp.ne.s32.totalorder %s112, %s113
    %p122 = scmp.eq.s32.totalorder %s18, 0
    %p123 = por %p121, %p122
    %p124 = scmp.ne.s32.totalorder %s112, %s113
    %p125 = scmp.eq.s32.totalorder %s19, 1
    %p126 = por %p124, %p125
    %p128 = scmp.ne.s32.totalorder %s113, %s127
    %p129 = scmp.eq.s32.totalorder %s19, 0
    %p130 = por %p128, %p129
    %s132 = sadd.s32 %s131, 1
    %p135 = scmp.eq.s32.totalorder %s13, 1
    %p136 = scmp.ne.s32.totalorder %s131, %s133
    %p137 = scmp.eq.s32.totalorder %s13, 0
    %p138 = por %p136, %p137
    %p139 = scmp.ne.s32.totalorder %s131, %s133
    %p140 = scmp.eq.s32.totalorder %s18, 1
    %p141 = por %p139, %p140
    %p142 = scmp.ne.s32.totalorder %s133, %s134
    %p143 = scmp.eq.s32.totalorder %s18, 0
    %p144 = por %p142, %p143
    %p145 = scmp.ne.s32.totalorder %s133, %s134
    %p146 = scmp.eq.s32.totalorder %s19, 1
    %p147 = por %p145, %p146
    %p149 = scmp.ne.s32.totalorder %s134, %s148
    %p150 = scmp.eq.s32.totalorder %s19, 0
    %p151 = por %p149, %p150
    %s153 = sadd.s32 %s152, 1
    %p156 = scmp.eq.s32.totalorder %s13, 1
    %p157 = scmp.ne.s32.totalorder %s152, %s154
    %p158 = scmp.eq.s32.totalorder %s13, 0
    %p159 = por %p157, %p158
    %p160 = scmp.ne.s32.totalorder %s152, %s154
    %p161 = scmp.eq.s32.totalorder %s18, 1
    %p162 = por %p160, %p161
    %p163 = scmp.ne.s32.totalorder %s154, %s155
    %p164 = scmp.eq.s32.totalorder %s18, 0
    %p165 = por %p163, %p164
    %p166 = scmp.ne.s32.totalorder %s154, %s155
    %p167 = scmp.eq.s32.totalorder %s19, 1
    %p168 = por %p166, %p167
    %p170 = scmp.ne.s32.totalorder %s155, %s169
    %p171 = scmp.eq.s32.totalorder %s19, 0
    %p172 = por %p170, %p171
    %s173 = ssub.s32 %s13, %s20
    %p174 = scmp.eq.s32.totalorder %s173, 0
    %s176 = sadd.s32 %s175, 1
    %s177 = scalar_select %p174, %s175, %s176
    %p180 = pneg %p174
    %p181 = scmp.eq.s32.totalorder %s13, 1
    %p182 = por %p180, %p181
    %p183 = scmp.ne.s32.totalorder %s175, %s178
    %p184 = scmp.eq.s32.totalorder %s13, 0
    %p185 = por %p183, %p184
    %p186 = scmp.ne.s32.totalorder %s175, %s178
    %p187 = scmp.eq.s32.totalorder %s18, 1
    %p188 = por %p186, %p187
    %p189 = scmp.ne.s32.totalorder %s178, %s179
    %p190 = scmp.eq.s32.totalorder %s18, 0
    %p191 = por %p189, %p190
    %p192 = scmp.ne.s32.totalorder %s178, %s179
    %p193 = scmp.eq.s32.totalorder %s19, 1
    %p194 = por %p192, %p193
    %p196 = scmp.ne.s32.totalorder %s179, %s195
    %p197 = scmp.eq.s32.totalorder %s19, 0
    %p198 = por %p196, %p197
    %p199 = scmp.le.s32.totalorder 1, %s13
    %p200 = scmp.lt.s32.totalorder %s13, 3
    %p201 = pnand %p199, %p200
    %p202 = pneg %p201
    // Predicated region
    $region9: #{model_forward.20} parent=5 // pred_check
      _
    $region10: #{model_forward.20} parent=5 // pred_check_branch
      %204 = sbr.rel (%p201) target = $region12
    $region11: #{model_forward.20} parent=5 // pred_region
      %s205 = ssub.s32 %s13, 1
      // Predicated region
      $region13: #{model_forward.20} parent=11 // pred_check
        %p206 = pneg %p60
      $region14: #{model_forward.20} parent=11 // pred_check_branch
        %208 = sbr.rel (%p206) target = $region16
      $region15: #{model_forward.20} parent=11 // pred_region
        _
      $region16: #{model_forward.20} parent=11 // pred_fallthru
        _
      // Predicated region
      $region17: #{model_forward.20} parent=11 // pred_check
        %p209 = pneg %p81
      $region18: #{model_forward.20} parent=11 // pred_check_branch
        %211 = sbr.rel (%p209) target = $region20
      $region19: #{model_forward.20} parent=11 // pred_region
        _
      $region20: #{model_forward.20} parent=11 // pred_fallthru
        _
      // Predicated region
      $region21: #{model_forward.20} parent=11 // pred_check
        %p212 = pneg %p102
      $region22: #{model_forward.20} parent=11 // pred_check_branch
        %214 = sbr.rel (%p212) target = $region24
      $region23: #{model_forward.20} parent=11 // pred_region
        _
      $region24: #{model_forward.20} parent=11 // pred_fallthru
        _
      // Predicated region
      $region25: #{model_forward.20} parent=11 // pred_check
        %p215 = pneg %p123
      $region26: #{model_forward.20} parent=11 // pred_check_branch
        %217 = sbr.rel (%p215) target = $region28
      $region27: #{model_forward.20} parent=11 // pred_region
        _
      $region28: #{model_forward.20} parent=11 // pred_fallthru
        _
      // Predicated region
      $region29: #{model_forward.20} parent=11 // pred_check
        %p218 = pneg %p144
      $region30: #{model_forward.20} parent=11 // pred_check_branch
        %220 = sbr.rel (%p218) target = $region32
      $region31: #{model_forward.20} parent=11 // pred_region
        _
      $region32: #{model_forward.20} parent=11 // pred_fallthru
        _
      // Predicated region
      $region33: #{model_forward.20} parent=11 // pred_check
        %p221 = pneg %p165
      $region34: #{model_forward.20} parent=11 // pred_check_branch
        %223 = sbr.rel (%p221) target = $region36
      $region35: #{model_forward.20} parent=11 // pred_region
        _
      $region36: #{model_forward.20} parent=11 // pred_fallthru
        _
    $region12: #{model_forward.20} parent=5 // pred_fallthru
      _
    %p224 = scmp.lt.s32.totalorder %s13, 2
    // Predicated region
    $region37: #{model_forward.20} parent=5 // pred_check
      %p225 = pneg %p224
    $region38: #{model_forward.20} parent=5 // pred_check_branch
      %227 = sbr.rel (%p225) target = $region40
    $region39: #{model_forward.20} parent=5 // pred_region
      // Predicated region
      $region41: #{model_forward.20} parent=39 // pred_check
        %p228 = pneg %p33
      $region42: #{model_forward.20} parent=39 // pred_check_branch
        %230 = sbr.rel (%p228) target = $region44
      $region43: #{model_forward.20} parent=39 // pred_region
        %p231 = scmp.lt.s32.totalorder %s13, 1
        %s232 = scalar_select %p231, %s13, 1
        %s233 = smul.addr %s232, 2
        %s234 = smul.addr %s233, 8
        %s235 = scalar_lea.vmem %s0, %s234
      $region44: #{model_forward.20} parent=39 // pred_fallthru
        _
    $region40: #{model_forward.20} parent=5 // pred_fallthru
      _
    %p236 = scmp.le.s32.totalorder 1, %s13
    %p237 = scmp.lt.s32.totalorder %s13, 3
    %p238 = pnand %p236, %p237
    %p239 = pneg %p238
    // Predicated region
    $region45: #{model_forward.20} parent=5 // pred_check
      _
    $region46: #{model_forward.20} parent=5 // pred_check_branch
      %241 = sbr.rel (%p238) target = $region48
    $region47: #{model_forward.20} parent=5 // pred_region
      %s242 = ssub.s32 %s13, 1
      %p243 = scmp.lt.s32.totalorder %s18, 1
      %s244 = scalar_select %p243, %s18, 1
      %s245 = smul.addr %s244, 2
      %s246 = smul.addr %s245, 8
      %s247 = scalar_lea.vmem %s0, %s246
      %p248 = pneg %p39
      %p249 = pneg %p36
      %p250 = pneg %p60
      %p251 = pneg %p57
      %p252 = pneg %p81
      %p253 = pneg %p78
      %p254 = pneg %p102
      %p255 = pneg %p99
      %p256 = pneg %p123
      %p257 = pneg %p120
      %p258 = pneg %p144
      %p259 = pneg %p141
      %p260 = pneg %p165
      %p261 = pneg %p162
      %p262 = pneg %p191
      %p263 = pneg %p188
      %p264 = scmp.lt.s32.totalorder %s18, 1
      %s265 = scalar_select %p264, %s18, 1
      %s266 = smul.addr %s265, 2
      %s267 = smul.addr %s266, 8
      %s268 = scalar_lea.vmem %s7, %s267
      %p269 = scmp.lt.s32.totalorder %s18, 1
      %s270 = scalar_select %p269, %s18, 1
      %s271 = smul.addr %s270, 2
      %s272 = smul.addr %s271, 8
      %s273 = scalar_lea.vmem %s0, %s272
      %p274 = scmp.lt.s32.totalorder %s18, 1
      %s275 = scalar_select %p274, %s18, 1
      %s276 = smul.addr %s275, 2
      %s277 = smul.addr %s276, 8
      %s278 = scalar_lea.vmem %s7, %s277
      %v279 = vld [vmem:[%s273] sm:$0xff]
      %v280 = vld [vmem:[%s273 + $0x8] sm:$0xf]
      %vm281 = vcmask 261120
      %282 = vst.msk [vmem:[#allocation2] sm:$0xff] %vm281, 0.0
      %283 = vst.msk [vmem:[#allocation2 + $0x8] sm:$0xff] %vm281, 0.0
      %vm284 = vcmask 257024
      %285 = vst.msk [vmem:[#allocation2 + $0x10] sm:$0xf] %vm284, 0.0
      %286 = vst.msk [vmem:[#allocation2 + $0x4] sm:$0xff] %vm281, %v279
      %287 = vst.msk [vmem:[#allocation2 + $0xc] sm:$0xf] %vm284, %v280
      %v288 = vld [vmem:[%s2] sm:$0x1]
      %v290 = vlaneseq
      %v291 = vshrl.u32 %v290, 7
      %v292 = vsub.s32 0, %v291
      %v293 = vrot.slane %v288, %v292
      %v295 = vadd.f32 %v293, 0.0
      %v296 = vld [vmem:[#allocation2] sm:$0xff]
      %v297 = vld [vmem:[#allocation2 + $0x8] sm:$0xf]
      %v298 = vld [vmem:[%s1] sm:$0xff]
      %v299 = vld [vmem:[%s1 + $0x8] sm:$0xff]
      %v300 = vld [vmem:[%s1 + $0x10] sm:$0xff]
      %v301 = vld [vmem:[%s1 + $0x18] sm:$0xff]
      %v303 = vsel %vm281, %v296, 0
      %v306 = vsel %vm281, %v297, 0
      %308 = vmatprep.subr.mxu0 0.0
      %309 = vmatpush1.msra.mxu0 %v298
      %310 = vmatprep.subr.mxu0 0.0
      %311 = vmatpush1.msra.mxu0 %v299
      %312 = vmatprep.subr.mxu0 0.0
      %313 = vmatpush1.msra.mxu0 %v300
      %314 = vmatprep.subr.mxu0 0.0
      %315 = vmatpush1.msra.mxu0 %v301
      %316 = vmatprep.subr.mxu0 0.0
      %317 = vmatpush1.msra.mxu0 0.0
      %318 = vmatprep.subr.mxu0 0.0
      %319 = vmatpush1.msra.mxu0 0.0
      %320 = vmatprep.subr.mxu0 0.0
      %321 = vmatpush1.msra.mxu0 0.0
      %322 = vmatprep.subr.mxu0 0.0
      %323 = vmatpush1.msra.mxu0 0.0
      %324 = vmatprep.subr.mxu0 0.0
      %325 = vmatpush1.msra.mxu0 0.0
      %326 = vmatprep.subr.mxu0 0.0
      %327 = vmatpush1.msra.mxu0 0.0
      %328 = vmatprep.subr.mxu0 0.0
      %329 = vmatpush1.msra.mxu0 0.0
      %330 = vmatprep.subr.mxu0 0.0
      %331 = vmatpush1.msra.mxu0 0.0
      %332 = vmatprep.subr.mxu0 0.0
      %333 = vmatpush1.msra.mxu0 0.0
      %334 = vmatprep.subr.mxu0 0.0
      %335 = vmatpush1.msra.mxu0 0.0
      %336 = vmatprep.subr.mxu0 0.0
      %337 = vmatpush1.msra.mxu0 0.0
      %338 = vmatprep.subr.mxu0 0.0
      %339 = vmatpush1.msra.mxu0 0.0
      %340 = vmatprep.subr.mxu0 0.0
      %341 = vmatpush1.msra.mxu0 0.0
      %342 = vmatprep.subr.mxu0 0.0
      %343 = vmatpush1.msra.mxu0 0.0
      %344 = vmatprep.subr.mxu0 0.0
      %345 = vmatpush1.msra.mxu0 0.0
      %346 = vmatprep.subr.mxu0 0.0
      %347 = vmatpush1.msra.mxu0 0.0
      %348 = vmatprep.subr.mxu0 0.0
      %349 = vmatpush1.msra.mxu0 0.0
      %350 = vmatprep.subr.mxu0 0.0
      %351 = vmatpush1.msra.mxu0 0.0
      %352 = vmatprep.subr.mxu0 0.0
      %353 = vmatpush1.msra.mxu0 0.0
      %354 = vmatprep.subr.mxu0 0.0
      %355 = vmatpush1.msra.mxu0 0.0
      %356 = vmatprep.subr.mxu0 0.0
      %357 = vmatpush1.msra.mxu0 0.0
      %358 = vmatprep.subr.mxu0 0.0
      %359 = vmatpush1.msra.mxu0 0.0
      %360 = vmatprep.subr.mxu0 0.0
      %361 = vmatpush1.msra.mxu0 0.0
      %362 = vmatprep.subr.mxu0 0.0
      %363 = vmatpush1.msra.mxu0 0.0
      %364 = vmatprep.subr.mxu0 0.0
      %365 = vmatpush1.msra.mxu0 0.0
      %366 = vmatprep.subr.mxu0 0.0
      %367 = vmatpush1.msra.mxu0 0.0
      %368 = vmatprep.subr.mxu0 0.0
      %369 = vmatpush1.msra.mxu0 0.0
      %370 = vmatprep.subr.mxu0 0.0
      %371 = vmatpush1.msra.mxu0 0.0
      %372 = vmatprep.mubr.f32.mxu0 0.0
      %373 = vmatmul.mubr.f32.gmra.mrb[0].mxu0 %v303
      %v374 = vpop.f32.mrb[0].mxu0
      %v375 = vadd.f32 0.0, %v374
      %v376 = vpop.f32.mrb[0].mxu0
      %377 = vmatprep.mubr.f32.mxu0 0.0
      %378 = vmatmul.mubr.f32.gmra.mrb[0].mxu0 %v306
      %v379 = vpop.f32.mrb[0].mxu0
      %v380 = vadd.f32 0.0, %v379
      %v381 = vpop.f32.mrb[0].mxu0
      %382 = vdwg.mxu0
      %v383 = vadd.f32 %v295, %v375
      %v384 = vadd.f32 %v295, %v380
      %v385 = vld [vmem:[#allocation2 + $0x1] sm:$0xff]
      %v386 = vld [vmem:[#allocation2 + $0x9] sm:$0xf]
      %s387 = scalar_lea.vmem %s1, 32
      %v388 = vld [vmem:[%s387] sm:$0xff]
      %v389 = vld [vmem:[%s387 + $0x8] sm:$0xff]
      %v390 = vld [vmem:[%s387 + $0x10] sm:$0xff]
      %v391 = vld [vmem:[%s387 + $0x18] sm:$0xff]
      %v393 = vsel %vm281, %v385, 0
      %v396 = vsel %vm281, %v386, 0
      %398 = vmatprep.subr.mxu0 0.0
      %399 = vmatpush1.msra.mxu0 %v388
      %400 = vmatprep.subr.mxu0 0.0
      %401 = vmatpush1.msra.mxu0 %v389
      %402 = vmatprep.subr.mxu0 0.0
      %403 = vmatpush1.msra.mxu0 %v390
      %404 = vmatprep.subr.mxu0 0.0
      %405 = vmatpush1.msra.mxu0 %v391
      %406 = vmatprep.subr.mxu0 0.0
      %407 = vmatpush1.msra.mxu0 0.0
      %408 = vmatprep.subr.mxu0 0.0
      %409 = vmatpush1.msra.mxu0 0.0
      %410 = vmatprep.subr.mxu0 0.0
      %411 = vmatpush1.msra.mxu0 0.0
      %412 = vmatprep.subr.mxu0 0.0
      %413 = vmatpush1.msra.mxu0 0.0
      %414 = vmatprep.subr.mxu0 0.0
      %415 = vmatpush1.msra.mxu0 0.0
      %416 = vmatprep.subr.mxu0 0.0
      %417 = vmatpush1.msra.mxu0 0.0
      %418 = vmatprep.subr.mxu0 0.0
      %419 = vmatpush1.msra.mxu0 0.0
      %420 = vmatprep.subr.mxu0 0.0
      %421 = vmatpush1.msra.mxu0 0.0
      %422 = vmatprep.subr.mxu0 0.0
      %423 = vmatpush1.msra.mxu0 0.0
      %424 = vmatprep.subr.mxu0 0.0
      %425 = vmatpush1.msra.mxu0 0.0
      %426 = vmatprep.subr.mxu0 0.0
      %427 = vmatpush1.msra.mxu0 0.0
      %428 = vmatprep.subr.mxu0 0.0
      %429 = vmatpush1.msra.mxu0 0.0
      %430 = vmatprep.subr.mxu0 0.0
      %431 = vmatpush1.msra.mxu0 0.0
      %432 = vmatprep.subr.mxu0 0.0
      %433 = vmatpush1.msra.mxu0 0.0
      %434 = vmatprep.subr.mxu0 0.0
      %435 = vmatpush1.msra.mxu0 0.0
      %436 = vmatprep.subr.mxu0 0.0
      %437 = vmatpush1.msra.mxu0 0.0
      %438 = vmatprep.subr.mxu0 0.0
      %439 = vmatpush1.msra.mxu0 0.0
      %440 = vmatprep.subr.mxu0 0.0
      %441 = vmatpush1.msra.mxu0 0.0
      %442 = vmatprep.subr.mxu0 0.0
      %443 = vmatpush1.msra.mxu0 0.0
      %444 = vmatprep.subr.mxu0 0.0
      %445 = vmatpush1.msra.mxu0 0.0
      %446 = vmatprep.subr.mxu0 0.0
      %447 = vmatpush1.msra.mxu0 0.0
      %448 = vmatprep.subr.mxu0 0.0
      %449 = vmatpush1.msra.mxu0 0.0
      %450 = vmatprep.subr.mxu0 0.0
      %451 = vmatpush1.msra.mxu0 0.0
      %452 = vmatprep.subr.mxu0 0.0
      %453 = vmatpush1.msra.mxu0 0.0
      %454 = vmatprep.subr.mxu0 0.0
      %455 = vmatpush1.msra.mxu0 0.0
      %456 = vmatprep.subr.mxu0 0.0
      %457 = vmatpush1.msra.mxu0 0.0
      %458 = vmatprep.subr.mxu0 0.0
      %459 = vmatpush1.msra.mxu0 0.0
      %460 = vmatprep.subr.mxu0 0.0
      %461 = vmatpush1.msra.mxu0 0.0
      %462 = vmatprep.mubr.f32.mxu0 0.0
      %463 = vmatmul.mubr.f32.gmra.mrb[0].mxu0 %v393
      %v464 = vpop.f32.mrb[0].mxu0
      %v465 = vadd.f32 0.0, %v464
      %v466 = vpop.f32.mrb[0].mxu0
      %467 = vmatprep.mubr.f32.mxu0 0.0
      %468 = vmatmul.mubr.f32.gmra.mrb[0].mxu0 %v396
      %v469 = vpop.f32.mrb[0].mxu0
      %v470 = vadd.f32 0.0, %v469
      %v471 = vpop.f32.mrb[0].mxu0
      %472 = vdwg.mxu0
      %v473 = vadd.f32 %v383, %v465
      %v474 = vadd.f32 %v384, %v470
      %v475 = vld [vmem:[#allocation2 + $0x2] sm:$0xff]
      %v476 = vld [vmem:[#allocation2 + $0xa] sm:$0xf]
      %s477 = scalar_lea.vmem %s1, 64
      %v478 = vld [vmem:[%s477] sm:$0xff]
      %v479 = vld [vmem:[%s477 + $0x8] sm:$0xff]
      %v480 = vld [vmem:[%s477 + $0x10] sm:$0xff]
      %v481 = vld [vmem:[%s477 + $0x18] sm:$0xff]
      %v483 = vsel %vm281, %v475, 0
      %v486 = vsel %vm281, %v476, 0
      %488 = vmatprep.subr.mxu0 0.0
      %489 = vmatpush1.msra.mxu0 %v478
      %490 = vmatprep.subr.mxu0 0.0
      %491 = vmatpush1.msra.mxu0 %v479
      %492 = vmatprep.subr.mxu0 0.0
      %493 = vmatpush1.msra.mxu0 %v480
      %494 = vmatprep.subr.mxu0 0.0
      %495 = vmatpush1.msra.mxu0 %v481
      %496 = vmatprep.subr.mxu0 0.0
      %497 = vmatpush1.msra.mxu0 0.0
      %498 = vmatprep.subr.mxu0 0.0
      %499 = vmatpush1.msra.mxu0 0.0
      %500 = vmatprep.subr.mxu0 0.0
      %501 = vmatpush1.msra.mxu0 0.0
      %502 = vmatprep.subr.mxu0 0.0
      %503 = vmatpush1.msra.mxu0 0.0
      %504 = vmatprep.subr.mxu0 0.0
      %505 = vmatpush1.msra.mxu0 0.0
      %506 = vmatprep.subr.mxu0 0.0
      %507 = vmatpush1.msra.mxu0 0.0
      %508 = vmatprep.subr.mxu0 0.0
      %509 = vmatpush1.msra.mxu0 0.0
      %510 = vmatprep.subr.mxu0 0.0
      %511 = vmatpush1.msra.mxu0 0.0
      %512 = vmatprep.subr.mxu0 0.0
      %513 = vmatpush1.msra.mxu0 0.0
      %514 = vmatprep.subr.mxu0 0.0
      %515 = vmatpush1.msra.mxu0 0.0
      %516 = vmatprep.subr.mxu0 0.0
      %517 = vmatpush1.msra.mxu0 0.0
      %518 = vmatprep.subr.mxu0 0.0
      %519 = vmatpush1.msra.mxu0 0.0
      %520 = vmatprep.subr.mxu0 0.0
      %521 = vmatpush1.msra.mxu0 0.0
      %522 = vmatprep.subr.mxu0 0.0
      %523 = vmatpush1.msra.mxu0 0.0
      %524 = vmatprep.subr.mxu0 0.0
      %525 = vmatpush1.msra.mxu0 0.0
      %526 = vmatprep.subr.mxu0 0.0
      %527 = vmatpush1.msra.mxu0 0.0
      %528 = vmatprep.subr.mxu0 0.0
      %529 = vmatpush1.msra.mxu0 0.0
      %530 = vmatprep.subr.mxu0 0.0
      %531 = vmatpush1.msra.mxu0 0.0
      %532 = vmatprep.subr.mxu0 0.0
      %533 = vmatpush1.msra.mxu0 0.0
      %534 = vmatprep.subr.mxu0 0.0
      %535 = vmatpush1.msra.mxu0 0.0
      %536 = vmatprep.subr.mxu0 0.0
      %537 = vmatpush1.msra.mxu0 0.0
      %538 = vmatprep.subr.mxu0 0.0
      %539 = vmatpush1.msra.mxu0 0.0
      %540 = vmatprep.subr.mxu0 0.0
      %541 = vmatpush1.msra.mxu0 0.0
      %542 = vmatprep.subr.mxu0 0.0
      %543 = vmatpush1.msra.mxu0 0.0
      %544 = vmatprep.subr.mxu0 0.0
      %545 = vmatpush1.msra.mxu0 0.0
      %546 = vmatprep.subr.mxu0 0.0
      %547 = vmatpush1.msra.mxu0 0.0
      %548 = vmatprep.subr.mxu0 0.0
      %549 = vmatpush1.msra.mxu0 0.0
      %550 = vmatprep.subr.mxu0 0.0
      %551 = vmatpush1.msra.mxu0 0.0
      %552 = vmatprep.mubr.f32.mxu0 0.0
      %553 = vmatmul.mubr.f32.gmra.mrb[0].mxu0 %v483
      %v554 = vpop.f32.mrb[0].mxu0
      %v555 = vadd.f32 0.0, %v554
      %v556 = vpop.f32.mrb[0].mxu0
      %557 = vmatprep.mubr.f32.mxu0 0.0
      %558 = vmatmul.mubr.f32.gmra.mrb[0].mxu0 %v486
      %v559 = vpop.f32.mrb[0].mxu0
      %v560 = vadd.f32 0.0, %v559
      %v561 = vpop.f32.mrb[0].mxu0
      %562 = vdwg.mxu0
      %v563 = vadd.f32 %v473, %v555
      %v564 = vadd.f32 %v474, %v560
      %v565 = vld [vmem:[#allocation2 + $0x3] sm:$0xff]
      %v566 = vld [vmem:[#allocation2 + $0xb] sm:$0xf]
      %s567 = scalar_lea.vmem %s1, 96
      %v568 = vld [vmem:[%s567] sm:$0xff]
      %v569 = vld [vmem:[%s567 + $0x8] sm:$0xff]
      %v570 = vld [vmem:[%s567 + $0x10] sm:$0xff]
      %v571 = vld [vmem:[%s567 + $0x18] sm:$0xff]
      %v573 = vsel %vm281, %v565, 0
      %v576 = vsel %vm281, %v566, 0
      %578 = vmatprep.subr.mxu0 0.0
      %579 = vmatpush1.msra.mxu0 %v568
      %580 = vmatprep.subr.mxu0 0.0
      %581 = vmatpush1.msra.mxu0 %v569
      %582 = vmatprep.subr.mxu0 0.0
      %583 = vmatpush1.msra.mxu0 %v570
      %584 = vmatprep.subr.mxu0 0.0
      %585 = vmatpush1.msra.mxu0 %v571
      %586 = vmatprep.subr.mxu0 0.0
      %587 = vmatpush1.msra.mxu0 0.0
      %588 = vmatprep.subr.mxu0 0.0
      %589 = vmatpush1.msra.mxu0 0.0
      %590 = vmatprep.subr.mxu0 0.0
      %591 = vmatpush1.msra.mxu0 0.0
      %592 = vmatprep.subr.mxu0 0.0
      %593 = vmatpush1.msra.mxu0 0.0
      %594 = vmatprep.subr.mxu0 0.0
      %595 = vmatpush1.msra.mxu0 0.0
      %596 = vmatprep.subr.mxu0 0.0
      %597 = vmatpush1.msra.mxu0 0.0
      %598 = vmatprep.subr.mxu0 0.0
      %599 = vmatpush1.msra.mxu0 0.0
      %600 = vmatprep.subr.mxu0 0.0
      %601 = vmatpush1.msra.mxu0 0.0
      %602 = vmatprep.subr.mxu0 0.0
      %603 = vmatpush1.msra.mxu0 0.0
      %604 = vmatprep.subr.mxu0 0.0
      %605 = vmatpush1.msra.mxu0 0.0
      %606 = vmatprep.subr.mxu0 0.0
      %607 = vmatpush1.msra.mxu0 0.0
      %608 = vmatprep.subr.mxu0 0.0
      %609 = vmatpush1.msra.mxu0 0.0
      %610 = vmatprep.subr.mxu0 0.0
      %611 = vmatpush1.msra.mxu0 0.0
      %612 = vmatprep.subr.mxu0 0.0
      %613 = vmatpush1.msra.mxu0 0.0
      %614 = vmatprep.subr.mxu0 0.0
      %615 = vmatpush1.msra.mxu0 0.0
      %616 = vmatprep.subr.mxu0 0.0
      %617 = vmatpush1.msra.mxu0 0.0
      %618 = vmatprep.subr.mxu0 0.0
      %619 = vmatpush1.msra.mxu0 0.0
      %620 = vmatprep.subr.mxu0 0.0
      %621 = vmatpush1.msra.mxu0 0.0
      %622 = vmatprep.subr.mxu0 0.0
      %623 = vmatpush1.msra.mxu0 0.0
      %624 = vmatprep.subr.mxu0 0.0
      %625 = vmatpush1.msra.mxu0 0.0
      %626 = vmatprep.subr.mxu0 0.0
      %627 = vmatpush1.msra.mxu0 0.0
      %628 = vmatprep.subr.mxu0 0.0
      %629 = vmatpush1.msra.mxu0 0.0
      %630 = vmatprep.subr.mxu0 0.0
      %631 = vmatpush1.msra.mxu0 0.0
      %632 = vmatprep.subr.mxu0 0.0
      %633 = vmatpush1.msra.mxu0 0.0
      %634 = vmatprep.subr.mxu0 0.0
      %635 = vmatpush1.msra.mxu0 0.0
      %636 = vmatprep.subr.mxu0 0.0
      %637 = vmatpush1.msra.mxu0 0.0
      %638 = vmatprep.subr.mxu0 0.0
      %639 = vmatpush1.msra.mxu0 0.0
      %640 = vmatprep.subr.mxu0 0.0
      %641 = vmatpush1.msra.mxu0 0.0
      %642 = vmatprep.mubr.f32.mxu0 0.0
      %643 = vmatmul.mubr.f32.gmra.mrb[0].mxu0 %v573
      %v644 = vpop.f32.mrb[0].mxu0
      %v645 = vadd.f32 0.0, %v644
      %v646 = vpop.f32.mrb[0].mxu0
      %647 = vmatprep.mubr.f32.mxu0 0.0
      %648 = vmatmul.mubr.f32.gmra.mrb[0].mxu0 %v576
      %v649 = vpop.f32.mrb[0].mxu0
      %v650 = vadd.f32 0.0, %v649
      %v651 = vpop.f32.mrb[0].mxu0
      %652 = vdwg.mxu0
      %v653 = vadd.f32 %v563, %v645
      %v654 = vadd.f32 %v564, %v650
      %v655 = vld [vmem:[#allocation2 + $0x4] sm:$0xff]
      %v656 = vld [vmem:[#allocation2 + $0xc] sm:$0xf]
      %s657 = scalar_lea.vmem %s1, 128
      %v658 = vld [vmem:[%s657] sm:$0xff]
      %v659 = vld [vmem:[%s657 + $0x8] sm:$0xff]
      %v660 = vld [vmem:[%s657 + $0x10] sm:$0xff]
      %v661 = vld [vmem:[%s657 + $0x18] sm:$0xff]
      %v663 = vsel %vm281, %v655, 0
      %v666 = vsel %vm281, %v656, 0
      %668 = vmatprep.subr.mxu0 0.0
      %669 = vmatpush1.msra.mxu0 %v658
      %670 = vmatprep.subr.mxu0 0.0
      %671 = vmatpush1.msra.mxu0 %v659
      %672 = vmatprep.subr.mxu0 0.0
      %673 = vmatpush1.msra.mxu0 %v660
      %674 = vmatprep.subr.mxu0 0.0
      %675 = vmatpush1.msra.mxu0 %v661
      %676 = vmatprep.subr.mxu0 0.0
      %677 = vmatpush1.msra.mxu0 0.0
      %678 = vmatprep.subr.mxu0 0.0
      %679 = vmatpush1.msra.mxu0 0.0
      %680 = vmatprep.subr.mxu0 0.0
      %681 = vmatpush1.msra.mxu0 0.0
      %682 = vmatprep.subr.mxu0 0.0
      %683 = vmatpush1.msra.mxu0 0.0
      %684 = vmatprep.subr.mxu0 0.0
      %685 = vmatpush1.msra.mxu0 0.0
      %686 = vmatprep.subr.mxu0 0.0
      %687 = vmatpush1.msra.mxu0 0.0
      %688 = vmatprep.subr.mxu0 0.0
      %689 = vmatpush1.msra.mxu0 0.0
      %690 = vmatprep.subr.mxu0 0.0
      %691 = vmatpush1.msra.mxu0 0.0
      %692 = vmatprep.subr.mxu0 0.0
      %693 = vmatpush1.msra.mxu0 0.0
      %694 = vmatprep.subr.mxu0 0.0
      %695 = vmatpush1.msra.mxu0 0.0
      %696 = vmatprep.subr.mxu0 0.0
      %697 = vmatpush1.msra.mxu0 0.0
      %698 = vmatprep.subr.mxu0 0.0
      %699 = vmatpush1.msra.mxu0 0.0
      %700 = vmatprep.subr.mxu0 0.0
      %701 = vmatpush1.msra.mxu0 0.0
      %702 = vmatprep.subr.mxu0 0.0
      %703 = vmatpush1.msra.mxu0 0.0
      %704 = vmatprep.subr.mxu0 0.0
      %705 = vmatpush1.msra.mxu0 0.0
      %706 = vmatprep.subr.mxu0 0.0
      %707 = vmatpush1.msra.mxu0 0.0
      %708 = vmatprep.subr.mxu0 0.0
      %709 = vmatpush1.msra.mxu0 0.0
      %710 = vmatprep.subr.mxu0 0.0
      %711 = vmatpush1.msra.mxu0 0.0
      %712 = vmatprep.subr.mxu0 0.0
      %713 = vmatpush1.msra.mxu0 0.0
      %714 = vmatprep.subr.mxu0 0.0
      %715 = vmatpush1.msra.mxu0 0.0
      %716 = vmatprep.subr.mxu0 0.0
      %717 = vmatpush1.msra.mxu0 0.0
      %718 = vmatprep.subr.mxu0 0.0
      %719 = vmatpush1.msra.mxu0 0.0
      %720 = vmatprep.subr.mxu0 0.0
      %721 = vmatpush1.msra.mxu0 0.0
      %722 = vmatprep.subr.mxu0 0.0
      %723 = vmatpush1.msra.mxu0 0.0
      %724 = vmatprep.subr.mxu0 0.0
      %725 = vmatpush1.msra.mxu0 0.0
      %726 = vmatprep.subr.mxu0 0.0
      %727 = vmatpush1.msra.mxu0 0.0
      %728 = vmatprep.subr.mxu0 0.0
      %729 = vmatpush1.msra.mxu0 0.0
      %730 = vmatprep.subr.mxu0 0.0
      %731 = vmatpush1.msra.mxu0 0.0
      %732 = vmatprep.mubr.f32.mxu0 0.0
      %733 = vmatmul.mubr.f32.gmra.mrb[0].mxu0 %v663
      %v734 = vpop.f32.mrb[0].mxu0
      %v735 = vadd.f32 0.0, %v734
      %v736 = vpop.f32.mrb[0].mxu0
      %737 = vmatprep.mubr.f32.mxu0 0.0
      %738 = vmatmul.mubr.f32.gmra.mrb[0].mxu0 %v666
      %v739 = vpop.f32.mrb[0].mxu0
      %v740 = vadd.f32 0.0, %v739
      %v741 = vpop.f32.mrb[0].mxu0
      %742 = vdwg.mxu0
      %v743 = vadd.f32 %v653, %v735
      %v744 = vadd.f32 %v654, %v740
      %v745 = vld [vmem:[#allocation2 + $0x5] sm:$0xff]
      %v746 = vld [vmem:[#allocation2 + $0xd] sm:$0xf]
      %s747 = scalar_lea.vmem %s1, 160
      %v748 = vld [vmem:[%s747] sm:$0xff]
      %v749 = vld [vmem:[%s747 + $0x8] sm:$0xff]
      %v750 = vld [vmem:[%s747 + $0x10] sm:$0xff]
      %v751 = vld [vmem:[%s747 + $0x18] sm:$0xff]
      %v753 = vsel %vm281, %v745, 0
      %v756 = vsel %vm281, %v746, 0
      %758 = vmatprep.subr.mxu0 0.0
      %759 = vmatpush1.msra.mxu0 %v748
      %760 = vmatprep.subr.mxu0 0.0
      %761 = vmatpush1.msra.mxu0 %v749
      %762 = vmatprep.subr.mxu0 0.0
      %763 = vmatpush1.msra.mxu0 %v750
      %764 = vmatprep.subr.mxu0 0.0
      %765 = vmatpush1.msra.mxu0 %v751
      %766 = vmatprep.subr.mxu0 0.0
      %767 = vmatpush1.msra.mxu0 0.0
      %768 = vmatprep.subr.mxu0 0.0
      %769 = vmatpush1.msra.mxu0 0.0
      %770 = vmatprep.subr.mxu0 0.0
      %771 = vmatpush1.msra.mxu0 0.0
      %772 = vmatprep.subr.mxu0 0.0
      %773 = vmatpush1.msra.mxu0 0.0
      %774 = vmatprep.subr.mxu0 0.0
      %775 = vmatpush1.msra.mxu0 0.0
      %776 = vmatprep.subr.mxu0 0.0
      %777 = vmatpush1.msra.mxu0 0.0
      %778 = vmatprep.subr.mxu0 0.0
      %779 = vmatpush1.msra.mxu0 0.0
      %780 = vmatprep.subr.mxu0 0.0
      %781 = vmatpush1.msra.mxu0 0.0
      %782 = vmatprep.subr.mxu0 0.0
      %783 = vmatpush1.msra.mxu0 0.0
      %784 = vmatprep.subr.mxu0 0.0
      %785 = vmatpush1.msra.mxu0 0.0
      %786 = vmatprep.subr.mxu0 0.0
      %787 = vmatpush1.msra.mxu0 0.0
      %788 = vmatprep.subr.mxu0 0.0
      %789 = vmatpush1.msra.mxu0 0.0
      %790 = vmatprep.subr.mxu0 0.0
      %791 = vmatpush1.msra.mxu0 0.0
      %792 = vmatprep.subr.mxu0 0.0
      %793 = vmatpush1.msra.mxu0 0.0
      %794 = vmatprep.subr.mxu0 0.0
      %795 = vmatpush1.msra.mxu0 0.0
      %796 = vmatprep.subr.mxu0 0.0
      %797 = vmatpush1.msra.mxu0 0.0
      %798 = vmatprep.subr.mxu0 0.0
      %799 = vmatpush1.msra.mxu0 0.0
      %800 = vmatprep.subr.mxu0 0.0
      %801 = vmatpush1.msra.mxu0 0.0
      %802 = vmatprep.subr.mxu0 0.0
      %803 = vmatpush1.msra.mxu0 0.0
      %804 = vmatprep.subr.mxu0 0.0
      %805 = vmatpush1.msra.mxu0 0.0
      %806 = vmatprep.subr.mxu0 0.0
      %807 = vmatpush1.msra.mxu0 0.0
      %808 = vmatprep.subr.mxu0 0.0
      %809 = vmatpush1.msra.mxu0 0.0
      %810 = vmatprep.subr.mxu0 0.0
      %811 = vmatpush1.msra.mxu0 0.0
      %812 = vmatprep.subr.mxu0 0.0
      %813 = vmatpush1.msra.mxu0 0.0
      %814 = vmatprep.subr.mxu0 0.0
      %815 = vmatpush1.msra.mxu0 0.0
      %816 = vmatprep.subr.mxu0 0.0
      %817 = vmatpush1.msra.mxu0 0.0
      %818 = vmatprep.subr.mxu0 0.0
      %819 = vmatpush1.msra.mxu0 0.0
      %820 = vmatprep.subr.mxu0 0.0
      %821 = vmatpush1.msra.mxu0 0.0
      %822 = vmatprep.mubr.f32.mxu0 0.0
      %823 = vmatmul.mubr.f32.gmra.mrb[0].mxu0 %v753
      %v824 = vpop.f32.mrb[0].mxu0
      %v825 = vadd.f32 0.0, %v824
      %v826 = vpop.f32.mrb[0].mxu0
      %827 = vmatprep.mubr.f32.mxu0 0.0
      %828 = vmatmul.mubr.f32.gmra.mrb[0].mxu0 %v756
      %v829 = vpop.f32.mrb[0].mxu0
      %v830 = vadd.f32 0.0, %v829
      %v831 = vpop.f32.mrb[0].mxu0
      %832 = vdwg.mxu0
      %v833 = vadd.f32 %v743, %v825
      %v834 = vadd.f32 %v744, %v830
      %v835 = vld [vmem:[#allocation2 + $0x6] sm:$0xff]
      %v836 = vld [vmem:[#allocation2 + $0xe] sm:$0xf]
      %s837 = scalar_lea.vmem %s1, 192
      %v838 = vld [vmem:[%s837] sm:$0xff]
      %v839 = vld [vmem:[%s837 + $0x8] sm:$0xff]
      %v840 = vld [vmem:[%s837 + $0x10] sm:$0xff]
      %v841 = vld [vmem:[%s837 + $0x18] sm:$0xff]
      %v843 = vsel %vm281, %v835, 0
      %v846 = vsel %vm281, %v836, 0
      %848 = vmatprep.subr.mxu0 0.0
      %849 = vmatpush1.msra.mxu0 %v838
      %850 = vmatprep.subr.mxu0 0.0
      %851 = vmatpush1.msra.mxu0 %v839
      %852 = vmatprep.subr.mxu0 0.0
      %853 = vmatpush1.msra.mxu0 %v840
      %854 = vmatprep.subr.mxu0 0.0
      %855 = vmatpush1.msra.mxu0 %v841
      %856 = vmatprep.subr.mxu0 0.0
      %857 = vmatpush1.msra.mxu0 0.0
      %858 = vmatprep.subr.mxu0 0.0
      %859 = vmatpush1.msra.mxu0 0.0
      %860 = vmatprep.subr.mxu0 0.0
      %861 = vmatpush1.msra.mxu0 0.0
      %862 = vmatprep.subr.mxu0 0.0
      %863 = vmatpush1.msra.mxu0 0.0
      %864 = vmatprep.subr.mxu0 0.0
      %865 = vmatpush1.msra.mxu0 0.0
      %866 = vmatprep.subr.mxu0 0.0
      %867 = vmatpush1.msra.mxu0 0.0
      %868 = vmatprep.subr.mxu0 0.0
      %869 = vmatpush1.msra.mxu0 0.0
      %870 = vmatprep.subr.mxu0 0.0
      %871 = vmatpush1.msra.mxu0 0.0
      %872 = vmatprep.subr.mxu0 0.0
      %873 = vmatpush1.msra.mxu0 0.0
      %874 = vmatprep.subr.mxu0 0.0
      %875 = vmatpush1.msra.mxu0 0.0
      %876 = vmatprep.subr.mxu0 0.0
      %877 = vmatpush1.msra.mxu0 0.0
      %878 = vmatprep.subr.mxu0 0.0
      %879 = vmatpush1.msra.mxu0 0.0
      %880 = vmatprep.subr.mxu0 0.0
      %881 = vmatpush1.msra.mxu0 0.0
      %882 = vmatprep.subr.mxu0 0.0
      %883 = vmatpush1.msra.mxu0 0.0
      %884 = vmatprep.subr.mxu0 0.0
      %885 = vmatpush1.msra.mxu0 0.0
      %886 = vmatprep.subr.mxu0 0.0
      %887 = vmatpush1.msra.mxu0 0.0
      %888 = vmatprep.subr.mxu0 0.0
      %889 = vmatpush1.msra.mxu0 0.0
      %890 = vmatprep.subr.mxu0 0.0
      %891 = vmatpush1.msra.mxu0 0.0
      %892 = vmatprep.subr.mxu0 0.0
      %893 = vmatpush1.msra.mxu0 0.0
      %894 = vmatprep.subr.mxu0 0.0
      %895 = vmatpush1.msra.mxu0 0.0
      %896 = vmatprep.subr.mxu0 0.0
      %897 = vmatpush1.msra.mxu0 0.0
      %898 = vmatprep.subr.mxu0 0.0
      %899 = vmatpush1.msra.mxu0 0.0
      %900 = vmatprep.subr.mxu0 0.0
      %901 = vmatpush1.msra.mxu0 0.0
      %902 = vmatprep.subr.mxu0 0.0
      %903 = vmatpush1.msra.mxu0 0.0
      %904 = vmatprep.subr.mxu0 0.0
      %905 = vmatpush1.msra.mxu0 0.0
      %906 = vmatprep.subr.mxu0 0.0
      %907 = vmatpush1.msra.mxu0 0.0
      %908 = vmatprep.subr.mxu0 0.0
      %909 = vmatpush1.msra.mxu0 0.0
      %910 = vmatprep.subr.mxu0 0.0
      %911 = vmatpush1.msra.mxu0 0.0
      %912 = vmatprep.mubr.f32.mxu0 0.0
      %913 = vmatmul.mubr.f32.gmra.mrb[0].mxu0 %v843
      %v914 = vpop.f32.mrb[0].mxu0
      %v915 = vadd.f32 0.0, %v914
      %v916 = vpop.f32.mrb[0].mxu0
      %917 = vmatprep.mubr.f32.mxu0 0.0
      %918 = vmatmul.mubr.f32.gmra.mrb[0].mxu0 %v846
      %v919 = vpop.f32.mrb[0].mxu0
      %v920 = vadd.f32 0.0, %v919
      %v921 = vpop.f32.mrb[0].mxu0
      %922 = vdwg.mxu0
      %v923 = vadd.f32 %v833, %v915
      %v924 = vadd.f32 %v834, %v920
      %v925 = vld [vmem:[#allocation2 + $0x7] sm:$0xff]
      %v926 = vld [vmem:[#allocation2 + $0xf] sm:$0xf]
      %s927 = scalar_lea.vmem %s1, 224
      %v928 = vld [vmem:[%s927] sm:$0xff]
      %v929 = vld [vmem:[%s927 + $0x8] sm:$0xff]
      %v930 = vld [vmem:[%s927 + $0x10] sm:$0xff]
      %v931 = vld [vmem:[%s927 + $0x18] sm:$0xff]
      %v933 = vsel %vm281, %v925, 0
      %v936 = vsel %vm281, %v926, 0
      %938 = vmatprep.subr.mxu0 0.0
      %939 = vmatpush1.msra.mxu0 %v928
      %940 = vmatprep.subr.mxu0 0.0
      %941 = vmatpush1.msra.mxu0 %v929
      %942 = vmatprep.subr.mxu0 0.0
      %943 = vmatpush1.msra.mxu0 %v930
      %944 = vmatprep.subr.mxu0 0.0
      %945 = vmatpush1.msra.mxu0 %v931
      %946 = vmatprep.subr.mxu0 0.0
      %947 = vmatpush1.msra.mxu0 0.0
      %948 = vmatprep.subr.mxu0 0.0
      %949 = vmatpush1.msra.mxu0 0.0
      %950 = vmatprep.subr.mxu0 0.0
      %951 = vmatpush1.msra.mxu0 0.0
      %952 = vmatprep.subr.mxu0 0.0
      %953 = vmatpush1.msra.mxu0 0.0
      %954 = vmatprep.subr.mxu0 0.0
      %955 = vmatpush1.msra.mxu0 0.0
      %956 = vmatprep.subr.mxu0 0.0
      %957 = vmatpush1.msra.mxu0 0.0
      %958 = vmatprep.subr.mxu0 0.0
      %959 = vmatpush1.msra.mxu0 0.0
      %960 = vmatprep.subr.mxu0 0.0
      %961 = vmatpush1.msra.mxu0 0.0
      %962 = vmatprep.subr.mxu0 0.0
      %963 = vmatpush1.msra.mxu0 0.0
      %964 = vmatprep.subr.mxu0 0.0
      %965 = vmatpush1.msra.mxu0 0.0
      %966 = vmatprep.subr.mxu0 0.0
      %967 = vmatpush1.msra.mxu0 0.0
      %968 = vmatprep.subr.mxu0 0.0
      %969 = vmatpush1.msra.mxu0 0.0
      %970 = vmatprep.subr.mxu0 0.0
      %971 = vmatpush1.msra.mxu0 0.0
      %972 = vmatprep.subr.mxu0 0.0
      %973 = vmatpush1.msra.mxu0 0.0
      %974 = vmatprep.subr.mxu0 0.0
      %975 = vmatpush1.msra.mxu0 0.0
      %976 = vmatprep.subr.mxu0 0.0
      %977 = vmatpush1.msra.mxu0 0.0
      %978 = vmatprep.subr.mxu0 0.0
      %979 = vmatpush1.msra.mxu0 0.0
      %980 = vmatprep.subr.mxu0 0.0
      %981 = vmatpush1.msra.mxu0 0.0
      %982 = vmatprep.subr.mxu0 0.0
      %983 = vmatpush1.msra.mxu0 0.0
      %984 = vmatprep.subr.mxu0 0.0
      %985 = vmatpush1.msra.mxu0 0.0
      %986 = vmatprep.subr.mxu0 0.0
      %987 = vmatpush1.msra.mxu0 0.0
      %988 = vmatprep.subr.mxu0 0.0
      %989 = vmatpush1.msra.mxu0 0.0
      %990 = vmatprep.subr.mxu0 0.0
      %991 = vmatpush1.msra.mxu0 0.0
      %992 = vmatprep.subr.mxu0 0.0
      %993 = vmatpush1.msra.mxu0 0.0
      %994 = vmatprep.subr.mxu0 0.0
      %995 = vmatpush1.msra.mxu0 0.0
      %996 = vmatprep.subr.mxu0 0.0
      %997 = vmatpush1.msra.mxu0 0.0
      %998 = vmatprep.subr.mxu0 0.0
      %999 = vmatpush1.msra.mxu0 0.0
      %1000 = vmatprep.subr.mxu0 0.0
      %1001 = vmatpush1.msra.mxu0 0.0
      %1002 = vmatprep.mubr.f32.mxu0 0.0
      %1003 = vmatmul.mubr.f32.gmra.mrb[0].mxu0 %v933
      %v1004 = vpop.f32.mrb[0].mxu0
      %v1005 = vadd.f32 0.0, %v1004
      %v1006 = vpop.f32.mrb[0].mxu0
      %1007 = vmatprep.mubr.f32.mxu0 0.0
      %1008 = vmatmul.mubr.f32.gmra.mrb[0].mxu0 %v936
      %v1009 = vpop.f32.mrb[0].mxu0
      %v1010 = vadd.f32 0.0, %v1009
      %v1011 = vpop.f32.mrb[0].mxu0
      %1012 = vdwg.mxu0
      %v1013 = vadd.f32 %v923, %v1005
      %v1014 = vadd.f32 %v924, %v1010
      %v1015 = vld [vmem:[#allocation2 + $0x8] sm:$0xff]
      %v1016 = vld [vmem:[#allocation2 + $0x10] sm:$0xf]
      %s1017 = scalar_lea.vmem %s1, 256
      %v1018 = vld [vmem:[%s1017] sm:$0xff]
      %v1019 = vld [vmem:[%s1017 + $0x8] sm:$0xff]
      %v1020 = vld [vmem:[%s1017 + $0x10] sm:$0xff]
      %v1021 = vld [vmem:[%s1017 + $0x18] sm:$0xff]
      %v1023 = vsel %vm281, %v1015, 0
      %v1026 = vsel %vm281, %v1016, 0
      %1028 = vmatprep.subr.mxu0 0.0
      %1029 = vmatpush1.msra.mxu0 %v1018
      %1030 = vmatprep.subr.mxu0 0.0
      %1031 = vmatpush1.msra.mxu0 %v1019
      %1032 = vmatprep.subr.mxu0 0.0
      %1033 = vmatpush1.msra.mxu0 %v1020
      %1034 = vmatprep.subr.mxu0 0.0
      %1035 = vmatpush1.msra.mxu0 %v1021
      %1036 = vmatprep.subr.mxu0 0.0
      %1037 = vmatpush1.msra.mxu0 0.0
      %1038 = vmatprep.subr.mxu0 0.0
      %1039 = vmatpush1.msra.mxu0 0.0
      %1040 = vmatprep.subr.mxu0 0.0
      %1041 = vmatpush1.msra.mxu0 0.0
      %1042 = vmatprep.subr.mxu0 0.0
      %1043 = vmatpush1.msra.mxu0 0.0
      %1044 = vmatprep.subr.mxu0 0.0
      %1045 = vmatpush1.msra.mxu0 0.0
      %1046 = vmatprep.subr.mxu0 0.0
      %1047 = vmatpush1.msra.mxu0 0.0
      %1048 = vmatprep.subr.mxu0 0.0
      %1049 = vmatpush1.msra.mxu0 0.0
      %1050 = vmatprep.subr.mxu0 0.0
      %1051 = vmatpush1.msra.mxu0 0.0
      %1052 = vmatprep.subr.mxu0 0.0
      %1053 = vmatpush1.msra.mxu0 0.0
      %1054 = vmatprep.subr.mxu0 0.0
      %1055 = vmatpush1.msra.mxu0 0.0
      %1056 = vmatprep.subr.mxu0 0.0
      %1057 = vmatpush1.msra.mxu0 0.0
      %1058 = vmatprep.subr.mxu0 0.0
      %1059 = vmatpush1.msra.mxu0 0.0
      %1060 = vmatprep.subr.mxu0 0.0
      %1061 = vmatpush1.msra.mxu0 0.0
      %1062 = vmatprep.subr.mxu0 0.0
      %1063 = vmatpush1.msra.mxu0 0.0
      %1064 = vmatprep.subr.mxu0 0.0
      %1065 = vmatpush1.msra.mxu0 0.0
      %1066 = vmatprep.subr.mxu0 0.0
      %1067 = vmatpush1.msra.mxu0 0.0
      %1068 = vmatprep.subr.mxu0 0.0
      %1069 = vmatpush1.msra.mxu0 0.0
      %1070 = vmatprep.subr.mxu0 0.0
      %1071 = vmatpush1.msra.mxu0 0.0
      %1072 = vmatprep.subr.mxu0 0.0
      %1073 = vmatpush1.msra.mxu0 0.0
      %1074 = vmatprep.subr.mxu0 0.0
      %1075 = vmatpush1.msra.mxu0 0.0
      %1076 = vmatprep.subr.mxu0 0.0
      %1077 = vmatpush1.msra.mxu0 0.0
      %1078 = vmatprep.subr.mxu0 0.0
      %1079 = vmatpush1.msra.mxu0 0.0
      %1080 = vmatprep.subr.mxu0 0.0
      %1081 = vmatpush1.msra.mxu0 0.0
      %1082 = vmatprep.subr.mxu0 0.0
      %1083 = vmatpush1.msra.mxu0 0.0
      %1084 = vmatprep.subr.mxu0 0.0
      %1085 = vmatpush1.msra.mxu0 0.0
      %1086 = vmatprep.subr.mxu0 0.0
      %1087 = vmatpush1.msra.mxu0 0.0
      %1088 = vmatprep.subr.mxu0 0.0
      %1089 = vmatpush1.msra.mxu0 0.0
      %1090 = vmatprep.subr.mxu0 0.0
      %1091 = vmatpush1.msra.mxu0 0.0
      %1092 = vmatprep.mubr.f32.mxu0 0.0
      %1093 = vmatmul.mubr.f32.gmra.mrb[0].mxu0 %v1023
      %v1094 = vpop.f32.mrb[0].mxu0
      %v1095 = vadd.f32 0.0, %v1094
      %v1096 = vpop.f32.mrb[0].mxu0
      %1097 = vmatprep.mubr.f32.mxu0 0.0
      %1098 = vmatmul.mubr.f32.gmra.mrb[0].mxu0 %v1026
      %v1099 = vpop.f32.mrb[0].mxu0
      %v1100 = vadd.f32 0.0, %v1099
      %v1101 = vpop.f32.mrb[0].mxu0
      %1102 = vdwg.mxu0
      %v1103 = vadd.f32 %v1013, %v1095
      %v1104 = vadd.f32 %v1014, %v1100
      %v1105 = vmax.f32 %v1103, 0.0
      %v1106 = vmax.f32 %v1104, 0.0
      %v1107 = vld [vmem:[%s3] sm:$0xff]
      %v1108 = vld [vmem:[%s3 + $0x8] sm:$0xff]
      %v1109 = vld [vmem:[%s3 + $0x10] sm:$0xff]
      %v1110 = vld [vmem:[%s3 + $0x18] sm:$0xff]
      %v1111 = vld [vmem:[%s3 + $0x20] sm:$0xff]
      %v1112 = vld [vmem:[%s3 + $0x28] sm:$0xff]
      %v1113 = vld [vmem:[%s3 + $0x30] sm:$0xff]
      %v1114 = vld [vmem:[%s3 + $0x38] sm:$0xff]
      %v1115 = vld [vmem:[%s4] sm:$0x1]
      %v1117 = vlaneseq
      %v1118 = vshrl.u32 %v1117, 7
      %v1119 = vsub.s32 0, %v1118
      %v1120 = vrot.slane %v1115, %v1119
      %vm1122 = vcmask 523264
      %v1124 = vsel %vm1122, %v1105, 0
      %v1127 = vsel %vm1122, %v1106, 0
      %1129 = vmatprep.subr.mxu0 0.0
      %1130 = vmatpush1.msra.mxu0 %v1107
      %1131 = vmatprep.subr.mxu0 0.0
      %1132 = vmatpush1.msra.mxu0 %v1108
      %1133 = vmatprep.subr.mxu0 0.0
      %1134 = vmatpush1.msra.mxu0 %v1109
      %1135 = vmatprep.subr.mxu0 0.0
      %1136 = vmatpush1.msra.mxu0 %v1110
      %1137 = vmatprep.subr.mxu0 0.0
      %1138 = vmatpush1.msra.mxu0 %v1111
      %1139 = vmatprep.subr.mxu0 0.0
      %1140 = vmatpush1.msra.mxu0 %v1112
      %1141 = vmatprep.subr.mxu0 0.0
      %1142 = vmatpush1.msra.mxu0 %v1113
      %1143 = vmatprep.subr.mxu0 0.0
      %1144 = vmatpush1.msra.mxu0 %v1114
      %1145 = vmatprep.subr.mxu0 0.0
      %1146 = vmatpush1.msra.mxu0 0.0
      %1147 = vmatprep.subr.mxu0 0.0
      %1148 = vmatpush1.msra.mxu0 0.0
      %1149 = vmatprep.subr.mxu0 0.0
      %1150 = vmatpush1.msra.mxu0 0.0
      %1151 = vmatprep.subr.mxu0 0.0
      %1152 = vmatpush1.msra.mxu0 0.0
      %1153 = vmatprep.subr.mxu0 0.0
      %1154 = vmatpush1.msra.mxu0 0.0
      %1155 = vmatprep.subr.mxu0 0.0
      %1156 = vmatpush1.msra.mxu0 0.0
      %1157 = vmatprep.subr.mxu0 0.0
      %1158 = vmatpush1.msra.mxu0 0.0
      %1159 = vmatprep.subr.mxu0 0.0
      %1160 = vmatpush1.msra.mxu0 0.0
      %1161 = vmatprep.subr.mxu0 0.0
      %1162 = vmatpush1.msra.mxu0 0.0
      %1163 = vmatprep.subr.mxu0 0.0
      %1164 = vmatpush1.msra.mxu0 0.0
      %1165 = vmatprep.subr.mxu0 0.0
      %1166 = vmatpush1.msra.mxu0 0.0
      %1167 = vmatprep.subr.mxu0 0.0
      %1168 = vmatpush1.msra.mxu0 0.0
      %1169 = vmatprep.subr.mxu0 0.0
      %1170 = vmatpush1.msra.mxu0 0.0
      %1171 = vmatprep.subr.mxu0 0.0
      %1172 = vmatpush1.msra.mxu0 0.0
      %1173 = vmatprep.subr.mxu0 0.0
      %1174 = vmatpush1.msra.mxu0 0.0
      %1175 = vmatprep.subr.mxu0 0.0
      %1176 = vmatpush1.msra.mxu0 0.0
      %1177 = vmatprep.subr.mxu0 0.0
      %1178 = vmatpush1.msra.mxu0 0.0
      %1179 = vmatprep.subr.mxu0 0.0
      %1180 = vmatpush1.msra.mxu0 0.0
      %1181 = vmatprep.subr.mxu0 0.0
      %1182 = vmatpush1.msra.mxu0 0.0
      %1183 = vmatprep.subr.mxu0 0.0
      %1184 = vmatpush1.msra.mxu0 0.0
      %1185 = vmatprep.subr.mxu0 0.0
      %1186 = vmatpush1.msra.mxu0 0.0
      %1187 = vmatprep.subr.mxu0 0.0
      %1188 = vmatpush1.msra.mxu0 0.0
      %1189 = vmatprep.subr.mxu0 0.0
      %1190 = vmatpush1.msra.mxu0 0.0
      %1191 = vmatprep.subr.mxu0 0.0
      %1192 = vmatpush1.msra.mxu0 0.0
      %1193 = vmatprep.mubr.f32.mxu0 0.0
      %1194 = vmatmul.mubr.f32.gmra.mrb[0].mxu0 %v1124
      %v1195 = vpop.f32.mrb[0].mxu0
      %v1196 = vadd.f32 %v1120, %v1195
      %v1197 = vpop.f32.mrb[0].mxu0
      %1198 = vmatprep.mubr.f32.mxu0 0.0
      %1199 = vmatmul.mubr.f32.gmra.mrb[0].mxu0 %v1127
      %v1200 = vpop.f32.mrb[0].mxu0
      %v1201 = vadd.f32 %v1120, %v1200
      %v1202 = vpop.f32.mrb[0].mxu0
      %1203 = vdwg.mxu0
      %v1204 = vadd.f32 %v1196, %v279
      %v1205 = vadd.f32 %v1201, %v280
      %v1206 = vld [vmem:[%s5] sm:$0x1]
      %v1207 = vld [vmem:[%s6] sm:$0x1]
      %v1208 = vsel %vm281, %v1204, 0.0
      %1209 = vadd.xlane.f32.xlu0 %v1208
      %v1210 = vpop.xlane.xlu0 %1209
      %v1211 = vsel %vm284, %v1205, 0.0
      %1212 = vadd.xlane.f32.xlu0 %v1211
      %v1213 = vpop.xlane.xlu0 %1212
      %v1214 = vrcp.pop 32.0
      %v1215 = vmul.f32 %v1210, %v1214
      %v1216 = vmul.f32 %v1213, %v1214
      %v1217 = vsub.f32 %v1204, %v1215
      %v1218 = vsub.f32 %v1205, %v1216
      %v1219 = vmul.f32 %v1217, %v1217
      %v1220 = vmul.f32 %v1218, %v1218
      %v1221 = vsel %vm281, %v1219, 0.0
      %1222 = vadd.xlane.f32.xlu0 %v1221
      %v1223 = vpop.xlane.xlu0 %1222
      %v1224 = vsel %vm284, %v1220, 0.0
      %1225 = vadd.xlane.f32.xlu0 %v1224
      %v1226 = vpop.xlane.xlu0 %1225
      %v1227 = vmul.f32 %v1223, %v1214
      %v1228 = vmul.f32 %v1226, %v1214
      %v1229 = vadd.f32 %v1227, 1e-05
      %v1230 = vadd.f32 %v1228, 1e-05
      %v1231 = vrsqrt.pop %v1229
      %v1232 = vrsqrt.pop %v1230
      %v1233 = vmul.f32 %v1217, %v1231
      %v1234 = vmul.f32 %v1218, %v1232
      %v1236 = vlaneseq
      %v1237 = vshrl.u32 %v1236, 7
      %v1238 = vsub.s32 0, %v1237
      %v1239 = vrot.slane %v1206, %v1238
      %v1241 = vmul.f32 %v1233, %v1239
      %v1242 = vmul.f32 %v1234, %v1239
      %v1244 = vlaneseq
      %v1245 = vshrl.u32 %v1244, 7
      %v1246 = vsub.s32 0, %v1245
      %v1247 = vrot.slane %v1207, %v1246
      %v1249 = vadd.f32 %v1241, %v1247
      %v1250 = vadd.f32 %v1242, %v1247
      %1251 = vst.msk [vmem:[%s278] sm:$0xff] %vm281, %v1249
      %1252 = vst.msk [vmem:[%s278 + $0x8] sm:$0xf] %vm284, %v1250
      %p1253 = scmp.lt.s32.totalorder %s18, 1
      %s1254 = scalar_select %p1253, %s18, 1
      %s1255 = smul.addr %s1254, 2
      %s1256 = smul.addr %s1255, 8
      %s1257 = scalar_lea.vmem %s7, %s1256
      // Predicated region
      $region49: #{model_forward.20} parent=47 // pred_check
        %p1258 = pneg %p188
      $region50: #{model_forward.20} parent=47 // pred_check_branch
        %1260 = sbr.rel (%p1258) target = $region52
      $region51: #{model_forward.20} parent=47 // pred_region
        _
      $region52: #{model_forward.20} parent=47 // pred_fallthru
        _
    $region48: #{model_forward.20} parent=5 // pred_fallthru
      _
    %p1261 = scmp.le.s32.totalorder 2, %s13
    // Predicated region
    $region53: #{model_forward.20} parent=5 // pred_check
      %p1262 = pneg %p1261
    $region54: #{model_forward.20} parent=5 // pred_check_branch
      %1264 = sbr.rel (%p1262) target = $region56
    $region55: #{model_forward.20} parent=5 // pred_region
      %s1265 = ssub.s32 %s13, 2
      // Predicated region
      $region57: #{model_forward.20} parent=55 // pred_check
        %p1266 = pneg %p194
      $region58: #{model_forward.20} parent=55 // pred_check_branch
        %1268 = sbr.rel (%p1266) target = $region60
      $region59: #{model_forward.20} parent=55 // pred_region
        %p1269 = scmp.lt.s32.totalorder %s19, 1
        %s1270 = scalar_select %p1269, %s19, 1
        %s1271 = smul.addr %s1270, 2
        %s1272 = smul.addr %s1271, 8
        %s1273 = scalar_lea.vmem %s7, %s1272
      $region60: #{model_forward.20} parent=55 // pred_fallthru
        _
    $region56: #{model_forward.20} parent=5 // pred_fallthru
      _
  $region6: #{model_forward.20} parent=0 // loop_footer
    %s17 = sadd.s32 1, %s13
  $region7: #{model_forward.20} parent=0 // loop_footer_branch
    %12 = sbr.rel target = $region3
  $region8: #{model_forward.20} parent=0 // loop_exit
    _

// kernel: model_forward.19
$region0: #{model_forward.19}
  #allocation0 [shape = 'u32[]', space=smem, size = 0x4, offset = 0x4, fixed_abs, tag = 'smem constant byte address 0x4 - core index']
  #allocation1 [shape = 'u32[144,128]{1,0:T(1,128)}', space=vmem, size = 0x12000, scoped, tag = 'internal scratch']
  %s0 = inlined_call_operand.vmem [shape: f32[2,12,32], index: 0, kind: input, shape index: {}]
  %s1 = inlined_call_operand.vmem [shape: f32[32,96], index: 1, kind: input, shape index: {}]
  %s2 = inlined_call_operand.vmem [shape: f32[1,96], index: 2, kind: input, shape index: {}]
  %s3 = inlined_call_operand.vmem [shape: f32[32,32], index: 3, kind: input, shape index: {}]
  %s4 = inlined_call_operand.vmem [shape: f32[1,32], index: 4, kind: input, shape index: {}]
  %s5 = inlined_call_operand.vmem [shape: f32[1,32], index: 5, kind: input, shape index: {}]
  %s6 = inlined_call_operand.vmem [shape: f32[1,32], index: 6, kind: input, shape index: {}]
  %s7 = inlined_call_operand.vmem [shape: f32[2,1,12], index: 7, kind: input, shape index: {}]
  %s8 = inlined_call_operand.vmem [shape: f32[2,12,32], index: 8, kind: output, shape index: {}]
  %s9 = sld [smem:[#allocation0]]
  $region65: #{model_forward.19} parent=0
    _
  %s11 = ssub.s32 1, %s9
  %s12 = scalar_select 0, %s11, %s9
  loop: start=0, step=1, limit=4
  $region2: #{model_forward.19} parent=0 // loop_pre_header
    _
  $region3: #{model_forward.19} parent=0 // loop_header
    %s14 = sphi 0, %s18
    %p15 = scmp.ge.s32.totalorder %s14, 4
    %s24 = sphi 0, %s26
    %s27 = sphi 0, %s24
    %s28 = sphi 0, %s27
    %s44 = sphi 0, %s28
    %s48 = sphi 0, %s48
    %s50 = sphi 0, %s48
    %s51 = sphi 0, %s50
    %s65 = sphi 0, %s51
    %s69 = sphi 0, %s69
    %s71 = sphi 0, %s69
    %s72 = sphi 0, %s71
    %s86 = sphi 0, %s72
    %s90 = sphi 0, %s90
    %s92 = sphi 0, %s90
    %s93 = sphi 0, %s92
    %s107 = sphi 0, %s93
    %s111 = sphi 0, %s111
    %s113 = sphi 0, %s111
    %s114 = sphi 0, %s113
    %s128 = sphi 0, %s114
    %s132 = sphi 0, %s132
    %s134 = sphi 0, %s132
    %s135 = sphi 0, %s134
    %s149 = sphi 0, %s135
    %s153 = sphi 0, %s153
    %s155 = sphi 0, %s153
    %s156 = sphi 0, %s155
    %s170 = sphi 0, %s156
    %s176 = sphi 0, %s178
    %s179 = sphi 0, %s176
    %s180 = sphi 0, %s179
    %s196 = sphi 0, %s180
    %s202 = sphi 0, %s204
    %s205 = sphi 0, %s202
    %s206 = sphi 0, %s205
    %s222 = sphi 0, %s206
  $region4: #{model_forward.19} parent=0 // loop_header_branch
    %17 = sbr.rel (%p15) target = $region8
  $region5: #{model_forward.19} parent=0 // loop_body
    %s19 = ssub.s32 %s14, 1
    %s20 = ssub.s32 %s14, 2
    %s21 = sadd.s32 %s14, 1
    %s22 = ssub.s32 %s14, %s21
    %p23 = scmp.eq.s32.totalorder %s22, 0
    %s25 = sadd.s32 %s24, 1
    %s26 = scalar_select %p23, %s24, %s25
    %p29 = pneg %p23
    %p30 = scmp.eq.s32.totalorder %s14, 1
    %p31 = por %p29, %p30
    %p32 = scmp.ne.s32.totalorder %s24, %s27
    %p33 = scmp.eq.s32.totalorder %s14, 0
    %p34 = por %p32, %p33
    %p35 = scmp.ne.s32.totalorder %s24, %s27
    %p36 = scmp.eq.s32.totalorder %s19, 1
    %p37 = por %p35, %p36
    %p38 = scmp.ne.s32.totalorder %s27, %s28
    %p39 = scmp.eq.s32.totalorder %s19, 0
    %p40 = por %p38, %p39
    %p41 = scmp.ne.s32.totalorder %s27, %s28
    %p42 = scmp.eq.s32.totalorder %s20, 1
    %p43 = por %p41, %p42
    %p45 = scmp.ne.s32.totalorder %s28, %s44
    %p46 = scmp.eq.s32.totalorder %s20, 0
    %p47 = por %p45, %p46
    %s49 = sadd.s32 %s48, 1
    %p52 = scmp.eq.s32.totalorder %s14, 1
    %p53 = scmp.ne.s32.totalorder %s48, %s50
    %p54 = scmp.eq.s32.totalorder %s14, 0
    %p55 = por %p53, %p54
    %p56 = scmp.ne.s32.totalorder %s48, %s50
    %p57 = scmp.eq.s32.totalorder %s19, 1
    %p58 = por %p56, %p57
    %p59 = scmp.ne.s32.totalorder %s50, %s51
    %p60 = scmp.eq.s32.totalorder %s19, 0
    %p61 = por %p59, %p60
    %p62 = scmp.ne.s32.totalorder %s50, %s51
    %p63 = scmp.eq.s32.totalorder %s20, 1
    %p64 = por %p62, %p63
    %p66 = scmp.ne.s32.totalorder %s51, %s65
    %p67 = scmp.eq.s32.totalorder %s20, 0
    %p68 = por %p66, %p67
    %s70 = sadd.s32 %s69, 1
    %p73 = scmp.eq.s32.totalorder %s14, 1
    %p74 = scmp.ne.s32.totalorder %s69, %s71
    %p75 = scmp.eq.s32.totalorder %s14, 0
    %p76 = por %p74, %p75
    %p77 = scmp.ne.s32.totalorder %s69, %s71
    %p78 = scmp.eq.s32.totalorder %s19, 1
    %p79 = por %p77, %p78
    %p80 = scmp.ne.s32.totalorder %s71, %s72
    %p81 = scmp.eq.s32.totalorder %s19, 0
    %p82 = por %p80, %p81
    %p83 = scmp.ne.s32.totalorder %s71, %s72
    %p84 = scmp.eq.s32.totalorder %s20, 1
    %p85 = por %p83, %p84
    %p87 = scmp.ne.s32.totalorder %s72, %s86
    %p88 = scmp.eq.s32.totalorder %s20, 0
    %p89 = por %p87, %p88
    %s91 = sadd.s32 %s90, 1
    %p94 = scmp.eq.s32.totalorder %s14, 1
    %p95 = scmp.ne.s32.totalorder %s90, %s92
    %p96 = scmp.eq.s32.totalorder %s14, 0
    %p97 = por %p95, %p96
    %p98 = scmp.ne.s32.totalorder %s90, %s92
    %p99 = scmp.eq.s32.totalorder %s19, 1
    %p100 = por %p98, %p99
    %p101 = scmp.ne.s32.totalorder %s92, %s93
    %p102 = scmp.eq.s32.totalorder %s19, 0
    %p103 = por %p101, %p102
    %p104 = scmp.ne.s32.totalorder %s92, %s93
    %p105 = scmp.eq.s32.totalorder %s20, 1
    %p106 = por %p104, %p105
    %p108 = scmp.ne.s32.totalorder %s93, %s107
    %p109 = scmp.eq.s32.totalorder %s20, 0
    %p110 = por %p108, %p109
    %s112 = sadd.s32 %s111, 1
    %p115 = scmp.eq.s32.totalorder %s14, 1
    %p116 = scmp.ne.s32.totalorder %s111, %s113
    %p117 = scmp.eq.s32.totalorder %s14, 0
    %p118 = por %p116, %p117
    %p119 = scmp.ne.s32.totalorder %s111, %s113
    %p120 = scmp.eq.s32.totalorder %s19, 1
    %p121 = por %p119, %p120
    %p122 = scmp.ne.s32.totalorder %s113, %s114
    %p123 = scmp.eq.s32.totalorder %s19, 0
    %p124 = por %p122, %p123
    %p125 = scmp.ne.s32.totalorder %s113, %s114
    %p126 = scmp.eq.s32.totalorder %s20, 1
    %p127 = por %p125, %p126
    %p129 = scmp.ne.s32.totalorder %s114, %s128
    %p130 = scmp.eq.s32.totalorder %s20, 0
    %p131 = por %p129, %p130
    %s133 = sadd.s32 %s132, 1
    %p136 = scmp.eq.s32.totalorder %s14, 1
    %p137 = scmp.ne.s32.totalorder %s132, %s134
    %p138 = scmp.eq.s32.totalorder %s14, 0
    %p139 = por %p137, %p138
    %p140 = scmp.ne.s32.totalorder %s132, %s134
    %p141 = scmp.eq.s32.totalorder %s19, 1
    %p142 = por %p140, %p141
    %p143 = scmp.ne.s32.totalorder %s134, %s135
    %p144 = scmp.eq.s32.totalorder %s19, 0
    %p145 = por %p143, %p144
    %p146 = scmp.ne.s32.totalorder %s134, %s135
    %p147 = scmp.eq.s32.totalorder %s20, 1
    %p148 = por %p146, %p147
    %p150 = scmp.ne.s32.totalorder %s135, %s149
    %p151 = scmp.eq.s32.totalorder %s20, 0
    %p152 = por %p150, %p151
    %s154 = sadd.s32 %s153, 1
    %p157 = scmp.eq.s32.totalorder %s14, 1
    %p158 = scmp.ne.s32.totalorder %s153, %s155
    %p159 = scmp.eq.s32.totalorder %s14, 0
    %p160 = por %p158, %p159
    %p161 = scmp.ne.s32.totalorder %s153, %s155
    %p162 = scmp.eq.s32.totalorder %s19, 1
    %p163 = por %p161, %p162
    %p164 = scmp.ne.s32.totalorder %s155, %s156
    %p165 = scmp.eq.s32.totalorder %s19, 0
    %p166 = por %p164, %p165
    %p167 = scmp.ne.s32.totalorder %s155, %s156
    %p168 = scmp.eq.s32.totalorder %s20, 1
    %p169 = por %p167, %p168
    %p171 = scmp.ne.s32.totalorder %s156, %s170
    %p172 = scmp.eq.s32.totalorder %s20, 0
    %p173 = por %p171, %p172
    %s174 = ssub.s32 %s14, %s21
    %p175 = scmp.eq.s32.totalorder %s174, 0
    %s177 = sadd.s32 %s176, 1
    %s178 = scalar_select %p175, %s176, %s177
    %p181 = pneg %p175
    %p182 = scmp.eq.s32.totalorder %s14, 1
    %p183 = por %p181, %p182
    %p184 = scmp.ne.s32.totalorder %s176, %s179
    %p185 = scmp.eq.s32.totalorder %s14, 0
    %p186 = por %p184, %p185
    %p187 = scmp.ne.s32.totalorder %s176, %s179
    %p188 = scmp.eq.s32.totalorder %s19, 1
    %p189 = por %p187, %p188
    %p190 = scmp.ne.s32.totalorder %s179, %s180
    %p191 = scmp.eq.s32.totalorder %s19, 0
    %p192 = por %p190, %p191
    %p193 = scmp.ne.s32.totalorder %s179, %s180
    %p194 = scmp.eq.s32.totalorder %s20, 1
    %p195 = por %p193, %p194
    %p197 = scmp.ne.s32.totalorder %s180, %s196
    %p198 = scmp.eq.s32.totalorder %s20, 0
    %p199 = por %p197, %p198
    %s200 = ssub.s32 %s14, %s21
    %p201 = scmp.eq.s32.totalorder %s200, 0
    %s203 = sadd.s32 %s202, 1
    %s204 = scalar_select %p201, %s202, %s203
    %p207 = pneg %p201
    %p208 = scmp.eq.s32.totalorder %s14, 1
    %p209 = por %p207, %p208
    %p210 = scmp.ne.s32.totalorder %s202, %s205
    %p211 = scmp.eq.s32.totalorder %s14, 0
    %p212 = por %p210, %p211
    %p213 = scmp.ne.s32.totalorder %s202, %s205
    %p214 = scmp.eq.s32.totalorder %s19, 1
    %p215 = por %p213, %p214
    %p216 = scmp.ne.s32.totalorder %s205, %s206
    %p217 = scmp.eq.s32.totalorder %s19, 0
    %p218 = por %p216, %p217
    %p219 = scmp.ne.s32.totalorder %s205, %s206
    %p220 = scmp.eq.s32.totalorder %s20, 1
    %p221 = por %p219, %p220
    %p223 = scmp.ne.s32.totalorder %s206, %s222
    %p224 = scmp.eq.s32.totalorder %s20, 0
    %p225 = por %p223, %p224
    %p226 = scmp.le.s32.totalorder 1, %s14
    %p227 = scmp.lt.s32.totalorder %s14, 3
    %p228 = pnand %p226, %p227
    %p229 = pneg %p228
    // Predicated region
    $region9: #{model_forward.19} parent=5 // pred_check
      _
    $region10: #{model_forward.19} parent=5 // pred_check_branch
      %231 = sbr.rel (%p228) target = $region12
    $region11: #{model_forward.19} parent=5 // pred_region
      %s232 = ssub.s32 %s14, 1
      // Predicated region
      $region13: #{model_forward.19} parent=11 // pred_check
        %p233 = pneg %p61
      $region14: #{model_forward.19} parent=11 // pred_check_branch
        %235 = sbr.rel (%p233) target = $region16
      $region15: #{model_forward.19} parent=11 // pred_region
        _
      $region16: #{model_forward.19} parent=11 // pred_fallthru
        _
      // Predicated region
      $region17: #{model_forward.19} parent=11 // pred_check
        %p236 = pneg %p82
      $region18: #{model_forward.19} parent=11 // pred_check_branch
        %238 = sbr.rel (%p236) target = $region20
      $region19: #{model_forward.19} parent=11 // pred_region
        _
      $region20: #{model_forward.19} parent=11 // pred_fallthru
        _
      // Predicated region
      $region21: #{model_forward.19} parent=11 // pred_check
        %p239 = pneg %p103
      $region22: #{model_forward.19} parent=11 // pred_check_branch
        %241 = sbr.rel (%p239) target = $region24
      $region23: #{model_forward.19} parent=11 // pred_region
        _
      $region24: #{model_forward.19} parent=11 // pred_fallthru
        _
      // Predicated region
      $region25: #{model_forward.19} parent=11 // pred_check
        %p242 = pneg %p124
      $region26: #{model_forward.19} parent=11 // pred_check_branch
        %244 = sbr.rel (%p242) target = $region28
      $region27: #{model_forward.19} parent=11 // pred_region
        _
      $region28: #{model_forward.19} parent=11 // pred_fallthru
        _
      // Predicated region
      $region29: #{model_forward.19} parent=11 // pred_check
        %p245 = pneg %p145
      $region30: #{model_forward.19} parent=11 // pred_check_branch
        %247 = sbr.rel (%p245) target = $region32
      $region31: #{model_forward.19} parent=11 // pred_region
        _
      $region32: #{model_forward.19} parent=11 // pred_fallthru
        _
      // Predicated region
      $region33: #{model_forward.19} parent=11 // pred_check
        %p248 = pneg %p166
      $region34: #{model_forward.19} parent=11 // pred_check_branch
        %250 = sbr.rel (%p248) target = $region36
      $region35: #{model_forward.19} parent=11 // pred_region
        _
      $region36: #{model_forward.19} parent=11 // pred_fallthru
        _
    $region12: #{model_forward.19} parent=5 // pred_fallthru
      _
    %p251 = scmp.lt.s32.totalorder %s14, 2
    // Predicated region
    $region37: #{model_forward.19} parent=5 // pred_check
      %p252 = pneg %p251
    $region38: #{model_forward.19} parent=5 // pred_check_branch
      %254 = sbr.rel (%p252) target = $region40
    $region39: #{model_forward.19} parent=5 // pred_region
      // Predicated region
      $region41: #{model_forward.19} parent=39 // pred_check
        %p255 = pneg %p34
      $region42: #{model_forward.19} parent=39 // pred_check_branch
        %257 = sbr.rel (%p255) target = $region44
      $region43: #{model_forward.19} parent=39 // pred_region
        %p258 = scmp.lt.s32.totalorder %s14, 1
        %s259 = scalar_select %p258, %s14, 1
        %s260 = smul.addr %s259, 2
        %s261 = smul.addr %s260, 8
        %s262 = scalar_lea.vmem %s0, %s261
      $region44: #{model_forward.19} parent=39 // pred_fallthru
        _
      // Predicated region
      $region45: #{model_forward.19} parent=39 // pred_check
        %p263 = pneg %p186
      $region46: #{model_forward.19} parent=39 // pred_check_branch
        %265 = sbr.rel (%p263) target = $region48
      $region47: #{model_forward.19} parent=39 // pred_region
        %p266 = scmp.lt.s32.totalorder %s14, 1
        %s267 = scalar_select %p266, %s14, 1
        %s268 = scalar_lea.vmem %s7, %s267
      $region48: #{model_forward.19} parent=39 // pred_fallthru
        _
    $region40: #{model_forward.19} parent=5 // pred_fallthru
      _
    %p269 = scmp.le.s32.totalorder 1, %s14
    %p270 = scmp.lt.s32.totalorder %s14, 3
    %p271 = pnand %p269, %p270
    %p272 = pneg %p271
    // Predicated region
    $region49: #{model_forward.19} parent=5 // pred_check
      _
    $region50: #{model_forward.19} parent=5 // pred_check_branch
      %274 = sbr.rel (%p271) target = $region52
    $region51: #{model_forward.19} parent=5 // pred_region
      %s275 = ssub.s32 %s14, 1
      %p276 = scmp.lt.s32.totalorder %s19, 1
      %s277 = scalar_select %p276, %s19, 1
      %s278 = smul.addr %s277, 2
      %s279 = smul.addr %s278, 8
      %s280 = scalar_lea.vmem %s0, %s279
      %p281 = pneg %p40
      %p282 = pneg %p37
      %p283 = pneg %p61
      %p284 = pneg %p58
      %p285 = pneg %p82
      %p286 = pneg %p79
      %p287 = pneg %p103
      %p288 = pneg %p100
      %p289 = pneg %p124
      %p290 = pneg %p121
      %p291 = pneg %p145
      %p292 = pneg %p142
      %p293 = pneg %p166
      %p294 = pneg %p163
      %p295 = scmp.lt.s32.totalorder %s19, 1
      %s296 = scalar_select %p295, %s19, 1
      %s297 = scalar_lea.vmem %s7, %s296
      %p298 = pneg %p192
      %p299 = pneg %p189
      %p300 = pneg %p218
      %p301 = pneg %p215
      %p302 = scmp.lt.s32.totalorder %s19, 1
      %s303 = scalar_select %p302, %s19, 1
      %s304 = smul.addr %s303, 2
      %s305 = smul.addr %s304, 8
      %s306 = scalar_lea.vmem %s8, %s305
      %p307 = scmp.lt.s32.totalorder %s19, 1
      %s308 = scalar_select %p307, %s19, 1
      %s309 = smul.addr %s308, 2
      %s310 = smul.addr %s309, 8
      %s311 = scalar_lea.vmem %s0, %s310
      %p312 = scmp.lt.s32.totalorder %s19, 1
      %s313 = scalar_select %p312, %s19, 1
      %s314 = scalar_lea.vmem %s7, %s313
      %p315 = scmp.lt.s32.totalorder %s19, 1
      %s316 = scalar_select %p315, %s19, 1
      %s317 = smul.addr %s316, 2
      %s318 = smul.addr %s317, 8
      %s319 = scalar_lea.vmem %s8, %s318
      %v320 = vld [vmem:[%s311] sm:$0xff]
      %v321 = vld [vmem:[%s311 + $0x8] sm:$0xf]
      %v322 = vld [vmem:[%s1] sm:$0xff]
      %v323 = vld [vmem:[%s1 + $0x8] sm:$0xff]
      %v324 = vld [vmem:[%s1 + $0x10] sm:$0xff]
      %v325 = vld [vmem:[%s1 + $0x18] sm:$0xff]
      %v326 = vld [vmem:[%s2] sm:$0x1]
      %v328 = vlaneseq
      %v329 = vshrl.u32 %v328, 7
      %v330 = vsub.s32 0, %v329
      %v331 = vrot.slane %v326, %v330
      %vm333 = vcmask 261120
      %v335 = vsel %vm333, %v320, 0
      %v338 = vsel %vm333, %v321, 0
      %340 = vmatprep.subr.mxu0 0.0
      %341 = vmatpush1.msra.mxu0 %v322
      %342 = vmatprep.subr.mxu0 0.0
      %343 = vmatpush1.msra.mxu0 %v323
      %344 = vmatprep.subr.mxu0 0.0
      %345 = vmatpush1.msra.mxu0 %v324
      %346 = vmatprep.subr.mxu0 0.0
      %347 = vmatpush1.msra.mxu0 %v325
      %348 = vmatprep.subr.mxu0 0.0
      %349 = vmatpush1.msra.mxu0 0.0
      %350 = vmatprep.subr.mxu0 0.0
      %351 = vmatpush1.msra.mxu0 0.0
      %352 = vmatprep.subr.mxu0 0.0
      %353 = vmatpush1.msra.mxu0 0.0
      %354 = vmatprep.subr.mxu0 0.0
      %355 = vmatpush1.msra.mxu0 0.0
      %356 = vmatprep.subr.mxu0 0.0
      %357 = vmatpush1.msra.mxu0 0.0
      %358 = vmatprep.subr.mxu0 0.0
      %359 = vmatpush1.msra.mxu0 0.0
      %360 = vmatprep.subr.mxu0 0.0
      %361 = vmatpush1.msra.mxu0 0.0
      %362 = vmatprep.subr.mxu0 0.0
      %363 = vmatpush1.msra.mxu0 0.0
      %364 = vmatprep.subr.mxu0 0.0
      %365 = vmatpush1.msra.mxu0 0.0
      %366 = vmatprep.subr.mxu0 0.0
      %367 = vmatpush1.msra.mxu0 0.0
      %368 = vmatprep.subr.mxu0 0.0
      %369 = vmatpush1.msra.mxu0 0.0
      %370 = vmatprep.subr.mxu0 0.0
      %371 = vmatpush1.msra.mxu0 0.0
      %372 = vmatprep.subr.mxu0 0.0
      %373 = vmatpush1.msra.mxu0 0.0
      %374 = vmatprep.subr.mxu0 0.0
      %375 = vmatpush1.msra.mxu0 0.0
      %376 = vmatprep.subr.mxu0 0.0
      %377 = vmatpush1.msra.mxu0 0.0
      %378 = vmatprep.subr.mxu0 0.0
      %379 = vmatpush1.msra.mxu0 0.0
      %380 = vmatprep.subr.mxu0 0.0
      %381 = vmatpush1.msra.mxu0 0.0
      %382 = vmatprep.subr.mxu0 0.0
      %383 = vmatpush1.msra.mxu0 0.0
      %384 = vmatprep.subr.mxu0 0.0
      %385 = vmatpush1.msra.mxu0 0.0
      %386 = vmatprep.subr.mxu0 0.0
      %387 = vmatpush1.msra.mxu0 0.0
      %388 = vmatprep.subr.mxu0 0.0
      %389 = vmatpush1.msra.mxu0 0.0
      %390 = vmatprep.subr.mxu0 0.0
      %391 = vmatpush1.msra.mxu0 0.0
      %392 = vmatprep.subr.mxu0 0.0
      %393 = vmatpush1.msra.mxu0 0.0
      %394 = vmatprep.subr.mxu0 0.0
      %395 = vmatpush1.msra.mxu0 0.0
      %396 = vmatprep.subr.mxu0 0.0
      %397 = vmatpush1.msra.mxu0 0.0
      %398 = vmatprep.subr.mxu0 0.0
      %399 = vmatpush1.msra.mxu0 0.0
      %400 = vmatprep.subr.mxu0 0.0
      %401 = vmatpush1.msra.mxu0 0.0
      %402 = vmatprep.subr.mxu0 0.0
      %403 = vmatpush1.msra.mxu0 0.0
      %404 = vmatprep.mubr.f32.mxu0 0.0
      %405 = vmatmul.mubr.f32.gmra.mrb[0].mxu0 %v335
      %v406 = vpop.f32.mrb[0].mxu0
      %v407 = vadd.f32 %v331, %v406
      %v408 = vpop.f32.mrb[0].mxu0
      %409 = vmatprep.mubr.f32.mxu0 0.0
      %410 = vmatmul.mubr.f32.gmra.mrb[0].mxu0 %v338
      %v411 = vpop.f32.mrb[0].mxu0
      %v412 = vadd.f32 %v331, %v411
      %v413 = vpop.f32.mrb[0].mxu0
      %414 = vdwg.mxu0
      %v415 = vld [vmem:[%s314] sm:$0x1]
      %v416 = vmul.f32 %v407, 0.35355338
      %v417 = vmul.f32 %v412, 0.35355338
      %v419 = vlaneseq
      %v420 = vshrl.u32 %v419, 7
      %v421 = vsub.s32 0, %v420
      %v422 = vrot.slane %v415, %v421
      %426 = vrot.lane.b32.xlu0 %v407, 96
      %v427 = vpop.permute.xlu0 %426
      %428 = vrot.lane.b32.xlu0 %v412, 96
      %v429 = vpop.permute.xlu0 %428
      %vm430 = vcmask 64512
      %v432 = vsel %vm430, %v416, 0
      %v435 = vsel %vm430, %v417, 0
      %v437 = vsel %vm430, %v427, 0
      %v439 = vsel %vm430, %v429, 0
      %441 = vmatprep.subr.mxu0 0.0
      %442 = vmatpush1.xpose.msra.mxu0 %v437
      %443 = vmatprep.subr.mxu0 0.0
      %444 = vmatpush1.xpose.msra.mxu0 %v439
      %445 = vmatprep.subr.mxu0 0.0
      %446 = vmatpush1.xpose.msra.mxu0 0.0
      %447 = vmatprep.subr.mxu0 0.0
      %448 = vmatpush1.xpose.msra.mxu0 0.0
      %449 = vmatprep.subr.mxu0 0.0
      %450 = vmatpush1.xpose.msra.mxu0 0.0
      %451 = vmatprep.subr.mxu0 0.0
      %452 = vmatpush1.xpose.msra.mxu0 0.0
      %453 = vmatprep.subr.mxu0 0.0
      %454 = vmatpush1.xpose.msra.mxu0 0.0
      %455 = vmatprep.subr.mxu0 0.0
      %456 = vmatpush1.xpose.msra.mxu0 0.0
      %457 = vmatprep.subr.mxu0 0.0
      %458 = vmatpush1.xpose.msra.mxu0 0.0
      %459 = vmatprep.subr.mxu0 0.0
      %460 = vmatpush1.xpose.msra.mxu0 0.0
      %461 = vmatprep.subr.mxu0 0.0
      %462 = vmatpush1.xpose.msra.mxu0 0.0
      %463 = vmatprep.subr.mxu0 0.0
      %464 = vmatpush1.xpose.msra.mxu0 0.0
      %465 = vmatprep.subr.mxu0 0.0
      %466 = vmatpush1.xpose.msra.mxu0 0.0
      %467 = vmatprep.subr.mxu0 0.0
      %468 = vmatpush1.xpose.msra.mxu0 0.0
      %469 = vmatprep.subr.mxu0 0.0
      %470 = vmatpush1.xpose.msra.mxu0 0.0
      %471 = vmatprep.subr.mxu0 0.0
      %472 = vmatpush1.xpose.msra.mxu0 0.0
      %473 = vmatprep.subr.mxu0 0.0
      %474 = vmatpush1.xpose.msra.mxu0 0.0
      %475 = vmatprep.subr.mxu0 0.0
      %476 = vmatpush1.xpose.msra.mxu0 0.0
      %477 = vmatprep.subr.mxu0 0.0
      %478 = vmatpush1.xpose.msra.mxu0 0.0
      %479 = vmatprep.subr.mxu0 0.0
      %480 = vmatpush1.xpose.msra.mxu0 0.0
      %481 = vmatprep.subr.mxu0 0.0
      %482 = vmatpush1.xpose.msra.mxu0 0.0
      %483 = vmatprep.subr.mxu0 0.0
      %484 = vmatpush1.xpose.msra.mxu0 0.0
      %485 = vmatprep.subr.mxu0 0.0
      %486 = vmatpush1.xpose.msra.mxu0 0.0
      %487 = vmatprep.subr.mxu0 0.0
      %488 = vmatpush1.xpose.msra.mxu0 0.0
      %489 = vmatprep.subr.mxu0 0.0
      %490 = vmatpush1.xpose.msra.mxu0 0.0
      %491 = vmatprep.subr.mxu0 0.0
      %492 = vmatpush1.xpose.msra.mxu0 0.0
      %493 = vmatprep.subr.mxu0 0.0
      %494 = vmatpush1.xpose.msra.mxu0 0.0
      %495 = vmatprep.subr.mxu0 0.0
      %496 = vmatpush1.xpose.msra.mxu0 0.0
      %497 = vmatprep.subr.mxu0 0.0
      %498 = vmatpush1.xpose.msra.mxu0 0.0
      %499 = vmatprep.subr.mxu0 0.0
      %500 = vmatpush1.xpose.msra.mxu0 0.0
      %501 = vmatprep.subr.mxu0 0.0
      %502 = vmatpush1.xpose.msra.mxu0 0.0
      %503 = vmatprep.subr.mxu0 0.0
      %504 = vmatpush1.xpose.msra.mxu0 0.0
      %505 = vmatprep.mubr.f32.mxu0 0.0
      %506 = vmatmul.mubr.f32.gmra.mrb[0].mxu0 %v432
      %v507 = vpop.f32.mrb[0].mxu0
      %v508 = vadd.f32 %v422, %v507
      %v509 = vpop.f32.mrb[0].mxu0
      %510 = vmatprep.mubr.f32.mxu0 0.0
      %511 = vmatmul.mubr.f32.gmra.mrb[0].mxu0 %v435
      %v512 = vpop.f32.mrb[0].mxu0
      %v513 = vadd.f32 %v422, %v512
      %v514 = vpop.f32.mrb[0].mxu0
      %515 = vdwg.mxu0
      %vm516 = vcmask 97280
      %v517 = vsel %vm516, %v508, -inf
      %518 = vmax.xlane.f32.xlu0 %v517
      %v519 = vpop.xlane.xlu0 %518
      %vm520 = vcmask 93184
      %v521 = vsel %vm520, %v513, -inf
      %522 = vmax.xlane.f32.xlu0 %v521
      %v523 = vpop.xlane.xlu0 %522
      %v524 = vsub.f32 %v508, %v519
      %v525 = vsub.f32 %v513, %v523
      %v526 = vmul.f32 %v524, 1.442695
      %v527 = vpow.pop %v526
      %v528 = vmul.f32 %v525, 1.442695
      %v529 = vpow.pop %v528
      %v530 = vsel %vm516, %v527, 0.0
      %531 = vadd.xlane.f32.xlu0 %v530
      %v532 = vpop.xlane.xlu0 %531
      %v533 = vsel %vm520, %v529, 0.0
      %534 = vadd.xlane.f32.xlu0 %v533
      %v535 = vpop.xlane.xlu0 %534
      %v536 = vrcp.pop %v532
      %v537 = vmul.f32 1.0, %v536
      %v538 = vrcp.pop %v535
      %v539 = vmul.f32 1.0, %v538
      %v540 = vmul.f32 %v527, %v537
      %v541 = vmul.f32 %v529, %v539
      %542 = vrot.lane.b32.xlu0 %v407, 64
      %v543 = vpop.permute.xlu0 %542
      %544 = vrot.lane.b32.xlu0 %v412, 64
      %v545 = vpop.permute.xlu0 %544
      %v548 = vsel %vm516, %v540, 0
      %v551 = vsel %vm516, %v541, 0
      %vm553 = vcmask 1043456
      %v554 = vsel %vm553, %v545, 0
      %556 = vmatprep.subr.mxu0 0.0
      %557 = vmatpush1.msra.mxu0 %v543
      %558 = vmatprep.subr.mxu0 0.0
      %559 = vmatpush1.msra.mxu0 %v554
      %560 = vmatprep.subr.mxu0 0.0
      %561 = vmatpush1.msra.mxu0 0.0
      %562 = vmatprep.subr.mxu0 0.0
      %563 = vmatpush1.msra.mxu0 0.0
      %564 = vmatprep.subr.mxu0 0.0
      %565 = vmatpush1.msra.mxu0 0.0
      %566 = vmatprep.subr.mxu0 0.0
      %567 = vmatpush1.msra.mxu0 0.0
      %568 = vmatprep.subr.mxu0 0.0
      %569 = vmatpush1.msra.mxu0 0.0
      %570 = vmatprep.subr.mxu0 0.0
      %571 = vmatpush1.msra.mxu0 0.0
      %572 = vmatprep.subr.mxu0 0.0
      %573 = vmatpush1.msra.mxu0 0.0
      %574 = vmatprep.subr.mxu0 0.0
      %575 = vmatpush1.msra.mxu0 0.0
      %576 = vmatprep.subr.mxu0 0.0
      %577 = vmatpush1.msra.mxu0 0.0
      %578 = vmatprep.subr.mxu0 0.0
      %579 = vmatpush1.msra.mxu0 0.0
      %580 = vmatprep.subr.mxu0 0.0
      %581 = vmatpush1.msra.mxu0 0.0
      %582 = vmatprep.subr.mxu0 0.0
      %583 = vmatpush1.msra.mxu0 0.0
      %584 = vmatprep.subr.mxu0 0.0
      %585 = vmatpush1.msra.mxu0 0.0
      %586 = vmatprep.subr.mxu0 0.0
      %587 = vmatpush1.msra.mxu0 0.0
      %588 = vmatprep.subr.mxu0 0.0
      %589 = vmatpush1.msra.mxu0 0.0
      %590 = vmatprep.subr.mxu0 0.0
      %591 = vmatpush1.msra.mxu0 0.0
      %592 = vmatprep.subr.mxu0 0.0
      %593 = vmatpush1.msra.mxu0 0.0
      %594 = vmatprep.subr.mxu0 0.0
      %595 = vmatpush1.msra.mxu0 0.0
      %596 = vmatprep.subr.mxu0 0.0
      %597 = vmatpush1.msra.mxu0 0.0
      %598 = vmatprep.subr.mxu0 0.0
      %599 = vmatpush1.msra.mxu0 0.0
      %600 = vmatprep.subr.mxu0 0.0
      %601 = vmatpush1.msra.mxu0 0.0
      %602 = vmatprep.subr.mxu0 0.0
      %603 = vmatpush1.msra.mxu0 0.0
      %604 = vmatprep.subr.mxu0 0.0
      %605 = vmatpush1.msra.mxu0 0.0
      %606 = vmatprep.subr.mxu0 0.0
      %607 = vmatpush1.msra.mxu0 0.0
      %608 = vmatprep.subr.mxu0 0.0
      %609 = vmatpush1.msra.mxu0 0.0
      %610 = vmatprep.subr.mxu0 0.0
      %611 = vmatpush1.msra.mxu0 0.0
      %612 = vmatprep.subr.mxu0 0.0
      %613 = vmatpush1.msra.mxu0 0.0
      %614 = vmatprep.subr.mxu0 0.0
      %615 = vmatpush1.msra.mxu0 0.0
      %616 = vmatprep.subr.mxu0 0.0
      %617 = vmatpush1.msra.mxu0 0.0
      %618 = vmatprep.subr.mxu0 0.0
      %619 = vmatpush1.msra.mxu0 0.0
      %620 = vmatprep.mubr.f32.mxu0 0.0
      %621 = vmatmul.mubr.f32.gmra.mrb[0].mxu0 %v548
      %v622 = vpop.f32.mrb[0].mxu0
      %v623 = vadd.f32 0.0, %v622
      %v624 = vpop.f32.mrb[0].mxu0
      %625 = vmatprep.mubr.f32.mxu0 0.0
      %626 = vmatmul.mubr.f32.gmra.mrb[0].mxu0 %v551
      %v627 = vpop.f32.mrb[0].mxu0
      %v628 = vadd.f32 0.0, %v627
      %v629 = vpop.f32.mrb[0].mxu0
      %630 = vdwg.mxu0
      %v631 = vld [vmem:[%s3] sm:$0xff]
      %632 = vrot.lane.b32.xlu0 %v416, 120
      %v633 = vpop.permute.xlu0 %632
      %634 = vrot.lane.b32.xlu0 %v417, 120
      %v635 = vpop.permute.xlu0 %634
      %636 = vrot.lane.b32.xlu0 %v407, 88
      %v637 = vpop.permute.xlu0 %636
      %638 = vrot.lane.b32.xlu0 %v412, 88
      %v639 = vpop.permute.xlu0 %638
      %v640 = vsel %vm430, %v633, 0
      %v642 = vsel %vm430, %v635, 0
      %v644 = vsel %vm430, %v637, 0
      %v646 = vsel %vm430, %v639, 0
      %648 = vmatprep.subr.mxu0 0.0
      %649 = vmatpush1.xpose.msra.mxu0 %v644
      %650 = vmatprep.subr.mxu0 0.0
      %651 = vmatpush1.xpose.msra.mxu0 %v646
      %652 = vmatprep.subr.mxu0 0.0
      %653 = vmatpush1.xpose.msra.mxu0 0.0
      %654 = vmatprep.subr.mxu0 0.0
      %655 = vmatpush1.xpose.msra.mxu0 0.0
      %656 = vmatprep.subr.mxu0 0.0
      %657 = vmatpush1.xpose.msra.mxu0 0.0
      %658 = vmatprep.subr.mxu0 0.0
      %659 = vmatpush1.xpose.msra.mxu0 0.0
      %660 = vmatprep.subr.mxu0 0.0
      %661 = vmatpush1.xpose.msra.mxu0 0.0
      %662 = vmatprep.subr.mxu0 0.0
      %663 = vmatpush1.xpose.msra.mxu0 0.0
      %664 = vmatprep.subr.mxu0 0.0
      %665 = vmatpush1.xpose.msra.mxu0 0.0
      %666 = vmatprep.subr.mxu0 0.0
      %667 = vmatpush1.xpose.msra.mxu0 0.0
      %668 = vmatprep.subr.mxu0 0.0
      %669 = vmatpush1.xpose.msra.mxu0 0.0
      %670 = vmatprep.subr.mxu0 0.0
      %671 = vmatpush1.xpose.msra.mxu0 0.0
      %672 = vmatprep.subr.mxu0 0.0
      %673 = vmatpush1.xpose.msra.mxu0 0.0
      %674 = vmatprep.subr.mxu0 0.0
      %675 = vmatpush1.xpose.msra.mxu0 0.0
      %676 = vmatprep.subr.mxu0 0.0
      %677 = vmatpush1.xpose.msra.mxu0 0.0
      %678 = vmatprep.subr.mxu0 0.0
      %679 = vmatpush1.xpose.msra.mxu0 0.0
      %680 = vmatprep.subr.mxu0 0.0
      %681 = vmatpush1.xpose.msra.mxu0 0.0
      %682 = vmatprep.subr.mxu0 0.0
      %683 = vmatpush1.xpose.msra.mxu0 0.0
      %684 = vmatprep.subr.mxu0 0.0
      %685 = vmatpush1.xpose.msra.mxu0 0.0
      %686 = vmatprep.subr.mxu0 0.0
      %687 = vmatpush1.xpose.msra.mxu0 0.0
      %688 = vmatprep.subr.mxu0 0.0
      %689 = vmatpush1.xpose.msra.mxu0 0.0
      %690 = vmatprep.subr.mxu0 0.0
      %691 = vmatpush1.xpose.msra.mxu0 0.0
      %692 = vmatprep.subr.mxu0 0.0
      %693 = vmatpush1.xpose.msra.mxu0 0.0
      %694 = vmatprep.subr.mxu0 0.0
      %695 = vmatpush1.xpose.msra.mxu0 0.0
      %696 = vmatprep.subr.mxu0 0.0
      %697 = vmatpush1.xpose.msra.mxu0 0.0
      %698 = vmatprep.subr.mxu0 0.0
      %699 = vmatpush1.xpose.msra.mxu0 0.0
      %700 = vmatprep.subr.mxu0 0.0
      %701 = vmatpush1.xpose.msra.mxu0 0.0
      %702 = vmatprep.subr.mxu0 0.0
      %703 = vmatpush1.xpose.msra.mxu0 0.0
      %704 = vmatprep.subr.mxu0 0.0
      %705 = vmatpush1.xpose.msra.mxu0 0.0
      %706 = vmatprep.subr.mxu0 0.0
      %707 = vmatpush1.xpose.msra.mxu0 0.0
      %708 = vmatprep.subr.mxu0 0.0
      %709 = vmatpush1.xpose.msra.mxu0 0.0
      %710 = vmatprep.subr.mxu0 0.0
      %711 = vmatpush1.xpose.msra.mxu0 0.0
      %712 = vmatprep.mubr.f32.mxu0 0.0
      %713 = vmatmul.mubr.f32.gmra.mrb[0].mxu0 %v640
      %v714 = vpop.f32.mrb[0].mxu0
      %v715 = vadd.f32 %v422, %v714
      %v716 = vpop.f32.mrb[0].mxu0
      %717 = vmatprep.mubr.f32.mxu0 0.0
      %718 = vmatmul.mubr.f32.gmra.mrb[0].mxu0 %v642
      %v719 = vpop.f32.mrb[0].mxu0
      %v720 = vadd.f32 %v422, %v719
      %v721 = vpop.f32.mrb[0].mxu0
      %722 = vdwg.mxu0
      %v723 = vsel %vm516, %v715, -inf
      %724 = vmax.xlane.f32.xlu0 %v723
      %v725 = vpop.xlane.xlu0 %724
      %v726 = vsel %vm520, %v720, -inf
      %727 = vmax.xlane.f32.xlu0 %v726
      %v728 = vpop.xlane.xlu0 %727
      %v729 = vsub.f32 %v715, %v725
      %v730 = vsub.f32 %v720, %v728
      %v731 = vmul.f32 %v729, 1.442695
      %v732 = vpow.pop %v731
      %v733 = vmul.f32 %v730, 1.442695
      %v734 = vpow.pop %v733
      %v735 = vsel %vm516, %v732, 0.0
      %736 = vadd.xlane.f32.xlu0 %v735
      %v737 = vpop.xlane.xlu0 %736
      %v738 = vsel %vm520, %v734, 0.0
      %739 = vadd.xlane.f32.xlu0 %v738
      %v740 = vpop.xlane.xlu0 %739
      %v741 = vrcp.pop %v737
      %v742 = vmul.f32 1.0, %v741
      %v743 = vrcp.pop %v740
      %v744 = vmul.f32 1.0, %v743
      %v745 = vmul.f32 %v732, %v742
      %v746 = vmul.f32 %v734, %v744
      %747 = vrot.lane.b32.xlu0 %v407, 56
      %v748 = vpop.permute.xlu0 %747
      %749 = vrot.lane.b32.xlu0 %v412, 56
      %v750 = vpop.permute.xlu0 %749
      %v753 = vsel %vm516, %v745, 0
      %v756 = vsel %vm516, %v746, 0
      %v758 = vsel %vm553, %v750, 0
      %760 = vmatprep.subr.mxu0 0.0
      %761 = vmatpush1.msra.mxu0 %v748
      %762 = vmatprep.subr.mxu0 0.0
      %763 = vmatpush1.msra.mxu0 %v758
      %764 = vmatprep.subr.mxu0 0.0
      %765 = vmatpush1.msra.mxu0 0.0
      %766 = vmatprep.subr.mxu0 0.0
      %767 = vmatpush1.msra.mxu0 0.0
      %768 = vmatprep.subr.mxu0 0.0
      %769 = vmatpush1.msra.mxu0 0.0
      %770 = vmatprep.subr.mxu0 0.0
      %771 = vmatpush1.msra.mxu0 0.0
      %772 = vmatprep.subr.mxu0 0.0
      %773 = vmatpush1.msra.mxu0 0.0
      %774 = vmatprep.subr.mxu0 0.0
      %775 = vmatpush1.msra.mxu0 0.0
      %776 = vmatprep.subr.mxu0 0.0
      %777 = vmatpush1.msra.mxu0 0.0
      %778 = vmatprep.subr.mxu0 0.0
      %779 = vmatpush1.msra.mxu0 0.0
      %780 = vmatprep.subr.mxu0 0.0
      %781 = vmatpush1.msra.mxu0 0.0
      %782 = vmatprep.subr.mxu0 0.0
      %783 = vmatpush1.msra.mxu0 0.0
      %784 = vmatprep.subr.mxu0 0.0
      %785 = vmatpush1.msra.mxu0 0.0
      %786 = vmatprep.subr.mxu0 0.0
      %787 = vmatpush1.msra.mxu0 0.0
      %788 = vmatprep.subr.mxu0 0.0
      %789 = vmatpush1.msra.mxu0 0.0
      %790 = vmatprep.subr.mxu0 0.0
      %791 = vmatpush1.msra.mxu0 0.0
      %792 = vmatprep.subr.mxu0 0.0
      %793 = vmatpush1.msra.mxu0 0.0
      %794 = vmatprep.subr.mxu0 0.0
      %795 = vmatpush1.msra.mxu0 0.0
      %796 = vmatprep.subr.mxu0 0.0
      %797 = vmatpush1.msra.mxu0 0.0
      %798 = vmatprep.subr.mxu0 0.0
      %799 = vmatpush1.msra.mxu0 0.0
      %800 = vmatprep.subr.mxu0 0.0
      %801 = vmatpush1.msra.mxu0 0.0
      %802 = vmatprep.subr.mxu0 0.0
      %803 = vmatpush1.msra.mxu0 0.0
      %804 = vmatprep.subr.mxu0 0.0
      %805 = vmatpush1.msra.mxu0 0.0
      %806 = vmatprep.subr.mxu0 0.0
      %807 = vmatpush1.msra.mxu0 0.0
      %808 = vmatprep.subr.mxu0 0.0
      %809 = vmatpush1.msra.mxu0 0.0
      %810 = vmatprep.subr.mxu0 0.0
      %811 = vmatpush1.msra.mxu0 0.0
      %812 = vmatprep.subr.mxu0 0.0
      %813 = vmatpush1.msra.mxu0 0.0
      %814 = vmatprep.subr.mxu0 0.0
      %815 = vmatpush1.msra.mxu0 0.0
      %816 = vmatprep.subr.mxu0 0.0
      %817 = vmatpush1.msra.mxu0 0.0
      %818 = vmatprep.subr.mxu0 0.0
      %819 = vmatpush1.msra.mxu0 0.0
      %820 = vmatprep.subr.mxu0 0.0
      %821 = vmatpush1.msra.mxu0 0.0
      %822 = vmatprep.subr.mxu0 0.0
      %823 = vmatpush1.msra.mxu0 0.0
      %824 = vmatprep.mubr.f32.mxu0 0.0
      %825 = vmatmul.mubr.f32.gmra.mrb[0].mxu0 %v753
      %v826 = vpop.f32.mrb[0].mxu0
      %v827 = vadd.f32 0.0, %v826
      %v828 = vpop.f32.mrb[0].mxu0
      %829 = vmatprep.mubr.f32.mxu0 0.0
      %830 = vmatmul.mubr.f32.gmra.mrb[0].mxu0 %v756
      %v831 = vpop.f32.mrb[0].mxu0
      %v832 = vadd.f32 0.0, %v831
      %v833 = vpop.f32.mrb[0].mxu0
      %834 = vdwg.mxu0
      %v835 = vld [vmem:[%s3 + $0x8] sm:$0xff]
      %v837 = vsel %vm430, %v827, 0
      %v840 = vsel %vm430, %v832, 0
      %842 = vmatprep.subr.mxu0 0.0
      %843 = vmatpush1.msra.mxu0 %v835
      %844 = vmatprep.subr.mxu0 0.0
      %845 = vmatpush1.msra.mxu0 0.0
      %846 = vmatprep.subr.mxu0 0.0
      %847 = vmatpush1.msra.mxu0 0.0
      %848 = vmatprep.subr.mxu0 0.0
      %849 = vmatpush1.msra.mxu0 0.0
      %850 = vmatprep.subr.mxu0 0.0
      %851 = vmatpush1.msra.mxu0 0.0
      %852 = vmatprep.subr.mxu0 0.0
      %853 = vmatpush1.msra.mxu0 0.0
      %854 = vmatprep.subr.mxu0 0.0
      %855 = vmatpush1.msra.mxu0 0.0
      %856 = vmatprep.subr.mxu0 0.0
      %857 = vmatpush1.msra.mxu0 0.0
      %858 = vmatprep.subr.mxu0 0.0
      %859 = vmatpush1.msra.mxu0 0.0
      %860 = vmatprep.subr.mxu0 0.0
      %861 = vmatpush1.msra.mxu0 0.0
      %862 = vmatprep.subr.mxu0 0.0
      %863 = vmatpush1.msra.mxu0 0.0
      %864 = vmatprep.subr.mxu0 0.0
      %865 = vmatpush1.msra.mxu0 0.0
      %866 = vmatprep.subr.mxu0 0.0
      %867 = vmatpush1.msra.mxu0 0.0
      %868 = vmatprep.subr.mxu0 0.0
      %869 = vmatpush1.msra.mxu0 0.0
      %870 = vmatprep.subr.mxu0 0.0
      %871 = vmatpush1.msra.mxu0 0.0
      %872 = vmatprep.subr.mxu0 0.0
      %873 = vmatpush1.msra.mxu0 0.0
      %874 = vmatprep.subr.mxu0 0.0
      %875 = vmatpush1.msra.mxu0 0.0
      %876 = vmatprep.subr.mxu0 0.0
      %877 = vmatpush1.msra.mxu0 0.0
      %878 = vmatprep.subr.mxu0 0.0
      %879 = vmatpush1.msra.mxu0 0.0
      %880 = vmatprep.subr.mxu0 0.0
      %881 = vmatpush1.msra.mxu0 0.0
      %882 = vmatprep.subr.mxu0 0.0
      %883 = vmatpush1.msra.mxu0 0.0
      %884 = vmatprep.subr.mxu0 0.0
      %885 = vmatpush1.msra.mxu0 0.0
      %886 = vmatprep.subr.mxu0 0.0
      %887 = vmatpush1.msra.mxu0 0.0
      %888 = vmatprep.subr.mxu0 0.0
      %889 = vmatpush1.msra.mxu0 0.0
      %890 = vmatprep.subr.mxu0 0.0
      %891 = vmatpush1.msra.mxu0 0.0
      %892 = vmatprep.subr.mxu0 0.0
      %893 = vmatpush1.msra.mxu0 0.0
      %894 = vmatprep.subr.mxu0 0.0
      %895 = vmatpush1.msra.mxu0 0.0
      %896 = vmatprep.subr.mxu0 0.0
      %897 = vmatpush1.msra.mxu0 0.0
      %898 = vmatprep.subr.mxu0 0.0
      %899 = vmatpush1.msra.mxu0 0.0
      %900 = vmatprep.subr.mxu0 0.0
      %901 = vmatpush1.msra.mxu0 0.0
      %902 = vmatprep.subr.mxu0 0.0
      %903 = vmatpush1.msra.mxu0 0.0
      %904 = vmatprep.subr.mxu0 0.0
      %905 = vmatpush1.msra.mxu0 0.0
      %906 = vmatprep.mubr.f32.mxu0 0.0
      %907 = vmatmul.mubr.f32.gmra.mrb[0].mxu0 %v837
      %v908 = vpop.f32.mrb[0].mxu0
      %v909 = vadd.f32 0.0, %v908
      %v910 = vpop.f32.mrb[0].mxu0
      %911 = vmatprep.mubr.f32.mxu0 0.0
      %912 = vmatmul.mubr.f32.gmra.mrb[0].mxu0 %v840
      %v913 = vpop.f32.mrb[0].mxu0
      %v914 = vadd.f32 0.0, %v913
      %v915 = vpop.f32.mrb[0].mxu0
      %916 = vdwg.mxu0
      %v918 = vsel %vm430, %v623, 0
      %v921 = vsel %vm430, %v628, 0
      %923 = vmatprep.subr.mxu0 0.0
      %924 = vmatpush1.msra.mxu0 %v631
      %925 = vmatprep.subr.mxu0 0.0
      %926 = vmatpush1.msra.mxu0 0.0
      %927 = vmatprep.subr.mxu0 0.0
      %928 = vmatpush1.msra.mxu0 0.0
      %929 = vmatprep.subr.mxu0 0.0
      %930 = vmatpush1.msra.mxu0 0.0
      %931 = vmatprep.subr.mxu0 0.0
      %932 = vmatpush1.msra.mxu0 0.0
      %933 = vmatprep.subr.mxu0 0.0
      %934 = vmatpush1.msra.mxu0 0.0
      %935 = vmatprep.subr.mxu0 0.0
      %936 = vmatpush1.msra.mxu0 0.0
      %937 = vmatprep.subr.mxu0 0.0
      %938 = vmatpush1.msra.mxu0 0.0
      %939 = vmatprep.subr.mxu0 0.0
      %940 = vmatpush1.msra.mxu0 0.0
      %941 = vmatprep.subr.mxu0 0.0
      %942 = vmatpush1.msra.mxu0 0.0
      %943 = vmatprep.subr.mxu0 0.0
      %944 = vmatpush1.msra.mxu0 0.0
      %945 = vmatprep.subr.mxu0 0.0
      %946 = vmatpush1.msra.mxu0 0.0
      %947 = vmatprep.subr.mxu0 0.0
      %948 = vmatpush1.msra.mxu0 0.0
      %949 = vmatprep.subr.mxu0 0.0
      %950 = vmatpush1.msra.mxu0 0.0
      %951 = vmatprep.subr.mxu0 0.0
      %952 = vmatpush1.msra.mxu0 0.0
      %953 = vmatprep.subr.mxu0 0.0
      %954 = vmatpush1.msra.mxu0 0.0
      %955 = vmatprep.subr.mxu0 0.0
      %956 = vmatpush1.msra.mxu0 0.0
      %957 = vmatprep.subr.mxu0 0.0
      %958 = vmatpush1.msra.mxu0 0.0
      %959 = vmatprep.subr.mxu0 0.0
      %960 = vmatpush1.msra.mxu0 0.0
      %961 = vmatprep.subr.mxu0 0.0
      %962 = vmatpush1.msra.mxu0 0.0
      %963 = vmatprep.subr.mxu0 0.0
      %964 = vmatpush1.msra.mxu0 0.0
      %965 = vmatprep.subr.mxu0 0.0
      %966 = vmatpush1.msra.mxu0 0.0
      %967 = vmatprep.subr.mxu0 0.0
      %968 = vmatpush1.msra.mxu0 0.0
      %969 = vmatprep.subr.mxu0 0.0
      %970 = vmatpush1.msra.mxu0 0.0
      %971 = vmatprep.subr.mxu0 0.0
      %972 = vmatpush1.msra.mxu0 0.0
      %973 = vmatprep.subr.mxu0 0.0
      %974 = vmatpush1.msra.mxu0 0.0
      %975 = vmatprep.subr.mxu0 0.0
      %976 = vmatpush1.msra.mxu0 0.0
      %977 = vmatprep.subr.mxu0 0.0
      %978 = vmatpush1.msra.mxu0 0.0
      %979 = vmatprep.subr.mxu0 0.0
      %980 = vmatpush1.msra.mxu0 0.0
      %981 = vmatprep.subr.mxu0 0.0
      %982 = vmatpush1.msra.mxu0 0.0
      %983 = vmatprep.subr.mxu0 0.0
      %984 = vmatpush1.msra.mxu0 0.0
      %985 = vmatprep.subr.mxu0 0.0
      %986 = vmatpush1.msra.mxu0 0.0
      %987 = vmatprep.mubr.f32.mxu0 0.0
      %988 = vmatmul.mubr.f32.gmra.mrb[0].mxu0 %v918
      %v989 = vpop.f32.mrb[0].mxu0
      %v990 = vadd.f32 %v909, %v989
      %v991 = vpop.f32.mrb[0].mxu0
      %992 = vmatprep.mubr.f32.mxu0 0.0
      %993 = vmatmul.mubr.f32.gmra.mrb[0].mxu0 %v921
      %v994 = vpop.f32.mrb[0].mxu0
      %v995 = vadd.f32 %v914, %v994
      %v996 = vpop.f32.mrb[0].mxu0
      %997 = vdwg.mxu0
      %998 = vrot.lane.b32.xlu0 %v416, 112
      %v999 = vpop.permute.xlu0 %998
      %1000 = vrot.lane.b32.xlu0 %v417, 112
      %v1001 = vpop.permute.xlu0 %1000
      %1002 = vrot.lane.b32.xlu0 %v407, 80
      %v1003 = vpop.permute.xlu0 %1002
      %1004 = vrot.lane.b32.xlu0 %v412, 80
      %v1005 = vpop.permute.xlu0 %1004
      %v1006 = vsel %vm430, %v999, 0
      %v1008 = vsel %vm430, %v1001, 0
      %v1010 = vsel %vm430, %v1003, 0
      %v1012 = vsel %vm430, %v1005, 0
      %1014 = vmatprep.subr.mxu0 0.0
      %1015 = vmatpush1.xpose.msra.mxu0 %v1010
      %1016 = vmatprep.subr.mxu0 0.0
      %1017 = vmatpush1.xpose.msra.mxu0 %v1012
      %1018 = vmatprep.subr.mxu0 0.0
      %1019 = vmatpush1.xpose.msra.mxu0 0.0
      %1020 = vmatprep.subr.mxu0 0.0
      %1021 = vmatpush1.xpose.msra.mxu0 0.0
      %1022 = vmatprep.subr.mxu0 0.0
      %1023 = vmatpush1.xpose.msra.mxu0 0.0
      %1024 = vmatprep.subr.mxu0 0.0
      %1025 = vmatpush1.xpose.msra.mxu0 0.0
      %1026 = vmatprep.subr.mxu0 0.0
      %1027 = vmatpush1.xpose.msra.mxu0 0.0
      %1028 = vmatprep.subr.mxu0 0.0
      %1029 = vmatpush1.xpose.msra.mxu0 0.0
      %1030 = vmatprep.subr.mxu0 0.0
      %1031 = vmatpush1.xpose.msra.mxu0 0.0
      %1032 = vmatprep.subr.mxu0 0.0
      %1033 = vmatpush1.xpose.msra.mxu0 0.0
      %1034 = vmatprep.subr.mxu0 0.0
      %1035 = vmatpush1.xpose.msra.mxu0 0.0
      %1036 = vmatprep.subr.mxu0 0.0
      %1037 = vmatpush1.xpose.msra.mxu0 0.0
      %1038 = vmatprep.subr.mxu0 0.0
      %1039 = vmatpush1.xpose.msra.mxu0 0.0
      %1040 = vmatprep.subr.mxu0 0.0
      %1041 = vmatpush1.xpose.msra.mxu0 0.0
      %1042 = vmatprep.subr.mxu0 0.0
      %1043 = vmatpush1.xpose.msra.mxu0 0.0
      %1044 = vmatprep.subr.mxu0 0.0
      %1045 = vmatpush1.xpose.msra.mxu0 0.0
      %1046 = vmatprep.subr.mxu0 0.0
      %1047 = vmatpush1.xpose.msra.mxu0 0.0
      %1048 = vmatprep.subr.mxu0 0.0
      %1049 = vmatpush1.xpose.msra.mxu0 0.0
      %1050 = vmatprep.subr.mxu0 0.0
      %1051 = vmatpush1.xpose.msra.mxu0 0.0
      %1052 = vmatprep.subr.mxu0 0.0
      %1053 = vmatpush1.xpose.msra.mxu0 0.0
      %1054 = vmatprep.subr.mxu0 0.0
      %1055 = vmatpush1.xpose.msra.mxu0 0.0
      %1056 = vmatprep.subr.mxu0 0.0
      %1057 = vmatpush1.xpose.msra.mxu0 0.0
      %1058 = vmatprep.subr.mxu0 0.0
      %1059 = vmatpush1.xpose.msra.mxu0 0.0
      %1060 = vmatprep.subr.mxu0 0.0
      %1061 = vmatpush1.xpose.msra.mxu0 0.0
      %1062 = vmatprep.subr.mxu0 0.0
      %1063 = vmatpush1.xpose.msra.mxu0 0.0
      %1064 = vmatprep.subr.mxu0 0.0
      %1065 = vmatpush1.xpose.msra.mxu0 0.0
      %1066 = vmatprep.subr.mxu0 0.0
      %1067 = vmatpush1.xpose.msra.mxu0 0.0
      %1068 = vmatprep.subr.mxu0 0.0
      %1069 = vmatpush1.xpose.msra.mxu0 0.0
      %1070 = vmatprep.subr.mxu0 0.0
      %1071 = vmatpush1.xpose.msra.mxu0 0.0
      %1072 = vmatprep.subr.mxu0 0.0
      %1073 = vmatpush1.xpose.msra.mxu0 0.0
      %1074 = vmatprep.subr.mxu0 0.0
      %1075 = vmatpush1.xpose.msra.mxu0 0.0
      %1076 = vmatprep.subr.mxu0 0.0
      %1077 = vmatpush1.xpose.msra.mxu0 0.0
      %1078 = vmatprep.mubr.f32.mxu0 0.0
      %1079 = vmatmul.mubr.f32.gmra.mrb[0].mxu0 %v1006
      %v1080 = vpop.f32.mrb[0].mxu0
      %v1081 = vadd.f32 %v422, %v1080
      %v1082 = vpop.f32.mrb[0].mxu0
      %1083 = vmatprep.mubr.f32.mxu0 0.0
      %1084 = vmatmul.mubr.f32.gmra.mrb[0].mxu0 %v1008
      %v1085 = vpop.f32.mrb[0].mxu0
      %v1086 = vadd.f32 %v422, %v1085
      %v1087 = vpop.f32.mrb[0].mxu0
      %1088 = vdwg.mxu0
      %v1089 = vsel %vm516, %v1081, -inf
      %1090 = vmax.xlane.f32.xlu0 %v1089
      %v1091 = vpop.xlane.xlu0 %1090
      %v1092 = vsel %vm520, %v1086, -inf
      %1093 = vmax.xlane.f32.xlu0 %v1092
      %v1094 = vpop.xlane.xlu0 %1093
      %v1095 = vsub.f32 %v1081, %v1091
      %v1096 = vsub.f32 %v1086, %v1094
      %v1097 = vmul.f32 %v1095, 1.442695
      %v1098 = vpow.pop %v1097
      %v1099 = vmul.f32 %v1096, 1.442695
      %v1100 = vpow.pop %v1099
      %v1101 = vsel %vm516, %v1098, 0.0
      %1102 = vadd.xlane.f32.xlu0 %v1101
      %v1103 = vpop.xlane.xlu0 %1102
      %v1104 = vsel %vm520, %v1100, 0.0
      %1105 = vadd.xlane.f32.xlu0 %v1104
      %v1106 = vpop.xlane.xlu0 %1105
      %v1107 = vrcp.pop %v1103
      %v1108 = vmul.f32 1.0, %v1107
      %v1109 = vrcp.pop %v1106
      %v1110 = vmul.f32 1.0, %v1109
      %v1111 = vmul.f32 %v1098, %v1108
      %v1112 = vmul.f32 %v1100, %v1110
      %1113 = vrot.lane.b32.xlu0 %v407, 48
      %v1114 = vpop.permute.xlu0 %1113
      %1115 = vrot.lane.b32.xlu0 %v412, 48
      %v1116 = vpop.permute.xlu0 %1115
      %v1119 = vsel %vm516, %v1111, 0
      %v1122 = vsel %vm516, %v1112, 0
      %v1124 = vsel %vm553, %v1116, 0
      %1126 = vmatprep.subr.mxu0 0.0
      %1127 = vmatpush1.msra.mxu0 %v1114
      %1128 = vmatprep.subr.mxu0 0.0
      %1129 = vmatpush1.msra.mxu0 %v1124
      %1130 = vmatprep.subr.mxu0 0.0
      %1131 = vmatpush1.msra.mxu0 0.0
      %1132 = vmatprep.subr.mxu0 0.0
      %1133 = vmatpush1.msra.mxu0 0.0
      %1134 = vmatprep.subr.mxu0 0.0
      %1135 = vmatpush1.msra.mxu0 0.0
      %1136 = vmatprep.subr.mxu0 0.0
      %1137 = vmatpush1.msra.mxu0 0.0
      %1138 = vmatprep.subr.mxu0 0.0
      %1139 = vmatpush1.msra.mxu0 0.0
      %1140 = vmatprep.subr.mxu0 0.0
      %1141 = vmatpush1.msra.mxu0 0.0
      %1142 = vmatprep.subr.mxu0 0.0
      %1143 = vmatpush1.msra.mxu0 0.0
      %1144 = vmatprep.subr.mxu0 0.0
      %1145 = vmatpush1.msra.mxu0 0.0
      %1146 = vmatprep.subr.mxu0 0.0
      %1147 = vmatpush1.msra.mxu0 0.0
      %1148 = vmatprep.subr.mxu0 0.0
      %1149 = vmatpush1.msra.mxu0 0.0
      %1150 = vmatprep.subr.mxu0 0.0
      %1151 = vmatpush1.msra.mxu0 0.0
      %1152 = vmatprep.subr.mxu0 0.0
      %1153 = vmatpush1.msra.mxu0 0.0
      %1154 = vmatprep.subr.mxu0 0.0
      %1155 = vmatpush1.msra.mxu0 0.0
      %1156 = vmatprep.subr.mxu0 0.0
      %1157 = vmatpush1.msra.mxu0 0.0
      %1158 = vmatprep.subr.mxu0 0.0
      %1159 = vmatpush1.msra.mxu0 0.0
      %1160 = vmatprep.subr.mxu0 0.0
      %1161 = vmatpush1.msra.mxu0 0.0
      %1162 = vmatprep.subr.mxu0 0.0
      %1163 = vmatpush1.msra.mxu0 0.0
      %1164 = vmatprep.subr.mxu0 0.0
      %1165 = vmatpush1.msra.mxu0 0.0
      %1166 = vmatprep.subr.mxu0 0.0
      %1167 = vmatpush1.msra.mxu0 0.0
      %1168 = vmatprep.subr.mxu0 0.0
      %1169 = vmatpush1.msra.mxu0 0.0
      %1170 = vmatprep.subr.mxu0 0.0
      %1171 = vmatpush1.msra.mxu0 0.0
      %1172 = vmatprep.subr.mxu0 0.0
      %1173 = vmatpush1.msra.mxu0 0.0
      %1174 = vmatprep.subr.mxu0 0.0
      %1175 = vmatpush1.msra.mxu0 0.0
      %1176 = vmatprep.subr.mxu0 0.0
      %1177 = vmatpush1.msra.mxu0 0.0
      %1178 = vmatprep.subr.mxu0 0.0
      %1179 = vmatpush1.msra.mxu0 0.0
      %1180 = vmatprep.subr.mxu0 0.0
      %1181 = vmatpush1.msra.mxu0 0.0
      %1182 = vmatprep.subr.mxu0 0.0
      %1183 = vmatpush1.msra.mxu0 0.0
      %1184 = vmatprep.subr.mxu0 0.0
      %1185 = vmatpush1.msra.mxu0 0.0
      %1186 = vmatprep.subr.mxu0 0.0
      %1187 = vmatpush1.msra.mxu0 0.0
      %1188 = vmatprep.subr.mxu0 0.0
      %1189 = vmatpush1.msra.mxu0 0.0
      %1190 = vmatprep.mubr.f32.mxu0 0.0
      %1191 = vmatmul.mubr.f32.gmra.mrb[0].mxu0 %v1119
      %v1192 = vpop.f32.mrb[0].mxu0
      %v1193 = vadd.f32 0.0, %v1192
      %v1194 = vpop.f32.mrb[0].mxu0
      %1195 = vmatprep.mubr.f32.mxu0 0.0
      %1196 = vmatmul.mubr.f32.gmra.mrb[0].mxu0 %v1122
      %v1197 = vpop.f32.mrb[0].mxu0
      %v1198 = vadd.f32 0.0, %v1197
      %v1199 = vpop.f32.mrb[0].mxu0
      %1200 = vdwg.mxu0
      %v1201 = vld [vmem:[%s3 + $0x10] sm:$0xff]
      %v1203 = vsel %vm430, %v1193, 0
      %v1206 = vsel %vm430, %v1198, 0
      %1208 = vmatprep.subr.mxu0 0.0
      %1209 = vmatpush1.msra.mxu0 %v1201
      %1210 = vmatprep.subr.mxu0 0.0
      %1211 = vmatpush1.msra.mxu0 0.0
      %1212 = vmatprep.subr.mxu0 0.0
      %1213 = vmatpush1.msra.mxu0 0.0
      %1214 = vmatprep.subr.mxu0 0.0
      %1215 = vmatpush1.msra.mxu0 0.0
      %1216 = vmatprep.subr.mxu0 0.0
      %1217 = vmatpush1.msra.mxu0 0.0
      %1218 = vmatprep.subr.mxu0 0.0
      %1219 = vmatpush1.msra.mxu0 0.0
      %1220 = vmatprep.subr.mxu0 0.0
      %1221 = vmatpush1.msra.mxu0 0.0
      %1222 = vmatprep.subr.mxu0 0.0
      %1223 = vmatpush1.msra.mxu0 0.0
      %1224 = vmatprep.subr.mxu0 0.0
      %1225 = vmatpush1.msra.mxu0 0.0
      %1226 = vmatprep.subr.mxu0 0.0
      %1227 = vmatpush1.msra.mxu0 0.0
      %1228 = vmatprep.subr.mxu0 0.0
      %1229 = vmatpush1.msra.mxu0 0.0
      %1230 = vmatprep.subr.mxu0 0.0
      %1231 = vmatpush1.msra.mxu0 0.0
      %1232 = vmatprep.subr.mxu0 0.0
      %1233 = vmatpush1.msra.mxu0 0.0
      %1234 = vmatprep.subr.mxu0 0.0
      %1235 = vmatpush1.msra.mxu0 0.0
      %1236 = vmatprep.subr.mxu0 0.0
      %1237 = vmatpush1.msra.mxu0 0.0
      %1238 = vmatprep.subr.mxu0 0.0
      %1239 = vmatpush1.msra.mxu0 0.0
      %1240 = vmatprep.subr.mxu0 0.0
      %1241 = vmatpush1.msra.mxu0 0.0
      %1242 = vmatprep.subr.mxu0 0.0
      %1243 = vmatpush1.msra.mxu0 0.0
      %1244 = vmatprep.subr.mxu0 0.0
      %1245 = vmatpush1.msra.mxu0 0.0
      %1246 = vmatprep.subr.mxu0 0.0
      %1247 = vmatpush1.msra.mxu0 0.0
      %1248 = vmatprep.subr.mxu0 0.0
      %1249 = vmatpush1.msra.mxu0 0.0
      %1250 = vmatprep.subr.mxu0 0.0
      %1251 = vmatpush1.msra.mxu0 0.0
      %1252 = vmatprep.subr.mxu0 0.0
      %1253 = vmatpush1.msra.mxu0 0.0
      %1254 = vmatprep.subr.mxu0 0.0
      %1255 = vmatpush1.msra.mxu0 0.0
      %1256 = vmatprep.subr.mxu0 0.0
      %1257 = vmatpush1.msra.mxu0 0.0
      %1258 = vmatprep.subr.mxu0 0.0
      %1259 = vmatpush1.msra.mxu0 0.0
      %1260 = vmatprep.subr.mxu0 0.0
      %1261 = vmatpush1.msra.mxu0 0.0
      %1262 = vmatprep.subr.mxu0 0.0
      %1263 = vmatpush1.msra.mxu0 0.0
      %1264 = vmatprep.subr.mxu0 0.0
      %1265 = vmatpush1.msra.mxu0 0.0
      %1266 = vmatprep.subr.mxu0 0.0
      %1267 = vmatpush1.msra.mxu0 0.0
      %1268 = vmatprep.subr.mxu0 0.0
      %1269 = vmatpush1.msra.mxu0 0.0
      %1270 = vmatprep.subr.mxu0 0.0
      %1271 = vmatpush1.msra.mxu0 0.0
      %1272 = vmatprep.mubr.f32.mxu0 0.0
      %1273 = vmatmul.mubr.f32.gmra.mrb[0].mxu0 %v1203
      %v1274 = vpop.f32.mrb[0].mxu0
      %v1275 = vadd.f32 0.0, %v1274
      %v1276 = vpop.f32.mrb[0].mxu0
      %1277 = vmatprep.mubr.f32.mxu0 0.0
      %1278 = vmatmul.mubr.f32.gmra.mrb[0].mxu0 %v1206
      %v1279 = vpop.f32.mrb[0].mxu0
      %v1280 = vadd.f32 0.0, %v1279
      %v1281 = vpop.f32.mrb[0].mxu0
      %1282 = vdwg.mxu0
      %v1283 = vadd.f32 %v990, %v1275
      %v1284 = vadd.f32 %v995, %v1280
      %1285 = vrot.lane.b32.xlu0 %v416, 104
      %v1286 = vpop.permute.xlu0 %1285
      %1287 = vrot.lane.b32.xlu0 %v417, 104
      %v1288 = vpop.permute.xlu0 %1287
      %1289 = vrot.lane.b32.xlu0 %v407, 72
      %v1290 = vpop.permute.xlu0 %1289
      %1291 = vrot.lane.b32.xlu0 %v412, 72
      %v1292 = vpop.permute.xlu0 %1291
      %v1293 = vsel %vm430, %v1286, 0
      %v1295 = vsel %vm430, %v1288, 0
      %v1297 = vsel %vm430, %v1290, 0
      %v1299 = vsel %vm430, %v1292, 0
      %1301 = vmatprep.subr.mxu0 0.0
      %1302 = vmatpush1.xpose.msra.mxu0 %v1297
      %1303 = vmatprep.subr.mxu0 0.0
      %1304 = vmatpush1.xpose.msra.mxu0 %v1299
      %1305 = vmatprep.subr.mxu0 0.0
      %1306 = vmatpush1.xpose.msra.mxu0 0.0
      %1307 = vmatprep.subr.mxu0 0.0
      %1308 = vmatpush1.xpose.msra.mxu0 0.0
      %1309 = vmatprep.subr.mxu0 0.0
      %1310 = vmatpush1.xpose.msra.mxu0 0.0
      %1311 = vmatprep.subr.mxu0 0.0
      %1312 = vmatpush1.xpose.msra.mxu0 0.0
      %1313 = vmatprep.subr.mxu0 0.0
      %1314 = vmatpush1.xpose.msra.mxu0 0.0
      %1315 = vmatprep.subr.mxu0 0.0
      %1316 = vmatpush1.xpose.msra.mxu0 0.0
      %1317 = vmatprep.subr.mxu0 0.0
      %1318 = vmatpush1.xpose.msra.mxu0 0.0
      %1319 = vmatprep.subr.mxu0 0.0
      %1320 = vmatpush1.xpose.msra.mxu0 0.0
      %1321 = vmatprep.subr.mxu0 0.0
      %1322 = vmatpush1.xpose.msra.mxu0 0.0
      %1323 = vmatprep.subr.mxu0 0.0
      %1324 = vmatpush1.xpose.msra.mxu0 0.0
      %1325 = vmatprep.subr.mxu0 0.0
      %1326 = vmatpush1.xpose.msra.mxu0 0.0
      %1327 = vmatprep.subr.mxu0 0.0
      %1328 = vmatpush1.xpose.msra.mxu0 0.0
      %1329 = vmatprep.subr.mxu0 0.0
      %1330 = vmatpush1.xpose.msra.mxu0 0.0
      %1331 = vmatprep.subr.mxu0 0.0
      %1332 = vmatpush1.xpose.msra.mxu0 0.0
      %1333 = vmatprep.subr.mxu0 0.0
      %1334 = vmatpush1.xpose.msra.mxu0 0.0
      %1335 = vmatprep.subr.mxu0 0.0
      %1336 = vmatpush1.xpose.msra.mxu0 0.0
      %1337 = vmatprep.subr.mxu0 0.0
      %1338 = vmatpush1.xpose.msra.mxu0 0.0
      %1339 = vmatprep.subr.mxu0 0.0
      %1340 = vmatpush1.xpose.msra.mxu0 0.0
      %1341 = vmatprep.subr.mxu0 0.0
      %1342 = vmatpush1.xpose.msra.mxu0 0.0
      %1343 = vmatprep.subr.mxu0 0.0
      %1344 = vmatpush1.xpose.msra.mxu0 0.0
      %1345 = vmatprep.subr.mxu0 0.0
      %1346 = vmatpush1.xpose.msra.mxu0 0.0
      %1347 = vmatprep.subr.mxu0 0.0
      %1348 = vmatpush1.xpose.msra.mxu0 0.0
      %1349 = vmatprep.subr.mxu0 0.0
      %1350 = vmatpush1.xpose.msra.mxu0 0.0
      %1351 = vmatprep.subr.mxu0 0.0
      %1352 = vmatpush1.xpose.msra.mxu0 0.0
      %1353 = vmatprep.subr.mxu0 0.0
      %1354 = vmatpush1.xpose.msra.mxu0 0.0
      %1355 = vmatprep.subr.mxu0 0.0
      %1356 = vmatpush1.xpose.msra.mxu0 0.0
      %1357 = vmatprep.subr.mxu0 0.0
      %1358 = vmatpush1.xpose.msra.mxu0 0.0
      %1359 = vmatprep.subr.mxu0 0.0
      %1360 = vmatpush1.xpose.msra.mxu0 0.0
      %1361 = vmatprep.subr.mxu0 0.0
      %1362 = vmatpush1.xpose.msra.mxu0 0.0
      %1363 = vmatprep.subr.mxu0 0.0
      %1364 = vmatpush1.xpose.msra.mxu0 0.0
      %1365 = vmatprep.mubr.f32.mxu0 0.0
      %1366 = vmatmul.mubr.f32.gmra.mrb[0].mxu0 %v1293
      %v1367 = vpop.f32.mrb[0].mxu0
      %v1368 = vadd.f32 %v422, %v1367
      %v1369 = vpop.f32.mrb[0].mxu0
      %1370 = vmatprep.mubr.f32.mxu0 0.0
      %1371 = vmatmul.mubr.f32.gmra.mrb[0].mxu0 %v1295
      %v1372 = vpop.f32.mrb[0].mxu0
      %v1373 = vadd.f32 %v422, %v1372
      %v1374 = vpop.f32.mrb[0].mxu0
      %1375 = vdwg.mxu0
      %v1376 = vsel %vm516, %v1368, -inf
      %1377 = vmax.xlane.f32.xlu0 %v1376
      %v1378 = vpop.xlane.xlu0 %1377
      %v1379 = vsel %vm520, %v1373, -inf
      %1380 = vmax.xlane.f32.xlu0 %v1379
      %v1381 = vpop.xlane.xlu0 %1380
      %v1382 = vsub.f32 %v1368, %v1378
      %v1383 = vsub.f32 %v1373, %v1381
      %v1384 = vmul.f32 %v1382, 1.442695
      %v1385 = vpow.pop %v1384
      %v1386 = vmul.f32 %v1383, 1.442695
      %v1387 = vpow.pop %v1386
      %v1388 = vsel %vm516, %v1385, 0.0
      %1389 = vadd.xlane.f32.xlu0 %v1388
      %v1390 = vpop.xlane.xlu0 %1389
      %v1391 = vsel %vm520, %v1387, 0.0
      %1392 = vadd.xlane.f32.xlu0 %v1391
      %v1393 = vpop.xlane.xlu0 %1392
      %v1394 = vrcp.pop %v1390
      %v1395 = vmul.f32 1.0, %v1394
      %v1396 = vrcp.pop %v1393
      %v1397 = vmul.f32 1.0, %v1396
      %v1398 = vmul.f32 %v1385, %v1395
      %v1399 = vmul.f32 %v1387, %v1397
      %1400 = vrot.lane.b32.xlu0 %v407, 40
      %v1401 = vpop.permute.xlu0 %1400
      %1402 = vrot.lane.b32.xlu0 %v412, 40
      %v1403 = vpop.permute.xlu0 %1402
      %v1406 = vsel %vm516, %v1398, 0
      %v1409 = vsel %vm516, %v1399, 0
      %v1411 = vsel %vm553, %v1403, 0
      %1413 = vmatprep.subr.mxu0 0.0
      %1414 = vmatpush1.msra.mxu0 %v1401
      %1415 = vmatprep.subr.mxu0 0.0
      %1416 = vmatpush1.msra.mxu0 %v1411
      %1417 = vmatprep.subr.mxu0 0.0
      %1418 = vmatpush1.msra.mxu0 0.0
      %1419 = vmatprep.subr.mxu0 0.0
      %1420 = vmatpush1.msra.mxu0 0.0
      %1421 = vmatprep.subr.mxu0 0.0
      %1422 = vmatpush1.msra.mxu0 0.0
      %1423 = vmatprep.subr.mxu0 0.0
      %1424 = vmatpush1.msra.mxu0 0.0
      %1425 = vmatprep.subr.mxu0 0.0
      %1426 = vmatpush1.msra.mxu0 0.0
      %1427 = vmatprep.subr.mxu0 0.0
      %1428 = vmatpush1.msra.mxu0 0.0
      %1429 = vmatprep.subr.mxu0 0.0
      %1430 = vmatpush1.msra.mxu0 0.0
      %1431 = vmatprep.subr.mxu0 0.0
      %1432 = vmatpush1.msra.mxu0 0.0
      %1433 = vmatprep.subr.mxu0 0.0
      %1434 = vmatpush1.msra.mxu0 0.0
      %1435 = vmatprep.subr.mxu0 0.0
      %1436 = vmatpush1.msra.mxu0 0.0
      %1437 = vmatprep.subr.mxu0 0.0
      %1438 = vmatpush1.msra.mxu0 0.0
      %1439 = vmatprep.subr.mxu0 0.0
      %1440 = vmatpush1.msra.mxu0 0.0
      %1441 = vmatprep.subr.mxu0 0.0
      %1442 = vmatpush1.msra.mxu0 0.0
      %1443 = vmatprep.subr.mxu0 0.0
      %1444 = vmatpush1.msra.mxu0 0.0
      %1445 = vmatprep.subr.mxu0 0.0
      %1446 = vmatpush1.msra.mxu0 0.0
      %1447 = vmatprep.subr.mxu0 0.0
      %1448 = vmatpush1.msra.mxu0 0.0
      %1449 = vmatprep.subr.mxu0 0.0
      %1450 = vmatpush1.msra.mxu0 0.0
      %1451 = vmatprep.subr.mxu0 0.0
      %1452 = vmatpush1.msra.mxu0 0.0
      %1453 = vmatprep.subr.mxu0 0.0
      %1454 = vmatpush1.msra.mxu0 0.0
      %1455 = vmatprep.subr.mxu0 0.0
      %1456 = vmatpush1.msra.mxu0 0.0
      %1457 = vmatprep.subr.mxu0 0.0
      %1458 = vmatpush1.msra.mxu0 0.0
      %1459 = vmatprep.subr.mxu0 0.0
      %1460 = vmatpush1.msra.mxu0 0.0
      %1461 = vmatprep.subr.mxu0 0.0
      %1462 = vmatpush1.msra.mxu0 0.0
      %1463 = vmatprep.subr.mxu0 0.0
      %1464 = vmatpush1.msra.mxu0 0.0
      %1465 = vmatprep.subr.mxu0 0.0
      %1466 = vmatpush1.msra.mxu0 0.0
      %1467 = vmatprep.subr.mxu0 0.0
      %1468 = vmatpush1.msra.mxu0 0.0
      %1469 = vmatprep.subr.mxu0 0.0
      %1470 = vmatpush1.msra.mxu0 0.0
      %1471 = vmatprep.subr.mxu0 0.0
      %1472 = vmatpush1.msra.mxu0 0.0
      %1473 = vmatprep.subr.mxu0 0.0
      %1474 = vmatpush1.msra.mxu0 0.0
      %1475 = vmatprep.subr.mxu0 0.0
      %1476 = vmatpush1.msra.mxu0 0.0
      %1477 = vmatprep.mubr.f32.mxu0 0.0
      %1478 = vmatmul.mubr.f32.gmra.mrb[0].mxu0 %v1406
      %v1479 = vpop.f32.mrb[0].mxu0
      %v1480 = vadd.f32 0.0, %v1479
      %v1481 = vpop.f32.mrb[0].mxu0
      %1482 = vmatprep.mubr.f32.mxu0 0.0
      %1483 = vmatmul.mubr.f32.gmra.mrb[0].mxu0 %v1409
      %v1484 = vpop.f32.mrb[0].mxu0
      %v1485 = vadd.f32 0.0, %v1484
      %v1486 = vpop.f32.mrb[0].mxu0
      %1487 = vdwg.mxu0
      %v1488 = vld [vmem:[%s3 + $0x18] sm:$0xff]
      %v1490 = vsel %vm430, %v1480, 0
      %v1493 = vsel %vm430, %v1485, 0
      %1495 = vmatprep.subr.mxu0 0.0
      %1496 = vmatpush1.msra.mxu0 %v1488
      %1497 = vmatprep.subr.mxu0 0.0
      %1498 = vmatpush1.msra.mxu0 0.0
      %1499 = vmatprep.subr.mxu0 0.0
      %1500 = vmatpush1.msra.mxu0 0.0
      %1501 = vmatprep.subr.mxu0 0.0
      %1502 = vmatpush1.msra.mxu0 0.0
      %1503 = vmatprep.subr.mxu0 0.0
      %1504 = vmatpush1.msra.mxu0 0.0
      %1505 = vmatprep.subr.mxu0 0.0
      %1506 = vmatpush1.msra.mxu0 0.0
      %1507 = vmatprep.subr.mxu0 0.0
      %1508 = vmatpush1.msra.mxu0 0.0
      %1509 = vmatprep.subr.mxu0 0.0
      %1510 = vmatpush1.msra.mxu0 0.0
      %1511 = vmatprep.subr.mxu0 0.0
      %1512 = vmatpush1.msra.mxu0 0.0
      %1513 = vmatprep.subr.mxu0 0.0
      %1514 = vmatpush1.msra.mxu0 0.0
      %1515 = vmatprep.subr.mxu0 0.0
      %1516 = vmatpush1.msra.mxu0 0.0
      %1517 = vmatprep.subr.mxu0 0.0
      %1518 = vmatpush1.msra.mxu0 0.0
      %1519 = vmatprep.subr.mxu0 0.0
      %1520 = vmatpush1.msra.mxu0 0.0
      %1521 = vmatprep.subr.mxu0 0.0
      %1522 = vmatpush1.msra.mxu0 0.0
      %1523 = vmatprep.subr.mxu0 0.0
      %1524 = vmatpush1.msra.mxu0 0.0
      %1525 = vmatprep.subr.mxu0 0.0
      %1526 = vmatpush1.msra.mxu0 0.0
      %1527 = vmatprep.subr.mxu0 0.0
      %1528 = vmatpush1.msra.mxu0 0.0
      %1529 = vmatprep.subr.mxu0 0.0
      %1530 = vmatpush1.msra.mxu0 0.0
      %1531 = vmatprep.subr.mxu0 0.0
      %1532 = vmatpush1.msra.mxu0 0.0
      %1533 = vmatprep.subr.mxu0 0.0
      %1534 = vmatpush1.msra.mxu0 0.0
      %1535 = vmatprep.subr.mxu0 0.0
      %1536 = vmatpush1.msra.mxu0 0.0
      %1537 = vmatprep.subr.mxu0 0.0
      %1538 = vmatpush1.msra.mxu0 0.0
      %1539 = vmatprep.subr.mxu0 0.0
      %1540 = vmatpush1.msra.mxu0 0.0
      %1541 = vmatprep.subr.mxu0 0.0
      %1542 = vmatpush1.msra.mxu0 0.0
      %1543 = vmatprep.subr.mxu0 0.0
      %1544 = vmatpush1.msra.mxu0 0.0
      %1545 = vmatprep.subr.mxu0 0.0
      %1546 = vmatpush1.msra.mxu0 0.0
      %1547 = vmatprep.subr.mxu0 0.0
      %1548 = vmatpush1.msra.mxu0 0.0
      %1549 = vmatprep.subr.mxu0 0.0
      %1550 = vmatpush1.msra.mxu0 0.0
      %1551 = vmatprep.subr.mxu0 0.0
      %1552 = vmatpush1.msra.mxu0 0.0
      %1553 = vmatprep.subr.mxu0 0.0
      %1554 = vmatpush1.msra.mxu0 0.0
      %1555 = vmatprep.subr.mxu0 0.0
      %1556 = vmatpush1.msra.mxu0 0.0
      %1557 = vmatprep.subr.mxu0 0.0
      %1558 = vmatpush1.msra.mxu0 0.0
      %1559 = vmatprep.mubr.f32.mxu0 0.0
      %1560 = vmatmul.mubr.f32.gmra.mrb[0].mxu0 %v1490
      %v1561 = vpop.f32.mrb[0].mxu0
      %v1562 = vadd.f32 0.0, %v1561
      %v1563 = vpop.f32.mrb[0].mxu0
      %1564 = vmatprep.mubr.f32.mxu0 0.0
      %1565 = vmatmul.mubr.f32.gmra.mrb[0].mxu0 %v1493
      %v1566 = vpop.f32.mrb[0].mxu0
      %v1567 = vadd.f32 0.0, %v1566
      %v1568 = vpop.f32.mrb[0].mxu0
      %1569 = vdwg.mxu0
      %v1570 = vadd.f32 %v1283, %v1562
      %v1571 = vadd.f32 %v1284, %v1567
      %v1572 = vld [vmem:[%s4] sm:$0x1]
      %v1574 = vlaneseq
      %v1575 = vshrl.u32 %v1574, 7
      %v1576 = vsub.s32 0, %v1575
      %v1577 = vrot.slane %v1572, %v1576
      %v1579 = vadd.f32 %v1570, %v1577
      %v1580 = vadd.f32 %v1571, %v1577
      %v1581 = vadd.f32 %v1579, %v320
      %v1582 = vadd.f32 %v1580, %v321
      %v1583 = vld [vmem:[%s5] sm:$0x1]
      %v1584 = vld [vmem:[%s6] sm:$0x1]
      %v1585 = vsel %vm333, %v1581, 0.0
      %1586 = vadd.xlane.f32.xlu0 %v1585
      %v1587 = vpop.xlane.xlu0 %1586
      %vm1588 = vcmask 257024
      %v1589 = vsel %vm1588, %v1582, 0.0
      %1590 = vadd.xlane.f32.xlu0 %v1589
      %v1591 = vpop.xlane.xlu0 %1590
      %v1592 = vrcp.pop 32.0
      %v1593 = vmul.f32 %v1587, %v1592
      %v1594 = vmul.f32 %v1591, %v1592
      %v1595 = vsub.f32 %v1581, %v1593
      %v1596 = vsub.f32 %v1582, %v1594
      %v1597 = vmul.f32 %v1595, %v1595
      %v1598 = vmul.f32 %v1596, %v1596
      %v1599 = vsel %vm333, %v1597, 0.0
      %1600 = vadd.xlane.f32.xlu0 %v1599
      %v1601 = vpop.xlane.xlu0 %1600
      %v1602 = vsel %vm1588, %v1598, 0.0
      %1603 = vadd.xlane.f32.xlu0 %v1602
      %v1604 = vpop.xlane.xlu0 %1603
      %v1605 = vmul.f32 %v1601, %v1592
      %v1606 = vmul.f32 %v1604, %v1592
      %v1607 = vadd.f32 %v1605, 1e-05
      %v1608 = vadd.f32 %v1606, 1e-05
      %v1609 = vrsqrt.pop %v1607
      %v1610 = vrsqrt.pop %v1608
      %v1611 = vmul.f32 %v1595, %v1609
      %v1612 = vmul.f32 %v1596, %v1610
      %v1614 = vlaneseq
      %v1615 = vshrl.u32 %v1614, 7
      %v1616 = vsub.s32 0, %v1615
      %v1617 = vrot.slane %v1583, %v1616
      %v1619 = vmul.f32 %v1611, %v1617
      %v1620 = vmul.f32 %v1612, %v1617
      %v1622 = vlaneseq
      %v1623 = vshrl.u32 %v1622, 7
      %v1624 = vsub.s32 0, %v1623
      %v1625 = vrot.slane %v1584, %v1624
      %v1627 = vadd.f32 %v1619, %v1625
      %v1628 = vadd.f32 %v1620, %v1625
      %1629 = vst.msk [vmem:[%s319] sm:$0xff] %vm333, %v1627
      %1630 = vst.msk [vmem:[%s319 + $0x8] sm:$0xf] %vm1588, %v1628
      %p1631 = scmp.lt.s32.totalorder %s19, 1
      %s1632 = scalar_select %p1631, %s19, 1
      %s1633 = smul.addr %s1632, 2
      %s1634 = smul.addr %s1633, 8
      %s1635 = scalar_lea.vmem %s8, %s1634
      // Predicated region
      $region53: #{model_forward.19} parent=51 // pred_check
        %p1636 = pneg %p215
      $region54: #{model_forward.19} parent=51 // pred_check_branch
        %1638 = sbr.rel (%p1636) target = $region56
      $region55: #{model_forward.19} parent=51 // pred_region
        _
      $region56: #{model_forward.19} parent=51 // pred_fallthru
        _
    $region52: #{model_forward.19} parent=5 // pred_fallthru
      _
    %p1639 = scmp.le.s32.totalorder 2, %s14
    // Predicated region
    $region57: #{model_forward.19} parent=5 // pred_check
      %p1640 = pneg %p1639
    $region58: #{model_forward.19} parent=5 // pred_check_branch
      %1642 = sbr.rel (%p1640) target = $region60
    $region59: #{model_forward.19} parent=5 // pred_region
      %s1643 = ssub.s32 %s14, 2
      // Predicated region
      $region61: #{model_forward.19} parent=59 // pred_check
        %p1644 = pneg %p221
      $region62: #{model_forward.19} parent=59 // pred_check_branch
        %1646 = sbr.rel (%p1644) target = $region64
      $region63: #{model_forward.19} parent=59 // pred_region
        %p1647 = scmp.lt.s32.totalorder %s20, 1
        %s1648 = scalar_select %p1647, %s20, 1
        %s1649 = smul.addr %s1648, 2
        %s1650 = smul.addr %s1649, 8
        %s1651 = scalar_lea.vmem %s8, %s1650
      $region64: #{model_forward.19} parent=59 // pred_fallthru
        _
    $region60: #{model_forward.19} parent=5 // pred_fallthru
      _
  $region6: #{model_forward.19} parent=0 // loop_footer
    %s18 = sadd.s32 1, %s14
  $region7: #{model_forward.19} parent=0 // loop_footer_branch
    %13 = sbr.rel target = $region3
  $region8: #{model_forward.19} parent=0 // loop_exit
    _

// kernel: model_forward.17
$region0: #{model_forward.17}
  #allocation0 [shape = 'u32[]', space=smem, size = 0x4, offset = 0x4, fixed_abs, tag = 'smem constant byte address 0x4 - core index']
  #allocation1 [shape = 'u32[144,128]{1,0:T(1,128)}', space=vmem, size = 0x12000, scoped, tag = 'internal scratch']
  #allocation2 [shape = 'f32[16,32]{1,0:T(8,128)}', space=vmem, size = 0x2000, scoped, tag = 'scratch operand']
  %s0 = inlined_call_operand.vmem [shape: f32[2,12,32], index: 0, kind: input, shape index: {}]
  %s1 = inlined_call_operand.vmem [shape: f32[5,32,32], index: 1, kind: input, shape index: {}]
  %s2 = inlined_call_operand.vmem [shape: f32[1,32], index: 2, kind: input, shape index: {}]
  %s3 = inlined_call_operand.vmem [shape: f32[1,32], index: 3, kind: input, shape index: {}]
  %s4 = inlined_call_operand.vmem [shape: f32[1,32], index: 4, kind: input, shape index: {}]
  %s5 = inlined_call_operand.vmem [shape: f32[2,12,32], index: 5, kind: output, shape index: {}]
  %s6 = sld [smem:[#allocation0]]
  $region53: #{model_forward.17} parent=0
    _
  %s8 = ssub.s32 1, %s6
  %s9 = scalar_select 0, %s8, %s6
  loop: start=0, step=1, limit=4
  $region2: #{model_forward.17} parent=0 // loop_pre_header
    _
  $region3: #{model_forward.17} parent=0 // loop_header
    %s11 = sphi 0, %s15
    %p12 = scmp.ge.s32.totalorder %s11, 4
    %s21 = sphi 0, %s23
    %s24 = sphi 0, %s21
    %s25 = sphi 0, %s24
    %s41 = sphi 0, %s25
    %s45 = sphi 0, %s45
    %s47 = sphi 0, %s45
    %s48 = sphi 0, %s47
    %s62 = sphi 0, %s48
    %s66 = sphi 0, %s66
    %s68 = sphi 0, %s66
    %s69 = sphi 0, %s68
    %s83 = sphi 0, %s69
    %s87 = sphi 0, %s87
    %s89 = sphi 0, %s87
    %s90 = sphi 0, %s89
    %s104 = sphi 0, %s90
    %s108 = sphi 0, %s108
    %s110 = sphi 0, %s108
    %s111 = sphi 0, %s110
    %s125 = sphi 0, %s111
    %s131 = sphi 0, %s133
    %s134 = sphi 0, %s131
    %s135 = sphi 0, %s134
    %s151 = sphi 0, %s135
  $region4: #{model_forward.17} parent=0 // loop_header_branch
    %14 = sbr.rel (%p12) target = $region8
  $region5: #{model_forward.17} parent=0 // loop_body
    %s16 = ssub.s32 %s11, 1
    %s17 = ssub.s32 %s11, 2
    %s18 = sadd.s32 %s11, 1
    %s19 = ssub.s32 %s11, %s18
    %p20 = scmp.eq.s32.totalorder %s19, 0
    %s22 = sadd.s32 %s21, 1
    %s23 = scalar_select %p20, %s21, %s22
    %p26 = pneg %p20
    %p27 = scmp.eq.s32.totalorder %s11, 1
    %p28 = por %p26, %p27
    %p29 = scmp.ne.s32.totalorder %s21, %s24
    %p30 = scmp.eq.s32.totalorder %s11, 0
    %p31 = por %p29, %p30
    %p32 = scmp.ne.s32.totalorder %s21, %s24
    %p33 = scmp.eq.s32.totalorder %s16, 1
    %p34 = por %p32, %p33
    %p35 = scmp.ne.s32.totalorder %s24, %s25
    %p36 = scmp.eq.s32.totalorder %s16, 0
    %p37 = por %p35, %p36
    %p38 = scmp.ne.s32.totalorder %s24, %s25
    %p39 = scmp.eq.s32.totalorder %s17, 1
    %p40 = por %p38, %p39
    %p42 = scmp.ne.s32.totalorder %s25, %s41
    %p43 = scmp.eq.s32.totalorder %s17, 0
    %p44 = por %p42, %p43
    %s46 = sadd.s32 %s45, 1
    %p49 = scmp.eq.s32.totalorder %s11, 1
    %p50 = scmp.ne.s32.totalorder %s45, %s47
    %p51 = scmp.eq.s32.totalorder %s11, 0
    %p52 = por %p50, %p51
    %p53 = scmp.ne.s32.totalorder %s45, %s47
    %p54 = scmp.eq.s32.totalorder %s16, 1
    %p55 = por %p53, %p54
    %p56 = scmp.ne.s32.totalorder %s47, %s48
    %p57 = scmp.eq.s32.totalorder %s16, 0
    %p58 = por %p56, %p57
    %p59 = scmp.ne.s32.totalorder %s47, %s48
    %p60 = scmp.eq.s32.totalorder %s17, 1
    %p61 = por %p59, %p60
    %p63 = scmp.ne.s32.totalorder %s48, %s62
    %p64 = scmp.eq.s32.totalorder %s17, 0
    %p65 = por %p63, %p64
    %s67 = sadd.s32 %s66, 1
    %p70 = scmp.eq.s32.totalorder %s11, 1
    %p71 = scmp.ne.s32.totalorder %s66, %s68
    %p72 = scmp.eq.s32.totalorder %s11, 0
    %p73 = por %p71, %p72
    %p74 = scmp.ne.s32.totalorder %s66, %s68
    %p75 = scmp.eq.s32.totalorder %s16, 1
    %p76 = por %p74, %p75
    %p77 = scmp.ne.s32.totalorder %s68, %s69
    %p78 = scmp.eq.s32.totalorder %s16, 0
    %p79 = por %p77, %p78
    %p80 = scmp.ne.s32.totalorder %s68, %s69
    %p81 = scmp.eq.s32.totalorder %s17, 1
    %p82 = por %p80, %p81
    %p84 = scmp.ne.s32.totalorder %s69, %s83
    %p85 = scmp.eq.s32.totalorder %s17, 0
    %p86 = por %p84, %p85
    %s88 = sadd.s32 %s87, 1
    %p91 = scmp.eq.s32.totalorder %s11, 1
    %p92 = scmp.ne.s32.totalorder %s87, %s89
    %p93 = scmp.eq.s32.totalorder %s11, 0
    %p94 = por %p92, %p93
    %p95 = scmp.ne.s32.totalorder %s87, %s89
    %p96 = scmp.eq.s32.totalorder %s16, 1
    %p97 = por %p95, %p96
    %p98 = scmp.ne.s32.totalorder %s89, %s90
    %p99 = scmp.eq.s32.totalorder %s16, 0
    %p100 = por %p98, %p99
    %p101 = scmp.ne.s32.totalorder %s89, %s90
    %p102 = scmp.eq.s32.totalorder %s17, 1
    %p103 = por %p101, %p102
    %p105 = scmp.ne.s32.totalorder %s90, %s104
    %p106 = scmp.eq.s32.totalorder %s17, 0
    %p107 = por %p105, %p106
    %s109 = sadd.s32 %s108, 1
    %p112 = scmp.eq.s32.totalorder %s11, 1
    %p113 = scmp.ne.s32.totalorder %s108, %s110
    %p114 = scmp.eq.s32.totalorder %s11, 0
    %p115 = por %p113, %p114
    %p116 = scmp.ne.s32.totalorder %s108, %s110
    %p117 = scmp.eq.s32.totalorder %s16, 1
    %p118 = por %p116, %p117
    %p119 = scmp.ne.s32.totalorder %s110, %s111
    %p120 = scmp.eq.s32.totalorder %s16, 0
    %p121 = por %p119, %p120
    %p122 = scmp.ne.s32.totalorder %s110, %s111
    %p123 = scmp.eq.s32.totalorder %s17, 1
    %p124 = por %p122, %p123
    %p126 = scmp.ne.s32.totalorder %s111, %s125
    %p127 = scmp.eq.s32.totalorder %s17, 0
    %p128 = por %p126, %p127
    %s129 = ssub.s32 %s11, %s18
    %p130 = scmp.eq.s32.totalorder %s129, 0
    %s132 = sadd.s32 %s131, 1
    %s133 = scalar_select %p130, %s131, %s132
    %p136 = pneg %p130
    %p137 = scmp.eq.s32.totalorder %s11, 1
    %p138 = por %p136, %p137
    %p139 = scmp.ne.s32.totalorder %s131, %s134
    %p140 = scmp.eq.s32.totalorder %s11, 0
    %p141 = por %p139, %p140
    %p142 = scmp.ne.s32.totalorder %s131, %s134
    %p143 = scmp.eq.s32.totalorder %s16, 1
    %p144 = por %p142, %p143
    %p145 = scmp.ne.s32.totalorder %s134, %s135
    %p146 = scmp.eq.s32.totalorder %s16, 0
    %p147 = por %p145, %p146
    %p148 = scmp.ne.s32.totalorder %s134, %s135
    %p149 = scmp.eq.s32.totalorder %s17, 1
    %p150 = por %p148, %p149
    %p152 = scmp.ne.s32.totalorder %s135, %s151
    %p153 = scmp.eq.s32.totalorder %s17, 0
    %p154 = por %p152, %p153
    %p155 = scmp.le.s32.totalorder 1, %s11
    %p156 = scmp.lt.s32.totalorder %s11, 3
    %p157 = pnand %p155, %p156
    %p158 = pneg %p157
    // Predicated region
    $region9: #{model_forward.17} parent=5 // pred_check
      _
    $region10: #{model_forward.17} parent=5 // pred_check_branch
      %160 = sbr.rel (%p157) target = $region12
    $region11: #{model_forward.17} parent=5 // pred_region
      %s161 = ssub.s32 %s11, 1
      // Predicated region
      $region13: #{model_forward.17} parent=11 // pred_check
        %p162 = pneg %p58
      $region14: #{model_forward.17} parent=11 // pred_check_branch
        %164 = sbr.rel (%p162) target = $region16
      $region15: #{model_forward.17} parent=11 // pred_region
        _
      $region16: #{model_forward.17} parent=11 // pred_fallthru
        _
      // Predicated region
      $region17: #{model_forward.17} parent=11 // pred_check
        %p165 = pneg %p79
      $region18: #{model_forward.17} parent=11 // pred_check_branch
        %167 = sbr.rel (%p165) target = $region20
      $region19: #{model_forward.17} parent=11 // pred_region
        _
      $region20: #{model_forward.17} parent=11 // pred_fallthru
        _
      // Predicated region
      $region21: #{model_forward.17} parent=11 // pred_check
        %p168 = pneg %p100
      $region22: #{model_forward.17} parent=11 // pred_check_branch
        %170 = sbr.rel (%p168) target = $region24
      $region23: #{model_forward.17} parent=11 // pred_region
        _
      $region24: #{model_forward.17} parent=11 // pred_fallthru
        _
      // Predicated region
      $region25: #{model_forward.17} parent=11 // pred_check
        %p171 = pneg %p121
      $region26: #{model_forward.17} parent=11 // pred_check_branch
        %173 = sbr.rel (%p171) target = $region28
      $region27: #{model_forward.17} parent=11 // pred_region
        _
      $region28: #{model_forward.17} parent=11 // pred_fallthru
        _
    $region12: #{model_forward.17} parent=5 // pred_fallthru
      _
    %p174 = scmp.lt.s32.totalorder %s11, 2
    // Predicated region
    $region29: #{model_forward.17} parent=5 // pred_check
      %p175 = pneg %p174
    $region30: #{model_forward.17} parent=5 // pred_check_branch
      %177 = sbr.rel (%p175) target = $region32
    $region31: #{model_forward.17} parent=5 // pred_region
      // Predicated region
      $region33: #{model_forward.17} parent=31 // pred_check
        %p178 = pneg %p31
      $region34: #{model_forward.17} parent=31 // pred_check_branch
        %180 = sbr.rel (%p178) target = $region36
      $region35: #{model_forward.17} parent=31 // pred_region
        %p181 = scmp.lt.s32.totalorder %s11, 1
        %s182 = scalar_select %p181, %s11, 1
        %s183 = smul.addr %s182, 2
        %s184 = smul.addr %s183, 8
        %s185 = scalar_lea.vmem %s0, %s184
      $region36: #{model_forward.17} parent=31 // pred_fallthru
        _
    $region32: #{model_forward.17} parent=5 // pred_fallthru
      _
    %p186 = scmp.le.s32.totalorder 1, %s11
    %p187 = scmp.lt.s32.totalorder %s11, 3
    %p188 = pnand %p186, %p187
    %p189 = pneg %p188
    // Predicated region
    $region37: #{model_forward.17} parent=5 // pred_check
      _
    $region38: #{model_forward.17} parent=5 // pred_check_branch
      %191 = sbr.rel (%p188) target = $region40
    $region39: #{model_forward.17} parent=5 // pred_region
      %s192 = ssub.s32 %s11, 1
      %p193 = scmp.lt.s32.totalorder %s16, 1
      %s194 = scalar_select %p193, %s16, 1
      %s195 = smul.addr %s194, 2
      %s196 = smul.addr %s195, 8
      %s197 = scalar_lea.vmem %s0, %s196
      %p198 = pneg %p37
      %p199 = pneg %p34
      %p200 = pneg %p58
      %p201 = pneg %p55
      %p202 = pneg %p79
      %p203 = pneg %p76
      %p204 = pneg %p100
      %p205 = pneg %p97
      %p206 = pneg %p121
      %p207 = pneg %p118
      %p208 = pneg %p147
      %p209 = pneg %p144
      %p210 = scmp.lt.s32.totalorder %s16, 1
      %s211 = scalar_select %p210, %s16, 1
      %s212 = smul.addr %s211, 2
      %s213 = smul.addr %s212, 8
      %s214 = scalar_lea.vmem %s5, %s213
      %p215 = scmp.lt.s32.totalorder %s16, 1
      %s216 = scalar_select %p215, %s16, 1
      %s217 = smul.addr %s216, 2
      %s218 = smul.addr %s217, 8
      %s219 = scalar_lea.vmem %s0, %s218
      %p220 = scmp.lt.s32.totalorder %s16, 1
      %s221 = scalar_select %p220, %s16, 1
      %s222 = smul.addr %s221, 2
      %s223 = smul.addr %s222, 8
      %s224 = scalar_lea.vmem %s5, %s223
      %v225 = vld [vmem:[%s219] sm:$0xff]
      %v226 = vld [vmem:[%s219 + $0x8] sm:$0xf]
      %vm227 = vcmask 261120
      %228 = vst.msk [vmem:[#allocation2] sm:$0xff] %vm227, 0.0
      %229 = vst.msk [vmem:[#allocation2 + $0x8] sm:$0xff] %vm227, 0.0
      %230 = vst.msk [vmem:[#allocation2 + $0x2] sm:$0xff] %vm227, %v225
      %vm231 = vcmask 257024
      %232 = vst.msk [vmem:[#allocation2 + $0xa] sm:$0xf] %vm231, %v226
      %v233 = vld [vmem:[%s2] sm:$0x1]
      %v235 = vlaneseq
      %v236 = vshrl.u32 %v235, 7
      %v237 = vsub.s32 0, %v236
      %v238 = vrot.slane %v233, %v237
      %v240 = vadd.f32 %v238, 0.0
      %v241 = vld [vmem:[#allocation2] sm:$0xff]
      %v242 = vld [vmem:[#allocation2 + $0x8] sm:$0xf]
      %v243 = vld [vmem:[%s1] sm:$0xff]
      %v244 = vld [vmem:[%s1 + $0x8] sm:$0xff]
      %v245 = vld [vmem:[%s1 + $0x10] sm:$0xff]
      %v246 = vld [vmem:[%s1 + $0x18] sm:$0xff]
      %v248 = vsel %vm227, %v241, 0
      %v251 = vsel %vm227, %v242, 0
      %253 = vmatprep.subr.mxu0 0.0
      %254 = vmatpush1.msra.mxu0 %v243
      %255 = vmatprep.subr.mxu0 0.0
      %256 = vmatpush1.msra.mxu0 %v244
      %257 = vmatprep.subr.mxu0 0.0
      %258 = vmatpush1.msra.mxu0 %v245
      %259 = vmatprep.subr.mxu0 0.0
      %260 = vmatpush1.msra.mxu0 %v246
      %261 = vmatprep.subr.mxu0 0.0
      %262 = vmatpush1.msra.mxu0 0.0
      %263 = vmatprep.subr.mxu0 0.0
      %264 = vmatpush1.msra.mxu0 0.0
      %265 = vmatprep.subr.mxu0 0.0
      %266 = vmatpush1.msra.mxu0 0.0
      %267 = vmatprep.subr.mxu0 0.0
      %268 = vmatpush1.msra.mxu0 0.0
      %269 = vmatprep.subr.mxu0 0.0
      %270 = vmatpush1.msra.mxu0 0.0
      %271 = vmatprep.subr.mxu0 0.0
      %272 = vmatpush1.msra.mxu0 0.0
      %273 = vmatprep.subr.mxu0 0.0
      %274 = vmatpush1.msra.mxu0 0.0
      %275 = vmatprep.subr.mxu0 0.0
      %276 = vmatpush1.msra.mxu0 0.0
      %277 = vmatprep.subr.mxu0 0.0
      %278 = vmatpush1.msra.mxu0 0.0
      %279 = vmatprep.subr.mxu0 0.0
      %280 = vmatpush1.msra.mxu0 0.0
      %281 = vmatprep.subr.mxu0 0.0
      %282 = vmatpush1.msra.mxu0 0.0
      %283 = vmatprep.subr.mxu0 0.0
      %284 = vmatpush1.msra.mxu0 0.0
      %285 = vmatprep.subr.mxu0 0.0
      %286 = vmatpush1.msra.mxu0 0.0
      %287 = vmatprep.subr.mxu0 0.0
      %288 = vmatpush1.msra.mxu0 0.0
      %289 = vmatprep.subr.mxu0 0.0
      %290 = vmatpush1.msra.mxu0 0.0
      %291 = vmatprep.subr.mxu0 0.0
      %292 = vmatpush1.msra.mxu0 0.0
      %293 = vmatprep.subr.mxu0 0.0
      %294 = vmatpush1.msra.mxu0 0.0
      %295 = vmatprep.subr.mxu0 0.0
      %296 = vmatpush1.msra.mxu0 0.0
      %297 = vmatprep.subr.mxu0 0.0
      %298 = vmatpush1.msra.mxu0 0.0
      %299 = vmatprep.subr.mxu0 0.0
      %300 = vmatpush1.msra.mxu0 0.0
      %301 = vmatprep.subr.mxu0 0.0
      %302 = vmatpush1.msra.mxu0 0.0
      %303 = vmatprep.subr.mxu0 0.0
      %304 = vmatpush1.msra.mxu0 0.0
      %305 = vmatprep.subr.mxu0 0.0
      %306 = vmatpush1.msra.mxu0 0.0
      %307 = vmatprep.subr.mxu0 0.0
      %308 = vmatpush1.msra.mxu0 0.0
      %309 = vmatprep.subr.mxu0 0.0
      %310 = vmatpush1.msra.mxu0 0.0
      %311 = vmatprep.subr.mxu0 0.0
      %312 = vmatpush1.msra.mxu0 0.0
      %313 = vmatprep.subr.mxu0 0.0
      %314 = vmatpush1.msra.mxu0 0.0
      %315 = vmatprep.subr.mxu0 0.0
      %316 = vmatpush1.msra.mxu0 0.0
      %317 = vmatprep.mubr.f32.mxu0 0.0
      %318 = vmatmul.mubr.f32.gmra.mrb[0].mxu0 %v248
      %v319 = vpop.f32.mrb[0].mxu0
      %v320 = vadd.f32 0.0, %v319
      %v321 = vpop.f32.mrb[0].mxu0
      %322 = vmatprep.mubr.f32.mxu0 0.0
      %323 = vmatmul.mubr.f32.gmra.mrb[0].mxu0 %v251
      %v324 = vpop.f32.mrb[0].mxu0
      %v325 = vadd.f32 0.0, %v324
      %v326 = vpop.f32.mrb[0].mxu0
      %327 = vdwg.mxu0
      %v328 = vadd.f32 %v240, %v320
      %v329 = vadd.f32 %v240, %v325
      %v330 = vld [vmem:[#allocation2 + $0x1] sm:$0xff]
      %v331 = vld [vmem:[#allocation2 + $0x9] sm:$0xf]
      %s332 = scalar_lea.vmem %s1, 32
      %v333 = vld [vmem:[%s332] sm:$0xff]
      %v334 = vld [vmem:[%s332 + $0x8] sm:$0xff]
      %v335 = vld [vmem:[%s332 + $0x10] sm:$0xff]
      %v336 = vld [vmem:[%s332 + $0x18] sm:$0xff]
      %v338 = vsel %vm227, %v330, 0
      %v341 = vsel %vm227, %v331, 0
      %343 = vmatprep.subr.mxu0 0.0
      %344 = vmatpush1.msra.mxu0 %v333
      %345 = vmatprep.subr.mxu0 0.0
      %346 = vmatpush1.msra.mxu0 %v334
      %347 = vmatprep.subr.mxu0 0.0
      %348 = vmatpush1.msra.mxu0 %v335
      %349 = vmatprep.subr.mxu0 0.0
      %350 = vmatpush1.msra.mxu0 %v336
      %351 = vmatprep.subr.mxu0 0.0
      %352 = vmatpush1.msra.mxu0 0.0
      %353 = vmatprep.subr.mxu0 0.0
      %354 = vmatpush1.msra.mxu0 0.0
      %355 = vmatprep.subr.mxu0 0.0
      %356 = vmatpush1.msra.mxu0 0.0
      %357 = vmatprep.subr.mxu0 0.0
      %358 = vmatpush1.msra.mxu0 0.0
      %359 = vmatprep.subr.mxu0 0.0
      %360 = vmatpush1.msra.mxu0 0.0
      %361 = vmatprep.subr.mxu0 0.0
      %362 = vmatpush1.msra.mxu0 0.0
      %363 = vmatprep.subr.mxu0 0.0
      %364 = vmatpush1.msra.mxu0 0.0
      %365 = vmatprep.subr.mxu0 0.0
      %366 = vmatpush1.msra.mxu0 0.0
      %367 = vmatprep.subr.mxu0 0.0
      %368 = vmatpush1.msra.mxu0 0.0
      %369 = vmatprep.subr.mxu0 0.0
      %370 = vmatpush1.msra.mxu0 0.0
      %371 = vmatprep.subr.mxu0 0.0
      %372 = vmatpush1.msra.mxu0 0.0
      %373 = vmatprep.subr.mxu0 0.0
      %374 = vmatpush1.msra.mxu0 0.0
      %375 = vmatprep.subr.mxu0 0.0
      %376 = vmatpush1.msra.mxu0 0.0
      %377 = vmatprep.subr.mxu0 0.0
      %378 = vmatpush1.msra.mxu0 0.0
      %379 = vmatprep.subr.mxu0 0.0
      %380 = vmatpush1.msra.mxu0 0.0
      %381 = vmatprep.subr.mxu0 0.0
      %382 = vmatpush1.msra.mxu0 0.0
      %383 = vmatprep.subr.mxu0 0.0
      %384 = vmatpush1.msra.mxu0 0.0
      %385 = vmatprep.subr.mxu0 0.0
      %386 = vmatpush1.msra.mxu0 0.0
      %387 = vmatprep.subr.mxu0 0.0
      %388 = vmatpush1.msra.mxu0 0.0
      %389 = vmatprep.subr.mxu0 0.0
      %390 = vmatpush1.msra.mxu0 0.0
      %391 = vmatprep.subr.mxu0 0.0
      %392 = vmatpush1.msra.mxu0 0.0
      %393 = vmatprep.subr.mxu0 0.0
      %394 = vmatpush1.msra.mxu0 0.0
      %395 = vmatprep.subr.mxu0 0.0
      %396 = vmatpush1.msra.mxu0 0.0
      %397 = vmatprep.subr.mxu0 0.0
      %398 = vmatpush1.msra.mxu0 0.0
      %399 = vmatprep.subr.mxu0 0.0
      %400 = vmatpush1.msra.mxu0 0.0
      %401 = vmatprep.subr.mxu0 0.0
      %402 = vmatpush1.msra.mxu0 0.0
      %403 = vmatprep.subr.mxu0 0.0
      %404 = vmatpush1.msra.mxu0 0.0
      %405 = vmatprep.subr.mxu0 0.0
      %406 = vmatpush1.msra.mxu0 0.0
      %407 = vmatprep.mubr.f32.mxu0 0.0
      %408 = vmatmul.mubr.f32.gmra.mrb[0].mxu0 %v338
      %v409 = vpop.f32.mrb[0].mxu0
      %v410 = vadd.f32 0.0, %v409
      %v411 = vpop.f32.mrb[0].mxu0
      %412 = vmatprep.mubr.f32.mxu0 0.0
      %413 = vmatmul.mubr.f32.gmra.mrb[0].mxu0 %v341
      %v414 = vpop.f32.mrb[0].mxu0
      %v415 = vadd.f32 0.0, %v414
      %v416 = vpop.f32.mrb[0].mxu0
      %417 = vdwg.mxu0
      %v418 = vadd.f32 %v328, %v410
      %v419 = vadd.f32 %v329, %v415
      %v420 = vld [vmem:[#allocation2 + $0x2] sm:$0xff]
      %v421 = vld [vmem:[#allocation2 + $0xa] sm:$0xf]
      %s422 = scalar_lea.vmem %s1, 64
      %v423 = vld [vmem:[%s422] sm:$0xff]
      %v424 = vld [vmem:[%s422 + $0x8] sm:$0xff]
      %v425 = vld [vmem:[%s422 + $0x10] sm:$0xff]
      %v426 = vld [vmem:[%s422 + $0x18] sm:$0xff]
      %v428 = vsel %vm227, %v420, 0
      %v431 = vsel %vm227, %v421, 0
      %433 = vmatprep.subr.mxu0 0.0
      %434 = vmatpush1.msra.mxu0 %v423
      %435 = vmatprep.subr.mxu0 0.0
      %436 = vmatpush1.msra.mxu0 %v424
      %437 = vmatprep.subr.mxu0 0.0
      %438 = vmatpush1.msra.mxu0 %v425
      %439 = vmatprep.subr.mxu0 0.0
      %440 = vmatpush1.msra.mxu0 %v426
      %441 = vmatprep.subr.mxu0 0.0
      %442 = vmatpush1.msra.mxu0 0.0
      %443 = vmatprep.subr.mxu0 0.0
      %444 = vmatpush1.msra.mxu0 0.0
      %445 = vmatprep.subr.mxu0 0.0
      %446 = vmatpush1.msra.mxu0 0.0
      %447 = vmatprep.subr.mxu0 0.0
      %448 = vmatpush1.msra.mxu0 0.0
      %449 = vmatprep.subr.mxu0 0.0
      %450 = vmatpush1.msra.mxu0 0.0
      %451 = vmatprep.subr.mxu0 0.0
      %452 = vmatpush1.msra.mxu0 0.0
      %453 = vmatprep.subr.mxu0 0.0
      %454 = vmatpush1.msra.mxu0 0.0
      %455 = vmatprep.subr.mxu0 0.0
      %456 = vmatpush1.msra.mxu0 0.0
      %457 = vmatprep.subr.mxu0 0.0
      %458 = vmatpush1.msra.mxu0 0.0
      %459 = vmatprep.subr.mxu0 0.0
      %460 = vmatpush1.msra.mxu0 0.0
      %461 = vmatprep.subr.mxu0 0.0
      %462 = vmatpush1.msra.mxu0 0.0
      %463 = vmatprep.subr.mxu0 0.0
      %464 = vmatpush1.msra.mxu0 0.0
      %465 = vmatprep.subr.mxu0 0.0
      %466 = vmatpush1.msra.mxu0 0.0
      %467 = vmatprep.subr.mxu0 0.0
      %468 = vmatpush1.msra.mxu0 0.0
      %469 = vmatprep.subr.mxu0 0.0
      %470 = vmatpush1.msra.mxu0 0.0
      %471 = vmatprep.subr.mxu0 0.0
      %472 = vmatpush1.msra.mxu0 0.0
      %473 = vmatprep.subr.mxu0 0.0
      %474 = vmatpush1.msra.mxu0 0.0
      %475 = vmatprep.subr.mxu0 0.0
      %476 = vmatpush1.msra.mxu0 0.0
      %477 = vmatprep.subr.mxu0 0.0
      %478 = vmatpush1.msra.mxu0 0.0
      %479 = vmatprep.subr.mxu0 0.0
      %480 = vmatpush1.msra.mxu0 0.0
      %481 = vmatprep.subr.mxu0 0.0
      %482 = vmatpush1.msra.mxu0 0.0
      %483 = vmatprep.subr.mxu0 0.0
      %484 = vmatpush1.msra.mxu0 0.0
      %485 = vmatprep.subr.mxu0 0.0
      %486 = vmatpush1.msra.mxu0 0.0
      %487 = vmatprep.subr.mxu0 0.0
      %488 = vmatpush1.msra.mxu0 0.0
      %489 = vmatprep.subr.mxu0 0.0
      %490 = vmatpush1.msra.mxu0 0.0
      %491 = vmatprep.subr.mxu0 0.0
      %492 = vmatpush1.msra.mxu0 0.0
      %493 = vmatprep.subr.mxu0 0.0
      %494 = vmatpush1.msra.mxu0 0.0
      %495 = vmatprep.subr.mxu0 0.0
      %496 = vmatpush1.msra.mxu0 0.0
      %497 = vmatprep.mubr.f32.mxu0 0.0
      %498 = vmatmul.mubr.f32.gmra.mrb[0].mxu0 %v428
      %v499 = vpop.f32.mrb[0].mxu0
      %v500 = vadd.f32 0.0, %v499
      %v501 = vpop.f32.mrb[0].mxu0
      %502 = vmatprep.mubr.f32.mxu0 0.0
      %503 = vmatmul.mubr.f32.gmra.mrb[0].mxu0 %v431
      %v504 = vpop.f32.mrb[0].mxu0
      %v505 = vadd.f32 0.0, %v504
      %v506 = vpop.f32.mrb[0].mxu0
      %507 = vdwg.mxu0
      %v508 = vadd.f32 %v418, %v500
      %v509 = vadd.f32 %v419, %v505
      %v510 = vld [vmem:[#allocation2 + $0x3] sm:$0xff]
      %v511 = vld [vmem:[#allocation2 + $0xb] sm:$0xf]
      %s512 = scalar_lea.vmem %s1, 96
      %v513 = vld [vmem:[%s512] sm:$0xff]
      %v514 = vld [vmem:[%s512 + $0x8] sm:$0xff]
      %v515 = vld [vmem:[%s512 + $0x10] sm:$0xff]
      %v516 = vld [vmem:[%s512 + $0x18] sm:$0xff]
      %v518 = vsel %vm227, %v510, 0
      %v521 = vsel %vm227, %v511, 0
      %523 = vmatprep.subr.mxu0 0.0
      %524 = vmatpush1.msra.mxu0 %v513
      %525 = vmatprep.subr.mxu0 0.0
      %526 = vmatpush1.msra.mxu0 %v514
      %527 = vmatprep.subr.mxu0 0.0
      %528 = vmatpush1.msra.mxu0 %v515
      %529 = vmatprep.subr.mxu0 0.0
      %530 = vmatpush1.msra.mxu0 %v516
      %531 = vmatprep.subr.mxu0 0.0
      %532 = vmatpush1.msra.mxu0 0.0
      %533 = vmatprep.subr.mxu0 0.0
      %534 = vmatpush1.msra.mxu0 0.0
      %535 = vmatprep.subr.mxu0 0.0
      %536 = vmatpush1.msra.mxu0 0.0
      %537 = vmatprep.subr.mxu0 0.0
      %538 = vmatpush1.msra.mxu0 0.0
      %539 = vmatprep.subr.mxu0 0.0
      %540 = vmatpush1.msra.mxu0 0.0
      %541 = vmatprep.subr.mxu0 0.0
      %542 = vmatpush1.msra.mxu0 0.0
      %543 = vmatprep.subr.mxu0 0.0
      %544 = vmatpush1.msra.mxu0 0.0
      %545 = vmatprep.subr.mxu0 0.0
      %546 = vmatpush1.msra.mxu0 0.0
      %547 = vmatprep.subr.mxu0 0.0
      %548 = vmatpush1.msra.mxu0 0.0
      %549 = vmatprep.subr.mxu0 0.0
      %550 = vmatpush1.msra.mxu0 0.0
      %551 = vmatprep.subr.mxu0 0.0
      %552 = vmatpush1.msra.mxu0 0.0
      %553 = vmatprep.subr.mxu0 0.0
      %554 = vmatpush1.msra.mxu0 0.0
      %555 = vmatprep.subr.mxu0 0.0
      %556 = vmatpush1.msra.mxu0 0.0
      %557 = vmatprep.subr.mxu0 0.0
      %558 = vmatpush1.msra.mxu0 0.0
      %559 = vmatprep.subr.mxu0 0.0
      %560 = vmatpush1.msra.mxu0 0.0
      %561 = vmatprep.subr.mxu0 0.0
      %562 = vmatpush1.msra.mxu0 0.0
      %563 = vmatprep.subr.mxu0 0.0
      %564 = vmatpush1.msra.mxu0 0.0
      %565 = vmatprep.subr.mxu0 0.0
      %566 = vmatpush1.msra.mxu0 0.0
      %567 = vmatprep.subr.mxu0 0.0
      %568 = vmatpush1.msra.mxu0 0.0
      %569 = vmatprep.subr.mxu0 0.0
      %570 = vmatpush1.msra.mxu0 0.0
      %571 = vmatprep.subr.mxu0 0.0
      %572 = vmatpush1.msra.mxu0 0.0
      %573 = vmatprep.subr.mxu0 0.0
      %574 = vmatpush1.msra.mxu0 0.0
      %575 = vmatprep.subr.mxu0 0.0
      %576 = vmatpush1.msra.mxu0 0.0
      %577 = vmatprep.subr.mxu0 0.0
      %578 = vmatpush1.msra.mxu0 0.0
      %579 = vmatprep.subr.mxu0 0.0
      %580 = vmatpush1.msra.mxu0 0.0
      %581 = vmatprep.subr.mxu0 0.0
      %582 = vmatpush1.msra.mxu0 0.0
      %583 = vmatprep.subr.mxu0 0.0
      %584 = vmatpush1.msra.mxu0 0.0
      %585 = vmatprep.subr.mxu0 0.0
      %586 = vmatpush1.msra.mxu0 0.0
      %587 = vmatprep.mubr.f32.mxu0 0.0
      %588 = vmatmul.mubr.f32.gmra.mrb[0].mxu0 %v518
      %v589 = vpop.f32.mrb[0].mxu0
      %v590 = vadd.f32 0.0, %v589
      %v591 = vpop.f32.mrb[0].mxu0
      %592 = vmatprep.mubr.f32.mxu0 0.0
      %593 = vmatmul.mubr.f32.gmra.mrb[0].mxu0 %v521
      %v594 = vpop.f32.mrb[0].mxu0
      %v595 = vadd.f32 0.0, %v594
      %v596 = vpop.f32.mrb[0].mxu0
      %597 = vdwg.mxu0
      %v598 = vadd.f32 %v508, %v590
      %v599 = vadd.f32 %v509, %v595
      %v600 = vld [vmem:[#allocation2 + $0x4] sm:$0xff]
      %v601 = vld [vmem:[#allocation2 + $0xc] sm:$0xf]
      %s602 = scalar_lea.vmem %s1, 128
      %v603 = vld [vmem:[%s602] sm:$0xff]
      %v604 = vld [vmem:[%s602 + $0x8] sm:$0xff]
      %v605 = vld [vmem:[%s602 + $0x10] sm:$0xff]
      %v606 = vld [vmem:[%s602 + $0x18] sm:$0xff]
      %v608 = vsel %vm227, %v600, 0
      %v611 = vsel %vm227, %v601, 0
      %613 = vmatprep.subr.mxu0 0.0
      %614 = vmatpush1.msra.mxu0 %v603
      %615 = vmatprep.subr.mxu0 0.0
      %616 = vmatpush1.msra.mxu0 %v604
      %617 = vmatprep.subr.mxu0 0.0
      %618 = vmatpush1.msra.mxu0 %v605
      %619 = vmatprep.subr.mxu0 0.0
      %620 = vmatpush1.msra.mxu0 %v606
      %621 = vmatprep.subr.mxu0 0.0
      %622 = vmatpush1.msra.mxu0 0.0
      %623 = vmatprep.subr.mxu0 0.0
      %624 = vmatpush1.msra.mxu0 0.0
      %625 = vmatprep.subr.mxu0 0.0
      %626 = vmatpush1.msra.mxu0 0.0
      %627 = vmatprep.subr.mxu0 0.0
      %628 = vmatpush1.msra.mxu0 0.0
      %629 = vmatprep.subr.mxu0 0.0
      %630 = vmatpush1.msra.mxu0 0.0
      %631 = vmatprep.subr.mxu0 0.0
      %632 = vmatpush1.msra.mxu0 0.0
      %633 = vmatprep.subr.mxu0 0.0
      %634 = vmatpush1.msra.mxu0 0.0
      %635 = vmatprep.subr.mxu0 0.0
      %636 = vmatpush1.msra.mxu0 0.0
      %637 = vmatprep.subr.mxu0 0.0
      %638 = vmatpush1.msra.mxu0 0.0
      %639 = vmatprep.subr.mxu0 0.0
      %640 = vmatpush1.msra.mxu0 0.0
      %641 = vmatprep.subr.mxu0 0.0
      %642 = vmatpush1.msra.mxu0 0.0
      %643 = vmatprep.subr.mxu0 0.0
      %644 = vmatpush1.msra.mxu0 0.0
      %645 = vmatprep.subr.mxu0 0.0
      %646 = vmatpush1.msra.mxu0 0.0
      %647 = vmatprep.subr.mxu0 0.0
      %648 = vmatpush1.msra.mxu0 0.0
      %649 = vmatprep.subr.mxu0 0.0
      %650 = vmatpush1.msra.mxu0 0.0
      %651 = vmatprep.subr.mxu0 0.0
      %652 = vmatpush1.msra.mxu0 0.0
      %653 = vmatprep.subr.mxu0 0.0
      %654 = vmatpush1.msra.mxu0 0.0
      %655 = vmatprep.subr.mxu0 0.0
      %656 = vmatpush1.msra.mxu0 0.0
      %657 = vmatprep.subr.mxu0 0.0
      %658 = vmatpush1.msra.mxu0 0.0
      %659 = vmatprep.subr.mxu0 0.0
      %660 = vmatpush1.msra.mxu0 0.0
      %661 = vmatprep.subr.mxu0 0.0
      %662 = vmatpush1.msra.mxu0 0.0
      %663 = vmatprep.subr.mxu0 0.0
      %664 = vmatpush1.msra.mxu0 0.0
      %665 = vmatprep.subr.mxu0 0.0
      %666 = vmatpush1.msra.mxu0 0.0
      %667 = vmatprep.subr.mxu0 0.0
      %668 = vmatpush1.msra.mxu0 0.0
      %669 = vmatprep.subr.mxu0 0.0
      %670 = vmatpush1.msra.mxu0 0.0
      %671 = vmatprep.subr.mxu0 0.0
      %672 = vmatpush1.msra.mxu0 0.0
      %673 = vmatprep.subr.mxu0 0.0
      %674 = vmatpush1.msra.mxu0 0.0
      %675 = vmatprep.subr.mxu0 0.0
      %676 = vmatpush1.msra.mxu0 0.0
      %677 = vmatprep.mubr.f32.mxu0 0.0
      %678 = vmatmul.mubr.f32.gmra.mrb[0].mxu0 %v608
      %v679 = vpop.f32.mrb[0].mxu0
      %v680 = vadd.f32 0.0, %v679
      %v681 = vpop.f32.mrb[0].mxu0
      %682 = vmatprep.mubr.f32.mxu0 0.0
      %683 = vmatmul.mubr.f32.gmra.mrb[0].mxu0 %v611
      %v684 = vpop.f32.mrb[0].mxu0
      %v685 = vadd.f32 0.0, %v684
      %v686 = vpop.f32.mrb[0].mxu0
      %687 = vdwg.mxu0
      %v688 = vadd.f32 %v598, %v680
      %v689 = vadd.f32 %v599, %v685
      %v690 = vmax.f32 %v688, 0.0
      %v691 = vmax.f32 %v689, 0.0
      %v692 = vld [vmem:[%s3] sm:$0x1]
      %v693 = vld [vmem:[%s4] sm:$0x1]
      %v694 = vsel %vm227, %v690, 0.0
      %695 = vadd.xlane.f32.xlu0 %v694
      %v696 = vpop.xlane.xlu0 %695
      %v697 = vsel %vm231, %v691, 0.0
      %698 = vadd.xlane.f32.xlu0 %v697
      %v699 = vpop.xlane.xlu0 %698
      %v700 = vrcp.pop 32.0
      %v701 = vmul.f32 %v696, %v700
      %v702 = vmul.f32 %v699, %v700
      %v703 = vsub.f32 %v690, %v701
      %v704 = vsub.f32 %v691, %v702
      %v705 = vmul.f32 %v703, %v703
      %v706 = vmul.f32 %v704, %v704
      %v707 = vsel %vm227, %v705, 0.0
      %708 = vadd.xlane.f32.xlu0 %v707
      %v709 = vpop.xlane.xlu0 %708
      %v710 = vsel %vm231, %v706, 0.0
      %711 = vadd.xlane.f32.xlu0 %v710
      %v712 = vpop.xlane.xlu0 %711
      %v713 = vmul.f32 %v709, %v700
      %v714 = vmul.f32 %v712, %v700
      %v715 = vadd.f32 %v713, 1e-05
      %v716 = vadd.f32 %v714, 1e-05
      %v717 = vrsqrt.pop %v715
      %v718 = vrsqrt.pop %v716
      %v719 = vmul.f32 %v703, %v717
      %v720 = vmul.f32 %v704, %v718
      %v722 = vlaneseq
      %v723 = vshrl.u32 %v722, 7
      %v724 = vsub.s32 0, %v723
      %v725 = vrot.slane %v692, %v724
      %v727 = vmul.f32 %v719, %v725
      %v728 = vmul.f32 %v720, %v725
      %v730 = vlaneseq
      %v731 = vshrl.u32 %v730, 7
      %v732 = vsub.s32 0, %v731
      %v733 = vrot.slane %v693, %v732
      %v735 = vadd.f32 %v727, %v733
      %v736 = vadd.f32 %v728, %v733
      %737 = vst.msk [vmem:[%s224] sm:$0xff] %vm227, %v735
      %738 = vst.msk [vmem:[%s224 + $0x8] sm:$0xf] %vm231, %v736
      %p739 = scmp.lt.s32.totalorder %s16, 1
      %s740 = scalar_select %p739, %s16, 1
      %s741 = smul.addr %s740, 2
      %s742 = smul.addr %s741, 8
      %s743 = scalar_lea.vmem %s5, %s742
      // Predicated region
      $region41: #{model_forward.17} parent=39 // pred_check
        %p744 = pneg %p144
      $region42: #{model_forward.17} parent=39 // pred_check_branch
        %746 = sbr.rel (%p744) target = $region44
      $region43: #{model_forward.17} parent=39 // pred_region
        _
      $region44: #{model_forward.17} parent=39 // pred_fallthru
        _
    $region40: #{model_forward.17} parent=5 // pred_fallthru
      _
    %p747 = scmp.le.s32.totalorder 2, %s11
    // Predicated region
    $region45: #{model_forward.17} parent=5 // pred_check
      %p748 = pneg %p747
    $region46: #{model_forward.17} parent=5 // pred_check_branch
      %750 = sbr.rel (%p748) target = $region48
    $region47: #{model_forward.17} parent=5 // pred_region
      %s751 = ssub.s32 %s11, 2
      // Predicated region
      $region49: #{model_forward.17} parent=47 // pred_check
        %p752 = pneg %p150
      $region50: #{model_forward.17} parent=47 // pred_check_branch
        %754 = sbr.rel (%p752) target = $region52
      $region51: #{model_forward.17} parent=47 // pred_region
        %p755 = scmp.lt.s32.totalorder %s17, 1
        %s756 = scalar_select %p755, %s17, 1
        %s757 = smul.addr %s756, 2
        %s758 = smul.addr %s757, 8
        %s759 = scalar_lea.vmem %s5, %s758
      $region52: #{model_forward.17} parent=47 // pred_fallthru
        _
    $region48: #{model_forward.17} parent=5 // pred_fallthru
      _
  $region6: #{model_forward.17} parent=0 // loop_footer
    %s15 = sadd.s32 1, %s11
  $region7: #{model_forward.17} parent=0 // loop_footer_branch
    %10 = sbr.rel target = $region3
  $region8: #{model_forward.17} parent=0 // loop_exit
    _

// kernel: model_forward.16
$region0: #{model_forward.16}
  #allocation0 [shape = 'u32[]', space=smem, size = 0x4, offset = 0x4, fixed_abs, tag = 'smem constant byte address 0x4 - core index']
  #allocation1 [shape = 'u32[144,128]{1,0:T(1,128)}', space=vmem, size = 0x12000, scoped, tag = 'internal scratch']
  #allocation2 [shape = 'f32[10,32]{1,0:T(8,128)}', space=vmem, size = 0x2000, scoped, tag = 'scratch operand']
  %s0 = inlined_call_operand.vmem [shape: f32[2,8,32], index: 0, kind: input, shape index: {}]
  %s1 = inlined_call_operand.vmem [shape: f32[3,32,32], index: 1, kind: input, shape index: {}]
  %s2 = inlined_call_operand.vmem [shape: f32[1,32], index: 2, kind: input, shape index: {}]
  %s3 = inlined_call_operand.vmem [shape: f32[1,32], index: 3, kind: input, shape index: {}]
  %s4 = inlined_call_operand.vmem [shape: f32[1,32], index: 4, kind: input, shape index: {}]
  %s5 = inlined_call_operand.vmem [shape: f32[2,8,32], index: 5, kind: output, shape index: {}]
  %s6 = sld [smem:[#allocation0]]
  $region53: #{model_forward.16} parent=0
    _
  %s8 = ssub.s32 1, %s6
  %s9 = scalar_select 0, %s8, %s6
  loop: start=0, step=1, limit=4
  $region2: #{model_forward.16} parent=0 // loop_pre_header
    _
  $region3: #{model_forward.16} parent=0 // loop_header
    %s11 = sphi 0, %s15
    %p12 = scmp.ge.s32.totalorder %s11, 4
    %s21 = sphi 0, %s23
    %s24 = sphi 0, %s21
    %s25 = sphi 0, %s24
    %s41 = sphi 0, %s25
    %s45 = sphi 0, %s45
    %s47 = sphi 0, %s45
    %s48 = sphi 0, %s47
    %s62 = sphi 0, %s48
    %s66 = sphi 0, %s66
    %s68 = sphi 0, %s66
    %s69 = sphi 0, %s68
    %s83 = sphi 0, %s69
    %s87 = sphi 0, %s87
    %s89 = sphi 0, %s87
    %s90 = sphi 0, %s89
    %s104 = sphi 0, %s90
    %s108 = sphi 0, %s108
    %s110 = sphi 0, %s108
    %s111 = sphi 0, %s110
    %s125 = sphi 0, %s111
    %s131 = sphi 0, %s133
    %s134 = sphi 0, %s131
    %s135 = sphi 0, %s134
    %s151 = sphi 0, %s135
  $region4: #{model_forward.16} parent=0 // loop_header_branch
    %14 = sbr.rel (%p12) target = $region8
  $region5: #{model_forward.16} parent=0 // loop_body
    %s16 = ssub.s32 %s11, 1
    %s17 = ssub.s32 %s11, 2
    %s18 = sadd.s32 %s11, 1
    %s19 = ssub.s32 %s11, %s18
    %p20 = scmp.eq.s32.totalorder %s19, 0
    %s22 = sadd.s32 %s21, 1
    %s23 = scalar_select %p20, %s21, %s22
    %p26 = pneg %p20
    %p27 = scmp.eq.s32.totalorder %s11, 1
    %p28 = por %p26, %p27
    %p29 = scmp.ne.s32.totalorder %s21, %s24
    %p30 = scmp.eq.s32.totalorder %s11, 0
    %p31 = por %p29, %p30
    %p32 = scmp.ne.s32.totalorder %s21, %s24
    %p33 = scmp.eq.s32.totalorder %s16, 1
    %p34 = por %p32, %p33
    %p35 = scmp.ne.s32.totalorder %s24, %s25
    %p36 = scmp.eq.s32.totalorder %s16, 0
    %p37 = por %p35, %p36
    %p38 = scmp.ne.s32.totalorder %s24, %s25
    %p39 = scmp.eq.s32.totalorder %s17, 1
    %p40 = por %p38, %p39
    %p42 = scmp.ne.s32.totalorder %s25, %s41
    %p43 = scmp.eq.s32.totalorder %s17, 0
    %p44 = por %p42, %p43
    %s46 = sadd.s32 %s45, 1
    %p49 = scmp.eq.s32.totalorder %s11, 1
    %p50 = scmp.ne.s32.totalorder %s45, %s47
    %p51 = scmp.eq.s32.totalorder %s11, 0
    %p52 = por %p50, %p51
    %p53 = scmp.ne.s32.totalorder %s45, %s47
    %p54 = scmp.eq.s32.totalorder %s16, 1
    %p55 = por %p53, %p54
    %p56 = scmp.ne.s32.totalorder %s47, %s48
    %p57 = scmp.eq.s32.totalorder %s16, 0
    %p58 = por %p56, %p57
    %p59 = scmp.ne.s32.totalorder %s47, %s48
    %p60 = scmp.eq.s32.totalorder %s17, 1
    %p61 = por %p59, %p60
    %p63 = scmp.ne.s32.totalorder %s48, %s62
    %p64 = scmp.eq.s32.totalorder %s17, 0
    %p65 = por %p63, %p64
    %s67 = sadd.s32 %s66, 1
    %p70 = scmp.eq.s32.totalorder %s11, 1
    %p71 = scmp.ne.s32.totalorder %s66, %s68
    %p72 = scmp.eq.s32.totalorder %s11, 0
    %p73 = por %p71, %p72
    %p74 = scmp.ne.s32.totalorder %s66, %s68
    %p75 = scmp.eq.s32.totalorder %s16, 1
    %p76 = por %p74, %p75
    %p77 = scmp.ne.s32.totalorder %s68, %s69
    %p78 = scmp.eq.s32.totalorder %s16, 0
    %p79 = por %p77, %p78
    %p80 = scmp.ne.s32.totalorder %s68, %s69
    %p81 = scmp.eq.s32.totalorder %s17, 1
    %p82 = por %p80, %p81
    %p84 = scmp.ne.s32.totalorder %s69, %s83
    %p85 = scmp.eq.s32.totalorder %s17, 0
    %p86 = por %p84, %p85
    %s88 = sadd.s32 %s87, 1
    %p91 = scmp.eq.s32.totalorder %s11, 1
    %p92 = scmp.ne.s32.totalorder %s87, %s89
    %p93 = scmp.eq.s32.totalorder %s11, 0
    %p94 = por %p92, %p93
    %p95 = scmp.ne.s32.totalorder %s87, %s89
    %p96 = scmp.eq.s32.totalorder %s16, 1
    %p97 = por %p95, %p96
    %p98 = scmp.ne.s32.totalorder %s89, %s90
    %p99 = scmp.eq.s32.totalorder %s16, 0
    %p100 = por %p98, %p99
    %p101 = scmp.ne.s32.totalorder %s89, %s90
    %p102 = scmp.eq.s32.totalorder %s17, 1
    %p103 = por %p101, %p102
    %p105 = scmp.ne.s32.totalorder %s90, %s104
    %p106 = scmp.eq.s32.totalorder %s17, 0
    %p107 = por %p105, %p106
    %s109 = sadd.s32 %s108, 1
    %p112 = scmp.eq.s32.totalorder %s11, 1
    %p113 = scmp.ne.s32.totalorder %s108, %s110
    %p114 = scmp.eq.s32.totalorder %s11, 0
    %p115 = por %p113, %p114
    %p116 = scmp.ne.s32.totalorder %s108, %s110
    %p117 = scmp.eq.s32.totalorder %s16, 1
    %p118 = por %p116, %p117
    %p119 = scmp.ne.s32.totalorder %s110, %s111
    %p120 = scmp.eq.s32.totalorder %s16, 0
    %p121 = por %p119, %p120
    %p122 = scmp.ne.s32.totalorder %s110, %s111
    %p123 = scmp.eq.s32.totalorder %s17, 1
    %p124 = por %p122, %p123
    %p126 = scmp.ne.s32.totalorder %s111, %s125
    %p127 = scmp.eq.s32.totalorder %s17, 0
    %p128 = por %p126, %p127
    %s129 = ssub.s32 %s11, %s18
    %p130 = scmp.eq.s32.totalorder %s129, 0
    %s132 = sadd.s32 %s131, 1
    %s133 = scalar_select %p130, %s131, %s132
    %p136 = pneg %p130
    %p137 = scmp.eq.s32.totalorder %s11, 1
    %p138 = por %p136, %p137
    %p139 = scmp.ne.s32.totalorder %s131, %s134
    %p140 = scmp.eq.s32.totalorder %s11, 0
    %p141 = por %p139, %p140
    %p142 = scmp.ne.s32.totalorder %s131, %s134
    %p143 = scmp.eq.s32.totalorder %s16, 1
    %p144 = por %p142, %p143
    %p145 = scmp.ne.s32.totalorder %s134, %s135
    %p146 = scmp.eq.s32.totalorder %s16, 0
    %p147 = por %p145, %p146
    %p148 = scmp.ne.s32.totalorder %s134, %s135
    %p149 = scmp.eq.s32.totalorder %s17, 1
    %p150 = por %p148, %p149
    %p152 = scmp.ne.s32.totalorder %s135, %s151
    %p153 = scmp.eq.s32.totalorder %s17, 0
    %p154 = por %p152, %p153
    %p155 = scmp.le.s32.totalorder 1, %s11
    %p156 = scmp.lt.s32.totalorder %s11, 3
    %p157 = pnand %p155, %p156
    %p158 = pneg %p157
    // Predicated region
    $region9: #{model_forward.16} parent=5 // pred_check
      _
    $region10: #{model_forward.16} parent=5 // pred_check_branch
      %160 = sbr.rel (%p157) target = $region12
    $region11: #{model_forward.16} parent=5 // pred_region
      %s161 = ssub.s32 %s11, 1
      // Predicated region
      $region13: #{model_forward.16} parent=11 // pred_check
        %p162 = pneg %p58
      $region14: #{model_forward.16} parent=11 // pred_check_branch
        %164 = sbr.rel (%p162) target = $region16
      $region15: #{model_forward.16} parent=11 // pred_region
        _
      $region16: #{model_forward.16} parent=11 // pred_fallthru
        _
      // Predicated region
      $region17: #{model_forward.16} parent=11 // pred_check
        %p165 = pneg %p79
      $region18: #{model_forward.16} parent=11 // pred_check_branch
        %167 = sbr.rel (%p165) target = $region20
      $region19: #{model_forward.16} parent=11 // pred_region
        _
      $region20: #{model_forward.16} parent=11 // pred_fallthru
        _
      // Predicated region
      $region21: #{model_forward.16} parent=11 // pred_check
        %p168 = pneg %p100
      $region22: #{model_forward.16} parent=11 // pred_check_branch
        %170 = sbr.rel (%p168) target = $region24
      $region23: #{model_forward.16} parent=11 // pred_region
        _
      $region24: #{model_forward.16} parent=11 // pred_fallthru
        _
      // Predicated region
      $region25: #{model_forward.16} parent=11 // pred_check
        %p171 = pneg %p121
      $region26: #{model_forward.16} parent=11 // pred_check_branch
        %173 = sbr.rel (%p171) target = $region28
      $region27: #{model_forward.16} parent=11 // pred_region
        _
      $region28: #{model_forward.16} parent=11 // pred_fallthru
        _
    $region12: #{model_forward.16} parent=5 // pred_fallthru
      _
    %p174 = scmp.lt.s32.totalorder %s11, 2
    // Predicated region
    $region29: #{model_forward.16} parent=5 // pred_check
      %p175 = pneg %p174
    $region30: #{model_forward.16} parent=5 // pred_check_branch
      %177 = sbr.rel (%p175) target = $region32
    $region31: #{model_forward.16} parent=5 // pred_region
      // Predicated region
      $region33: #{model_forward.16} parent=31 // pred_check
        %p178 = pneg %p31
      $region34: #{model_forward.16} parent=31 // pred_check_branch
        %180 = sbr.rel (%p178) target = $region36
      $region35: #{model_forward.16} parent=31 // pred_region
        %p181 = scmp.lt.s32.totalorder %s11, 1
        %s182 = scalar_select %p181, %s11, 1
        %s183 = smul.addr %s182, 8
        %s184 = scalar_lea.vmem %s0, %s183
      $region36: #{model_forward.16} parent=31 // pred_fallthru
        _
    $region32: #{model_forward.16} parent=5 // pred_fallthru
      _
    %p185 = scmp.le.s32.totalorder 1, %s11
    %p186 = scmp.lt.s32.totalorder %s11, 3
    %p187 = pnand %p185, %p186
    %p188 = pneg %p187
    // Predicated region
    $region37: #{model_forward.16} parent=5 // pred_check
      _
    $region38: #{model_forward.16} parent=5 // pred_check_branch
      %190 = sbr.rel (%p187) target = $region40
    $region39: #{model_forward.16} parent=5 // pred_region
      %s191 = ssub.s32 %s11, 1
      %p192 = scmp.lt.s32.totalorder %s16, 1
      %s193 = scalar_select %p192, %s16, 1
      %s194 = smul.addr %s193, 8
      %s195 = scalar_lea.vmem %s0, %s194
      %p196 = pneg %p37
      %p197 = pneg %p34
      %p198 = pneg %p58
      %p199 = pneg %p55
      %p200 = pneg %p79
      %p201 = pneg %p76
      %p202 = pneg %p100
      %p203 = pneg %p97
      %p204 = pneg %p121
      %p205 = pneg %p118
      %p206 = pneg %p147
      %p207 = pneg %p144
      %p208 = scmp.lt.s32.totalorder %s16, 1
      %s209 = scalar_select %p208, %s16, 1
      %s210 = smul.addr %s209, 8
      %s211 = scalar_lea.vmem %s5, %s210
      %p212 = scmp.lt.s32.totalorder %s16, 1
      %s213 = scalar_select %p212, %s16, 1
      %s214 = smul.addr %s213, 8
      %s215 = scalar_lea.vmem %s0, %s214
      %p216 = scmp.lt.s32.totalorder %s16, 1
      %s217 = scalar_select %p216, %s16, 1
      %s218 = smul.addr %s217, 8
      %s219 = scalar_lea.vmem %s5, %s218
      %v220 = vld [vmem:[%s215] sm:$0xff]
      %vm221 = vcmask 261120
      %222 = vst.msk [vmem:[#allocation2] sm:$0xff] %vm221, 0.0
      %vm223 = vcmask 254976
      %224 = vst.msk [vmem:[#allocation2 + $0x8] sm:$0x3] %vm223, 0.0
      %225 = vst.msk [vmem:[#allocation2 + $0x1] sm:$0xff] %vm221, %v220
      %v226 = vld [vmem:[%s2] sm:$0x1]
      %v228 = vlaneseq
      %v229 = vshrl.u32 %v228, 7
      %v230 = vsub.s32 0, %v229
      %v231 = vrot.slane %v226, %v230
      %v233 = vadd.f32 %v231, 0.0
      %v234 = vld [vmem:[#allocation2] sm:$0xff]
      %v235 = vld [vmem:[%s1] sm:$0xff]
      %v236 = vld [vmem:[%s1 + $0x8] sm:$0xff]
      %v237 = vld [vmem:[%s1 + $0x10] sm:$0xff]
      %v238 = vld [vmem:[%s1 + $0x18] sm:$0xff]
      %v240 = vsel %vm221, %v234, 0
      %242 = vmatprep.subr.mxu0 0.0
      %243 = vmatpush1.msra.mxu0 %v235
      %244 = vmatprep.subr.mxu0 0.0
      %245 = vmatpush1.msra.mxu0 %v236
      %246 = vmatprep.subr.mxu0 0.0
      %247 = vmatpush1.msra.mxu0 %v237
      %248 = vmatprep.subr.mxu0 0.0
      %249 = vmatpush1.msra.mxu0 %v238
      %250 = vmatprep.subr.mxu0 0.0
      %251 = vmatpush1.msra.mxu0 0.0
      %252 = vmatprep.subr.mxu0 0.0
      %253 = vmatpush1.msra.mxu0 0.0
      %254 = vmatprep.subr.mxu0 0.0
      %255 = vmatpush1.msra.mxu0 0.0
      %256 = vmatprep.subr.mxu0 0.0
      %257 = vmatpush1.msra.mxu0 0.0
      %258 = vmatprep.subr.mxu0 0.0
      %259 = vmatpush1.msra.mxu0 0.0
      %260 = vmatprep.subr.mxu0 0.0
      %261 = vmatpush1.msra.mxu0 0.0
      %262 = vmatprep.subr.mxu0 0.0
      %263 = vmatpush1.msra.mxu0 0.0
      %264 = vmatprep.subr.mxu0 0.0
      %265 = vmatpush1.msra.mxu0 0.0
      %266 = vmatprep.subr.mxu0 0.0
      %267 = vmatpush1.msra.mxu0 0.0
      %268 = vmatprep.subr.mxu0 0.0
      %269 = vmatpush1.msra.mxu0 0.0
      %270 = vmatprep.subr.mxu0 0.0
      %271 = vmatpush1.msra.mxu0 0.0
      %272 = vmatprep.subr.mxu0 0.0
      %273 = vmatpush1.msra.mxu0 0.0
      %274 = vmatprep.subr.mxu0 0.0
      %275 = vmatpush1.msra.mxu0 0.0
      %276 = vmatprep.subr.mxu0 0.0
      %277 = vmatpush1.msra.mxu0 0.0
      %278 = vmatprep.subr.mxu0 0.0
      %279 = vmatpush1.msra.mxu0 0.0
      %280 = vmatprep.subr.mxu0 0.0
      %281 = vmatpush1.msra.mxu0 0.0
      %282 = vmatprep.subr.mxu0 0.0
      %283 = vmatpush1.msra.mxu0 0.0
      %284 = vmatprep.subr.mxu0 0.0
      %285 = vmatpush1.msra.mxu0 0.0
      %286 = vmatprep.subr.mxu0 0.0
      %287 = vmatpush1.msra.mxu0 0.0
      %288 = vmatprep.subr.mxu0 0.0
      %289 = vmatpush1.msra.mxu0 0.0
      %290 = vmatprep.subr.mxu0 0.0
      %291 = vmatpush1.msra.mxu0 0.0
      %292 = vmatprep.subr.mxu0 0.0
      %293 = vmatpush1.msra.mxu0 0.0
      %294 = vmatprep.subr.mxu0 0.0
      %295 = vmatpush1.msra.mxu0 0.0
      %296 = vmatprep.subr.mxu0 0.0
      %297 = vmatpush1.msra.mxu0 0.0
      %298 = vmatprep.subr.mxu0 0.0
      %299 = vmatpush1.msra.mxu0 0.0
      %300 = vmatprep.subr.mxu0 0.0
      %301 = vmatpush1.msra.mxu0 0.0
      %302 = vmatprep.subr.mxu0 0.0
      %303 = vmatpush1.msra.mxu0 0.0
      %304 = vmatprep.subr.mxu0 0.0
      %305 = vmatpush1.msra.mxu0 0.0
      %306 = vmatprep.mubr.f32.mxu0 0.0
      %307 = vmatmul.mubr.f32.gmra.mrb[0].mxu0 %v240
      %v308 = vpop.f32.mrb[0].mxu0
      %v309 = vadd.f32 0.0, %v308
      %v310 = vpop.f32.mrb[0].mxu0
      %311 = vdwg.mxu0
      %v312 = vadd.f32 %v233, %v309
      %v313 = vld [vmem:[#allocation2 + $0x1] sm:$0xff]
      %s314 = scalar_lea.vmem %s1, 32
      %v315 = vld [vmem:[%s314] sm:$0xff]
      %v316 = vld [vmem:[%s314 + $0x8] sm:$0xff]
      %v317 = vld [vmem:[%s314 + $0x10] sm:$0xff]
      %v318 = vld [vmem:[%s314 + $0x18] sm:$0xff]
      %v320 = vsel %vm221, %v313, 0
      %322 = vmatprep.subr.mxu0 0.0
      %323 = vmatpush1.msra.mxu0 %v315
      %324 = vmatprep.subr.mxu0 0.0
      %325 = vmatpush1.msra.mxu0 %v316
      %326 = vmatprep.subr.mxu0 0.0
      %327 = vmatpush1.msra.mxu0 %v317
      %328 = vmatprep.subr.mxu0 0.0
      %329 = vmatpush1.msra.mxu0 %v318
      %330 = vmatprep.subr.mxu0 0.0
      %331 = vmatpush1.msra.mxu0 0.0
      %332 = vmatprep.subr.mxu0 0.0
      %333 = vmatpush1.msra.mxu0 0.0
      %334 = vmatprep.subr.mxu0 0.0
      %335 = vmatpush1.msra.mxu0 0.0
      %336 = vmatprep.subr.mxu0 0.0
      %337 = vmatpush1.msra.mxu0 0.0
      %338 = vmatprep.subr.mxu0 0.0
      %339 = vmatpush1.msra.mxu0 0.0
      %340 = vmatprep.subr.mxu0 0.0
      %341 = vmatpush1.msra.mxu0 0.0
      %342 = vmatprep.subr.mxu0 0.0
      %343 = vmatpush1.msra.mxu0 0.0
      %344 = vmatprep.subr.mxu0 0.0
      %345 = vmatpush1.msra.mxu0 0.0
      %346 = vmatprep.subr.mxu0 0.0
      %347 = vmatpush1.msra.mxu0 0.0
      %348 = vmatprep.subr.mxu0 0.0
      %349 = vmatpush1.msra.mxu0 0.0
      %350 = vmatprep.subr.mxu0 0.0
      %351 = vmatpush1.msra.mxu0 0.0
      %352 = vmatprep.subr.mxu0 0.0
      %353 = vmatpush1.msra.mxu0 0.0
      %354 = vmatprep.subr.mxu0 0.0
      %355 = vmatpush1.msra.mxu0 0.0
      %356 = vmatprep.subr.mxu0 0.0
      %357 = vmatpush1.msra.mxu0 0.0
      %358 = vmatprep.subr.mxu0 0.0
      %359 = vmatpush1.msra.mxu0 0.0
      %360 = vmatprep.subr.mxu0 0.0
      %361 = vmatpush1.msra.mxu0 0.0
      %362 = vmatprep.subr.mxu0 0.0
      %363 = vmatpush1.msra.mxu0 0.0
      %364 = vmatprep.subr.mxu0 0.0
      %365 = vmatpush1.msra.mxu0 0.0
      %366 = vmatprep.subr.mxu0 0.0
      %367 = vmatpush1.msra.mxu0 0.0
      %368 = vmatprep.subr.mxu0 0.0
      %369 = vmatpush1.msra.mxu0 0.0
      %370 = vmatprep.subr.mxu0 0.0
      %371 = vmatpush1.msra.mxu0 0.0
      %372 = vmatprep.subr.mxu0 0.0
      %373 = vmatpush1.msra.mxu0 0.0
      %374 = vmatprep.subr.mxu0 0.0
      %375 = vmatpush1.msra.mxu0 0.0
      %376 = vmatprep.subr.mxu0 0.0
      %377 = vmatpush1.msra.mxu0 0.0
      %378 = vmatprep.subr.mxu0 0.0
      %379 = vmatpush1.msra.mxu0 0.0
      %380 = vmatprep.subr.mxu0 0.0
      %381 = vmatpush1.msra.mxu0 0.0
      %382 = vmatprep.subr.mxu0 0.0
      %383 = vmatpush1.msra.mxu0 0.0
      %384 = vmatprep.subr.mxu0 0.0
      %385 = vmatpush1.msra.mxu0 0.0
      %386 = vmatprep.mubr.f32.mxu0 0.0
      %387 = vmatmul.mubr.f32.gmra.mrb[0].mxu0 %v320
      %v388 = vpop.f32.mrb[0].mxu0
      %v389 = vadd.f32 0.0, %v388
      %v390 = vpop.f32.mrb[0].mxu0
      %391 = vdwg.mxu0
      %v392 = vadd.f32 %v312, %v389
      %v393 = vld [vmem:[#allocation2 + $0x2] sm:$0xff]
      %s394 = scalar_lea.vmem %s1, 64
      %v395 = vld [vmem:[%s394] sm:$0xff]
      %v396 = vld [vmem:[%s394 + $0x8] sm:$0xff]
      %v397 = vld [vmem:[%s394 + $0x10] sm:$0xff]
      %v398 = vld [vmem:[%s394 + $0x18] sm:$0xff]
      %v400 = vsel %vm221, %v393, 0
      %402 = vmatprep.subr.mxu0 0.0
      %403 = vmatpush1.msra.mxu0 %v395
      %404 = vmatprep.subr.mxu0 0.0
      %405 = vmatpush1.msra.mxu0 %v396
      %406 = vmatprep.subr.mxu0 0.0
      %407 = vmatpush1.msra.mxu0 %v397
      %408 = vmatprep.subr.mxu0 0.0
      %409 = vmatpush1.msra.mxu0 %v398
      %410 = vmatprep.subr.mxu0 0.0
      %411 = vmatpush1.msra.mxu0 0.0
      %412 = vmatprep.subr.mxu0 0.0
      %413 = vmatpush1.msra.mxu0 0.0
      %414 = vmatprep.subr.mxu0 0.0
      %415 = vmatpush1.msra.mxu0 0.0
      %416 = vmatprep.subr.mxu0 0.0
      %417 = vmatpush1.msra.mxu0 0.0
      %418 = vmatprep.subr.mxu0 0.0
      %419 = vmatpush1.msra.mxu0 0.0
      %420 = vmatprep.subr.mxu0 0.0
      %421 = vmatpush1.msra.mxu0 0.0
      %422 = vmatprep.subr.mxu0 0.0
      %423 = vmatpush1.msra.mxu0 0.0
      %424 = vmatprep.subr.mxu0 0.0
      %425 = vmatpush1.msra.mxu0 0.0
      %426 = vmatprep.subr.mxu0 0.0
      %427 = vmatpush1.msra.mxu0 0.0
      %428 = vmatprep.subr.mxu0 0.0
      %429 = vmatpush1.msra.mxu0 0.0
      %430 = vmatprep.subr.mxu0 0.0
      %431 = vmatpush1.msra.mxu0 0.0
      %432 = vmatprep.subr.mxu0 0.0
      %433 = vmatpush1.msra.mxu0 0.0
      %434 = vmatprep.subr.mxu0 0.0
      %435 = vmatpush1.msra.mxu0 0.0
      %436 = vmatprep.subr.mxu0 0.0
      %437 = vmatpush1.msra.mxu0 0.0
      %438 = vmatprep.subr.mxu0 0.0
      %439 = vmatpush1.msra.mxu0 0.0
      %440 = vmatprep.subr.mxu0 0.0
      %441 = vmatpush1.msra.mxu0 0.0
      %442 = vmatprep.subr.mxu0 0.0
      %443 = vmatpush1.msra.mxu0 0.0
      %444 = vmatprep.subr.mxu0 0.0
      %445 = vmatpush1.msra.mxu0 0.0
      %446 = vmatprep.subr.mxu0 0.0
      %447 = vmatpush1.msra.mxu0 0.0
      %448 = vmatprep.subr.mxu0 0.0
      %449 = vmatpush1.msra.mxu0 0.0
      %450 = vmatprep.subr.mxu0 0.0
      %451 = vmatpush1.msra.mxu0 0.0
      %452 = vmatprep.subr.mxu0 0.0
      %453 = vmatpush1.msra.mxu0 0.0
      %454 = vmatprep.subr.mxu0 0.0
      %455 = vmatpush1.msra.mxu0 0.0
      %456 = vmatprep.subr.mxu0 0.0
      %457 = vmatpush1.msra.mxu0 0.0
      %458 = vmatprep.subr.mxu0 0.0
      %459 = vmatpush1.msra.mxu0 0.0
      %460 = vmatprep.subr.mxu0 0.0
      %461 = vmatpush1.msra.mxu0 0.0
      %462 = vmatprep.subr.mxu0 0.0
      %463 = vmatpush1.msra.mxu0 0.0
      %464 = vmatprep.subr.mxu0 0.0
      %465 = vmatpush1.msra.mxu0 0.0
      %466 = vmatprep.mubr.f32.mxu0 0.0
      %467 = vmatmul.mubr.f32.gmra.mrb[0].mxu0 %v400
      %v468 = vpop.f32.mrb[0].mxu0
      %v469 = vadd.f32 0.0, %v468
      %v470 = vpop.f32.mrb[0].mxu0
      %471 = vdwg.mxu0
      %v472 = vadd.f32 %v392, %v469
      %v473 = vmax.f32 %v472, 0.0
      %v474 = vld [vmem:[%s3] sm:$0x1]
      %v475 = vld [vmem:[%s4] sm:$0x1]
      %v476 = vsel %vm221, %v473, 0.0
      %477 = vadd.xlane.f32.xlu0 %v476
      %v478 = vpop.xlane.xlu0 %477
      %v479 = vrcp.pop 32.0
      %v480 = vmul.f32 %v478, %v479
      %v481 = vsub.f32 %v473, %v480
      %v482 = vmul.f32 %v481, %v481
      %v483 = vsel %vm221, %v482, 0.0
      %484 = vadd.xlane.f32.xlu0 %v483
      %v485 = vpop.xlane.xlu0 %484
      %v486 = vmul.f32 %v485, %v479
      %v487 = vadd.f32 %v486, 1e-05
      %v488 = vrsqrt.pop %v487
      %v489 = vmul.f32 %v481, %v488
      %v491 = vlaneseq
      %v492 = vshrl.u32 %v491, 7
      %v493 = vsub.s32 0, %v492
      %v494 = vrot.slane %v474, %v493
      %v496 = vmul.f32 %v489, %v494
      %v498 = vlaneseq
      %v499 = vshrl.u32 %v498, 7
      %v500 = vsub.s32 0, %v499
      %v501 = vrot.slane %v475, %v500
      %v503 = vadd.f32 %v496, %v501
      %504 = vst.msk [vmem:[%s219] sm:$0xff] %vm221, %v503
      %p505 = scmp.lt.s32.totalorder %s16, 1
      %s506 = scalar_select %p505, %s16, 1
      %s507 = smul.addr %s506, 8
      %s508 = scalar_lea.vmem %s5, %s507
      // Predicated region
      $region41: #{model_forward.16} parent=39 // pred_check
        %p509 = pneg %p144
      $region42: #{model_forward.16} parent=39 // pred_check_branch
        %511 = sbr.rel (%p509) target = $region44
      $region43: #{model_forward.16} parent=39 // pred_region
        _
      $region44: #{model_forward.16} parent=39 // pred_fallthru
        _
    $region40: #{model_forward.16} parent=5 // pred_fallthru
      _
    %p512 = scmp.le.s32.totalorder 2, %s11
    // Predicated region
    $region45: #{model_forward.16} parent=5 // pred_check
      %p513 = pneg %p512
    $region46: #{model_forward.16} parent=5 // pred_check_branch
      %515 = sbr.rel (%p513) target = $region48
    $region47: #{model_forward.16} parent=5 // pred_region
      %s516 = ssub.s32 %s11, 2
      // Predicated region
      $region49: #{model_forward.16} parent=47 // pred_check
        %p517 = pneg %p150
      $region50: #{model_forward.16} parent=47 // pred_check_branch
        %519 = sbr.rel (%p517) target = $region52
      $region51: #{model_forward.16} parent=47 // pred_region
        %p520 = scmp.lt.s32.totalorder %s17, 1
        %s521 = scalar_select %p520, %s17, 1
        %s522 = smul.addr %s521, 8
        %s523 = scalar_lea.vmem %s5, %s522
      $region52: #{model_forward.16} parent=47 // pred_fallthru
        _
    $region48: #{model_forward.16} parent=5 // pred_fallthru
      _
  $region6: #{model_forward.16} parent=0 // loop_footer
    %s15 = sadd.s32 1, %s11
  $region7: #{model_forward.16} parent=0 // loop_footer_branch
    %10 = sbr.rel target = $region3
  $region8: #{model_forward.16} parent=0 // loop_exit
    _

</llo_original>
